<compile_context>
chip_gen: v7x
topology: tpu7x:2x2x1
jax: 0.10.0
libtpu: 0.0.40
codegen_flags: <defaults>
</compile_context>

<pallas_src>
import functools

import jax
import jax.numpy as jnp
from jax.experimental import pallas as pl
from jax.experimental.pallas import tpu as pltpu

VMEM_SPEC = pl.BlockSpec(memory_space=pltpu.MemorySpace.VMEM)
_LANES = 128        # lane-dense output width (last dim multiple of 128)
_EXP_CLAMP = 60.0   # clamp for exp arguments: keeps e_att finite in f32/bf16


# ----------------------------------------------------------------------------
# Fully fused SpGAT forward kernel
# ----------------------------------------------------------------------------
def _spgat_fused_kernel(
    x_ref, ef_ref,
    srcA_c, dstA_c, srcA_r, srcB_c, dstB_c, srcB_r,
    in_w, in_b,
    uv_w, uv_as, uv_ad, uv_ae,
    vu_w, vu_as, vu_ad, vu_ae,
    ouv_w, ouv_as, ouv_ad, ouv_ae,
    ovu_w, ovu_as, ovu_ad, ovu_ae,
    rep_ref,
    w1, b1, g1, be1, w2, b2, g2, be2, w3p,
    out_ref, edge_ref,
    *, alpha, nheads, nclass):
    n = x_ref.shape[0]
    e_cnt = ef_ref.shape[0]
    f32 = jnp.float32
    bf16 = jnp.bfloat16

    def dotf(a, b):   # f32 MXU matmul (small / accuracy-critical operands)
        return jnp.dot(a, b, preferred_element_type=f32)

    def dotb(a, b):   # bf16-operand MXU matmul with f32 accumulation
        return jnp.dot(a.astype(bf16), b.astype(bf16), preferred_element_type=f32)

    def leaky(z):
        return jnp.where(z > 0, z, alpha * z)

    # ---- one-hot edge selectors: built ONCE (hoisted above both rounds), in
    #      bf16 (0/1 exact).  Scatter selector is built directly in (N, E)
    #      layout from the (1, E) index row -> no materialized transposes.
    ids_col = jax.lax.broadcasted_iota(jnp.int32, (e_cnt, n), 1)   # (E, N)
    ids_row = jax.lax.broadcasted_iota(jnp.int32, (n, e_cnt), 0)   # (N, E)

    def selectors(src_c, dst_c, src_r):
        oh_src = jnp.where(ids_col == src_c, 1.0, 0.0).astype(bf16)  # (E,N) gather@src
        oh_dst = jnp.where(ids_col == dst_c, 1.0, 0.0).astype(bf16)  # (E,N) gather@dst
        oh_scT = jnp.where(ids_row == src_r, 1.0, 0.0).astype(bf16)  # (N,E) scatter->src
        return oh_src, oh_dst, oh_scT

    selA = selectors(srcA_c[...], dstA_c[...], srcA_r[...])
    selB = selectors(srcB_c[...], dstB_c[...], srcB_r[...])
    rep = rep_ref[...]                                  # (H, H*Dh) head replicator

    def gat_heads(x_in, ef, sel, W, Asrc, Adst, a_e):
        """All nheads SpGraphAttentionLayers (concat=True) fused."""
        oh_src, oh_dst, oh_scT = sel
        h = dotb(x_in, W)                               # (N, H*Dh)
        h_dst = dotb(oh_dst, h)                         # (E, H*Dh) gathered once, reused
        # dst-score gather folded into the already-gathered h_dst (one fewer
        # (E,N)-contraction matmul than gathering s_dst separately).
        logit = dotb(oh_src, dotf(h, Asrc)) + dotf(h_dst, Adst) + ef * a_e   # (E, H)
        e_att = jnp.exp(jnp.minimum(-leaky(logit), _EXP_CLAMP))             # (E, H)
        e_rep = dotf(e_att, rep)                        # (E, H*Dh) exact per-head bcast
        num = dotb(oh_scT, e_rep * h_dst)               # (N, H*Dh) scatter-add
        rowsum = dotb(oh_scT, e_att)                    # (N, H)
        inv = pl.reciprocal(jnp.where(rowsum == 0.0, 1.0, rowsum), approx=True)
        hp = num * dotf(inv, rep)                       # reciprocal BEFORE replication
        hp = jnp.where(hp > 0, hp, jnp.exp(jnp.minimum(hp, 0.0)) - 1.0)     # safe ELU
        return hp, e_att

    def gat_out(x_in, ef, sel, W, a_src, a_dst, a_e):
        """Single-head SpGraphAttentionLayer (concat=False)."""
        oh_src, oh_dst, oh_scT = sel
        h = dotb(x_in, W)                               # (N, embed)
        h_dst = dotb(oh_dst, h)                         # (E, embed)
        logit = dotb(oh_src, dotf(h, a_src)) + dotf(h_dst, a_dst) + ef * a_e  # (E, 1)
        e_att = jnp.exp(jnp.minimum(-leaky(logit), _EXP_CLAMP))
        num = dotb(oh_scT, e_att * h_dst)               # (N, embed)
        rowsum = dotb(oh_scT, e_att)                    # (N, 1)
        inv = pl.reciprocal(jnp.where(rowsum == 0.0, 1.0, rowsum), approx=True)
        return num * inv

    inv_h = 1.0 / nheads

    # ---- input linear ----
    x = dotf(x_ref[...], in_w[...]) + in_b[...]
    ef0 = ef_ref[...]

    # ---- two rounds of (u->v, v->u) message passing (weights shared) ----
    new_edge_ = None
    for _ in range(2):
        xc, e_uv = gat_heads(x, ef0, selA,
                             uv_w[...], uv_as[...], uv_ad[...], uv_ae[...])
        x = gat_out(xc, ef0, selA,
                    ouv_w[...], ouv_as[...], ouv_ad[...], ouv_ae[...])
        new_edge = jnp.sum(e_uv, axis=1, keepdims=True) * inv_h           # (E, 1)

        xc, e_vu = gat_heads(x, new_edge, selB,
                             vu_w[...], vu_as[...], vu_ad[...], vu_ae[...])
        x = gat_out(xc, new_edge, selB,
                    ovu_w[...], ovu_as[...], ovu_ad[...], ovu_ae[...])
        new_edge_ = jnp.sum(e_vu, axis=1, keepdims=True) * inv_h          # (E, 1)

    # ---- output MLP: (Linear+ReLU+LayerNorm) x2 -> Linear(no bias) -> softmax
    def layernorm(hh, g, b):
        mu = jnp.mean(hh, axis=1, keepdims=True)
        var = jnp.mean((hh - mu) ** 2, axis=1, keepdims=True)
        return (hh - mu) * jax.lax.rsqrt(var + 1e-5) * g + b

    h = jnp.maximum(dotf(x, w1[...]) + b1[...], 0.0)
    h = layernorm(h, g1[...], be1[...])
    h = jnp.maximum(dotf(h, w2[...]) + b2[...], 0.0)
    h = layernorm(h, g2[...], be2[...])

    # Lane-dense (N, 128) store: W3 is zero-padded to 128 classes in the
    # wrapper; pad columns are pushed to -1e30 so they get exactly 0 prob.
    lane = jax.lax.broadcasted_iota(jnp.int32, (1, out_ref.shape[1]), 1)
    logits = dotf(h, w3p[...]) + jnp.where(lane < nclass, 0.0, -1e30)
    m = jnp.max(logits, axis=1, keepdims=True)
    ex = jnp.exp(logits - m)
    out_ref[...] = ex / jnp.sum(ex, axis=1, keepdims=True)   # exact final softmax

    # Lane-dense (E, 128) store of the final edge feature (wrapper keeps col 0).
    edge_ref[...] = jnp.broadcast_to(new_edge_, edge_ref.shape)


# ----------------------------------------------------------------------------
# Parameter packing helpers (plain JAX, outside the kernel)
# ----------------------------------------------------------------------------
def _stack_heads(w_list, a_list, nhid):
    """Stack per-head weights / attention vectors for the fused multi-head path."""
    nheads = len(w_list)
    w_all = jnp.concatenate(w_list, axis=1)                    # (din, H*Dh)
    a_mat = jnp.stack([a.reshape(-1) for a in a_list])         # (H, 2*Dh+1)
    a_src = a_mat[:, :nhid]                                    # (H, Dh)
    a_dst = a_mat[:, nhid:2 * nhid]                            # (H, Dh)
    a_e = a_mat[:, 2 * nhid].reshape(1, nheads)                # (1, H)
    eye = jnp.eye(nheads, dtype=jnp.float32)
    # block-diagonal (H*Dh, H): column i holds head i's attention vector
    A_src = (a_src[:, :, None] * eye[:, None, :]).reshape(nheads * nhid, nheads)
    A_dst = (a_dst[:, :, None] * eye[:, None, :]).reshape(nheads * nhid, nheads)
    return w_all, A_src, A_dst, a_e


def _split_single(a, dout):
    a = a.reshape(-1)
    return (a[:dout].reshape(dout, 1),
            a[dout:2 * dout].reshape(dout, 1),
            a[2 * dout:].reshape(1, 1))


def _vmem_limit_bytes():
    # Raise the scoped-VMEM limit (defaults: 16 MiB v5e, 32 MiB v6e/v7x).  Use
    # 3/4 of physical capacity when queryable (96 MiB on v5e/v6e, 48 MiB on
    # v7x's 64 MiB parts); fall back to a value safe on every generation.
    try:
        return int(pltpu.get_tpu_info().vmem_capacity_bytes) * 3 // 4
    except Exception:
        return 48 * 1024 * 1024


# ----------------------------------------------------------------------------
# SpGAT forward — one pallas_call for the whole network
# ----------------------------------------------------------------------------
def spgat_forward(params, x, edgeA, edgeB, edge_feat, *, alpha, nheads):
    n, nfeat = x.shape
    e_cnt = edgeA.shape[1]
    embed = params["in_w"].shape[1]
    nhid = params["att_uv_w"][0].shape[1]
    nclass = params["mlp_w3"].shape[1]
    hd = nheads * nhid

    uv_w, uv_as, uv_ad, uv_ae = _stack_heads(params["att_uv_w"],
                                             params["att_uv_a"], nhid)
    vu_w, vu_as, vu_ad, vu_ae = _stack_heads(params["att_vu_w"],
                                             params["att_vu_a"], nhid)
    ouv_as, ouv_ad, ouv_ae = _split_single(params["out_uv_a"], embed)
    ovu_as, ovu_ad, ovu_ae = _split_single(params["out_vu_a"], embed)
    rep = jnp.kron(jnp.eye(nheads, dtype=jnp.float32),
                   jnp.ones((1, nhid), jnp.float32))            # (H, H*Dh)
    w3_pad = jnp.pad(params["mlp_w3"], ((0, 0), (0, _LANES - nclass)))

    srcA_c = edgeA[0].reshape(e_cnt, 1).astype(jnp.int32)
    dstA_c = edgeA[1].reshape(e_cnt, 1).astype(jnp.int32)
    srcA_r = edgeA[0].reshape(1, e_cnt).astype(jnp.int32)
    srcB_c = edgeB[0].reshape(e_cnt, 1).astype(jnp.int32)
    dstB_c = edgeB[1].reshape(e_cnt, 1).astype(jnp.int32)
    srcB_r = edgeB[0].reshape(1, e_cnt).astype(jnp.int32)

    args = (x.astype(jnp.float32), edge_feat.astype(jnp.float32),
            srcA_c, dstA_c, srcA_r, srcB_c, dstB_c, srcB_r,
            params["in_w"], params["in_b"].reshape(1, -1),
            uv_w, uv_as, uv_ad, uv_ae,
            vu_w, vu_as, vu_ad, vu_ae,
            params["out_uv_w"], ouv_as, ouv_ad, ouv_ae,
            params["out_vu_w"], ovu_as, ovu_ad, ovu_ae,
            rep,
            params["mlp_w1"], params["mlp_b1"].reshape(1, -1),
            params["mlp_g1"].reshape(1, -1), params["mlp_be1"].reshape(1, -1),
            params["mlp_w2"], params["mlp_b2"].reshape(1, -1),
            params["mlp_g2"].reshape(1, -1), params["mlp_be2"].reshape(1, -1),
            w3_pad)

    # Advisory cost estimate so XLA schedules around the single fused call.
    def mm(m, k, o):
        return 2 * m * k * o
    gat_h = (mm(n, embed, hd) + mm(n, hd, nheads) + mm(e_cnt, n, nheads)
             + mm(e_cnt, hd, nheads) + mm(e_cnt, n, hd) + mm(e_cnt, nheads, hd)
             + mm(n, e_cnt, hd) + mm(n, e_cnt, nheads) + mm(n, nheads, hd))
    gat_o = (mm(n, hd, embed) + mm(n, embed, 1) + mm(e_cnt, n, 1)
             + mm(e_cnt, embed, 1) + mm(e_cnt, n, embed)
             + mm(n, e_cnt, embed) + mm(n, e_cnt, 1))
    flops = (mm(n, nfeat, embed) + 4 * (gat_h + gat_o)
             + 2 * mm(n, embed, embed) + mm(n, embed, _LANES))
    transc = 4 * (e_cnt * (nheads + 1) + n * (hd + nheads + 1)) + n * _LANES
    bytes_accessed = (sum(int(a.size) * a.dtype.itemsize for a in args)
                      + (n + e_cnt) * _LANES * 4)

    kernel = functools.partial(_spgat_fused_kernel, alpha=alpha, nheads=nheads,
                               nclass=nclass)
    out_pad, edge_pad = pl.pallas_call(
        kernel,
        out_shape=(jax.ShapeDtypeStruct((n, _LANES), jnp.float32),
                   jax.ShapeDtypeStruct((e_cnt, _LANES), jnp.float32)),
        in_specs=[VMEM_SPEC] * len(args),
        out_specs=(VMEM_SPEC, VMEM_SPEC),
        compiler_params=pltpu.CompilerParams(vmem_limit_bytes=_vmem_limit_bytes()),
        cost_estimate=pl.CostEstimate(flops=int(flops),
                                      transcendentals=int(transc),
                                      bytes_accessed=int(bytes_accessed)),
    )(*args)
    return out_pad[:, :nclass], edge_pad[:, :1]


# ----------------------------------------------------------------------------
# Deterministic parameter init (shapes mirror the PyTorch __init__)
# ----------------------------------------------------------------------------
def init_params(key, nfeat, nhid, nclass, nheads, embed=64):
    keys = iter(jax.random.split(key, 64))

    def nrm(shape, scale=0.1):
        return jax.random.normal(next(keys), shape, jnp.float32) * scale

    return {
        "in_w": nrm((nfeat, embed)), "in_b": nrm((embed,)),
        "att_uv_w": [nrm((embed, nhid)) for _ in range(nheads)],
        "att_uv_a": [nrm((2 * nhid + 1,)) for _ in range(nheads)],
        "att_vu_w": [nrm((embed, nhid)) for _ in range(nheads)],
        "att_vu_a": [nrm((2 * nhid + 1,)) for _ in range(nheads)],
        "out_uv_w": nrm((nhid * nheads, embed)),
        "out_uv_a": nrm((2 * embed + 1,)),
        "out_vu_w": nrm((nhid * nheads, embed)),
        "out_vu_a": nrm((2 * embed + 1,)),
        "mlp_w1": nrm((embed, embed)), "mlp_b1": nrm((embed,)),
        "mlp_g1": jnp.ones((embed,), jnp.float32),
        "mlp_be1": jnp.zeros((embed,), jnp.float32),
        "mlp_w2": nrm((embed, embed)), "mlp_b2": nrm((embed,)),
        "mlp_g2": jnp.ones((embed,), jnp.float32),
        "mlp_be2": jnp.zeros((embed,), jnp.float32),
        "mlp_w3": nrm((embed, nclass)),
    }


if __name__ == "__main__":
    # small, forward-consistent shapes
    N = 48          # total nodes (variables + constraints stacked)
    E = 2 * N       # edges; every node appears as a source in both directions
    NFEAT = 6
    NHID = 16
    NHEADS = 4
    NCLASS = 2
    ALPHA = 0.2

    key = jax.random.PRNGKey(0)
    k_x, k_ef, k_p = jax.random.split(key, 3)

    x = jax.random.normal(k_x, (N, NFEAT), jnp.float32)
    edge_feat = jax.random.normal(k_ef, (E, 1), jnp.float32)

    src = jnp.concatenate([jnp.arange(N), jnp.arange(N)]).astype(jnp.int32)
    dst = jnp.concatenate([(jnp.arange(N) + 1) % N,
                           (jnp.arange(N) + 5) % N]).astype(jnp.int32)
    edgeA = jnp.stack([src, dst])          # (2, E)
    edgeB = jnp.stack([dst, src])          # reversed direction, same E

    params = init_params(k_p, NFEAT, NHID, NCLASS, NHEADS)

    fwd = jax.jit(functools.partial(spgat_forward, alpha=ALPHA, nheads=NHEADS))
    out, new_edge_ = fwd(params, x, edgeA, edgeB, edge_feat)
    out = jax.block_until_ready(out)
    new_edge_ = jax.block_until_ready(new_edge_)

    assert out.shape == (N, NCLASS) and new_edge_.shape == (E, 1)
    assert bool(jnp.all(jnp.isfinite(out))) and bool(jnp.all(jnp.isfinite(new_edge_)))
    # softmax rows must sum to 1
    assert bool(jnp.allclose(jnp.sum(out, axis=1), 1.0, atol=1e-5))
    print("KERNEL_OK")
</pallas_src>

<mosaic_0001>
module attributes {stable_mosaic.version = 11 : i64} {
  func.func @_spgat_fused_kernel(%arg0: memref<48x6xf32, #tpu.memory_space<vmem>>, %arg1: memref<96x1xf32, #tpu.memory_space<vmem>>, %arg2: memref<96x1xi32, #tpu.memory_space<vmem>>, %arg3: memref<96x1xi32, #tpu.memory_space<vmem>>, %arg4: memref<1x96xi32, #tpu.memory_space<vmem>>, %arg5: memref<96x1xi32, #tpu.memory_space<vmem>>, %arg6: memref<96x1xi32, #tpu.memory_space<vmem>>, %arg7: memref<1x96xi32, #tpu.memory_space<vmem>>, %arg8: memref<6x64xf32, #tpu.memory_space<vmem>>, %arg9: memref<1x64xf32, #tpu.memory_space<vmem>>, %arg10: memref<64x64xf32, #tpu.memory_space<vmem>>, %arg11: memref<64x4xf32, #tpu.memory_space<vmem>>, %arg12: memref<64x4xf32, #tpu.memory_space<vmem>>, %arg13: memref<1x4xf32, #tpu.memory_space<vmem>>, %arg14: memref<64x64xf32, #tpu.memory_space<vmem>>, %arg15: memref<64x4xf32, #tpu.memory_space<vmem>>, %arg16: memref<64x4xf32, #tpu.memory_space<vmem>>, %arg17: memref<1x4xf32, #tpu.memory_space<vmem>>, %arg18: memref<64x64xf32, #tpu.memory_space<vmem>>, %arg19: memref<64x1xf32, #tpu.memory_space<vmem>>, %arg20: memref<64x1xf32, #tpu.memory_space<vmem>>, %arg21: memref<1x1xf32, #tpu.memory_space<vmem>>, %arg22: memref<64x64xf32, #tpu.memory_space<vmem>>, %arg23: memref<64x1xf32, #tpu.memory_space<vmem>>, %arg24: memref<64x1xf32, #tpu.memory_space<vmem>>, %arg25: memref<1x1xf32, #tpu.memory_space<vmem>>, %arg26: memref<4x64xf32, #tpu.memory_space<vmem>>, %arg27: memref<64x64xf32, #tpu.memory_space<vmem>>, %arg28: memref<1x64xf32, #tpu.memory_space<vmem>>, %arg29: memref<1x64xf32, #tpu.memory_space<vmem>>, %arg30: memref<1x64xf32, #tpu.memory_space<vmem>>, %arg31: memref<64x64xf32, #tpu.memory_space<vmem>>, %arg32: memref<1x64xf32, #tpu.memory_space<vmem>>, %arg33: memref<1x64xf32, #tpu.memory_space<vmem>>, %arg34: memref<1x64xf32, #tpu.memory_space<vmem>>, %arg35: memref<64x128xf32, #tpu.memory_space<vmem>>, %arg36: memref<48x128xf32, #tpu.memory_space<vmem>>, %arg37: memref<96x128xf32, #tpu.memory_space<vmem>>) attributes {dimension_semantics = [], scalar_prefetch = 0 : i64, scratch_operands = 0 : i64, tpu.core_type = #tpu.core_type<tc>} {
    %0 = tpu.iota {dimensions = array<i32: 1>} : vector<96x48xi32>
    %1 = tpu.iota {dimensions = array<i32: 0>} : vector<48x96xi32>
    %c0 = arith.constant 0 : index
    %c0_0 = arith.constant 0 : index
    %2 = vector.load %arg2[%c0, %c0_0] : memref<96x1xi32, #tpu.memory_space<vmem>>, vector<96x1xi32>
    %c0_1 = arith.constant 0 : index
    %c0_2 = arith.constant 0 : index
    %3 = vector.load %arg3[%c0_1, %c0_2] : memref<96x1xi32, #tpu.memory_space<vmem>>, vector<96x1xi32>
    %c0_3 = arith.constant 0 : index
    %c0_4 = arith.constant 0 : index
    %4 = vector.load %arg4[%c0_3, %c0_4] : memref<1x96xi32, #tpu.memory_space<vmem>>, vector<1x96xi32>
    %5 = vector.broadcast %2 : vector<96x1xi32> to vector<96x48xi32>
    %6 = arith.cmpi eq, %0, %5 : vector<96x48xi32>
    %cst = arith.constant 1.000000e+00 : f32
    %cst_5 = arith.constant 0.000000e+00 : f32
    %7 = vector.broadcast %cst : f32 to vector<96x48xf32>
    %8 = vector.broadcast %cst_5 : f32 to vector<96x48xf32>
    %9 = arith.select %6, %7, %8 : vector<96x48xi1>, vector<96x48xf32>
    %10 = arith.truncf %9 : vector<96x48xf32> to vector<96x48xbf16>
    %11 = vector.broadcast %3 : vector<96x1xi32> to vector<96x48xi32>
    %12 = arith.cmpi eq, %0, %11 : vector<96x48xi32>
    %cst_6 = arith.constant 1.000000e+00 : f32
    %cst_7 = arith.constant 0.000000e+00 : f32
    %13 = vector.broadcast %cst_6 : f32 to vector<96x48xf32>
    %14 = vector.broadcast %cst_7 : f32 to vector<96x48xf32>
    %15 = arith.select %12, %13, %14 : vector<96x48xi1>, vector<96x48xf32>
    %16 = arith.truncf %15 : vector<96x48xf32> to vector<96x48xbf16>
    %17 = vector.broadcast %4 : vector<1x96xi32> to vector<48x96xi32>
    %18 = arith.cmpi eq, %1, %17 : vector<48x96xi32>
    %cst_8 = arith.constant 1.000000e+00 : f32
    %cst_9 = arith.constant 0.000000e+00 : f32
    %19 = vector.broadcast %cst_8 : f32 to vector<48x96xf32>
    %20 = vector.broadcast %cst_9 : f32 to vector<48x96xf32>
    %21 = arith.select %18, %19, %20 : vector<48x96xi1>, vector<48x96xf32>
    %22 = arith.truncf %21 : vector<48x96xf32> to vector<48x96xbf16>
    %c0_10 = arith.constant 0 : index
    %c0_11 = arith.constant 0 : index
    %23 = vector.load %arg5[%c0_10, %c0_11] : memref<96x1xi32, #tpu.memory_space<vmem>>, vector<96x1xi32>
    %c0_12 = arith.constant 0 : index
    %c0_13 = arith.constant 0 : index
    %24 = vector.load %arg6[%c0_12, %c0_13] : memref<96x1xi32, #tpu.memory_space<vmem>>, vector<96x1xi32>
    %c0_14 = arith.constant 0 : index
    %c0_15 = arith.constant 0 : index
    %25 = vector.load %arg7[%c0_14, %c0_15] : memref<1x96xi32, #tpu.memory_space<vmem>>, vector<1x96xi32>
    %26 = vector.broadcast %23 : vector<96x1xi32> to vector<96x48xi32>
    %27 = arith.cmpi eq, %0, %26 : vector<96x48xi32>
    %cst_16 = arith.constant 1.000000e+00 : f32
    %cst_17 = arith.constant 0.000000e+00 : f32
    %28 = vector.broadcast %cst_16 : f32 to vector<96x48xf32>
    %29 = vector.broadcast %cst_17 : f32 to vector<96x48xf32>
    %30 = arith.select %27, %28, %29 : vector<96x48xi1>, vector<96x48xf32>
    %31 = arith.truncf %30 : vector<96x48xf32> to vector<96x48xbf16>
    %32 = vector.broadcast %24 : vector<96x1xi32> to vector<96x48xi32>
    %33 = arith.cmpi eq, %0, %32 : vector<96x48xi32>
    %cst_18 = arith.constant 1.000000e+00 : f32
    %cst_19 = arith.constant 0.000000e+00 : f32
    %34 = vector.broadcast %cst_18 : f32 to vector<96x48xf32>
    %35 = vector.broadcast %cst_19 : f32 to vector<96x48xf32>
    %36 = arith.select %33, %34, %35 : vector<96x48xi1>, vector<96x48xf32>
    %37 = arith.truncf %36 : vector<96x48xf32> to vector<96x48xbf16>
    %38 = vector.broadcast %25 : vector<1x96xi32> to vector<48x96xi32>
    %39 = arith.cmpi eq, %1, %38 : vector<48x96xi32>
    %cst_20 = arith.constant 1.000000e+00 : f32
    %cst_21 = arith.constant 0.000000e+00 : f32
    %40 = vector.broadcast %cst_20 : f32 to vector<48x96xf32>
    %41 = vector.broadcast %cst_21 : f32 to vector<48x96xf32>
    %42 = arith.select %39, %40, %41 : vector<48x96xi1>, vector<48x96xf32>
    %43 = arith.truncf %42 : vector<48x96xf32> to vector<48x96xbf16>
    %c0_22 = arith.constant 0 : index
    %c0_23 = arith.constant 0 : index
    %44 = vector.load %arg26[%c0_22, %c0_23] : memref<4x64xf32, #tpu.memory_space<vmem>>, vector<4x64xf32>
    %c0_24 = arith.constant 0 : index
    %c0_25 = arith.constant 0 : index
    %45 = vector.load %arg0[%c0_24, %c0_25] : memref<48x6xf32, #tpu.memory_space<vmem>>, vector<48x6xf32>
    %c0_26 = arith.constant 0 : index
    %c0_27 = arith.constant 0 : index
    %46 = vector.load %arg8[%c0_26, %c0_27] : memref<6x64xf32, #tpu.memory_space<vmem>>, vector<6x64xf32>
    %cst_28 = arith.constant dense<0.000000e+00> : vector<48x64xf32>
    %47 = tpu.matmul %45, %46, %cst_28 {dimension_numbers = #tpu.dot_dimension_numbers<[1], [0], [0], [1], [0, 0, 1, 1], [], []>} : vector<48x6xf32>, vector<6x64xf32>, vector<48x64xf32> -> vector<48x64xf32>
    %c0_29 = arith.constant 0 : index
    %c0_30 = arith.constant 0 : index
    %48 = vector.load %arg9[%c0_29, %c0_30] : memref<1x64xf32, #tpu.memory_space<vmem>>, vector<1x64xf32>
    %49 = vector.broadcast %48 : vector<1x64xf32> to vector<48x64xf32>
    %50 = arith.addf %47, %49 : vector<48x64xf32>
    %c0_31 = arith.constant 0 : index
    %c0_32 = arith.constant 0 : index
    %51 = vector.load %arg1[%c0_31, %c0_32] : memref<96x1xf32, #tpu.memory_space<vmem>>, vector<96x1xf32>
    %c0_33 = arith.constant 0 : index
    %c0_34 = arith.constant 0 : index
    %52 = vector.load %arg10[%c0_33, %c0_34] : memref<64x64xf32, #tpu.memory_space<vmem>>, vector<64x64xf32>
    %c0_35 = arith.constant 0 : index
    %c0_36 = arith.constant 0 : index
    %53 = vector.load %arg11[%c0_35, %c0_36] : memref<64x4xf32, #tpu.memory_space<vmem>>, vector<64x4xf32>
    %c0_37 = arith.constant 0 : index
    %c0_38 = arith.constant 0 : index
    %54 = vector.load %arg12[%c0_37, %c0_38] : memref<64x4xf32, #tpu.memory_space<vmem>>, vector<64x4xf32>
    %c0_39 = arith.constant 0 : index
    %c0_40 = arith.constant 0 : index
    %55 = vector.load %arg13[%c0_39, %c0_40] : memref<1x4xf32, #tpu.memory_space<vmem>>, vector<1x4xf32>
    %56 = arith.truncf %50 : vector<48x64xf32> to vector<48x64xbf16>
    %57 = arith.truncf %52 : vector<64x64xf32> to vector<64x64xbf16>
    %cst_41 = arith.constant dense<0.000000e+00> : vector<48x64xf32>
    %58 = tpu.matmul %56, %57, %cst_41 {dimension_numbers = #tpu.dot_dimension_numbers<[1], [0], [0], [1], [0, 0, 1, 1], [], []>} : vector<48x64xbf16>, vector<64x64xbf16>, vector<48x64xf32> -> vector<48x64xf32>
    %59 = arith.truncf %58 : vector<48x64xf32> to vector<48x64xbf16>
    %cst_42 = arith.constant dense<0.000000e+00> : vector<96x64xf32>
    %60 = tpu.matmul %16, %59, %cst_42 {dimension_numbers = #tpu.dot_dimension_numbers<[1], [0], [0], [1], [0, 0, 1, 1], [], []>} : vector<96x48xbf16>, vector<48x64xbf16>, vector<96x64xf32> -> vector<96x64xf32>
    %cst_43 = arith.constant dense<0.000000e+00> : vector<48x4xf32>
    %61 = tpu.matmul %58, %53, %cst_43 {dimension_numbers = #tpu.dot_dimension_numbers<[1], [0], [0], [1], [0, 0, 1, 1], [], []>} : vector<48x64xf32>, vector<64x4xf32>, vector<48x4xf32> -> vector<48x4xf32>
    %62 = arith.truncf %61 : vector<48x4xf32> to vector<48x4xbf16>
    %cst_44 = arith.constant dense<0.000000e+00> : vector<96x4xf32>
    %63 = tpu.matmul %10, %62, %cst_44 {dimension_numbers = #tpu.dot_dimension_numbers<[1], [0], [0], [1], [0, 0, 1, 1], [], []>} : vector<96x48xbf16>, vector<48x4xbf16>, vector<96x4xf32> -> vector<96x4xf32>
    %cst_45 = arith.constant dense<0.000000e+00> : vector<96x4xf32>
    %64 = tpu.matmul %60, %54, %cst_45 {dimension_numbers = #tpu.dot_dimension_numbers<[1], [0], [0], [1], [0, 0, 1, 1], [], []>} : vector<96x64xf32>, vector<64x4xf32>, vector<96x4xf32> -> vector<96x4xf32>
    %65 = arith.addf %63, %64 : vector<96x4xf32>
    %66 = vector.broadcast %51 : vector<96x1xf32> to vector<96x4xf32>
    %67 = vector.broadcast %55 : vector<1x4xf32> to vector<96x4xf32>
    %68 = arith.mulf %66, %67 : vector<96x4xf32>
    %69 = arith.addf %65, %68 : vector<96x4xf32>
    %cst_46 = arith.constant 0.000000e+00 : f32
    %70 = vector.broadcast %cst_46 : f32 to vector<96x4xf32>
    %71 = arith.cmpf ogt, %69, %70 : vector<96x4xf32>
    %cst_47 = arith.constant 2.000000e-01 : f32
    %72 = vector.broadcast %cst_47 : f32 to vector<96x4xf32>
    %73 = arith.mulf %72, %69 : vector<96x4xf32>
    %74 = arith.select %71, %69, %73 : vector<96x4xi1>, vector<96x4xf32>
    %cst_48 = arith.constant 0.000000e+00 : f32
    %75 = vector.broadcast %cst_48 : f32 to vector<96x4xf32>
    %76 = arith.subf %75, %74 : vector<96x4xf32>
    %cst_49 = arith.constant 6.000000e+01 : f32
    %77 = vector.broadcast %cst_49 : f32 to vector<96x4xf32>
    %78 = arith.minimumf %76, %77 : vector<96x4xf32>
    %79 = math.exp %78 : vector<96x4xf32>
    %cst_50 = arith.constant dense<0.000000e+00> : vector<96x64xf32>
    %80 = tpu.matmul %79, %44, %cst_50 {dimension_numbers = #tpu.dot_dimension_numbers<[1], [0], [0], [1], [0, 0, 1, 1], [], []>} : vector<96x4xf32>, vector<4x64xf32>, vector<96x64xf32> -> vector<96x64xf32>
    %81 = arith.mulf %80, %60 : vector<96x64xf32>
    %82 = arith.truncf %81 : vector<96x64xf32> to vector<96x64xbf16>
    %cst_51 = arith.constant dense<0.000000e+00> : vector<48x64xf32>
    %83 = tpu.matmul %22, %82, %cst_51 {dimension_numbers = #tpu.dot_dimension_numbers<[1], [0], [0], [1], [0, 0, 1, 1], [], []>} : vector<48x96xbf16>, vector<96x64xbf16>, vector<48x64xf32> -> vector<48x64xf32>
    %84 = arith.truncf %79 : vector<96x4xf32> to vector<96x4xbf16>
    %cst_52 = arith.constant dense<0.000000e+00> : vector<48x4xf32>
    %85 = tpu.matmul %22, %84, %cst_52 {dimension_numbers = #tpu.dot_dimension_numbers<[1], [0], [0], [1], [0, 0, 1, 1], [], []>} : vector<48x96xbf16>, vector<96x4xbf16>, vector<48x4xf32> -> vector<48x4xf32>
    %cst_53 = arith.constant 0.000000e+00 : f32
    %86 = vector.broadcast %cst_53 : f32 to vector<48x4xf32>
    %87 = arith.cmpf oeq, %85, %86 : vector<48x4xf32>
    %cst_54 = arith.constant 1.000000e+00 : f32
    %88 = vector.broadcast %cst_54 : f32 to vector<48x4xf32>
    %89 = arith.select %87, %88, %85 : vector<48x4xi1>, vector<48x4xf32>
    %90 = tpu.reciprocal %89 {approx = true} : vector<48x4xf32> -> vector<48x4xf32>
    %cst_55 = arith.constant dense<0.000000e+00> : vector<48x64xf32>
    %91 = tpu.matmul %90, %44, %cst_55 {dimension_numbers = #tpu.dot_dimension_numbers<[1], [0], [0], [1], [0, 0, 1, 1], [], []>} : vector<48x4xf32>, vector<4x64xf32>, vector<48x64xf32> -> vector<48x64xf32>
    %92 = arith.mulf %83, %91 : vector<48x64xf32>
    %cst_56 = arith.constant 0.000000e+00 : f32
    %93 = vector.broadcast %cst_56 : f32 to vector<48x64xf32>
    %94 = arith.cmpf ogt, %92, %93 : vector<48x64xf32>
    %cst_57 = arith.constant 0.000000e+00 : f32
    %95 = vector.broadcast %cst_57 : f32 to vector<48x64xf32>
    %96 = arith.minimumf %92, %95 : vector<48x64xf32>
    %97 = math.exp %96 : vector<48x64xf32>
    %cst_58 = arith.constant 1.000000e+00 : f32
    %98 = vector.broadcast %cst_58 : f32 to vector<48x64xf32>
    %99 = arith.subf %97, %98 : vector<48x64xf32>
    %100 = arith.select %94, %92, %99 : vector<48x64xi1>, vector<48x64xf32>
    %c0_59 = arith.constant 0 : index
    %c0_60 = arith.constant 0 : index
    %101 = vector.load %arg18[%c0_59, %c0_60] : memref<64x64xf32, #tpu.memory_space<vmem>>, vector<64x64xf32>
    %c0_61 = arith.constant 0 : index
    %c0_62 = arith.constant 0 : index
    %102 = vector.load %arg19[%c0_61, %c0_62] : memref<64x1xf32, #tpu.memory_space<vmem>>, vector<64x1xf32>
    %c0_63 = arith.constant 0 : index
    %c0_64 = arith.constant 0 : index
    %103 = vector.load %arg20[%c0_63, %c0_64] : memref<64x1xf32, #tpu.memory_space<vmem>>, vector<64x1xf32>
    %c0_65 = arith.constant 0 : index
    %c0_66 = arith.constant 0 : index
    %104 = vector.load %arg21[%c0_65, %c0_66] : memref<1x1xf32, #tpu.memory_space<vmem>>, vector<1x1xf32>
    %105 = arith.truncf %100 : vector<48x64xf32> to vector<48x64xbf16>
    %106 = arith.truncf %101 : vector<64x64xf32> to vector<64x64xbf16>
    %cst_67 = arith.constant dense<0.000000e+00> : vector<48x64xf32>
    %107 = tpu.matmul %105, %106, %cst_67 {dimension_numbers = #tpu.dot_dimension_numbers<[1], [0], [0], [1], [0, 0, 1, 1], [], []>} : vector<48x64xbf16>, vector<64x64xbf16>, vector<48x64xf32> -> vector<48x64xf32>
    %108 = arith.truncf %107 : vector<48x64xf32> to vector<48x64xbf16>
    %cst_68 = arith.constant dense<0.000000e+00> : vector<96x64xf32>
    %109 = tpu.matmul %16, %108, %cst_68 {dimension_numbers = #tpu.dot_dimension_numbers<[1], [0], [0], [1], [0, 0, 1, 1], [], []>} : vector<96x48xbf16>, vector<48x64xbf16>, vector<96x64xf32> -> vector<96x64xf32>
    %cst_69 = arith.constant dense<0.000000e+00> : vector<48x1xf32>
    %110 = tpu.matmul %107, %102, %cst_69 {dimension_numbers = #tpu.dot_dimension_numbers<[1], [0], [0], [1], [0, 0, 1, 1], [], []>} : vector<48x64xf32>, vector<64x1xf32>, vector<48x1xf32> -> vector<48x1xf32>
    %111 = arith.truncf %110 : vector<48x1xf32> to vector<48x1xbf16>
    %cst_70 = arith.constant dense<0.000000e+00> : vector<96x1xf32>
    %112 = tpu.matmul %10, %111, %cst_70 {dimension_numbers = #tpu.dot_dimension_numbers<[1], [0], [0], [1], [0, 0, 1, 1], [], []>} : vector<96x48xbf16>, vector<48x1xbf16>, vector<96x1xf32> -> vector<96x1xf32>
    %cst_71 = arith.constant dense<0.000000e+00> : vector<96x1xf32>
    %113 = tpu.matmul %109, %103, %cst_71 {dimension_numbers = #tpu.dot_dimension_numbers<[1], [0], [0], [1], [0, 0, 1, 1], [], []>} : vector<96x64xf32>, vector<64x1xf32>, vector<96x1xf32> -> vector<96x1xf32>
    %114 = arith.addf %112, %113 : vector<96x1xf32>
    %115 = vector.broadcast %104 : vector<1x1xf32> to vector<96x1xf32>
    %116 = arith.mulf %51, %115 : vector<96x1xf32>
    %117 = arith.addf %114, %116 : vector<96x1xf32>
    %cst_72 = arith.constant 0.000000e+00 : f32
    %118 = vector.broadcast %cst_72 : f32 to vector<96x1xf32>
    %119 = arith.cmpf ogt, %117, %118 : vector<96x1xf32>
    %cst_73 = arith.constant 2.000000e-01 : f32
    %120 = vector.broadcast %cst_73 : f32 to vector<96x1xf32>
    %121 = arith.mulf %120, %117 : vector<96x1xf32>
    %122 = arith.select %119, %117, %121 : vector<96x1xi1>, vector<96x1xf32>
    %cst_74 = arith.constant 0.000000e+00 : f32
    %123 = vector.broadcast %cst_74 : f32 to vector<96x1xf32>
    %124 = arith.subf %123, %122 : vector<96x1xf32>
    %cst_75 = arith.constant 6.000000e+01 : f32
    %125 = vector.broadcast %cst_75 : f32 to vector<96x1xf32>
    %126 = arith.minimumf %124, %125 : vector<96x1xf32>
    %127 = math.exp %126 : vector<96x1xf32>
    %128 = vector.broadcast %127 : vector<96x1xf32> to vector<96x64xf32>
    %129 = arith.mulf %128, %109 : vector<96x64xf32>
    %130 = arith.truncf %129 : vector<96x64xf32> to vector<96x64xbf16>
    %cst_76 = arith.constant dense<0.000000e+00> : vector<48x64xf32>
    %131 = tpu.matmul %22, %130, %cst_76 {dimension_numbers = #tpu.dot_dimension_numbers<[1], [0], [0], [1], [0, 0, 1, 1], [], []>} : vector<48x96xbf16>, vector<96x64xbf16>, vector<48x64xf32> -> vector<48x64xf32>
    %132 = arith.truncf %127 : vector<96x1xf32> to vector<96x1xbf16>
    %cst_77 = arith.constant dense<0.000000e+00> : vector<48x1xf32>
    %133 = tpu.matmul %22, %132, %cst_77 {dimension_numbers = #tpu.dot_dimension_numbers<[1], [0], [0], [1], [0, 0, 1, 1], [], []>} : vector<48x96xbf16>, vector<96x1xbf16>, vector<48x1xf32> -> vector<48x1xf32>
    %cst_78 = arith.constant 0.000000e+00 : f32
    %134 = vector.broadcast %cst_78 : f32 to vector<48x1xf32>
    %135 = arith.cmpf oeq, %133, %134 : vector<48x1xf32>
    %cst_79 = arith.constant 1.000000e+00 : f32
    %136 = vector.broadcast %cst_79 : f32 to vector<48x1xf32>
    %137 = arith.select %135, %136, %133 : vector<48x1xi1>, vector<48x1xf32>
    %138 = tpu.reciprocal %137 {approx = true} : vector<48x1xf32> -> vector<48x1xf32>
    %139 = vector.broadcast %138 : vector<48x1xf32> to vector<48x64xf32>
    %140 = arith.mulf %131, %139 : vector<48x64xf32>
    %cst_80 = arith.constant dense<0.000000e+00> : vector<96xf32>
    %141 = vector.multi_reduction <add>, %79, %cst_80 [1] : vector<96x4xf32> to vector<96xf32>
    %142 = vector.shape_cast %141 : vector<96xf32> to vector<96x1xf32>
    %cst_81 = arith.constant 2.500000e-01 : f32
    %143 = vector.broadcast %cst_81 : f32 to vector<96x1xf32>
    %144 = arith.mulf %142, %143 : vector<96x1xf32>
    %c0_82 = arith.constant 0 : index
    %c0_83 = arith.constant 0 : index
    %145 = vector.load %arg14[%c0_82, %c0_83] : memref<64x64xf32, #tpu.memory_space<vmem>>, vector<64x64xf32>
    %c0_84 = arith.constant 0 : index
    %c0_85 = arith.constant 0 : index
    %146 = vector.load %arg15[%c0_84, %c0_85] : memref<64x4xf32, #tpu.memory_space<vmem>>, vector<64x4xf32>
    %c0_86 = arith.constant 0 : index
    %c0_87 = arith.constant 0 : index
    %147 = vector.load %arg16[%c0_86, %c0_87] : memref<64x4xf32, #tpu.memory_space<vmem>>, vector<64x4xf32>
    %c0_88 = arith.constant 0 : index
    %c0_89 = arith.constant 0 : index
    %148 = vector.load %arg17[%c0_88, %c0_89] : memref<1x4xf32, #tpu.memory_space<vmem>>, vector<1x4xf32>
    %149 = arith.truncf %140 : vector<48x64xf32> to vector<48x64xbf16>
    %150 = arith.truncf %145 : vector<64x64xf32> to vector<64x64xbf16>
    %cst_90 = arith.constant dense<0.000000e+00> : vector<48x64xf32>
    %151 = tpu.matmul %149, %150, %cst_90 {dimension_numbers = #tpu.dot_dimension_numbers<[1], [0], [0], [1], [0, 0, 1, 1], [], []>} : vector<48x64xbf16>, vector<64x64xbf16>, vector<48x64xf32> -> vector<48x64xf32>
    %152 = arith.truncf %151 : vector<48x64xf32> to vector<48x64xbf16>
    %cst_91 = arith.constant dense<0.000000e+00> : vector<96x64xf32>
    %153 = tpu.matmul %37, %152, %cst_91 {dimension_numbers = #tpu.dot_dimension_numbers<[1], [0], [0], [1], [0, 0, 1, 1], [], []>} : vector<96x48xbf16>, vector<48x64xbf16>, vector<96x64xf32> -> vector<96x64xf32>
    %cst_92 = arith.constant dense<0.000000e+00> : vector<48x4xf32>
    %154 = tpu.matmul %151, %146, %cst_92 {dimension_numbers = #tpu.dot_dimension_numbers<[1], [0], [0], [1], [0, 0, 1, 1], [], []>} : vector<48x64xf32>, vector<64x4xf32>, vector<48x4xf32> -> vector<48x4xf32>
    %155 = arith.truncf %154 : vector<48x4xf32> to vector<48x4xbf16>
    %cst_93 = arith.constant dense<0.000000e+00> : vector<96x4xf32>
    %156 = tpu.matmul %31, %155, %cst_93 {dimension_numbers = #tpu.dot_dimension_numbers<[1], [0], [0], [1], [0, 0, 1, 1], [], []>} : vector<96x48xbf16>, vector<48x4xbf16>, vector<96x4xf32> -> vector<96x4xf32>
    %cst_94 = arith.constant dense<0.000000e+00> : vector<96x4xf32>
    %157 = tpu.matmul %153, %147, %cst_94 {dimension_numbers = #tpu.dot_dimension_numbers<[1], [0], [0], [1], [0, 0, 1, 1], [], []>} : vector<96x64xf32>, vector<64x4xf32>, vector<96x4xf32> -> vector<96x4xf32>
    %158 = arith.addf %156, %157 : vector<96x4xf32>
    %159 = vector.broadcast %144 : vector<96x1xf32> to vector<96x4xf32>
    %160 = vector.broadcast %148 : vector<1x4xf32> to vector<96x4xf32>
    %161 = arith.mulf %159, %160 : vector<96x4xf32>
    %162 = arith.addf %158, %161 : vector<96x4xf32>
    %cst_95 = arith.constant 0.000000e+00 : f32
    %163 = vector.broadcast %cst_95 : f32 to vector<96x4xf32>
    %164 = arith.cmpf ogt, %162, %163 : vector<96x4xf32>
    %cst_96 = arith.constant 2.000000e-01 : f32
    %165 = vector.broadcast %cst_96 : f32 to vector<96x4xf32>
    %166 = arith.mulf %165, %162 : vector<96x4xf32>
    %167 = arith.select %164, %162, %166 : vector<96x4xi1>, vector<96x4xf32>
    %cst_97 = arith.constant 0.000000e+00 : f32
    %168 = vector.broadcast %cst_97 : f32 to vector<96x4xf32>
    %169 = arith.subf %168, %167 : vector<96x4xf32>
    %cst_98 = arith.constant 6.000000e+01 : f32
    %170 = vector.broadcast %cst_98 : f32 to vector<96x4xf32>
    %171 = arith.minimumf %169, %170 : vector<96x4xf32>
    %172 = math.exp %171 : vector<96x4xf32>
    %cst_99 = arith.constant dense<0.000000e+00> : vector<96x64xf32>
    %173 = tpu.matmul %172, %44, %cst_99 {dimension_numbers = #tpu.dot_dimension_numbers<[1], [0], [0], [1], [0, 0, 1, 1], [], []>} : vector<96x4xf32>, vector<4x64xf32>, vector<96x64xf32> -> vector<96x64xf32>
    %174 = arith.mulf %173, %153 : vector<96x64xf32>
    %175 = arith.truncf %174 : vector<96x64xf32> to vector<96x64xbf16>
    %cst_100 = arith.constant dense<0.000000e+00> : vector<48x64xf32>
    %176 = tpu.matmul %43, %175, %cst_100 {dimension_numbers = #tpu.dot_dimension_numbers<[1], [0], [0], [1], [0, 0, 1, 1], [], []>} : vector<48x96xbf16>, vector<96x64xbf16>, vector<48x64xf32> -> vector<48x64xf32>
    %177 = arith.truncf %172 : vector<96x4xf32> to vector<96x4xbf16>
    %cst_101 = arith.constant dense<0.000000e+00> : vector<48x4xf32>
    %178 = tpu.matmul %43, %177, %cst_101 {dimension_numbers = #tpu.dot_dimension_numbers<[1], [0], [0], [1], [0, 0, 1, 1], [], []>} : vector<48x96xbf16>, vector<96x4xbf16>, vector<48x4xf32> -> vector<48x4xf32>
    %cst_102 = arith.constant 0.000000e+00 : f32
    %179 = vector.broadcast %cst_102 : f32 to vector<48x4xf32>
    %180 = arith.cmpf oeq, %178, %179 : vector<48x4xf32>
    %cst_103 = arith.constant 1.000000e+00 : f32
    %181 = vector.broadcast %cst_103 : f32 to vector<48x4xf32>
    %182 = arith.select %180, %181, %178 : vector<48x4xi1>, vector<48x4xf32>
    %183 = tpu.reciprocal %182 {approx = true} : vector<48x4xf32> -> vector<48x4xf32>
    %cst_104 = arith.constant dense<0.000000e+00> : vector<48x64xf32>
    %184 = tpu.matmul %183, %44, %cst_104 {dimension_numbers = #tpu.dot_dimension_numbers<[1], [0], [0], [1], [0, 0, 1, 1], [], []>} : vector<48x4xf32>, vector<4x64xf32>, vector<48x64xf32> -> vector<48x64xf32>
    %185 = arith.mulf %176, %184 : vector<48x64xf32>
    %cst_105 = arith.constant 0.000000e+00 : f32
    %186 = vector.broadcast %cst_105 : f32 to vector<48x64xf32>
    %187 = arith.cmpf ogt, %185, %186 : vector<48x64xf32>
    %cst_106 = arith.constant 0.000000e+00 : f32
    %188 = vector.broadcast %cst_106 : f32 to vector<48x64xf32>
    %189 = arith.minimumf %185, %188 : vector<48x64xf32>
    %190 = math.exp %189 : vector<48x64xf32>
    %cst_107 = arith.constant 1.000000e+00 : f32
    %191 = vector.broadcast %cst_107 : f32 to vector<48x64xf32>
    %192 = arith.subf %190, %191 : vector<48x64xf32>
    %193 = arith.select %187, %185, %192 : vector<48x64xi1>, vector<48x64xf32>
    %c0_108 = arith.constant 0 : index
    %c0_109 = arith.constant 0 : index
    %194 = vector.load %arg22[%c0_108, %c0_109] : memref<64x64xf32, #tpu.memory_space<vmem>>, vector<64x64xf32>
    %c0_110 = arith.constant 0 : index
    %c0_111 = arith.constant 0 : index
    %195 = vector.load %arg23[%c0_110, %c0_111] : memref<64x1xf32, #tpu.memory_space<vmem>>, vector<64x1xf32>
    %c0_112 = arith.constant 0 : index
    %c0_113 = arith.constant 0 : index
    %196 = vector.load %arg24[%c0_112, %c0_113] : memref<64x1xf32, #tpu.memory_space<vmem>>, vector<64x1xf32>
    %c0_114 = arith.constant 0 : index
    %c0_115 = arith.constant 0 : index
    %197 = vector.load %arg25[%c0_114, %c0_115] : memref<1x1xf32, #tpu.memory_space<vmem>>, vector<1x1xf32>
    %198 = arith.truncf %193 : vector<48x64xf32> to vector<48x64xbf16>
    %199 = arith.truncf %194 : vector<64x64xf32> to vector<64x64xbf16>
    %cst_116 = arith.constant dense<0.000000e+00> : vector<48x64xf32>
    %200 = tpu.matmul %198, %199, %cst_116 {dimension_numbers = #tpu.dot_dimension_numbers<[1], [0], [0], [1], [0, 0, 1, 1], [], []>} : vector<48x64xbf16>, vector<64x64xbf16>, vector<48x64xf32> -> vector<48x64xf32>
    %201 = arith.truncf %200 : vector<48x64xf32> to vector<48x64xbf16>
    %cst_117 = arith.constant dense<0.000000e+00> : vector<96x64xf32>
    %202 = tpu.matmul %37, %201, %cst_117 {dimension_numbers = #tpu.dot_dimension_numbers<[1], [0], [0], [1], [0, 0, 1, 1], [], []>} : vector<96x48xbf16>, vector<48x64xbf16>, vector<96x64xf32> -> vector<96x64xf32>
    %cst_118 = arith.constant dense<0.000000e+00> : vector<48x1xf32>
    %203 = tpu.matmul %200, %195, %cst_118 {dimension_numbers = #tpu.dot_dimension_numbers<[1], [0], [0], [1], [0, 0, 1, 1], [], []>} : vector<48x64xf32>, vector<64x1xf32>, vector<48x1xf32> -> vector<48x1xf32>
    %204 = arith.truncf %203 : vector<48x1xf32> to vector<48x1xbf16>
    %cst_119 = arith.constant dense<0.000000e+00> : vector<96x1xf32>
    %205 = tpu.matmul %31, %204, %cst_119 {dimension_numbers = #tpu.dot_dimension_numbers<[1], [0], [0], [1], [0, 0, 1, 1], [], []>} : vector<96x48xbf16>, vector<48x1xbf16>, vector<96x1xf32> -> vector<96x1xf32>
    %cst_120 = arith.constant dense<0.000000e+00> : vector<96x1xf32>
    %206 = tpu.matmul %202, %196, %cst_120 {dimension_numbers = #tpu.dot_dimension_numbers<[1], [0], [0], [1], [0, 0, 1, 1], [], []>} : vector<96x64xf32>, vector<64x1xf32>, vector<96x1xf32> -> vector<96x1xf32>
    %207 = arith.addf %205, %206 : vector<96x1xf32>
    %208 = vector.broadcast %197 : vector<1x1xf32> to vector<96x1xf32>
    %209 = arith.mulf %144, %208 : vector<96x1xf32>
    %210 = arith.addf %207, %209 : vector<96x1xf32>
    %cst_121 = arith.constant 0.000000e+00 : f32
    %211 = vector.broadcast %cst_121 : f32 to vector<96x1xf32>
    %212 = arith.cmpf ogt, %210, %211 : vector<96x1xf32>
    %cst_122 = arith.constant 2.000000e-01 : f32
    %213 = vector.broadcast %cst_122 : f32 to vector<96x1xf32>
    %214 = arith.mulf %213, %210 : vector<96x1xf32>
    %215 = arith.select %212, %210, %214 : vector<96x1xi1>, vector<96x1xf32>
    %cst_123 = arith.constant 0.000000e+00 : f32
    %216 = vector.broadcast %cst_123 : f32 to vector<96x1xf32>
    %217 = arith.subf %216, %215 : vector<96x1xf32>
    %cst_124 = arith.constant 6.000000e+01 : f32
    %218 = vector.broadcast %cst_124 : f32 to vector<96x1xf32>
    %219 = arith.minimumf %217, %218 : vector<96x1xf32>
    %220 = math.exp %219 : vector<96x1xf32>
    %221 = vector.broadcast %220 : vector<96x1xf32> to vector<96x64xf32>
    %222 = arith.mulf %221, %202 : vector<96x64xf32>
    %223 = arith.truncf %222 : vector<96x64xf32> to vector<96x64xbf16>
    %cst_125 = arith.constant dense<0.000000e+00> : vector<48x64xf32>
    %224 = tpu.matmul %43, %223, %cst_125 {dimension_numbers = #tpu.dot_dimension_numbers<[1], [0], [0], [1], [0, 0, 1, 1], [], []>} : vector<48x96xbf16>, vector<96x64xbf16>, vector<48x64xf32> -> vector<48x64xf32>
    %225 = arith.truncf %220 : vector<96x1xf32> to vector<96x1xbf16>
    %cst_126 = arith.constant dense<0.000000e+00> : vector<48x1xf32>
    %226 = tpu.matmul %43, %225, %cst_126 {dimension_numbers = #tpu.dot_dimension_numbers<[1], [0], [0], [1], [0, 0, 1, 1], [], []>} : vector<48x96xbf16>, vector<96x1xbf16>, vector<48x1xf32> -> vector<48x1xf32>
    %cst_127 = arith.constant 0.000000e+00 : f32
    %227 = vector.broadcast %cst_127 : f32 to vector<48x1xf32>
    %228 = arith.cmpf oeq, %226, %227 : vector<48x1xf32>
    %cst_128 = arith.constant 1.000000e+00 : f32
    %229 = vector.broadcast %cst_128 : f32 to vector<48x1xf32>
    %230 = arith.select %228, %229, %226 : vector<48x1xi1>, vector<48x1xf32>
    %231 = tpu.reciprocal %230 {approx = true} : vector<48x1xf32> -> vector<48x1xf32>
    %232 = vector.broadcast %231 : vector<48x1xf32> to vector<48x64xf32>
    %233 = arith.mulf %224, %232 : vector<48x64xf32>
    %c0_129 = arith.constant 0 : index
    %c0_130 = arith.constant 0 : index
    %234 = vector.load %arg10[%c0_129, %c0_130] : memref<64x64xf32, #tpu.memory_space<vmem>>, vector<64x64xf32>
    %c0_131 = arith.constant 0 : index
    %c0_132 = arith.constant 0 : index
    %235 = vector.load %arg11[%c0_131, %c0_132] : memref<64x4xf32, #tpu.memory_space<vmem>>, vector<64x4xf32>
    %c0_133 = arith.constant 0 : index
    %c0_134 = arith.constant 0 : index
    %236 = vector.load %arg12[%c0_133, %c0_134] : memref<64x4xf32, #tpu.memory_space<vmem>>, vector<64x4xf32>
    %c0_135 = arith.constant 0 : index
    %c0_136 = arith.constant 0 : index
    %237 = vector.load %arg13[%c0_135, %c0_136] : memref<1x4xf32, #tpu.memory_space<vmem>>, vector<1x4xf32>
    %238 = arith.truncf %233 : vector<48x64xf32> to vector<48x64xbf16>
    %239 = arith.truncf %234 : vector<64x64xf32> to vector<64x64xbf16>
    %cst_137 = arith.constant dense<0.000000e+00> : vector<48x64xf32>
    %240 = tpu.matmul %238, %239, %cst_137 {dimension_numbers = #tpu.dot_dimension_numbers<[1], [0], [0], [1], [0, 0, 1, 1], [], []>} : vector<48x64xbf16>, vector<64x64xbf16>, vector<48x64xf32> -> vector<48x64xf32>
    %241 = arith.truncf %240 : vector<48x64xf32> to vector<48x64xbf16>
    %cst_138 = arith.constant dense<0.000000e+00> : vector<96x64xf32>
    %242 = tpu.matmul %16, %241, %cst_138 {dimension_numbers = #tpu.dot_dimension_numbers<[1], [0], [0], [1], [0, 0, 1, 1], [], []>} : vector<96x48xbf16>, vector<48x64xbf16>, vector<96x64xf32> -> vector<96x64xf32>
    %cst_139 = arith.constant dense<0.000000e+00> : vector<48x4xf32>
    %243 = tpu.matmul %240, %235, %cst_139 {dimension_numbers = #tpu.dot_dimension_numbers<[1], [0], [0], [1], [0, 0, 1, 1], [], []>} : vector<48x64xf32>, vector<64x4xf32>, vector<48x4xf32> -> vector<48x4xf32>
    %244 = arith.truncf %243 : vector<48x4xf32> to vector<48x4xbf16>
    %cst_140 = arith.constant dense<0.000000e+00> : vector<96x4xf32>
    %245 = tpu.matmul %10, %244, %cst_140 {dimension_numbers = #tpu.dot_dimension_numbers<[1], [0], [0], [1], [0, 0, 1, 1], [], []>} : vector<96x48xbf16>, vector<48x4xbf16>, vector<96x4xf32> -> vector<96x4xf32>
    %cst_141 = arith.constant dense<0.000000e+00> : vector<96x4xf32>
    %246 = tpu.matmul %242, %236, %cst_141 {dimension_numbers = #tpu.dot_dimension_numbers<[1], [0], [0], [1], [0, 0, 1, 1], [], []>} : vector<96x64xf32>, vector<64x4xf32>, vector<96x4xf32> -> vector<96x4xf32>
    %247 = arith.addf %245, %246 : vector<96x4xf32>
    %248 = vector.broadcast %51 : vector<96x1xf32> to vector<96x4xf32>
    %249 = vector.broadcast %237 : vector<1x4xf32> to vector<96x4xf32>
    %250 = arith.mulf %248, %249 : vector<96x4xf32>
    %251 = arith.addf %247, %250 : vector<96x4xf32>
    %cst_142 = arith.constant 0.000000e+00 : f32
    %252 = vector.broadcast %cst_142 : f32 to vector<96x4xf32>
    %253 = arith.cmpf ogt, %251, %252 : vector<96x4xf32>
    %cst_143 = arith.constant 2.000000e-01 : f32
    %254 = vector.broadcast %cst_143 : f32 to vector<96x4xf32>
    %255 = arith.mulf %254, %251 : vector<96x4xf32>
    %256 = arith.select %253, %251, %255 : vector<96x4xi1>, vector<96x4xf32>
    %cst_144 = arith.constant 0.000000e+00 : f32
    %257 = vector.broadcast %cst_144 : f32 to vector<96x4xf32>
    %258 = arith.subf %257, %256 : vector<96x4xf32>
    %cst_145 = arith.constant 6.000000e+01 : f32
    %259 = vector.broadcast %cst_145 : f32 to vector<96x4xf32>
    %260 = arith.minimumf %258, %259 : vector<96x4xf32>
    %261 = math.exp %260 : vector<96x4xf32>
    %cst_146 = arith.constant dense<0.000000e+00> : vector<96x64xf32>
    %262 = tpu.matmul %261, %44, %cst_146 {dimension_numbers = #tpu.dot_dimension_numbers<[1], [0], [0], [1], [0, 0, 1, 1], [], []>} : vector<96x4xf32>, vector<4x64xf32>, vector<96x64xf32> -> vector<96x64xf32>
    %263 = arith.mulf %262, %242 : vector<96x64xf32>
    %264 = arith.truncf %263 : vector<96x64xf32> to vector<96x64xbf16>
    %cst_147 = arith.constant dense<0.000000e+00> : vector<48x64xf32>
    %265 = tpu.matmul %22, %264, %cst_147 {dimension_numbers = #tpu.dot_dimension_numbers<[1], [0], [0], [1], [0, 0, 1, 1], [], []>} : vector<48x96xbf16>, vector<96x64xbf16>, vector<48x64xf32> -> vector<48x64xf32>
    %266 = arith.truncf %261 : vector<96x4xf32> to vector<96x4xbf16>
    %cst_148 = arith.constant dense<0.000000e+00> : vector<48x4xf32>
    %267 = tpu.matmul %22, %266, %cst_148 {dimension_numbers = #tpu.dot_dimension_numbers<[1], [0], [0], [1], [0, 0, 1, 1], [], []>} : vector<48x96xbf16>, vector<96x4xbf16>, vector<48x4xf32> -> vector<48x4xf32>
    %cst_149 = arith.constant 0.000000e+00 : f32
    %268 = vector.broadcast %cst_149 : f32 to vector<48x4xf32>
    %269 = arith.cmpf oeq, %267, %268 : vector<48x4xf32>
    %cst_150 = arith.constant 1.000000e+00 : f32
    %270 = vector.broadcast %cst_150 : f32 to vector<48x4xf32>
    %271 = arith.select %269, %270, %267 : vector<48x4xi1>, vector<48x4xf32>
    %272 = tpu.reciprocal %271 {approx = true} : vector<48x4xf32> -> vector<48x4xf32>
    %cst_151 = arith.constant dense<0.000000e+00> : vector<48x64xf32>
    %273 = tpu.matmul %272, %44, %cst_151 {dimension_numbers = #tpu.dot_dimension_numbers<[1], [0], [0], [1], [0, 0, 1, 1], [], []>} : vector<48x4xf32>, vector<4x64xf32>, vector<48x64xf32> -> vector<48x64xf32>
    %274 = arith.mulf %265, %273 : vector<48x64xf32>
    %cst_152 = arith.constant 0.000000e+00 : f32
    %275 = vector.broadcast %cst_152 : f32 to vector<48x64xf32>
    %276 = arith.cmpf ogt, %274, %275 : vector<48x64xf32>
    %cst_153 = arith.constant 0.000000e+00 : f32
    %277 = vector.broadcast %cst_153 : f32 to vector<48x64xf32>
    %278 = arith.minimumf %274, %277 : vector<48x64xf32>
    %279 = math.exp %278 : vector<48x64xf32>
    %cst_154 = arith.constant 1.000000e+00 : f32
    %280 = vector.broadcast %cst_154 : f32 to vector<48x64xf32>
    %281 = arith.subf %279, %280 : vector<48x64xf32>
    %282 = arith.select %276, %274, %281 : vector<48x64xi1>, vector<48x64xf32>
    %c0_155 = arith.constant 0 : index
    %c0_156 = arith.constant 0 : index
    %283 = vector.load %arg18[%c0_155, %c0_156] : memref<64x64xf32, #tpu.memory_space<vmem>>, vector<64x64xf32>
    %c0_157 = arith.constant 0 : index
    %c0_158 = arith.constant 0 : index
    %284 = vector.load %arg19[%c0_157, %c0_158] : memref<64x1xf32, #tpu.memory_space<vmem>>, vector<64x1xf32>
    %c0_159 = arith.constant 0 : index
    %c0_160 = arith.constant 0 : index
    %285 = vector.load %arg20[%c0_159, %c0_160] : memref<64x1xf32, #tpu.memory_space<vmem>>, vector<64x1xf32>
    %c0_161 = arith.constant 0 : index
    %c0_162 = arith.constant 0 : index
    %286 = vector.load %arg21[%c0_161, %c0_162] : memref<1x1xf32, #tpu.memory_space<vmem>>, vector<1x1xf32>
    %287 = arith.truncf %282 : vector<48x64xf32> to vector<48x64xbf16>
    %288 = arith.truncf %283 : vector<64x64xf32> to vector<64x64xbf16>
    %cst_163 = arith.constant dense<0.000000e+00> : vector<48x64xf32>
    %289 = tpu.matmul %287, %288, %cst_163 {dimension_numbers = #tpu.dot_dimension_numbers<[1], [0], [0], [1], [0, 0, 1, 1], [], []>} : vector<48x64xbf16>, vector<64x64xbf16>, vector<48x64xf32> -> vector<48x64xf32>
    %290 = arith.truncf %289 : vector<48x64xf32> to vector<48x64xbf16>
    %cst_164 = arith.constant dense<0.000000e+00> : vector<96x64xf32>
    %291 = tpu.matmul %16, %290, %cst_164 {dimension_numbers = #tpu.dot_dimension_numbers<[1], [0], [0], [1], [0, 0, 1, 1], [], []>} : vector<96x48xbf16>, vector<48x64xbf16>, vector<96x64xf32> -> vector<96x64xf32>
    %cst_165 = arith.constant dense<0.000000e+00> : vector<48x1xf32>
    %292 = tpu.matmul %289, %284, %cst_165 {dimension_numbers = #tpu.dot_dimension_numbers<[1], [0], [0], [1], [0, 0, 1, 1], [], []>} : vector<48x64xf32>, vector<64x1xf32>, vector<48x1xf32> -> vector<48x1xf32>
    %293 = arith.truncf %292 : vector<48x1xf32> to vector<48x1xbf16>
    %cst_166 = arith.constant dense<0.000000e+00> : vector<96x1xf32>
    %294 = tpu.matmul %10, %293, %cst_166 {dimension_numbers = #tpu.dot_dimension_numbers<[1], [0], [0], [1], [0, 0, 1, 1], [], []>} : vector<96x48xbf16>, vector<48x1xbf16>, vector<96x1xf32> -> vector<96x1xf32>
    %cst_167 = arith.constant dense<0.000000e+00> : vector<96x1xf32>
    %295 = tpu.matmul %291, %285, %cst_167 {dimension_numbers = #tpu.dot_dimension_numbers<[1], [0], [0], [1], [0, 0, 1, 1], [], []>} : vector<96x64xf32>, vector<64x1xf32>, vector<96x1xf32> -> vector<96x1xf32>
    %296 = arith.addf %294, %295 : vector<96x1xf32>
    %297 = vector.broadcast %286 : vector<1x1xf32> to vector<96x1xf32>
    %298 = arith.mulf %51, %297 : vector<96x1xf32>
    %299 = arith.addf %296, %298 : vector<96x1xf32>
    %cst_168 = arith.constant 0.000000e+00 : f32
    %300 = vector.broadcast %cst_168 : f32 to vector<96x1xf32>
    %301 = arith.cmpf ogt, %299, %300 : vector<96x1xf32>
    %cst_169 = arith.constant 2.000000e-01 : f32
    %302 = vector.broadcast %cst_169 : f32 to vector<96x1xf32>
    %303 = arith.mulf %302, %299 : vector<96x1xf32>
    %304 = arith.select %301, %299, %303 : vector<96x1xi1>, vector<96x1xf32>
    %cst_170 = arith.constant 0.000000e+00 : f32
    %305 = vector.broadcast %cst_170 : f32 to vector<96x1xf32>
    %306 = arith.subf %305, %304 : vector<96x1xf32>
    %cst_171 = arith.constant 6.000000e+01 : f32
    %307 = vector.broadcast %cst_171 : f32 to vector<96x1xf32>
    %308 = arith.minimumf %306, %307 : vector<96x1xf32>
    %309 = math.exp %308 : vector<96x1xf32>
    %310 = vector.broadcast %309 : vector<96x1xf32> to vector<96x64xf32>
    %311 = arith.mulf %310, %291 : vector<96x64xf32>
    %312 = arith.truncf %311 : vector<96x64xf32> to vector<96x64xbf16>
    %cst_172 = arith.constant dense<0.000000e+00> : vector<48x64xf32>
    %313 = tpu.matmul %22, %312, %cst_172 {dimension_numbers = #tpu.dot_dimension_numbers<[1], [0], [0], [1], [0, 0, 1, 1], [], []>} : vector<48x96xbf16>, vector<96x64xbf16>, vector<48x64xf32> -> vector<48x64xf32>
    %314 = arith.truncf %309 : vector<96x1xf32> to vector<96x1xbf16>
    %cst_173 = arith.constant dense<0.000000e+00> : vector<48x1xf32>
    %315 = tpu.matmul %22, %314, %cst_173 {dimension_numbers = #tpu.dot_dimension_numbers<[1], [0], [0], [1], [0, 0, 1, 1], [], []>} : vector<48x96xbf16>, vector<96x1xbf16>, vector<48x1xf32> -> vector<48x1xf32>
    %cst_174 = arith.constant 0.000000e+00 : f32
    %316 = vector.broadcast %cst_174 : f32 to vector<48x1xf32>
    %317 = arith.cmpf oeq, %315, %316 : vector<48x1xf32>
    %cst_175 = arith.constant 1.000000e+00 : f32
    %318 = vector.broadcast %cst_175 : f32 to vector<48x1xf32>
    %319 = arith.select %317, %318, %315 : vector<48x1xi1>, vector<48x1xf32>
    %320 = tpu.reciprocal %319 {approx = true} : vector<48x1xf32> -> vector<48x1xf32>
    %321 = vector.broadcast %320 : vector<48x1xf32> to vector<48x64xf32>
    %322 = arith.mulf %313, %321 : vector<48x64xf32>
    %cst_176 = arith.constant dense<0.000000e+00> : vector<96xf32>
    %323 = vector.multi_reduction <add>, %261, %cst_176 [1] : vector<96x4xf32> to vector<96xf32>
    %324 = vector.shape_cast %323 : vector<96xf32> to vector<96x1xf32>
    %cst_177 = arith.constant 2.500000e-01 : f32
    %325 = vector.broadcast %cst_177 : f32 to vector<96x1xf32>
    %326 = arith.mulf %324, %325 : vector<96x1xf32>
    %c0_178 = arith.constant 0 : index
    %c0_179 = arith.constant 0 : index
    %327 = vector.load %arg14[%c0_178, %c0_179] : memref<64x64xf32, #tpu.memory_space<vmem>>, vector<64x64xf32>
    %c0_180 = arith.constant 0 : index
    %c0_181 = arith.constant 0 : index
    %328 = vector.load %arg15[%c0_180, %c0_181] : memref<64x4xf32, #tpu.memory_space<vmem>>, vector<64x4xf32>
    %c0_182 = arith.constant 0 : index
    %c0_183 = arith.constant 0 : index
    %329 = vector.load %arg16[%c0_182, %c0_183] : memref<64x4xf32, #tpu.memory_space<vmem>>, vector<64x4xf32>
    %c0_184 = arith.constant 0 : index
    %c0_185 = arith.constant 0 : index
    %330 = vector.load %arg17[%c0_184, %c0_185] : memref<1x4xf32, #tpu.memory_space<vmem>>, vector<1x4xf32>
    %331 = arith.truncf %322 : vector<48x64xf32> to vector<48x64xbf16>
    %332 = arith.truncf %327 : vector<64x64xf32> to vector<64x64xbf16>
    %cst_186 = arith.constant dense<0.000000e+00> : vector<48x64xf32>
    %333 = tpu.matmul %331, %332, %cst_186 {dimension_numbers = #tpu.dot_dimension_numbers<[1], [0], [0], [1], [0, 0, 1, 1], [], []>} : vector<48x64xbf16>, vector<64x64xbf16>, vector<48x64xf32> -> vector<48x64xf32>
    %334 = arith.truncf %333 : vector<48x64xf32> to vector<48x64xbf16>
    %cst_187 = arith.constant dense<0.000000e+00> : vector<96x64xf32>
    %335 = tpu.matmul %37, %334, %cst_187 {dimension_numbers = #tpu.dot_dimension_numbers<[1], [0], [0], [1], [0, 0, 1, 1], [], []>} : vector<96x48xbf16>, vector<48x64xbf16>, vector<96x64xf32> -> vector<96x64xf32>
    %cst_188 = arith.constant dense<0.000000e+00> : vector<48x4xf32>
    %336 = tpu.matmul %333, %328, %cst_188 {dimension_numbers = #tpu.dot_dimension_numbers<[1], [0], [0], [1], [0, 0, 1, 1], [], []>} : vector<48x64xf32>, vector<64x4xf32>, vector<48x4xf32> -> vector<48x4xf32>
    %337 = arith.truncf %336 : vector<48x4xf32> to vector<48x4xbf16>
    %cst_189 = arith.constant dense<0.000000e+00> : vector<96x4xf32>
    %338 = tpu.matmul %31, %337, %cst_189 {dimension_numbers = #tpu.dot_dimension_numbers<[1], [0], [0], [1], [0, 0, 1, 1], [], []>} : vector<96x48xbf16>, vector<48x4xbf16>, vector<96x4xf32> -> vector<96x4xf32>
    %cst_190 = arith.constant dense<0.000000e+00> : vector<96x4xf32>
    %339 = tpu.matmul %335, %329, %cst_190 {dimension_numbers = #tpu.dot_dimension_numbers<[1], [0], [0], [1], [0, 0, 1, 1], [], []>} : vector<96x64xf32>, vector<64x4xf32>, vector<96x4xf32> -> vector<96x4xf32>
    %340 = arith.addf %338, %339 : vector<96x4xf32>
    %341 = vector.broadcast %326 : vector<96x1xf32> to vector<96x4xf32>
    %342 = vector.broadcast %330 : vector<1x4xf32> to vector<96x4xf32>
    %343 = arith.mulf %341, %342 : vector<96x4xf32>
    %344 = arith.addf %340, %343 : vector<96x4xf32>
    %cst_191 = arith.constant 0.000000e+00 : f32
    %345 = vector.broadcast %cst_191 : f32 to vector<96x4xf32>
    %346 = arith.cmpf ogt, %344, %345 : vector<96x4xf32>
    %cst_192 = arith.constant 2.000000e-01 : f32
    %347 = vector.broadcast %cst_192 : f32 to vector<96x4xf32>
    %348 = arith.mulf %347, %344 : vector<96x4xf32>
    %349 = arith.select %346, %344, %348 : vector<96x4xi1>, vector<96x4xf32>
    %cst_193 = arith.constant 0.000000e+00 : f32
    %350 = vector.broadcast %cst_193 : f32 to vector<96x4xf32>
    %351 = arith.subf %350, %349 : vector<96x4xf32>
    %cst_194 = arith.constant 6.000000e+01 : f32
    %352 = vector.broadcast %cst_194 : f32 to vector<96x4xf32>
    %353 = arith.minimumf %351, %352 : vector<96x4xf32>
    %354 = math.exp %353 : vector<96x4xf32>
    %cst_195 = arith.constant dense<0.000000e+00> : vector<96x64xf32>
    %355 = tpu.matmul %354, %44, %cst_195 {dimension_numbers = #tpu.dot_dimension_numbers<[1], [0], [0], [1], [0, 0, 1, 1], [], []>} : vector<96x4xf32>, vector<4x64xf32>, vector<96x64xf32> -> vector<96x64xf32>
    %356 = arith.mulf %355, %335 : vector<96x64xf32>
    %357 = arith.truncf %356 : vector<96x64xf32> to vector<96x64xbf16>
    %cst_196 = arith.constant dense<0.000000e+00> : vector<48x64xf32>
    %358 = tpu.matmul %43, %357, %cst_196 {dimension_numbers = #tpu.dot_dimension_numbers<[1], [0], [0], [1], [0, 0, 1, 1], [], []>} : vector<48x96xbf16>, vector<96x64xbf16>, vector<48x64xf32> -> vector<48x64xf32>
    %359 = arith.truncf %354 : vector<96x4xf32> to vector<96x4xbf16>
    %cst_197 = arith.constant dense<0.000000e+00> : vector<48x4xf32>
    %360 = tpu.matmul %43, %359, %cst_197 {dimension_numbers = #tpu.dot_dimension_numbers<[1], [0], [0], [1], [0, 0, 1, 1], [], []>} : vector<48x96xbf16>, vector<96x4xbf16>, vector<48x4xf32> -> vector<48x4xf32>
    %cst_198 = arith.constant 0.000000e+00 : f32
    %361 = vector.broadcast %cst_198 : f32 to vector<48x4xf32>
    %362 = arith.cmpf oeq, %360, %361 : vector<48x4xf32>
    %cst_199 = arith.constant 1.000000e+00 : f32
    %363 = vector.broadcast %cst_199 : f32 to vector<48x4xf32>
    %364 = arith.select %362, %363, %360 : vector<48x4xi1>, vector<48x4xf32>
    %365 = tpu.reciprocal %364 {approx = true} : vector<48x4xf32> -> vector<48x4xf32>
    %cst_200 = arith.constant dense<0.000000e+00> : vector<48x64xf32>
    %366 = tpu.matmul %365, %44, %cst_200 {dimension_numbers = #tpu.dot_dimension_numbers<[1], [0], [0], [1], [0, 0, 1, 1], [], []>} : vector<48x4xf32>, vector<4x64xf32>, vector<48x64xf32> -> vector<48x64xf32>
    %367 = arith.mulf %358, %366 : vector<48x64xf32>
    %cst_201 = arith.constant 0.000000e+00 : f32
    %368 = vector.broadcast %cst_201 : f32 to vector<48x64xf32>
    %369 = arith.cmpf ogt, %367, %368 : vector<48x64xf32>
    %cst_202 = arith.constant 0.000000e+00 : f32
    %370 = vector.broadcast %cst_202 : f32 to vector<48x64xf32>
    %371 = arith.minimumf %367, %370 : vector<48x64xf32>
    %372 = math.exp %371 : vector<48x64xf32>
    %cst_203 = arith.constant 1.000000e+00 : f32
    %373 = vector.broadcast %cst_203 : f32 to vector<48x64xf32>
    %374 = arith.subf %372, %373 : vector<48x64xf32>
    %375 = arith.select %369, %367, %374 : vector<48x64xi1>, vector<48x64xf32>
    %c0_204 = arith.constant 0 : index
    %c0_205 = arith.constant 0 : index
    %376 = vector.load %arg22[%c0_204, %c0_205] : memref<64x64xf32, #tpu.memory_space<vmem>>, vector<64x64xf32>
    %c0_206 = arith.constant 0 : index
    %c0_207 = arith.constant 0 : index
    %377 = vector.load %arg23[%c0_206, %c0_207] : memref<64x1xf32, #tpu.memory_space<vmem>>, vector<64x1xf32>
    %c0_208 = arith.constant 0 : index
    %c0_209 = arith.constant 0 : index
    %378 = vector.load %arg24[%c0_208, %c0_209] : memref<64x1xf32, #tpu.memory_space<vmem>>, vector<64x1xf32>
    %c0_210 = arith.constant 0 : index
    %c0_211 = arith.constant 0 : index
    %379 = vector.load %arg25[%c0_210, %c0_211] : memref<1x1xf32, #tpu.memory_space<vmem>>, vector<1x1xf32>
    %380 = arith.truncf %375 : vector<48x64xf32> to vector<48x64xbf16>
    %381 = arith.truncf %376 : vector<64x64xf32> to vector<64x64xbf16>
    %cst_212 = arith.constant dense<0.000000e+00> : vector<48x64xf32>
    %382 = tpu.matmul %380, %381, %cst_212 {dimension_numbers = #tpu.dot_dimension_numbers<[1], [0], [0], [1], [0, 0, 1, 1], [], []>} : vector<48x64xbf16>, vector<64x64xbf16>, vector<48x64xf32> -> vector<48x64xf32>
    %383 = arith.truncf %382 : vector<48x64xf32> to vector<48x64xbf16>
    %cst_213 = arith.constant dense<0.000000e+00> : vector<96x64xf32>
    %384 = tpu.matmul %37, %383, %cst_213 {dimension_numbers = #tpu.dot_dimension_numbers<[1], [0], [0], [1], [0, 0, 1, 1], [], []>} : vector<96x48xbf16>, vector<48x64xbf16>, vector<96x64xf32> -> vector<96x64xf32>
    %cst_214 = arith.constant dense<0.000000e+00> : vector<48x1xf32>
    %385 = tpu.matmul %382, %377, %cst_214 {dimension_numbers = #tpu.dot_dimension_numbers<[1], [0], [0], [1], [0, 0, 1, 1], [], []>} : vector<48x64xf32>, vector<64x1xf32>, vector<48x1xf32> -> vector<48x1xf32>
    %386 = arith.truncf %385 : vector<48x1xf32> to vector<48x1xbf16>
    %cst_215 = arith.constant dense<0.000000e+00> : vector<96x1xf32>
    %387 = tpu.matmul %31, %386, %cst_215 {dimension_numbers = #tpu.dot_dimension_numbers<[1], [0], [0], [1], [0, 0, 1, 1], [], []>} : vector<96x48xbf16>, vector<48x1xbf16>, vector<96x1xf32> -> vector<96x1xf32>
    %cst_216 = arith.constant dense<0.000000e+00> : vector<96x1xf32>
    %388 = tpu.matmul %384, %378, %cst_216 {dimension_numbers = #tpu.dot_dimension_numbers<[1], [0], [0], [1], [0, 0, 1, 1], [], []>} : vector<96x64xf32>, vector<64x1xf32>, vector<96x1xf32> -> vector<96x1xf32>
    %389 = arith.addf %387, %388 : vector<96x1xf32>
    %390 = vector.broadcast %379 : vector<1x1xf32> to vector<96x1xf32>
    %391 = arith.mulf %326, %390 : vector<96x1xf32>
    %392 = arith.addf %389, %391 : vector<96x1xf32>
    %cst_217 = arith.constant 0.000000e+00 : f32
    %393 = vector.broadcast %cst_217 : f32 to vector<96x1xf32>
    %394 = arith.cmpf ogt, %392, %393 : vector<96x1xf32>
    %cst_218 = arith.constant 2.000000e-01 : f32
    %395 = vector.broadcast %cst_218 : f32 to vector<96x1xf32>
    %396 = arith.mulf %395, %392 : vector<96x1xf32>
    %397 = arith.select %394, %392, %396 : vector<96x1xi1>, vector<96x1xf32>
    %cst_219 = arith.constant 0.000000e+00 : f32
    %398 = vector.broadcast %cst_219 : f32 to vector<96x1xf32>
    %399 = arith.subf %398, %397 : vector<96x1xf32>
    %cst_220 = arith.constant 6.000000e+01 : f32
    %400 = vector.broadcast %cst_220 : f32 to vector<96x1xf32>
    %401 = arith.minimumf %399, %400 : vector<96x1xf32>
    %402 = math.exp %401 : vector<96x1xf32>
    %403 = vector.broadcast %402 : vector<96x1xf32> to vector<96x64xf32>
    %404 = arith.mulf %403, %384 : vector<96x64xf32>
    %405 = arith.truncf %404 : vector<96x64xf32> to vector<96x64xbf16>
    %cst_221 = arith.constant dense<0.000000e+00> : vector<48x64xf32>
    %406 = tpu.matmul %43, %405, %cst_221 {dimension_numbers = #tpu.dot_dimension_numbers<[1], [0], [0], [1], [0, 0, 1, 1], [], []>} : vector<48x96xbf16>, vector<96x64xbf16>, vector<48x64xf32> -> vector<48x64xf32>
    %407 = arith.truncf %402 : vector<96x1xf32> to vector<96x1xbf16>
    %cst_222 = arith.constant dense<0.000000e+00> : vector<48x1xf32>
    %408 = tpu.matmul %43, %407, %cst_222 {dimension_numbers = #tpu.dot_dimension_numbers<[1], [0], [0], [1], [0, 0, 1, 1], [], []>} : vector<48x96xbf16>, vector<96x1xbf16>, vector<48x1xf32> -> vector<48x1xf32>
    %cst_223 = arith.constant 0.000000e+00 : f32
    %409 = vector.broadcast %cst_223 : f32 to vector<48x1xf32>
    %410 = arith.cmpf oeq, %408, %409 : vector<48x1xf32>
    %cst_224 = arith.constant 1.000000e+00 : f32
    %411 = vector.broadcast %cst_224 : f32 to vector<48x1xf32>
    %412 = arith.select %410, %411, %408 : vector<48x1xi1>, vector<48x1xf32>
    %413 = tpu.reciprocal %412 {approx = true} : vector<48x1xf32> -> vector<48x1xf32>
    %414 = vector.broadcast %413 : vector<48x1xf32> to vector<48x64xf32>
    %415 = arith.mulf %406, %414 : vector<48x64xf32>
    %cst_225 = arith.constant dense<0.000000e+00> : vector<96xf32>
    %416 = vector.multi_reduction <add>, %354, %cst_225 [1] : vector<96x4xf32> to vector<96xf32>
    %417 = vector.shape_cast %416 : vector<96xf32> to vector<96x1xf32>
    %cst_226 = arith.constant 2.500000e-01 : f32
    %418 = vector.broadcast %cst_226 : f32 to vector<96x1xf32>
    %419 = arith.mulf %417, %418 : vector<96x1xf32>
    %c0_227 = arith.constant 0 : index
    %c0_228 = arith.constant 0 : index
    %420 = vector.load %arg27[%c0_227, %c0_228] : memref<64x64xf32, #tpu.memory_space<vmem>>, vector<64x64xf32>
    %cst_229 = arith.constant dense<0.000000e+00> : vector<48x64xf32>
    %421 = tpu.matmul %415, %420, %cst_229 {dimension_numbers = #tpu.dot_dimension_numbers<[1], [0], [0], [1], [0, 0, 1, 1], [], []>} : vector<48x64xf32>, vector<64x64xf32>, vector<48x64xf32> -> vector<48x64xf32>
    %c0_230 = arith.constant 0 : index
    %c0_231 = arith.constant 0 : index
    %422 = vector.load %arg28[%c0_230, %c0_231] : memref<1x64xf32, #tpu.memory_space<vmem>>, vector<1x64xf32>
    %423 = vector.broadcast %422 : vector<1x64xf32> to vector<48x64xf32>
    %424 = arith.addf %421, %423 : vector<48x64xf32>
    %cst_232 = arith.constant 0.000000e+00 : f32
    %425 = vector.broadcast %cst_232 : f32 to vector<48x64xf32>
    %426 = arith.maximumf %424, %425 : vector<48x64xf32>
    %c0_233 = arith.constant 0 : index
    %c0_234 = arith.constant 0 : index
    %427 = vector.load %arg29[%c0_233, %c0_234] : memref<1x64xf32, #tpu.memory_space<vmem>>, vector<1x64xf32>
    %c0_235 = arith.constant 0 : index
    %c0_236 = arith.constant 0 : index
    %428 = vector.load %arg30[%c0_235, %c0_236] : memref<1x64xf32, #tpu.memory_space<vmem>>, vector<1x64xf32>
    %cst_237 = arith.constant dense<0.000000e+00> : vector<48xf32>
    %429 = vector.multi_reduction <add>, %426, %cst_237 [1] : vector<48x64xf32> to vector<48xf32>
    %430 = vector.shape_cast %429 : vector<48xf32> to vector<48x1xf32>
    %cst_238 = arith.constant 6.400000e+01 : f32
    %431 = vector.broadcast %cst_238 : f32 to vector<48x1xf32>
    %432 = arith.divf %430, %431 : vector<48x1xf32>
    %433 = vector.broadcast %432 : vector<48x1xf32> to vector<48x64xf32>
    %434 = arith.subf %426, %433 : vector<48x64xf32>
    %435 = arith.mulf %434, %434 : vector<48x64xf32>
    %cst_239 = arith.constant dense<0.000000e+00> : vector<48xf32>
    %436 = vector.multi_reduction <add>, %435, %cst_239 [1] : vector<48x64xf32> to vector<48xf32>
    %437 = vector.shape_cast %436 : vector<48xf32> to vector<48x1xf32>
    %cst_240 = arith.constant 6.400000e+01 : f32
    %438 = vector.broadcast %cst_240 : f32 to vector<48x1xf32>
    %439 = arith.divf %437, %438 : vector<48x1xf32>
    %440 = vector.broadcast %432 : vector<48x1xf32> to vector<48x64xf32>
    %441 = arith.subf %426, %440 : vector<48x64xf32>
    %cst_241 = arith.constant 9.99999974E-6 : f32
    %442 = vector.broadcast %cst_241 : f32 to vector<48x1xf32>
    %443 = arith.addf %439, %442 : vector<48x1xf32>
    %444 = math.rsqrt %443 : vector<48x1xf32>
    %445 = vector.broadcast %444 : vector<48x1xf32> to vector<48x64xf32>
    %446 = arith.mulf %441, %445 : vector<48x64xf32>
    %447 = vector.broadcast %427 : vector<1x64xf32> to vector<48x64xf32>
    %448 = arith.mulf %446, %447 : vector<48x64xf32>
    %449 = vector.broadcast %428 : vector<1x64xf32> to vector<48x64xf32>
    %450 = arith.addf %448, %449 : vector<48x64xf32>
    %c0_242 = arith.constant 0 : index
    %c0_243 = arith.constant 0 : index
    %451 = vector.load %arg31[%c0_242, %c0_243] : memref<64x64xf32, #tpu.memory_space<vmem>>, vector<64x64xf32>
    %cst_244 = arith.constant dense<0.000000e+00> : vector<48x64xf32>
    %452 = tpu.matmul %450, %451, %cst_244 {dimension_numbers = #tpu.dot_dimension_numbers<[1], [0], [0], [1], [0, 0, 1, 1], [], []>} : vector<48x64xf32>, vector<64x64xf32>, vector<48x64xf32> -> vector<48x64xf32>
    %c0_245 = arith.constant 0 : index
    %c0_246 = arith.constant 0 : index
    %453 = vector.load %arg32[%c0_245, %c0_246] : memref<1x64xf32, #tpu.memory_space<vmem>>, vector<1x64xf32>
    %454 = vector.broadcast %453 : vector<1x64xf32> to vector<48x64xf32>
    %455 = arith.addf %452, %454 : vector<48x64xf32>
    %cst_247 = arith.constant 0.000000e+00 : f32
    %456 = vector.broadcast %cst_247 : f32 to vector<48x64xf32>
    %457 = arith.maximumf %455, %456 : vector<48x64xf32>
    %c0_248 = arith.constant 0 : index
    %c0_249 = arith.constant 0 : index
    %458 = vector.load %arg33[%c0_248, %c0_249] : memref<1x64xf32, #tpu.memory_space<vmem>>, vector<1x64xf32>
    %c0_250 = arith.constant 0 : index
    %c0_251 = arith.constant 0 : index
    %459 = vector.load %arg34[%c0_250, %c0_251] : memref<1x64xf32, #tpu.memory_space<vmem>>, vector<1x64xf32>
    %cst_252 = arith.constant dense<0.000000e+00> : vector<48xf32>
    %460 = vector.multi_reduction <add>, %457, %cst_252 [1] : vector<48x64xf32> to vector<48xf32>
    %461 = vector.shape_cast %460 : vector<48xf32> to vector<48x1xf32>
    %cst_253 = arith.constant 6.400000e+01 : f32
    %462 = vector.broadcast %cst_253 : f32 to vector<48x1xf32>
    %463 = arith.divf %461, %462 : vector<48x1xf32>
    %464 = vector.broadcast %463 : vector<48x1xf32> to vector<48x64xf32>
    %465 = arith.subf %457, %464 : vector<48x64xf32>
    %466 = arith.mulf %465, %465 : vector<48x64xf32>
    %cst_254 = arith.constant dense<0.000000e+00> : vector<48xf32>
    %467 = vector.multi_reduction <add>, %466, %cst_254 [1] : vector<48x64xf32> to vector<48xf32>
    %468 = vector.shape_cast %467 : vector<48xf32> to vector<48x1xf32>
    %cst_255 = arith.constant 6.400000e+01 : f32
    %469 = vector.broadcast %cst_255 : f32 to vector<48x1xf32>
    %470 = arith.divf %468, %469 : vector<48x1xf32>
    %471 = vector.broadcast %463 : vector<48x1xf32> to vector<48x64xf32>
    %472 = arith.subf %457, %471 : vector<48x64xf32>
    %cst_256 = arith.constant 9.99999974E-6 : f32
    %473 = vector.broadcast %cst_256 : f32 to vector<48x1xf32>
    %474 = arith.addf %470, %473 : vector<48x1xf32>
    %475 = math.rsqrt %474 : vector<48x1xf32>
    %476 = vector.broadcast %475 : vector<48x1xf32> to vector<48x64xf32>
    %477 = arith.mulf %472, %476 : vector<48x64xf32>
    %478 = vector.broadcast %458 : vector<1x64xf32> to vector<48x64xf32>
    %479 = arith.mulf %477, %478 : vector<48x64xf32>
    %480 = vector.broadcast %459 : vector<1x64xf32> to vector<48x64xf32>
    %481 = arith.addf %479, %480 : vector<48x64xf32>
    %482 = tpu.iota {dimensions = array<i32: 1>} : vector<1x128xi32>
    %c0_257 = arith.constant 0 : index
    %c0_258 = arith.constant 0 : index
    %483 = vector.load %arg35[%c0_257, %c0_258] : memref<64x128xf32, #tpu.memory_space<vmem>>, vector<64x128xf32>
    %cst_259 = arith.constant dense<0.000000e+00> : vector<48x128xf32>
    %484 = tpu.matmul %481, %483, %cst_259 {dimension_numbers = #tpu.dot_dimension_numbers<[1], [0], [0], [1], [0, 0, 1, 1], [], []>} : vector<48x64xf32>, vector<64x128xf32>, vector<48x128xf32> -> vector<48x128xf32>
    %c2_i32 = arith.constant 2 : i32
    %485 = vector.broadcast %c2_i32 : i32 to vector<1x128xi32>
    %486 = arith.cmpi slt, %482, %485 : vector<1x128xi32>
    %cst_260 = arith.constant 0.000000e+00 : f32
    %cst_261 = arith.constant -1.000000e+30 : f32
    %487 = vector.broadcast %cst_260 : f32 to vector<1x128xf32>
    %488 = vector.broadcast %cst_261 : f32 to vector<1x128xf32>
    %489 = arith.select %486, %487, %488 : vector<1x128xi1>, vector<1x128xf32>
    %490 = vector.broadcast %489 : vector<1x128xf32> to vector<48x128xf32>
    %491 = arith.addf %484, %490 : vector<48x128xf32>
    %cst_262 = arith.constant dense<0xFF800000> : vector<48xf32>
    %492 = vector.multi_reduction <maximumf>, %491, %cst_262 [1] : vector<48x128xf32> to vector<48xf32>
    %493 = vector.shape_cast %492 : vector<48xf32> to vector<48x1xf32>
    %494 = vector.broadcast %493 : vector<48x1xf32> to vector<48x128xf32>
    %495 = arith.subf %491, %494 : vector<48x128xf32>
    %496 = math.exp %495 : vector<48x128xf32>
    %cst_263 = arith.constant dense<0.000000e+00> : vector<48xf32>
    %497 = vector.multi_reduction <add>, %496, %cst_263 [1] : vector<48x128xf32> to vector<48xf32>
    %498 = vector.shape_cast %497 : vector<48xf32> to vector<48x1xf32>
    %499 = vector.broadcast %498 : vector<48x1xf32> to vector<48x128xf32>
    %500 = arith.divf %496, %499 : vector<48x128xf32>
    %c0_264 = arith.constant 0 : index
    %c0_265 = arith.constant 0 : index
    %501 = vector.load %arg36[%c0_264, %c0_265] : memref<48x128xf32, #tpu.memory_space<vmem>>, vector<48x128xf32>
    tpu.vector_store %arg36[%c0_264, %c0_265], %500 {strides = array<i32>} : memref<48x128xf32, #tpu.memory_space<vmem>>, vector<48x128xf32>,
    %502 = vector.shape_cast %419 : vector<96x1xf32> to vector<96x1xf32>
    %503 = vector.broadcast %502 : vector<96x1xf32> to vector<96x128xf32>
    %c0_266 = arith.constant 0 : index
    %c0_267 = arith.constant 0 : index
    %504 = vector.load %arg37[%c0_266, %c0_267] : memref<96x128xf32, #tpu.memory_space<vmem>>, vector<96x128xf32>
    tpu.vector_store %arg37[%c0_266, %c0_267], %503 {strides = array<i32>} : memref<96x128xf32, #tpu.memory_space<vmem>>, vector<96x128xf32>,
    return
  }
}

</mosaic_0001>

<llo_original>
// kernel: spgat_forward.1
$region0: #{spgat_forward.1}
  #allocation0 [shape = 'u32[]', space=smem, size = 0x4, offset = 0x4, fixed_abs, tag = 'smem constant byte address 0x4 - core index']
  #allocation1 [shape = 'u32[144,128]{1,0:T(1,128)}', space=vmem, size = 0x12000, scoped, tag = 'internal scratch']
  #allocation2 [shape = 'f32[1,1]{1,0:T(1,128)S(1)}', space=vmem, size = 0x200, scoped, tag = 'scoped memory for spgat_forward.1']
  #allocation3 [shape = 'f32[1,1]{1,0:T(1,128)S(1)}', space=vmem, size = 0x200, scoped, tag = 'scoped memory for spgat_forward.1']
  %s0 = inlined_call_operand.smem [shape: u32[38], index: -1, kind: input, shape index: {}]
  %s1 = sld [smem:[%s0]]
  %s2 = scalar_lea.smem %s0, 1
  %s3 = sld [smem:[%s2]]
  %s4 = scalar_lea.smem %s0, 2
  %s5 = sld [smem:[%s4]]
  %s6 = scalar_lea.smem %s0, 3
  %s7 = sld [smem:[%s6]]
  %s8 = scalar_lea.smem %s0, 4
  %s9 = sld [smem:[%s8]]
  %s10 = scalar_lea.smem %s0, 5
  %s11 = sld [smem:[%s10]]
  %s12 = scalar_lea.smem %s0, 6
  %s13 = sld [smem:[%s12]]
  %s14 = scalar_lea.smem %s0, 7
  %s15 = sld [smem:[%s14]]
  %s16 = scalar_lea.smem %s0, 8
  %s17 = sld [smem:[%s16]]
  %s18 = scalar_lea.smem %s0, 9
  %s19 = sld [smem:[%s18]]
  %s20 = scalar_lea.smem %s0, 10
  %s21 = sld [smem:[%s20]]
  %s22 = scalar_lea.smem %s0, 11
  %s23 = sld [smem:[%s22]]
  %s24 = scalar_lea.smem %s0, 12
  %s25 = sld [smem:[%s24]]
  %s26 = scalar_lea.smem %s0, 13
  %s27 = sld [smem:[%s26]]
  %s28 = scalar_lea.smem %s0, 14
  %s29 = sld [smem:[%s28]]
  %s30 = scalar_lea.smem %s0, 15
  %s31 = sld [smem:[%s30]]
  %s32 = scalar_lea.smem %s0, 16
  %s33 = sld [smem:[%s32]]
  %s34 = scalar_lea.smem %s0, 17
  %s35 = sld [smem:[%s34]]
  %s36 = scalar_lea.smem %s0, 18
  %s37 = sld [smem:[%s36]]
  %s38 = scalar_lea.smem %s0, 19
  %s39 = sld [smem:[%s38]]
  %s40 = scalar_lea.smem %s0, 20
  %s41 = sld [smem:[%s40]]
  %s42 = scalar_lea.smem %s0, 21
  %s43 = sld [smem:[%s42]]
  %s44 = scalar_lea.smem %s0, 22
  %s45 = sld [smem:[%s44]]
  %s46 = scalar_lea.smem %s0, 23
  %s47 = sld [smem:[%s46]]
  %s48 = scalar_lea.smem %s0, 24
  %s49 = sld [smem:[%s48]]
  %s50 = scalar_lea.smem %s0, 25
  %s51 = sld [smem:[%s50]]
  %s52 = scalar_lea.smem %s0, 26
  %s53 = sld [smem:[%s52]]
  %s54 = scalar_lea.smem %s0, 27
  %s55 = sld [smem:[%s54]]
  %s56 = scalar_lea.smem %s0, 28
  %s57 = sld [smem:[%s56]]
  %s58 = scalar_lea.smem %s0, 29
  %s59 = sld [smem:[%s58]]
  %s60 = scalar_lea.smem %s0, 30
  %s61 = sld [smem:[%s60]]
  %s62 = scalar_lea.smem %s0, 31
  %s63 = sld [smem:[%s62]]
  %s64 = scalar_lea.smem %s0, 32
  %s65 = sld [smem:[%s64]]
  %s66 = scalar_lea.smem %s0, 33
  %s67 = sld [smem:[%s66]]
  %s68 = scalar_lea.smem %s0, 34
  %s69 = sld [smem:[%s68]]
  %s70 = scalar_lea.smem %s0, 35
  %s71 = sld [smem:[%s70]]
  %s72 = scalar_lea.smem %s0, 36
  %s73 = sld [smem:[%s72]]
  %s74 = scalar_lea.smem %s0, 37
  %s75 = sld [smem:[%s74]]
  %76 = xla_tuple %s73, %s75
  %s77 = sld [smem:[#allocation0]]
  $region162: #{spgat_forward.1} parent=0
    _
  %s79 = ssub.s32 1, %s77
  %s80 = scalar_select 0, %s79, %s77
  %v81 = vstv %s43
  %82 = vst [vmem:[#allocation2] sm:$0x1] %v81
  %v83 = vstv %s51
  %84 = vst [vmem:[#allocation3] sm:$0x1] %v83
  // Predicated region
  $region2: #{spgat_forward.1} parent=0 // pred_check
    _
  $region3: #{spgat_forward.1} parent=0 // pred_check_branch
    %86 = sbr.rel (0) target = $region5
  $region4: #{spgat_forward.1} parent=0 // pred_region
    _
  $region5: #{spgat_forward.1} parent=0 // pred_fallthru
    _
  // Predicated region
  $region6: #{spgat_forward.1} parent=0 // pred_check
    _
  $region7: #{spgat_forward.1} parent=0 // pred_check_branch
    %88 = sbr.rel (0) target = $region9
  $region8: #{spgat_forward.1} parent=0 // pred_region
    _
  $region9: #{spgat_forward.1} parent=0 // pred_fallthru
    _
  // Predicated region
  $region10: #{spgat_forward.1} parent=0 // pred_check
    _
  $region11: #{spgat_forward.1} parent=0 // pred_check_branch
    %90 = sbr.rel (0) target = $region13
  $region12: #{spgat_forward.1} parent=0 // pred_region
    _
  $region13: #{spgat_forward.1} parent=0 // pred_fallthru
    _
  // Predicated region
  $region14: #{spgat_forward.1} parent=0 // pred_check
    _
  $region15: #{spgat_forward.1} parent=0 // pred_check_branch
    %92 = sbr.rel (0) target = $region17
  $region16: #{spgat_forward.1} parent=0 // pred_region
    _
  $region17: #{spgat_forward.1} parent=0 // pred_fallthru
    _
  // Predicated region
  $region18: #{spgat_forward.1} parent=0 // pred_check
    _
  $region19: #{spgat_forward.1} parent=0 // pred_check_branch
    %94 = sbr.rel (0) target = $region21
  $region20: #{spgat_forward.1} parent=0 // pred_region
    _
  $region21: #{spgat_forward.1} parent=0 // pred_fallthru
    _
  // Predicated region
  $region22: #{spgat_forward.1} parent=0 // pred_check
    _
  $region23: #{spgat_forward.1} parent=0 // pred_check_branch
    %96 = sbr.rel (0) target = $region25
  $region24: #{spgat_forward.1} parent=0 // pred_region
    _
  $region25: #{spgat_forward.1} parent=0 // pred_fallthru
    _
  // Predicated region
  $region26: #{spgat_forward.1} parent=0 // pred_check
    _
  $region27: #{spgat_forward.1} parent=0 // pred_check_branch
    %98 = sbr.rel (0) target = $region29
  $region28: #{spgat_forward.1} parent=0 // pred_region
    _
  $region29: #{spgat_forward.1} parent=0 // pred_fallthru
    _
  // Predicated region
  $region30: #{spgat_forward.1} parent=0 // pred_check
    _
  $region31: #{spgat_forward.1} parent=0 // pred_check_branch
    %100 = sbr.rel (0) target = $region33
  $region32: #{spgat_forward.1} parent=0 // pred_region
    _
  $region33: #{spgat_forward.1} parent=0 // pred_fallthru
    _
  // Predicated region
  $region34: #{spgat_forward.1} parent=0 // pred_check
    _
  $region35: #{spgat_forward.1} parent=0 // pred_check_branch
    %102 = sbr.rel (0) target = $region37
  $region36: #{spgat_forward.1} parent=0 // pred_region
    _
  $region37: #{spgat_forward.1} parent=0 // pred_fallthru
    _
  // Predicated region
  $region38: #{spgat_forward.1} parent=0 // pred_check
    _
  $region39: #{spgat_forward.1} parent=0 // pred_check_branch
    %104 = sbr.rel (0) target = $region41
  $region40: #{spgat_forward.1} parent=0 // pred_region
    _
  $region41: #{spgat_forward.1} parent=0 // pred_fallthru
    _
  // Predicated region
  $region42: #{spgat_forward.1} parent=0 // pred_check
    _
  $region43: #{spgat_forward.1} parent=0 // pred_check_branch
    %106 = sbr.rel (0) target = $region45
  $region44: #{spgat_forward.1} parent=0 // pred_region
    _
  $region45: #{spgat_forward.1} parent=0 // pred_fallthru
    _
  // Predicated region
  $region46: #{spgat_forward.1} parent=0 // pred_check
    _
  $region47: #{spgat_forward.1} parent=0 // pred_check_branch
    %108 = sbr.rel (0) target = $region49
  $region48: #{spgat_forward.1} parent=0 // pred_region
    _
  $region49: #{spgat_forward.1} parent=0 // pred_fallthru
    _
  // Predicated region
  $region50: #{spgat_forward.1} parent=0 // pred_check
    _
  $region51: #{spgat_forward.1} parent=0 // pred_check_branch
    %110 = sbr.rel (0) target = $region53
  $region52: #{spgat_forward.1} parent=0 // pred_region
    _
  $region53: #{spgat_forward.1} parent=0 // pred_fallthru
    _
  // Predicated region
  $region54: #{spgat_forward.1} parent=0 // pred_check
    _
  $region55: #{spgat_forward.1} parent=0 // pred_check_branch
    %112 = sbr.rel (0) target = $region57
  $region56: #{spgat_forward.1} parent=0 // pred_region
    _
  $region57: #{spgat_forward.1} parent=0 // pred_fallthru
    _
  // Predicated region
  $region58: #{spgat_forward.1} parent=0 // pred_check
    _
  $region59: #{spgat_forward.1} parent=0 // pred_check_branch
    %114 = sbr.rel (0) target = $region61
  $region60: #{spgat_forward.1} parent=0 // pred_region
    _
  $region61: #{spgat_forward.1} parent=0 // pred_fallthru
    _
  // Predicated region
  $region62: #{spgat_forward.1} parent=0 // pred_check
    _
  $region63: #{spgat_forward.1} parent=0 // pred_check_branch
    %116 = sbr.rel (0) target = $region65
  $region64: #{spgat_forward.1} parent=0 // pred_region
    _
  $region65: #{spgat_forward.1} parent=0 // pred_fallthru
    _
  // Predicated region
  $region66: #{spgat_forward.1} parent=0 // pred_check
    _
  $region67: #{spgat_forward.1} parent=0 // pred_check_branch
    %118 = sbr.rel (0) target = $region69
  $region68: #{spgat_forward.1} parent=0 // pred_region
    _
  $region69: #{spgat_forward.1} parent=0 // pred_fallthru
    _
  // Predicated region
  $region70: #{spgat_forward.1} parent=0 // pred_check
    _
  $region71: #{spgat_forward.1} parent=0 // pred_check_branch
    %120 = sbr.rel (0) target = $region73
  $region72: #{spgat_forward.1} parent=0 // pred_region
    _
  $region73: #{spgat_forward.1} parent=0 // pred_fallthru
    _
  // Predicated region
  $region74: #{spgat_forward.1} parent=0 // pred_check
    _
  $region75: #{spgat_forward.1} parent=0 // pred_check_branch
    %122 = sbr.rel (0) target = $region77
  $region76: #{spgat_forward.1} parent=0 // pred_region
    _
  $region77: #{spgat_forward.1} parent=0 // pred_fallthru
    _
  // Predicated region
  $region78: #{spgat_forward.1} parent=0 // pred_check
    _
  $region79: #{spgat_forward.1} parent=0 // pred_check_branch
    %124 = sbr.rel (0) target = $region81
  $region80: #{spgat_forward.1} parent=0 // pred_region
    _
  $region81: #{spgat_forward.1} parent=0 // pred_fallthru
    _
  // Predicated region
  $region82: #{spgat_forward.1} parent=0 // pred_check
    _
  $region83: #{spgat_forward.1} parent=0 // pred_check_branch
    %126 = sbr.rel (0) target = $region85
  $region84: #{spgat_forward.1} parent=0 // pred_region
    _
  $region85: #{spgat_forward.1} parent=0 // pred_fallthru
    _
  // Predicated region
  $region86: #{spgat_forward.1} parent=0 // pred_check
    _
  $region87: #{spgat_forward.1} parent=0 // pred_check_branch
    %128 = sbr.rel (0) target = $region89
  $region88: #{spgat_forward.1} parent=0 // pred_region
    _
  $region89: #{spgat_forward.1} parent=0 // pred_fallthru
    _
  // Predicated region
  $region90: #{spgat_forward.1} parent=0 // pred_check
    _
  $region91: #{spgat_forward.1} parent=0 // pred_check_branch
    %130 = sbr.rel (0) target = $region93
  $region92: #{spgat_forward.1} parent=0 // pred_region
    _
  $region93: #{spgat_forward.1} parent=0 // pred_fallthru
    _
  // Predicated region
  $region94: #{spgat_forward.1} parent=0 // pred_check
    _
  $region95: #{spgat_forward.1} parent=0 // pred_check_branch
    %132 = sbr.rel (0) target = $region97
  $region96: #{spgat_forward.1} parent=0 // pred_region
    _
  $region97: #{spgat_forward.1} parent=0 // pred_fallthru
    _
  // Predicated region
  $region98: #{spgat_forward.1} parent=0 // pred_check
    _
  $region99: #{spgat_forward.1} parent=0 // pred_check_branch
    %134 = sbr.rel (0) target = $region101
  $region100: #{spgat_forward.1} parent=0 // pred_region
    _
  $region101: #{spgat_forward.1} parent=0 // pred_fallthru
    _
  // Predicated region
  $region102: #{spgat_forward.1} parent=0 // pred_check
    _
  $region103: #{spgat_forward.1} parent=0 // pred_check_branch
    %136 = sbr.rel (0) target = $region105
  $region104: #{spgat_forward.1} parent=0 // pred_region
    _
  $region105: #{spgat_forward.1} parent=0 // pred_fallthru
    _
  // Predicated region
  $region106: #{spgat_forward.1} parent=0 // pred_check
    _
  $region107: #{spgat_forward.1} parent=0 // pred_check_branch
    %138 = sbr.rel (0) target = $region109
  $region108: #{spgat_forward.1} parent=0 // pred_region
    _
  $region109: #{spgat_forward.1} parent=0 // pred_fallthru
    _
  // Predicated region
  $region110: #{spgat_forward.1} parent=0 // pred_check
    _
  $region111: #{spgat_forward.1} parent=0 // pred_check_branch
    %140 = sbr.rel (0) target = $region113
  $region112: #{spgat_forward.1} parent=0 // pred_region
    _
  $region113: #{spgat_forward.1} parent=0 // pred_fallthru
    _
  // Predicated region
  $region114: #{spgat_forward.1} parent=0 // pred_check
    _
  $region115: #{spgat_forward.1} parent=0 // pred_check_branch
    %142 = sbr.rel (0) target = $region117
  $region116: #{spgat_forward.1} parent=0 // pred_region
    _
  $region117: #{spgat_forward.1} parent=0 // pred_fallthru
    _
  // Predicated region
  $region118: #{spgat_forward.1} parent=0 // pred_check
    _
  $region119: #{spgat_forward.1} parent=0 // pred_check_branch
    %144 = sbr.rel (0) target = $region121
  $region120: #{spgat_forward.1} parent=0 // pred_region
    _
  $region121: #{spgat_forward.1} parent=0 // pred_fallthru
    _
  // Predicated region
  $region122: #{spgat_forward.1} parent=0 // pred_check
    _
  $region123: #{spgat_forward.1} parent=0 // pred_check_branch
    %146 = sbr.rel (0) target = $region125
  $region124: #{spgat_forward.1} parent=0 // pred_region
    _
  $region125: #{spgat_forward.1} parent=0 // pred_fallthru
    _
  // Predicated region
  $region126: #{spgat_forward.1} parent=0 // pred_check
    _
  $region127: #{spgat_forward.1} parent=0 // pred_check_branch
    %148 = sbr.rel (0) target = $region129
  $region128: #{spgat_forward.1} parent=0 // pred_region
    _
  $region129: #{spgat_forward.1} parent=0 // pred_fallthru
    _
  // Predicated region
  $region130: #{spgat_forward.1} parent=0 // pred_check
    _
  $region131: #{spgat_forward.1} parent=0 // pred_check_branch
    %150 = sbr.rel (0) target = $region133
  $region132: #{spgat_forward.1} parent=0 // pred_region
    _
  $region133: #{spgat_forward.1} parent=0 // pred_fallthru
    _
  // Predicated region
  $region134: #{spgat_forward.1} parent=0 // pred_check
    _
  $region135: #{spgat_forward.1} parent=0 // pred_check_branch
    %152 = sbr.rel (0) target = $region137
  $region136: #{spgat_forward.1} parent=0 // pred_region
    _
  $region137: #{spgat_forward.1} parent=0 // pred_fallthru
    _
  // Predicated region
  $region138: #{spgat_forward.1} parent=0 // pred_check
    _
  $region139: #{spgat_forward.1} parent=0 // pred_check_branch
    %154 = sbr.rel (0) target = $region141
  $region140: #{spgat_forward.1} parent=0 // pred_region
    _
  $region141: #{spgat_forward.1} parent=0 // pred_fallthru
    _
  // Predicated region
  $region142: #{spgat_forward.1} parent=0 // pred_check
    _
  $region143: #{spgat_forward.1} parent=0 // pred_check_branch
    %156 = sbr.rel (0) target = $region145
  $region144: #{spgat_forward.1} parent=0 // pred_region
    _
  $region145: #{spgat_forward.1} parent=0 // pred_fallthru
    _
  %v158 = vlaneseq
  %v159 = vand.u32 %v158, 127
  %v160 = vlaneseq
  %v161 = vshrl.u32 %v160, 7
  %v162 = vadd.s32 %v161, 8
  %v163 = vadd.s32 %v161, 16
  %v164 = vadd.s32 %v161, 24
  %v165 = vadd.s32 %v161, 32
  %v166 = vadd.s32 %v161, 40
  %v167 = vld [vmem:[%s5] sm:$0xff]
  %v168 = vld [vmem:[%s5 + $0x8] sm:$0xff]
  %v169 = vld [vmem:[%s5 + $0x10] sm:$0xff]
  %v170 = vld [vmem:[%s5 + $0x18] sm:$0xff]
  %v171 = vld [vmem:[%s5 + $0x20] sm:$0xff]
  %v172 = vld [vmem:[%s5 + $0x28] sm:$0xff]
  %v173 = vld [vmem:[%s5 + $0x30] sm:$0xff]
  %v174 = vld [vmem:[%s5 + $0x38] sm:$0xff]
  %v175 = vld [vmem:[%s5 + $0x40] sm:$0xff]
  %v176 = vld [vmem:[%s5 + $0x48] sm:$0xff]
  %v177 = vld [vmem:[%s5 + $0x50] sm:$0xff]
  %v178 = vld [vmem:[%s5 + $0x58] sm:$0xff]
  %v179 = vld [vmem:[%s7] sm:$0xff]
  %v180 = vld [vmem:[%s7 + $0x8] sm:$0xff]
  %v181 = vld [vmem:[%s7 + $0x10] sm:$0xff]
  %v182 = vld [vmem:[%s7 + $0x18] sm:$0xff]
  %v183 = vld [vmem:[%s7 + $0x20] sm:$0xff]
  %v184 = vld [vmem:[%s7 + $0x28] sm:$0xff]
  %v185 = vld [vmem:[%s7 + $0x30] sm:$0xff]
  %v186 = vld [vmem:[%s7 + $0x38] sm:$0xff]
  %v187 = vld [vmem:[%s7 + $0x40] sm:$0xff]
  %v188 = vld [vmem:[%s7 + $0x48] sm:$0xff]
  %v189 = vld [vmem:[%s7 + $0x50] sm:$0xff]
  %v190 = vld [vmem:[%s7 + $0x58] sm:$0xff]
  %v191 = vld [vmem:[%s9] sm:$0x1]
  %192 = vset.pattern.permute.xlu0 0
  %193 = vperm.xlu0 %192, %v167
  %v194 = vpop.permute.xlu0 %193
  %195 = vset.pattern.permute.xlu0 0
  %196 = vperm.xlu0 %195, %v168
  %v197 = vpop.permute.xlu0 %196
  %198 = vset.pattern.permute.xlu0 0
  %199 = vperm.xlu0 %198, %v169
  %v200 = vpop.permute.xlu0 %199
  %201 = vset.pattern.permute.xlu0 0
  %202 = vperm.xlu0 %201, %v170
  %v203 = vpop.permute.xlu0 %202
  %204 = vset.pattern.permute.xlu0 0
  %205 = vperm.xlu0 %204, %v171
  %v206 = vpop.permute.xlu0 %205
  %207 = vset.pattern.permute.xlu0 0
  %208 = vperm.xlu0 %207, %v172
  %v209 = vpop.permute.xlu0 %208
  %210 = vset.pattern.permute.xlu0 0
  %211 = vperm.xlu0 %210, %v173
  %v212 = vpop.permute.xlu0 %211
  %213 = vset.pattern.permute.xlu0 0
  %214 = vperm.xlu0 %213, %v174
  %v215 = vpop.permute.xlu0 %214
  %216 = vset.pattern.permute.xlu0 0
  %217 = vperm.xlu0 %216, %v175
  %v218 = vpop.permute.xlu0 %217
  %219 = vset.pattern.permute.xlu0 0
  %220 = vperm.xlu0 %219, %v176
  %v221 = vpop.permute.xlu0 %220
  %222 = vset.pattern.permute.xlu0 0
  %223 = vperm.xlu0 %222, %v177
  %v224 = vpop.permute.xlu0 %223
  %225 = vset.pattern.permute.xlu0 0
  %226 = vperm.xlu0 %225, %v178
  %v227 = vpop.permute.xlu0 %226
  %vm228 = vcmp.eq.s32.totalorder %v159, %v194
  %vm229 = vcmp.eq.s32.totalorder %v159, %v197
  %vm230 = vcmp.eq.s32.totalorder %v159, %v200
  %vm231 = vcmp.eq.s32.totalorder %v159, %v203
  %vm232 = vcmp.eq.s32.totalorder %v159, %v206
  %vm233 = vcmp.eq.s32.totalorder %v159, %v209
  %vm234 = vcmp.eq.s32.totalorder %v159, %v212
  %vm235 = vcmp.eq.s32.totalorder %v159, %v215
  %vm236 = vcmp.eq.s32.totalorder %v159, %v218
  %vm237 = vcmp.eq.s32.totalorder %v159, %v221
  %vm238 = vcmp.eq.s32.totalorder %v159, %v224
  %vm239 = vcmp.eq.s32.totalorder %v159, %v227
  %v240 = vsel %vm228, 1.0, 0.0
  %v241 = vsel %vm229, 1.0, 0.0
  %v242 = vsel %vm230, 1.0, 0.0
  %v243 = vsel %vm231, 1.0, 0.0
  %v244 = vsel %vm232, 1.0, 0.0
  %v245 = vsel %vm233, 1.0, 0.0
  %v246 = vsel %vm234, 1.0, 0.0
  %v247 = vsel %vm235, 1.0, 0.0
  %v248 = vsel %vm236, 1.0, 0.0
  %v249 = vsel %vm237, 1.0, 0.0
  %v250 = vsel %vm238, 1.0, 0.0
  %v251 = vsel %vm239, 1.0, 0.0
  %v252 = vpack.c.bf16 %v241, %v240
  %v253 = vpack.c.bf16 %v243, %v242
  %v254 = vpack.c.bf16 %v245, %v244
  %v255 = vpack.c.bf16 %v247, %v246
  %v256 = vpack.c.bf16 %v249, %v248
  %v257 = vpack.c.bf16 %v251, %v250
  %258 = vset.pattern.permute.xlu0 0
  %259 = vperm.xlu0 %258, %v179
  %v260 = vpop.permute.xlu0 %259
  %261 = vset.pattern.permute.xlu0 0
  %262 = vperm.xlu0 %261, %v180
  %v263 = vpop.permute.xlu0 %262
  %264 = vset.pattern.permute.xlu0 0
  %265 = vperm.xlu0 %264, %v181
  %v266 = vpop.permute.xlu0 %265
  %267 = vset.pattern.permute.xlu0 0
  %268 = vperm.xlu0 %267, %v182
  %v269 = vpop.permute.xlu0 %268
  %270 = vset.pattern.permute.xlu0 0
  %271 = vperm.xlu0 %270, %v183
  %v272 = vpop.permute.xlu0 %271
  %273 = vset.pattern.permute.xlu0 0
  %274 = vperm.xlu0 %273, %v184
  %v275 = vpop.permute.xlu0 %274
  %276 = vset.pattern.permute.xlu0 0
  %277 = vperm.xlu0 %276, %v185
  %v278 = vpop.permute.xlu0 %277
  %279 = vset.pattern.permute.xlu0 0
  %280 = vperm.xlu0 %279, %v186
  %v281 = vpop.permute.xlu0 %280
  %282 = vset.pattern.permute.xlu0 0
  %283 = vperm.xlu0 %282, %v187
  %v284 = vpop.permute.xlu0 %283
  %285 = vset.pattern.permute.xlu0 0
  %286 = vperm.xlu0 %285, %v188
  %v287 = vpop.permute.xlu0 %286
  %288 = vset.pattern.permute.xlu0 0
  %289 = vperm.xlu0 %288, %v189
  %v290 = vpop.permute.xlu0 %289
  %291 = vset.pattern.permute.xlu0 0
  %292 = vperm.xlu0 %291, %v190
  %v293 = vpop.permute.xlu0 %292
  %vm294 = vcmp.eq.s32.totalorder %v159, %v260
  %vm295 = vcmp.eq.s32.totalorder %v159, %v263
  %vm296 = vcmp.eq.s32.totalorder %v159, %v266
  %vm297 = vcmp.eq.s32.totalorder %v159, %v269
  %vm298 = vcmp.eq.s32.totalorder %v159, %v272
  %vm299 = vcmp.eq.s32.totalorder %v159, %v275
  %vm300 = vcmp.eq.s32.totalorder %v159, %v278
  %vm301 = vcmp.eq.s32.totalorder %v159, %v281
  %vm302 = vcmp.eq.s32.totalorder %v159, %v284
  %vm303 = vcmp.eq.s32.totalorder %v159, %v287
  %vm304 = vcmp.eq.s32.totalorder %v159, %v290
  %vm305 = vcmp.eq.s32.totalorder %v159, %v293
  %v306 = vsel %vm294, 1.0, 0.0
  %v307 = vsel %vm295, 1.0, 0.0
  %v308 = vsel %vm296, 1.0, 0.0
  %v309 = vsel %vm297, 1.0, 0.0
  %v310 = vsel %vm298, 1.0, 0.0
  %v311 = vsel %vm299, 1.0, 0.0
  %v312 = vsel %vm300, 1.0, 0.0
  %v313 = vsel %vm301, 1.0, 0.0
  %v314 = vsel %vm302, 1.0, 0.0
  %v315 = vsel %vm303, 1.0, 0.0
  %v316 = vsel %vm304, 1.0, 0.0
  %v317 = vsel %vm305, 1.0, 0.0
  %v318 = vpack.c.bf16 %v307, %v306
  %v319 = vpack.c.bf16 %v309, %v308
  %v320 = vpack.c.bf16 %v311, %v310
  %v321 = vpack.c.bf16 %v313, %v312
  %v322 = vpack.c.bf16 %v315, %v314
  %v323 = vpack.c.bf16 %v317, %v316
  %v324 = vlaneseq
  %v325 = vshrl.u32 %v324, 7
  %v326 = vsub.s32 0, %v325
  %v327 = vrot.slane %v191, %v326
  %vm328 = vcmp.eq.s32.totalorder %v161, %v327
  %vm329 = vcmp.eq.s32.totalorder %v162, %v327
  %vm330 = vcmp.eq.s32.totalorder %v163, %v327
  %vm331 = vcmp.eq.s32.totalorder %v164, %v327
  %vm332 = vcmp.eq.s32.totalorder %v165, %v327
  %vm333 = vcmp.eq.s32.totalorder %v166, %v327
  %v334 = vsel %vm328, 1.0, 0.0
  %v335 = vsel %vm329, 1.0, 0.0
  %v336 = vsel %vm330, 1.0, 0.0
  %v337 = vsel %vm331, 1.0, 0.0
  %v338 = vsel %vm332, 1.0, 0.0
  %v339 = vsel %vm333, 1.0, 0.0
  %v340 = vpack.c.bf16 %v335, %v334
  %v341 = vpack.c.bf16 %v337, %v336
  %v342 = vpack.c.bf16 %v339, %v338
  %v343 = vld [vmem:[%s11] sm:$0xff]
  %v344 = vld [vmem:[%s11 + $0x8] sm:$0xff]
  %v345 = vld [vmem:[%s11 + $0x10] sm:$0xff]
  %v346 = vld [vmem:[%s11 + $0x18] sm:$0xff]
  %v347 = vld [vmem:[%s11 + $0x20] sm:$0xff]
  %v348 = vld [vmem:[%s11 + $0x28] sm:$0xff]
  %v349 = vld [vmem:[%s11 + $0x30] sm:$0xff]
  %v350 = vld [vmem:[%s11 + $0x38] sm:$0xff]
  %v351 = vld [vmem:[%s11 + $0x40] sm:$0xff]
  %v352 = vld [vmem:[%s11 + $0x48] sm:$0xff]
  %v353 = vld [vmem:[%s11 + $0x50] sm:$0xff]
  %v354 = vld [vmem:[%s11 + $0x58] sm:$0xff]
  %v355 = vld [vmem:[%s13] sm:$0xff]
  %v356 = vld [vmem:[%s13 + $0x8] sm:$0xff]
  %v357 = vld [vmem:[%s13 + $0x10] sm:$0xff]
  %v358 = vld [vmem:[%s13 + $0x18] sm:$0xff]
  %v359 = vld [vmem:[%s13 + $0x20] sm:$0xff]
  %v360 = vld [vmem:[%s13 + $0x28] sm:$0xff]
  %v361 = vld [vmem:[%s13 + $0x30] sm:$0xff]
  %v362 = vld [vmem:[%s13 + $0x38] sm:$0xff]
  %v363 = vld [vmem:[%s13 + $0x40] sm:$0xff]
  %v364 = vld [vmem:[%s13 + $0x48] sm:$0xff]
  %v365 = vld [vmem:[%s13 + $0x50] sm:$0xff]
  %v366 = vld [vmem:[%s13 + $0x58] sm:$0xff]
  %v367 = vld [vmem:[%s15] sm:$0x1]
  %368 = vset.pattern.permute.xlu0 0
  %369 = vperm.xlu0 %368, %v343
  %v370 = vpop.permute.xlu0 %369
  %371 = vset.pattern.permute.xlu0 0
  %372 = vperm.xlu0 %371, %v344
  %v373 = vpop.permute.xlu0 %372
  %374 = vset.pattern.permute.xlu0 0
  %375 = vperm.xlu0 %374, %v345
  %v376 = vpop.permute.xlu0 %375
  %377 = vset.pattern.permute.xlu0 0
  %378 = vperm.xlu0 %377, %v346
  %v379 = vpop.permute.xlu0 %378
  %380 = vset.pattern.permute.xlu0 0
  %381 = vperm.xlu0 %380, %v347
  %v382 = vpop.permute.xlu0 %381
  %383 = vset.pattern.permute.xlu0 0
  %384 = vperm.xlu0 %383, %v348
  %v385 = vpop.permute.xlu0 %384
  %386 = vset.pattern.permute.xlu0 0
  %387 = vperm.xlu0 %386, %v349
  %v388 = vpop.permute.xlu0 %387
  %389 = vset.pattern.permute.xlu0 0
  %390 = vperm.xlu0 %389, %v350
  %v391 = vpop.permute.xlu0 %390
  %392 = vset.pattern.permute.xlu0 0
  %393 = vperm.xlu0 %392, %v351
  %v394 = vpop.permute.xlu0 %393
  %395 = vset.pattern.permute.xlu0 0
  %396 = vperm.xlu0 %395, %v352
  %v397 = vpop.permute.xlu0 %396
  %398 = vset.pattern.permute.xlu0 0
  %399 = vperm.xlu0 %398, %v353
  %v400 = vpop.permute.xlu0 %399
  %401 = vset.pattern.permute.xlu0 0
  %402 = vperm.xlu0 %401, %v354
  %v403 = vpop.permute.xlu0 %402
  %vm404 = vcmp.eq.s32.totalorder %v159, %v370
  %vm405 = vcmp.eq.s32.totalorder %v159, %v373
  %vm406 = vcmp.eq.s32.totalorder %v159, %v376
  %vm407 = vcmp.eq.s32.totalorder %v159, %v379
  %vm408 = vcmp.eq.s32.totalorder %v159, %v382
  %vm409 = vcmp.eq.s32.totalorder %v159, %v385
  %vm410 = vcmp.eq.s32.totalorder %v159, %v388
  %vm411 = vcmp.eq.s32.totalorder %v159, %v391
  %vm412 = vcmp.eq.s32.totalorder %v159, %v394
  %vm413 = vcmp.eq.s32.totalorder %v159, %v397
  %vm414 = vcmp.eq.s32.totalorder %v159, %v400
  %vm415 = vcmp.eq.s32.totalorder %v159, %v403
  %v416 = vsel %vm404, 1.0, 0.0
  %v417 = vsel %vm405, 1.0, 0.0
  %v418 = vsel %vm406, 1.0, 0.0
  %v419 = vsel %vm407, 1.0, 0.0
  %v420 = vsel %vm408, 1.0, 0.0
  %v421 = vsel %vm409, 1.0, 0.0
  %v422 = vsel %vm410, 1.0, 0.0
  %v423 = vsel %vm411, 1.0, 0.0
  %v424 = vsel %vm412, 1.0, 0.0
  %v425 = vsel %vm413, 1.0, 0.0
  %v426 = vsel %vm414, 1.0, 0.0
  %v427 = vsel %vm415, 1.0, 0.0
  %v428 = vpack.c.bf16 %v417, %v416
  %v429 = vpack.c.bf16 %v419, %v418
  %v430 = vpack.c.bf16 %v421, %v420
  %v431 = vpack.c.bf16 %v423, %v422
  %v432 = vpack.c.bf16 %v425, %v424
  %v433 = vpack.c.bf16 %v427, %v426
  %434 = vset.pattern.permute.xlu0 0
  %435 = vperm.xlu0 %434, %v355
  %v436 = vpop.permute.xlu0 %435
  %437 = vset.pattern.permute.xlu0 0
  %438 = vperm.xlu0 %437, %v356
  %v439 = vpop.permute.xlu0 %438
  %440 = vset.pattern.permute.xlu0 0
  %441 = vperm.xlu0 %440, %v357
  %v442 = vpop.permute.xlu0 %441
  %443 = vset.pattern.permute.xlu0 0
  %444 = vperm.xlu0 %443, %v358
  %v445 = vpop.permute.xlu0 %444
  %446 = vset.pattern.permute.xlu0 0
  %447 = vperm.xlu0 %446, %v359
  %v448 = vpop.permute.xlu0 %447
  %449 = vset.pattern.permute.xlu0 0
  %450 = vperm.xlu0 %449, %v360
  %v451 = vpop.permute.xlu0 %450
  %452 = vset.pattern.permute.xlu0 0
  %453 = vperm.xlu0 %452, %v361
  %v454 = vpop.permute.xlu0 %453
  %455 = vset.pattern.permute.xlu0 0
  %456 = vperm.xlu0 %455, %v362
  %v457 = vpop.permute.xlu0 %456
  %458 = vset.pattern.permute.xlu0 0
  %459 = vperm.xlu0 %458, %v363
  %v460 = vpop.permute.xlu0 %459
  %461 = vset.pattern.permute.xlu0 0
  %462 = vperm.xlu0 %461, %v364
  %v463 = vpop.permute.xlu0 %462
  %464 = vset.pattern.permute.xlu0 0
  %465 = vperm.xlu0 %464, %v365
  %v466 = vpop.permute.xlu0 %465
  %467 = vset.pattern.permute.xlu0 0
  %468 = vperm.xlu0 %467, %v366
  %v469 = vpop.permute.xlu0 %468
  %vm470 = vcmp.eq.s32.totalorder %v159, %v436
  %vm471 = vcmp.eq.s32.totalorder %v159, %v439
  %vm472 = vcmp.eq.s32.totalorder %v159, %v442
  %vm473 = vcmp.eq.s32.totalorder %v159, %v445
  %vm474 = vcmp.eq.s32.totalorder %v159, %v448
  %vm475 = vcmp.eq.s32.totalorder %v159, %v451
  %vm476 = vcmp.eq.s32.totalorder %v159, %v454
  %vm477 = vcmp.eq.s32.totalorder %v159, %v457
  %vm478 = vcmp.eq.s32.totalorder %v159, %v460
  %vm479 = vcmp.eq.s32.totalorder %v159, %v463
  %vm480 = vcmp.eq.s32.totalorder %v159, %v466
  %vm481 = vcmp.eq.s32.totalorder %v159, %v469
  %v482 = vsel %vm470, 1.0, 0.0
  %v483 = vsel %vm471, 1.0, 0.0
  %v484 = vsel %vm472, 1.0, 0.0
  %v485 = vsel %vm473, 1.0, 0.0
  %v486 = vsel %vm474, 1.0, 0.0
  %v487 = vsel %vm475, 1.0, 0.0
  %v488 = vsel %vm476, 1.0, 0.0
  %v489 = vsel %vm477, 1.0, 0.0
  %v490 = vsel %vm478, 1.0, 0.0
  %v491 = vsel %vm479, 1.0, 0.0
  %v492 = vsel %vm480, 1.0, 0.0
  %v493 = vsel %vm481, 1.0, 0.0
  %v494 = vpack.c.bf16 %v483, %v482
  %v495 = vpack.c.bf16 %v485, %v484
  %v496 = vpack.c.bf16 %v487, %v486
  %v497 = vpack.c.bf16 %v489, %v488
  %v498 = vpack.c.bf16 %v491, %v490
  %v499 = vpack.c.bf16 %v493, %v492
  %v500 = vlaneseq
  %v501 = vshrl.u32 %v500, 7
  %v502 = vsub.s32 0, %v501
  %v503 = vrot.slane %v367, %v502
  %vm504 = vcmp.eq.s32.totalorder %v161, %v503
  %vm505 = vcmp.eq.s32.totalorder %v162, %v503
  %vm506 = vcmp.eq.s32.totalorder %v163, %v503
  %vm507 = vcmp.eq.s32.totalorder %v164, %v503
  %vm508 = vcmp.eq.s32.totalorder %v165, %v503
  %vm509 = vcmp.eq.s32.totalorder %v166, %v503
  %v510 = vsel %vm504, 1.0, 0.0
  %v511 = vsel %vm505, 1.0, 0.0
  %v512 = vsel %vm506, 1.0, 0.0
  %v513 = vsel %vm507, 1.0, 0.0
  %v514 = vsel %vm508, 1.0, 0.0
  %v515 = vsel %vm509, 1.0, 0.0
  %v516 = vpack.c.bf16 %v511, %v510
  %v517 = vpack.c.bf16 %v513, %v512
  %v518 = vpack.c.bf16 %v515, %v514
  %v519 = vld [vmem:[%s53] sm:$0xf]
  %v520 = vld [vmem:[%s1] sm:$0xff]
  %v521 = vld [vmem:[%s1 + $0x8] sm:$0xff]
  %v522 = vld [vmem:[%s1 + $0x10] sm:$0xff]
  %v523 = vld [vmem:[%s1 + $0x18] sm:$0xff]
  %v524 = vld [vmem:[%s1 + $0x20] sm:$0xff]
  %v525 = vld [vmem:[%s1 + $0x28] sm:$0xff]
  %v526 = vld [vmem:[%s17] sm:$0x3f]
  %v527 = vld [vmem:[%s19] sm:$0x1]
  %v529 = vlaneseq
  %v530 = vshrl.u32 %v529, 7
  %v531 = vsub.s32 0, %v530
  %v532 = vrot.slane %v527, %v531
  %vm534 = vcmask 48128
  %v536 = vsel %vm534, %v520, 0
  %v539 = vsel %vm534, %v521, 0
  %v542 = vsel %vm534, %v522, 0
  %v545 = vsel %vm534, %v523, 0
  %v548 = vsel %vm534, %v524, 0
  %v551 = vsel %vm534, %v525, 0
  %vm553 = vcmask 1045504
  %v555 = vsel %vm553, %v526, 0
  %557 = vmatprep.subr.mxu0 0.0
  %558 = vmatpush1.msra.mxu0 %v555
  %559 = vmatprep.subr.mxu0 0.0
  %560 = vmatpush1.msra.mxu0 0.0
  %561 = vmatprep.subr.mxu0 0.0
  %562 = vmatpush1.msra.mxu0 0.0
  %563 = vmatprep.subr.mxu0 0.0
  %564 = vmatpush1.msra.mxu0 0.0
  %565 = vmatprep.subr.mxu0 0.0
  %566 = vmatpush1.msra.mxu0 0.0
  %567 = vmatprep.subr.mxu0 0.0
  %568 = vmatpush1.msra.mxu0 0.0
  %569 = vmatprep.subr.mxu0 0.0
  %570 = vmatpush1.msra.mxu0 0.0
  %571 = vmatprep.subr.mxu0 0.0
  %572 = vmatpush1.msra.mxu0 0.0
  %573 = vmatprep.subr.mxu0 0.0
  %574 = vmatpush1.msra.mxu0 0.0
  %575 = vmatprep.subr.mxu0 0.0
  %576 = vmatpush1.msra.mxu0 0.0
  %577 = vmatprep.subr.mxu0 0.0
  %578 = vmatpush1.msra.mxu0 0.0
  %579 = vmatprep.subr.mxu0 0.0
  %580 = vmatpush1.msra.mxu0 0.0
  %581 = vmatprep.subr.mxu0 0.0
  %582 = vmatpush1.msra.mxu0 0.0
  %583 = vmatprep.subr.mxu0 0.0
  %584 = vmatpush1.msra.mxu0 0.0
  %585 = vmatprep.subr.mxu0 0.0
  %586 = vmatpush1.msra.mxu0 0.0
  %587 = vmatprep.subr.mxu0 0.0
  %588 = vmatpush1.msra.mxu0 0.0
  %589 = vmatprep.subr.mxu0 0.0
  %590 = vmatpush1.msra.mxu0 0.0
  %591 = vmatprep.subr.mxu0 0.0
  %592 = vmatpush1.msra.mxu0 0.0
  %593 = vmatprep.subr.mxu0 0.0
  %594 = vmatpush1.msra.mxu0 0.0
  %595 = vmatprep.subr.mxu0 0.0
  %596 = vmatpush1.msra.mxu0 0.0
  %597 = vmatprep.subr.mxu0 0.0
  %598 = vmatpush1.msra.mxu0 0.0
  %599 = vmatprep.subr.mxu0 0.0
  %600 = vmatpush1.msra.mxu0 0.0
  %601 = vmatprep.subr.mxu0 0.0
  %602 = vmatpush1.msra.mxu0 0.0
  %603 = vmatprep.subr.mxu0 0.0
  %604 = vmatpush1.msra.mxu0 0.0
  %605 = vmatprep.subr.mxu0 0.0
  %606 = vmatpush1.msra.mxu0 0.0
  %607 = vmatprep.subr.mxu0 0.0
  %608 = vmatpush1.msra.mxu0 0.0
  %609 = vmatprep.subr.mxu0 0.0
  %610 = vmatpush1.msra.mxu0 0.0
  %611 = vmatprep.subr.mxu0 0.0
  %612 = vmatpush1.msra.mxu0 0.0
  %613 = vmatprep.subr.mxu0 0.0
  %614 = vmatpush1.msra.mxu0 0.0
  %615 = vmatprep.subr.mxu0 0.0
  %616 = vmatpush1.msra.mxu0 0.0
  %617 = vmatprep.subr.mxu0 0.0
  %618 = vmatpush1.msra.mxu0 0.0
  %619 = vmatprep.subr.mxu0 0.0
  %620 = vmatpush1.msra.mxu0 0.0
  %621 = vmatprep.mubr.f32.mxu0 0.0
  %622 = vmatmul.mubr.f32.gmra.mrb[0].mxu0 %v536
  %v623 = vpop.f32.mrb[0].mxu0
  %v624 = vadd.f32 %v532, %v623
  %v625 = vpop.f32.mrb[0].mxu0
  %626 = vmatprep.mubr.f32.mxu0 0.0
  %627 = vmatmul.mubr.f32.gmra.mrb[0].mxu0 %v539
  %v628 = vpop.f32.mrb[0].mxu0
  %v629 = vadd.f32 %v532, %v628
  %v630 = vpop.f32.mrb[0].mxu0
  %631 = vmatprep.mubr.f32.mxu0 0.0
  %632 = vmatmul.mubr.f32.gmra.mrb[0].mxu0 %v542
  %v633 = vpop.f32.mrb[0].mxu0
  %v634 = vadd.f32 %v532, %v633
  %v635 = vpop.f32.mrb[0].mxu0
  %636 = vmatprep.mubr.f32.mxu0 0.0
  %637 = vmatmul.mubr.f32.gmra.mrb[0].mxu0 %v545
  %v638 = vpop.f32.mrb[0].mxu0
  %v639 = vadd.f32 %v532, %v638
  %v640 = vpop.f32.mrb[0].mxu0
  %641 = vmatprep.mubr.f32.mxu0 0.0
  %642 = vmatmul.mubr.f32.gmra.mrb[0].mxu0 %v548
  %v643 = vpop.f32.mrb[0].mxu0
  %v644 = vadd.f32 %v532, %v643
  %v645 = vpop.f32.mrb[0].mxu0
  %646 = vmatprep.mubr.f32.mxu0 0.0
  %647 = vmatmul.mubr.f32.gmra.mrb[0].mxu0 %v551
  %v648 = vpop.f32.mrb[0].mxu0
  %v649 = vadd.f32 %v532, %v648
  %v650 = vpop.f32.mrb[0].mxu0
  %651 = vdwg.mxu0
  %v652 = vld [vmem:[%s3] sm:$0xff]
  %v653 = vld [vmem:[%s3 + $0x8] sm:$0xff]
  %v654 = vld [vmem:[%s3 + $0x10] sm:$0xff]
  %v655 = vld [vmem:[%s3 + $0x18] sm:$0xff]
  %v656 = vld [vmem:[%s3 + $0x20] sm:$0xff]
  %v657 = vld [vmem:[%s3 + $0x28] sm:$0xff]
  %v658 = vld [vmem:[%s3 + $0x30] sm:$0xff]
  %v659 = vld [vmem:[%s3 + $0x38] sm:$0xff]
  %v660 = vld [vmem:[%s3 + $0x40] sm:$0xff]
  %v661 = vld [vmem:[%s3 + $0x48] sm:$0xff]
  %v662 = vld [vmem:[%s3 + $0x50] sm:$0xff]
  %v663 = vld [vmem:[%s3 + $0x58] sm:$0xff]
  %v664 = vld [vmem:[%s21] sm:$0xff]
  %v665 = vld [vmem:[%s21 + $0x8] sm:$0xff]
  %v666 = vld [vmem:[%s21 + $0x10] sm:$0xff]
  %v667 = vld [vmem:[%s21 + $0x18] sm:$0xff]
  %v668 = vld [vmem:[%s21 + $0x20] sm:$0xff]
  %v669 = vld [vmem:[%s21 + $0x28] sm:$0xff]
  %v670 = vld [vmem:[%s21 + $0x30] sm:$0xff]
  %v671 = vld [vmem:[%s21 + $0x38] sm:$0xff]
  %v672 = vld [vmem:[%s23] sm:$0xff]
  %v673 = vld [vmem:[%s23 + $0x8] sm:$0xff]
  %v674 = vld [vmem:[%s23 + $0x10] sm:$0xff]
  %v675 = vld [vmem:[%s23 + $0x18] sm:$0xff]
  %v676 = vld [vmem:[%s23 + $0x20] sm:$0xff]
  %v677 = vld [vmem:[%s23 + $0x28] sm:$0xff]
  %v678 = vld [vmem:[%s23 + $0x30] sm:$0xff]
  %v679 = vld [vmem:[%s23 + $0x38] sm:$0xff]
  %v680 = vld [vmem:[%s25] sm:$0xff]
  %v681 = vld [vmem:[%s25 + $0x8] sm:$0xff]
  %v682 = vld [vmem:[%s25 + $0x10] sm:$0xff]
  %v683 = vld [vmem:[%s25 + $0x18] sm:$0xff]
  %v684 = vld [vmem:[%s25 + $0x20] sm:$0xff]
  %v685 = vld [vmem:[%s25 + $0x28] sm:$0xff]
  %v686 = vld [vmem:[%s25 + $0x30] sm:$0xff]
  %v687 = vld [vmem:[%s25 + $0x38] sm:$0xff]
  %v688 = vld [vmem:[%s27] sm:$0x1]
  %v689 = vpack.c.bf16 %v629, %v624
  %v690 = vpack.c.bf16 %v639, %v634
  %v691 = vpack.c.bf16 %v649, %v644
  %v692 = vpack.c.bf16 %v665, %v664
  %v693 = vpack.c.bf16 %v667, %v666
  %v694 = vpack.c.bf16 %v669, %v668
  %v695 = vpack.c.bf16 %v671, %v670
  %vm696 = vcmask 523264
  %v698 = vsel %vm696, %v689, 0
  %v701 = vsel %vm696, %v690, 0
  %v704 = vsel %vm696, %v691, 0
  %706 = vmatprep.subr.bf16.mxu0 0
  %707 = vmatpush1.bf16.msra.mxu0 %v692
  %708 = vmatprep.subr.bf16.mxu0 0
  %709 = vmatpush1.bf16.msra.mxu0 %v693
  %710 = vmatprep.subr.bf16.mxu0 0
  %711 = vmatpush1.bf16.msra.mxu0 %v694
  %712 = vmatprep.subr.bf16.mxu0 0
  %713 = vmatpush1.bf16.msra.mxu0 %v695
  %714 = vmatprep.subr.bf16.mxu0 0
  %715 = vmatpush1.bf16.msra.mxu0 0
  %716 = vmatprep.subr.bf16.mxu0 0
  %717 = vmatpush1.bf16.msra.mxu0 0
  %718 = vmatprep.subr.bf16.mxu0 0
  %719 = vmatpush1.bf16.msra.mxu0 0
  %720 = vmatprep.subr.bf16.mxu0 0
  %721 = vmatpush1.bf16.msra.mxu0 0
  %722 = vmatprep.subr.bf16.mxu0 0
  %723 = vmatpush1.bf16.msra.mxu0 0
  %724 = vmatprep.subr.bf16.mxu0 0
  %725 = vmatpush1.bf16.msra.mxu0 0
  %726 = vmatprep.subr.bf16.mxu0 0
  %727 = vmatpush1.bf16.msra.mxu0 0
  %728 = vmatprep.subr.bf16.mxu0 0
  %729 = vmatpush1.bf16.msra.mxu0 0
  %730 = vmatprep.subr.bf16.mxu0 0
  %731 = vmatpush1.bf16.msra.mxu0 0
  %732 = vmatprep.subr.bf16.mxu0 0
  %733 = vmatpush1.bf16.msra.mxu0 0
  %734 = vmatprep.subr.bf16.mxu0 0
  %735 = vmatpush1.bf16.msra.mxu0 0
  %736 = vmatprep.subr.bf16.mxu0 0
  %737 = vmatpush1.bf16.msra.mxu0 0
  %738 = vmatprep.mubr.bf16.mxu0 0
  %739 = vmatmul.mubr.bf16.gmra.mrb[0].mxu0 %v698
  %v740 = vpop.f32.mrb[0].mxu0
  %v741 = vadd.f32 0.0, %v740
  %v742 = vpop.f32.mrb[0].mxu0
  %v743 = vpop.f32.mrb[0].mxu0
  %v744 = vadd.f32 0.0, %v743
  %v745 = vpop.f32.mrb[0].mxu0
  %746 = vmatprep.mubr.bf16.mxu0 0
  %747 = vmatmul.mubr.bf16.gmra.mrb[0].mxu0 %v701
  %v748 = vpop.f32.mrb[0].mxu0
  %v749 = vadd.f32 0.0, %v748
  %v750 = vpop.f32.mrb[0].mxu0
  %v751 = vpop.f32.mrb[0].mxu0
  %v752 = vadd.f32 0.0, %v751
  %v753 = vpop.f32.mrb[0].mxu0
  %754 = vmatprep.mubr.bf16.mxu0 0
  %755 = vmatmul.mubr.bf16.gmra.mrb[0].mxu0 %v704
  %v756 = vpop.f32.mrb[0].mxu0
  %v757 = vadd.f32 0.0, %v756
  %v758 = vpop.f32.mrb[0].mxu0
  %v759 = vpop.f32.mrb[0].mxu0
  %v760 = vadd.f32 0.0, %v759
  %v761 = vpop.f32.mrb[0].mxu0
  %762 = vdwg.mxu0
  %v763 = vpack.c.bf16 %v744, %v741
  %v764 = vpack.c.bf16 %v752, %v749
  %v765 = vpack.c.bf16 %v760, %v757
  %vm766 = vcmask 392192
  %v768 = vsel %vm766, %v318, 0
  %v771 = vsel %vm766, %v319, 0
  %v774 = vsel %vm766, %v320, 0
  %v777 = vsel %vm766, %v321, 0
  %v780 = vsel %vm766, %v322, 0
  %v783 = vsel %vm766, %v323, 0
  %785 = vmatprep.subr.bf16.mxu0 0
  %786 = vmatpush1.bf16.msra.mxu0 %v763
  %787 = vmatprep.subr.bf16.mxu0 0
  %788 = vmatpush1.bf16.msra.mxu0 %v764
  %789 = vmatprep.subr.bf16.mxu0 0
  %790 = vmatpush1.bf16.msra.mxu0 %v765
  %791 = vmatprep.subr.bf16.mxu0 0
  %792 = vmatpush1.bf16.msra.mxu0 0
  %793 = vmatprep.subr.bf16.mxu0 0
  %794 = vmatpush1.bf16.msra.mxu0 0
  %795 = vmatprep.subr.bf16.mxu0 0
  %796 = vmatpush1.bf16.msra.mxu0 0
  %797 = vmatprep.subr.bf16.mxu0 0
  %798 = vmatpush1.bf16.msra.mxu0 0
  %799 = vmatprep.subr.bf16.mxu0 0
  %800 = vmatpush1.bf16.msra.mxu0 0
  %801 = vmatprep.subr.bf16.mxu0 0
  %802 = vmatpush1.bf16.msra.mxu0 0
  %803 = vmatprep.subr.bf16.mxu0 0
  %804 = vmatpush1.bf16.msra.mxu0 0
  %805 = vmatprep.subr.bf16.mxu0 0
  %806 = vmatpush1.bf16.msra.mxu0 0
  %807 = vmatprep.subr.bf16.mxu0 0
  %808 = vmatpush1.bf16.msra.mxu0 0
  %809 = vmatprep.subr.bf16.mxu0 0
  %810 = vmatpush1.bf16.msra.mxu0 0
  %811 = vmatprep.subr.bf16.mxu0 0
  %812 = vmatpush1.bf16.msra.mxu0 0
  %813 = vmatprep.subr.bf16.mxu0 0
  %814 = vmatpush1.bf16.msra.mxu0 0
  %815 = vmatprep.subr.bf16.mxu0 0
  %816 = vmatpush1.bf16.msra.mxu0 0
  %817 = vmatprep.mubr.bf16.mxu0 0
  %818 = vmatmul.mubr.bf16.gmra.mrb[0].mxu0 %v768
  %v819 = vpop.f32.mrb[0].mxu0
  %v820 = vadd.f32 0.0, %v819
  %v821 = vpop.f32.mrb[0].mxu0
  %v822 = vpop.f32.mrb[0].mxu0
  %v823 = vadd.f32 0.0, %v822
  %v824 = vpop.f32.mrb[0].mxu0
  %825 = vmatprep.mubr.bf16.mxu0 0
  %826 = vmatmul.mubr.bf16.gmra.mrb[0].mxu0 %v771
  %v827 = vpop.f32.mrb[0].mxu0
  %v828 = vadd.f32 0.0, %v827
  %v829 = vpop.f32.mrb[0].mxu0
  %v830 = vpop.f32.mrb[0].mxu0
  %v831 = vadd.f32 0.0, %v830
  %v832 = vpop.f32.mrb[0].mxu0
  %833 = vmatprep.mubr.bf16.mxu0 0
  %834 = vmatmul.mubr.bf16.gmra.mrb[0].mxu0 %v774
  %v835 = vpop.f32.mrb[0].mxu0
  %v836 = vadd.f32 0.0, %v835
  %v837 = vpop.f32.mrb[0].mxu0
  %v838 = vpop.f32.mrb[0].mxu0
  %v839 = vadd.f32 0.0, %v838
  %v840 = vpop.f32.mrb[0].mxu0
  %841 = vmatprep.mubr.bf16.mxu0 0
  %842 = vmatmul.mubr.bf16.gmra.mrb[0].mxu0 %v777
  %v843 = vpop.f32.mrb[0].mxu0
  %v844 = vadd.f32 0.0, %v843
  %v845 = vpop.f32.mrb[0].mxu0
  %v846 = vpop.f32.mrb[0].mxu0
  %v847 = vadd.f32 0.0, %v846
  %v848 = vpop.f32.mrb[0].mxu0
  %849 = vmatprep.mubr.bf16.mxu0 0
  %850 = vmatmul.mubr.bf16.gmra.mrb[0].mxu0 %v780
  %v851 = vpop.f32.mrb[0].mxu0
  %v852 = vadd.f32 0.0, %v851
  %v853 = vpop.f32.mrb[0].mxu0
  %v854 = vpop.f32.mrb[0].mxu0
  %v855 = vadd.f32 0.0, %v854
  %v856 = vpop.f32.mrb[0].mxu0
  %857 = vmatprep.mubr.bf16.mxu0 0
  %858 = vmatmul.mubr.bf16.gmra.mrb[0].mxu0 %v783
  %v859 = vpop.f32.mrb[0].mxu0
  %v860 = vadd.f32 0.0, %v859
  %v861 = vpop.f32.mrb[0].mxu0
  %v862 = vpop.f32.mrb[0].mxu0
  %v863 = vadd.f32 0.0, %v862
  %v864 = vpop.f32.mrb[0].mxu0
  %865 = vdwg.mxu0
  %v867 = vsel %vm696, %v741, 0
  %v870 = vsel %vm696, %v744, 0
  %v873 = vsel %vm696, %v749, 0
  %v876 = vsel %vm696, %v752, 0
  %v879 = vsel %vm696, %v757, 0
  %v882 = vsel %vm696, %v760, 0
  %884 = vmatprep.subr.mxu0 0.0
  %885 = vmatpush1.msra.mxu0 %v672
  %886 = vmatprep.subr.mxu0 0.0
  %887 = vmatpush1.msra.mxu0 %v673
  %888 = vmatprep.subr.mxu0 0.0
  %889 = vmatpush1.msra.mxu0 %v674
  %890 = vmatprep.subr.mxu0 0.0
  %891 = vmatpush1.msra.mxu0 %v675
  %892 = vmatprep.subr.mxu0 0.0
  %893 = vmatpush1.msra.mxu0 %v676
  %894 = vmatprep.subr.mxu0 0.0
  %895 = vmatpush1.msra.mxu0 %v677
  %896 = vmatprep.subr.mxu0 0.0
  %897 = vmatpush1.msra.mxu0 %v678
  %898 = vmatprep.subr.mxu0 0.0
  %899 = vmatpush1.msra.mxu0 %v679
  %900 = vmatprep.subr.mxu0 0.0
  %901 = vmatpush1.msra.mxu0 0.0
  %902 = vmatprep.subr.mxu0 0.0
  %903 = vmatpush1.msra.mxu0 0.0
  %904 = vmatprep.subr.mxu0 0.0
  %905 = vmatpush1.msra.mxu0 0.0
  %906 = vmatprep.subr.mxu0 0.0
  %907 = vmatpush1.msra.mxu0 0.0
  %908 = vmatprep.subr.mxu0 0.0
  %909 = vmatpush1.msra.mxu0 0.0
  %910 = vmatprep.subr.mxu0 0.0
  %911 = vmatpush1.msra.mxu0 0.0
  %912 = vmatprep.subr.mxu0 0.0
  %913 = vmatpush1.msra.mxu0 0.0
  %914 = vmatprep.subr.mxu0 0.0
  %915 = vmatpush1.msra.mxu0 0.0
  %916 = vmatprep.subr.mxu0 0.0
  %917 = vmatpush1.msra.mxu0 0.0
  %918 = vmatprep.subr.mxu0 0.0
  %919 = vmatpush1.msra.mxu0 0.0
  %920 = vmatprep.subr.mxu0 0.0
  %921 = vmatpush1.msra.mxu0 0.0
  %922 = vmatprep.subr.mxu0 0.0
  %923 = vmatpush1.msra.mxu0 0.0
  %924 = vmatprep.subr.mxu0 0.0
  %925 = vmatpush1.msra.mxu0 0.0
  %926 = vmatprep.subr.mxu0 0.0
  %927 = vmatpush1.msra.mxu0 0.0
  %928 = vmatprep.subr.mxu0 0.0
  %929 = vmatpush1.msra.mxu0 0.0
  %930 = vmatprep.subr.mxu0 0.0
  %931 = vmatpush1.msra.mxu0 0.0
  %932 = vmatprep.subr.mxu0 0.0
  %933 = vmatpush1.msra.mxu0 0.0
  %934 = vmatprep.subr.mxu0 0.0
  %935 = vmatpush1.msra.mxu0 0.0
  %936 = vmatprep.subr.mxu0 0.0
  %937 = vmatpush1.msra.mxu0 0.0
  %938 = vmatprep.subr.mxu0 0.0
  %939 = vmatpush1.msra.mxu0 0.0
  %940 = vmatprep.subr.mxu0 0.0
  %941 = vmatpush1.msra.mxu0 0.0
  %942 = vmatprep.subr.mxu0 0.0
  %943 = vmatpush1.msra.mxu0 0.0
  %944 = vmatprep.subr.mxu0 0.0
  %945 = vmatpush1.msra.mxu0 0.0
  %946 = vmatprep.subr.mxu0 0.0
  %947 = vmatpush1.msra.mxu0 0.0
  %948 = vmatprep.mubr.f32.mxu0 0.0
  %949 = vmatmul.mubr.f32.gmra.mrb[0].mxu0 %v867
  %v950 = vpop.f32.mrb[0].mxu0
  %v951 = vadd.f32 0.0, %v950
  %v952 = vpop.f32.mrb[0].mxu0
  %953 = vmatprep.mubr.f32.mxu0 0.0
  %954 = vmatmul.mubr.f32.gmra.mrb[0].mxu0 %v870
  %v955 = vpop.f32.mrb[0].mxu0
  %v956 = vadd.f32 0.0, %v955
  %v957 = vpop.f32.mrb[0].mxu0
  %958 = vmatprep.mubr.f32.mxu0 0.0
  %959 = vmatmul.mubr.f32.gmra.mrb[0].mxu0 %v873
  %v960 = vpop.f32.mrb[0].mxu0
  %v961 = vadd.f32 0.0, %v960
  %v962 = vpop.f32.mrb[0].mxu0
  %963 = vmatprep.mubr.f32.mxu0 0.0
  %964 = vmatmul.mubr.f32.gmra.mrb[0].mxu0 %v876
  %v965 = vpop.f32.mrb[0].mxu0
  %v966 = vadd.f32 0.0, %v965
  %v967 = vpop.f32.mrb[0].mxu0
  %968 = vmatprep.mubr.f32.mxu0 0.0
  %969 = vmatmul.mubr.f32.gmra.mrb[0].mxu0 %v879
  %v970 = vpop.f32.mrb[0].mxu0
  %v971 = vadd.f32 0.0, %v970
  %v972 = vpop.f32.mrb[0].mxu0
  %973 = vmatprep.mubr.f32.mxu0 0.0
  %974 = vmatmul.mubr.f32.gmra.mrb[0].mxu0 %v882
  %v975 = vpop.f32.mrb[0].mxu0
  %v976 = vadd.f32 0.0, %v975
  %v977 = vpop.f32.mrb[0].mxu0
  %978 = vdwg.mxu0
  %v979 = vpack.c.bf16 %v956, %v951
  %v980 = vpack.c.bf16 %v966, %v961
  %v981 = vpack.c.bf16 %v976, %v971
  %v983 = vsel %vm696, %v820, 0
  %v986 = vsel %vm696, %v823, 0
  %v989 = vsel %vm696, %v828, 0
  %v992 = vsel %vm696, %v831, 0
  %v995 = vsel %vm696, %v836, 0
  %v998 = vsel %vm696, %v839, 0
  %v1001 = vsel %vm696, %v844, 0
  %v1004 = vsel %vm696, %v847, 0
  %v1007 = vsel %vm696, %v852, 0
  %v1010 = vsel %vm696, %v855, 0
  %v1013 = vsel %vm696, %v860, 0
  %v1016 = vsel %vm696, %v863, 0
  %1018 = vmatprep.subr.mxu0 0.0
  %1019 = vmatpush1.msra.mxu0 %v680
  %1020 = vmatprep.subr.mxu0 0.0
  %1021 = vmatpush1.msra.mxu0 %v681
  %1022 = vmatprep.subr.mxu0 0.0
  %1023 = vmatpush1.msra.mxu0 %v682
  %1024 = vmatprep.subr.mxu0 0.0
  %1025 = vmatpush1.msra.mxu0 %v683
  %1026 = vmatprep.subr.mxu0 0.0
  %1027 = vmatpush1.msra.mxu0 %v684
  %1028 = vmatprep.subr.mxu0 0.0
  %1029 = vmatpush1.msra.mxu0 %v685
  %1030 = vmatprep.subr.mxu0 0.0
  %1031 = vmatpush1.msra.mxu0 %v686
  %1032 = vmatprep.subr.mxu0 0.0
  %1033 = vmatpush1.msra.mxu0 %v687
  %1034 = vmatprep.subr.mxu0 0.0
  %1035 = vmatpush1.msra.mxu0 0.0
  %1036 = vmatprep.subr.mxu0 0.0
  %1037 = vmatpush1.msra.mxu0 0.0
  %1038 = vmatprep.subr.mxu0 0.0
  %1039 = vmatpush1.msra.mxu0 0.0
  %1040 = vmatprep.subr.mxu0 0.0
  %1041 = vmatpush1.msra.mxu0 0.0
  %1042 = vmatprep.subr.mxu0 0.0
  %1043 = vmatpush1.msra.mxu0 0.0
  %1044 = vmatprep.subr.mxu0 0.0
  %1045 = vmatpush1.msra.mxu0 0.0
  %1046 = vmatprep.subr.mxu0 0.0
  %1047 = vmatpush1.msra.mxu0 0.0
  %1048 = vmatprep.subr.mxu0 0.0
  %1049 = vmatpush1.msra.mxu0 0.0
  %1050 = vmatprep.subr.mxu0 0.0
  %1051 = vmatpush1.msra.mxu0 0.0
  %1052 = vmatprep.subr.mxu0 0.0
  %1053 = vmatpush1.msra.mxu0 0.0
  %1054 = vmatprep.subr.mxu0 0.0
  %1055 = vmatpush1.msra.mxu0 0.0
  %1056 = vmatprep.subr.mxu0 0.0
  %1057 = vmatpush1.msra.mxu0 0.0
  %1058 = vmatprep.subr.mxu0 0.0
  %1059 = vmatpush1.msra.mxu0 0.0
  %1060 = vmatprep.subr.mxu0 0.0
  %1061 = vmatpush1.msra.mxu0 0.0
  %1062 = vmatprep.subr.mxu0 0.0
  %1063 = vmatpush1.msra.mxu0 0.0
  %1064 = vmatprep.subr.mxu0 0.0
  %1065 = vmatpush1.msra.mxu0 0.0
  %1066 = vmatprep.subr.mxu0 0.0
  %1067 = vmatpush1.msra.mxu0 0.0
  %1068 = vmatprep.subr.mxu0 0.0
  %1069 = vmatpush1.msra.mxu0 0.0
  %1070 = vmatprep.subr.mxu0 0.0
  %1071 = vmatpush1.msra.mxu0 0.0
  %1072 = vmatprep.subr.mxu0 0.0
  %1073 = vmatpush1.msra.mxu0 0.0
  %1074 = vmatprep.subr.mxu0 0.0
  %1075 = vmatpush1.msra.mxu0 0.0
  %1076 = vmatprep.subr.mxu0 0.0
  %1077 = vmatpush1.msra.mxu0 0.0
  %1078 = vmatprep.subr.mxu0 0.0
  %1079 = vmatpush1.msra.mxu0 0.0
  %1080 = vmatprep.subr.mxu0 0.0
  %1081 = vmatpush1.msra.mxu0 0.0
  %1082 = vmatprep.mubr.f32.mxu0 0.0
  %1083 = vmatmul.mubr.f32.gmra.mrb[0].mxu0 %v983
  %v1084 = vpop.f32.mrb[0].mxu0
  %v1085 = vadd.f32 0.0, %v1084
  %v1086 = vpop.f32.mrb[0].mxu0
  %1087 = vmatprep.mubr.f32.mxu0 0.0
  %1088 = vmatmul.mubr.f32.gmra.mrb[0].mxu0 %v986
  %v1089 = vpop.f32.mrb[0].mxu0
  %v1090 = vadd.f32 0.0, %v1089
  %v1091 = vpop.f32.mrb[0].mxu0
  %1092 = vmatprep.mubr.f32.mxu0 0.0
  %1093 = vmatmul.mubr.f32.gmra.mrb[0].mxu0 %v989
  %v1094 = vpop.f32.mrb[0].mxu0
  %v1095 = vadd.f32 0.0, %v1094
  %v1096 = vpop.f32.mrb[0].mxu0
  %1097 = vmatprep.mubr.f32.mxu0 0.0
  %1098 = vmatmul.mubr.f32.gmra.mrb[0].mxu0 %v992
  %v1099 = vpop.f32.mrb[0].mxu0
  %v1100 = vadd.f32 0.0, %v1099
  %v1101 = vpop.f32.mrb[0].mxu0
  %1102 = vmatprep.mubr.f32.mxu0 0.0
  %1103 = vmatmul.mubr.f32.gmra.mrb[0].mxu0 %v995
  %v1104 = vpop.f32.mrb[0].mxu0
  %v1105 = vadd.f32 0.0, %v1104
  %v1106 = vpop.f32.mrb[0].mxu0
  %1107 = vmatprep.mubr.f32.mxu0 0.0
  %1108 = vmatmul.mubr.f32.gmra.mrb[0].mxu0 %v998
  %v1109 = vpop.f32.mrb[0].mxu0
  %v1110 = vadd.f32 0.0, %v1109
  %v1111 = vpop.f32.mrb[0].mxu0
  %1112 = vmatprep.mubr.f32.mxu0 0.0
  %1113 = vmatmul.mubr.f32.gmra.mrb[0].mxu0 %v1001
  %v1114 = vpop.f32.mrb[0].mxu0
  %v1115 = vadd.f32 0.0, %v1114
  %v1116 = vpop.f32.mrb[0].mxu0
  %1117 = vmatprep.mubr.f32.mxu0 0.0
  %1118 = vmatmul.mubr.f32.gmra.mrb[0].mxu0 %v1004
  %v1119 = vpop.f32.mrb[0].mxu0
  %v1120 = vadd.f32 0.0, %v1119
  %v1121 = vpop.f32.mrb[0].mxu0
  %1122 = vmatprep.mubr.f32.mxu0 0.0
  %1123 = vmatmul.mubr.f32.gmra.mrb[0].mxu0 %v1007
  %v1124 = vpop.f32.mrb[0].mxu0
  %v1125 = vadd.f32 0.0, %v1124
  %v1126 = vpop.f32.mrb[0].mxu0
  %1127 = vmatprep.mubr.f32.mxu0 0.0
  %1128 = vmatmul.mubr.f32.gmra.mrb[0].mxu0 %v1010
  %v1129 = vpop.f32.mrb[0].mxu0
  %v1130 = vadd.f32 0.0, %v1129
  %v1131 = vpop.f32.mrb[0].mxu0
  %1132 = vmatprep.mubr.f32.mxu0 0.0
  %1133 = vmatmul.mubr.f32.gmra.mrb[0].mxu0 %v1013
  %v1134 = vpop.f32.mrb[0].mxu0
  %v1135 = vadd.f32 0.0, %v1134
  %v1136 = vpop.f32.mrb[0].mxu0
  %1137 = vmatprep.mubr.f32.mxu0 0.0
  %1138 = vmatmul.mubr.f32.gmra.mrb[0].mxu0 %v1016
  %v1139 = vpop.f32.mrb[0].mxu0
  %v1140 = vadd.f32 0.0, %v1139
  %v1141 = vpop.f32.mrb[0].mxu0
  %1142 = vdwg.mxu0
  %v1144 = vsel %vm766, %v252, 0
  %v1147 = vsel %vm766, %v253, 0
  %v1150 = vsel %vm766, %v254, 0
  %v1153 = vsel %vm766, %v255, 0
  %v1156 = vsel %vm766, %v256, 0
  %v1159 = vsel %vm766, %v257, 0
  %1161 = vmatprep.subr.bf16.mxu0 0
  %1162 = vmatpush1.bf16.msra.mxu0 %v979
  %1163 = vmatprep.subr.bf16.mxu0 0
  %1164 = vmatpush1.bf16.msra.mxu0 %v980
  %1165 = vmatprep.subr.bf16.mxu0 0
  %1166 = vmatpush1.bf16.msra.mxu0 %v981
  %1167 = vmatprep.subr.bf16.mxu0 0
  %1168 = vmatpush1.bf16.msra.mxu0 0
  %1169 = vmatprep.subr.bf16.mxu0 0
  %1170 = vmatpush1.bf16.msra.mxu0 0
  %1171 = vmatprep.subr.bf16.mxu0 0
  %1172 = vmatpush1.bf16.msra.mxu0 0
  %1173 = vmatprep.subr.bf16.mxu0 0
  %1174 = vmatpush1.bf16.msra.mxu0 0
  %1175 = vmatprep.subr.bf16.mxu0 0
  %1176 = vmatpush1.bf16.msra.mxu0 0
  %1177 = vmatprep.subr.bf16.mxu0 0
  %1178 = vmatpush1.bf16.msra.mxu0 0
  %1179 = vmatprep.subr.bf16.mxu0 0
  %1180 = vmatpush1.bf16.msra.mxu0 0
  %1181 = vmatprep.subr.bf16.mxu0 0
  %1182 = vmatpush1.bf16.msra.mxu0 0
  %1183 = vmatprep.subr.bf16.mxu0 0
  %1184 = vmatpush1.bf16.msra.mxu0 0
  %1185 = vmatprep.subr.bf16.mxu0 0
  %1186 = vmatpush1.bf16.msra.mxu0 0
  %1187 = vmatprep.subr.bf16.mxu0 0
  %1188 = vmatpush1.bf16.msra.mxu0 0
  %1189 = vmatprep.subr.bf16.mxu0 0
  %1190 = vmatpush1.bf16.msra.mxu0 0
  %1191 = vmatprep.subr.bf16.mxu0 0
  %1192 = vmatpush1.bf16.msra.mxu0 0
  %1193 = vmatprep.mubr.bf16.mxu0 0
  %1194 = vmatmul.mubr.bf16.gmra.mrb[0].mxu0 %v1144
  %v1195 = vpop.f32.mrb[0].mxu0
  %v1196 = vadd.f32 %v1085, %v1195
  %v1197 = vpop.f32.mrb[0].mxu0
  %v1198 = vpop.f32.mrb[0].mxu0
  %v1199 = vadd.f32 %v1090, %v1198
  %v1200 = vpop.f32.mrb[0].mxu0
  %1201 = vmatprep.mubr.bf16.mxu0 0
  %1202 = vmatmul.mubr.bf16.gmra.mrb[0].mxu0 %v1147
  %v1203 = vpop.f32.mrb[0].mxu0
  %v1204 = vadd.f32 %v1095, %v1203
  %v1205 = vpop.f32.mrb[0].mxu0
  %v1206 = vpop.f32.mrb[0].mxu0
  %v1207 = vadd.f32 %v1100, %v1206
  %v1208 = vpop.f32.mrb[0].mxu0
  %1209 = vmatprep.mubr.bf16.mxu0 0
  %1210 = vmatmul.mubr.bf16.gmra.mrb[0].mxu0 %v1150
  %v1211 = vpop.f32.mrb[0].mxu0
  %v1212 = vadd.f32 %v1105, %v1211
  %v1213 = vpop.f32.mrb[0].mxu0
  %v1214 = vpop.f32.mrb[0].mxu0
  %v1215 = vadd.f32 %v1110, %v1214
  %v1216 = vpop.f32.mrb[0].mxu0
  %1217 = vmatprep.mubr.bf16.mxu0 0
  %1218 = vmatmul.mubr.bf16.gmra.mrb[0].mxu0 %v1153
  %v1219 = vpop.f32.mrb[0].mxu0
  %v1220 = vadd.f32 %v1115, %v1219
  %v1221 = vpop.f32.mrb[0].mxu0
  %v1222 = vpop.f32.mrb[0].mxu0
  %v1223 = vadd.f32 %v1120, %v1222
  %v1224 = vpop.f32.mrb[0].mxu0
  %1225 = vmatprep.mubr.bf16.mxu0 0
  %1226 = vmatmul.mubr.bf16.gmra.mrb[0].mxu0 %v1156
  %v1227 = vpop.f32.mrb[0].mxu0
  %v1228 = vadd.f32 %v1125, %v1227
  %v1229 = vpop.f32.mrb[0].mxu0
  %v1230 = vpop.f32.mrb[0].mxu0
  %v1231 = vadd.f32 %v1130, %v1230
  %v1232 = vpop.f32.mrb[0].mxu0
  %1233 = vmatprep.mubr.bf16.mxu0 0
  %1234 = vmatmul.mubr.bf16.gmra.mrb[0].mxu0 %v1159
  %v1235 = vpop.f32.mrb[0].mxu0
  %v1236 = vadd.f32 %v1135, %v1235
  %v1237 = vpop.f32.mrb[0].mxu0
  %v1238 = vpop.f32.mrb[0].mxu0
  %v1239 = vadd.f32 %v1140, %v1238
  %v1240 = vpop.f32.mrb[0].mxu0
  %1241 = vdwg.mxu0
  %1243 = vset.pattern.permute.xlu0 0
  %1244 = vperm.xlu0 %1243, %v652
  %v1245 = vpop.permute.xlu0 %1244
  %1248 = vset.pattern.permute.xlu0 0
  %1249 = vperm.xlu0 %1248, %v653
  %v1250 = vpop.permute.xlu0 %1249
  %1253 = vset.pattern.permute.xlu0 0
  %1254 = vperm.xlu0 %1253, %v654
  %v1255 = vpop.permute.xlu0 %1254
  %1258 = vset.pattern.permute.xlu0 0
  %1259 = vperm.xlu0 %1258, %v655
  %v1260 = vpop.permute.xlu0 %1259
  %1263 = vset.pattern.permute.xlu0 0
  %1264 = vperm.xlu0 %1263, %v656
  %v1265 = vpop.permute.xlu0 %1264
  %1268 = vset.pattern.permute.xlu0 0
  %1269 = vperm.xlu0 %1268, %v657
  %v1270 = vpop.permute.xlu0 %1269
  %1273 = vset.pattern.permute.xlu0 0
  %1274 = vperm.xlu0 %1273, %v658
  %v1275 = vpop.permute.xlu0 %1274
  %1278 = vset.pattern.permute.xlu0 0
  %1279 = vperm.xlu0 %1278, %v659
  %v1280 = vpop.permute.xlu0 %1279
  %1283 = vset.pattern.permute.xlu0 0
  %1284 = vperm.xlu0 %1283, %v660
  %v1285 = vpop.permute.xlu0 %1284
  %1288 = vset.pattern.permute.xlu0 0
  %1289 = vperm.xlu0 %1288, %v661
  %v1290 = vpop.permute.xlu0 %1289
  %1293 = vset.pattern.permute.xlu0 0
  %1294 = vperm.xlu0 %1293, %v662
  %v1295 = vpop.permute.xlu0 %1294
  %1298 = vset.pattern.permute.xlu0 0
  %1299 = vperm.xlu0 %1298, %v663
  %v1300 = vpop.permute.xlu0 %1299
  %v1303 = vlaneseq
  %v1304 = vshrl.u32 %v1303, 7
  %v1305 = vsub.s32 0, %v1304
  %v1306 = vrot.slane %v688, %v1305
  %v1308 = vmul.f32 %v1245, %v1306
  %v1309 = vmul.f32 %v1250, %v1306
  %v1310 = vmul.f32 %v1255, %v1306
  %v1311 = vmul.f32 %v1260, %v1306
  %v1312 = vmul.f32 %v1265, %v1306
  %v1313 = vmul.f32 %v1270, %v1306
  %v1314 = vmul.f32 %v1275, %v1306
  %v1315 = vmul.f32 %v1280, %v1306
  %v1316 = vmul.f32 %v1285, %v1306
  %v1317 = vmul.f32 %v1290, %v1306
  %v1318 = vmul.f32 %v1295, %v1306
  %v1319 = vmul.f32 %v1300, %v1306
  %v1320 = vadd.f32 %v1196, %v1308
  %v1321 = vadd.f32 %v1199, %v1309
  %v1322 = vadd.f32 %v1204, %v1310
  %v1323 = vadd.f32 %v1207, %v1311
  %v1324 = vadd.f32 %v1212, %v1312
  %v1325 = vadd.f32 %v1215, %v1313
  %v1326 = vadd.f32 %v1220, %v1314
  %v1327 = vadd.f32 %v1223, %v1315
  %v1328 = vadd.f32 %v1228, %v1316
  %v1329 = vadd.f32 %v1231, %v1317
  %v1330 = vadd.f32 %v1236, %v1318
  %v1331 = vadd.f32 %v1239, %v1319
  %vm1332 = vcmp.gt.f32.partialorder %v1320, 0.0
  %vm1333 = vcmp.gt.f32.partialorder %v1321, 0.0
  %vm1334 = vcmp.gt.f32.partialorder %v1322, 0.0
  %vm1335 = vcmp.gt.f32.partialorder %v1323, 0.0
  %vm1336 = vcmp.gt.f32.partialorder %v1324, 0.0
  %vm1337 = vcmp.gt.f32.partialorder %v1325, 0.0
  %vm1338 = vcmp.gt.f32.partialorder %v1326, 0.0
  %vm1339 = vcmp.gt.f32.partialorder %v1327, 0.0
  %vm1340 = vcmp.gt.f32.partialorder %v1328, 0.0
  %vm1341 = vcmp.gt.f32.partialorder %v1329, 0.0
  %vm1342 = vcmp.gt.f32.partialorder %v1330, 0.0
  %vm1343 = vcmp.gt.f32.partialorder %v1331, 0.0
  %v1344 = vmul.f32 %v1320, 0.2
  %v1345 = vmul.f32 %v1321, 0.2
  %v1346 = vmul.f32 %v1322, 0.2
  %v1347 = vmul.f32 %v1323, 0.2
  %v1348 = vmul.f32 %v1324, 0.2
  %v1349 = vmul.f32 %v1325, 0.2
  %v1350 = vmul.f32 %v1326, 0.2
  %v1351 = vmul.f32 %v1327, 0.2
  %v1352 = vmul.f32 %v1328, 0.2
  %v1353 = vmul.f32 %v1329, 0.2
  %v1354 = vmul.f32 %v1330, 0.2
  %v1355 = vmul.f32 %v1331, 0.2
  %v1356 = vsel %vm1332, %v1320, %v1344
  %v1357 = vsel %vm1333, %v1321, %v1345
  %v1358 = vsel %vm1334, %v1322, %v1346
  %v1359 = vsel %vm1335, %v1323, %v1347
  %v1360 = vsel %vm1336, %v1324, %v1348
  %v1361 = vsel %vm1337, %v1325, %v1349
  %v1362 = vsel %vm1338, %v1326, %v1350
  %v1363 = vsel %vm1339, %v1327, %v1351
  %v1364 = vsel %vm1340, %v1328, %v1352
  %v1365 = vsel %vm1341, %v1329, %v1353
  %v1366 = vsel %vm1342, %v1330, %v1354
  %v1367 = vsel %vm1343, %v1331, %v1355
  %v1368 = vsub.f32 0.0, %v1356
  %v1369 = vsub.f32 0.0, %v1357
  %v1370 = vsub.f32 0.0, %v1358
  %v1371 = vsub.f32 0.0, %v1359
  %v1372 = vsub.f32 0.0, %v1360
  %v1373 = vsub.f32 0.0, %v1361
  %v1374 = vsub.f32 0.0, %v1362
  %v1375 = vsub.f32 0.0, %v1363
  %v1376 = vsub.f32 0.0, %v1364
  %v1377 = vsub.f32 0.0, %v1365
  %v1378 = vsub.f32 0.0, %v1366
  %v1379 = vsub.f32 0.0, %v1367
  %v1380 = vmin.f32 %v1368, 60.0
  %v1381 = vmin.f32 %v1369, 60.0
  %v1382 = vmin.f32 %v1370, 60.0
  %v1383 = vmin.f32 %v1371, 60.0
  %v1384 = vmin.f32 %v1372, 60.0
  %v1385 = vmin.f32 %v1373, 60.0
  %v1386 = vmin.f32 %v1374, 60.0
  %v1387 = vmin.f32 %v1375, 60.0
  %v1388 = vmin.f32 %v1376, 60.0
  %v1389 = vmin.f32 %v1377, 60.0
  %v1390 = vmin.f32 %v1378, 60.0
  %v1391 = vmin.f32 %v1379, 60.0
  %v1392 = vmul.f32 %v1380, 1.442695
  %v1393 = vpow.pop %v1392
  %v1394 = vmul.f32 %v1381, 1.442695
  %v1395 = vpow.pop %v1394
  %v1396 = vmul.f32 %v1382, 1.442695
  %v1397 = vpow.pop %v1396
  %v1398 = vmul.f32 %v1383, 1.442695
  %v1399 = vpow.pop %v1398
  %v1400 = vmul.f32 %v1384, 1.442695
  %v1401 = vpow.pop %v1400
  %v1402 = vmul.f32 %v1385, 1.442695
  %v1403 = vpow.pop %v1402
  %v1404 = vmul.f32 %v1386, 1.442695
  %v1405 = vpow.pop %v1404
  %v1406 = vmul.f32 %v1387, 1.442695
  %v1407 = vpow.pop %v1406
  %v1408 = vmul.f32 %v1388, 1.442695
  %v1409 = vpow.pop %v1408
  %v1410 = vmul.f32 %v1389, 1.442695
  %v1411 = vpow.pop %v1410
  %v1412 = vmul.f32 %v1390, 1.442695
  %v1413 = vpow.pop %v1412
  %v1414 = vmul.f32 %v1391, 1.442695
  %v1415 = vpow.pop %v1414
  %vm1416 = vcmask 31744
  %v1418 = vsel %vm1416, %v1393, 0
  %v1421 = vsel %vm1416, %v1395, 0
  %v1424 = vsel %vm1416, %v1397, 0
  %v1427 = vsel %vm1416, %v1399, 0
  %v1430 = vsel %vm1416, %v1401, 0
  %v1433 = vsel %vm1416, %v1403, 0
  %v1436 = vsel %vm1416, %v1405, 0
  %v1439 = vsel %vm1416, %v1407, 0
  %v1442 = vsel %vm1416, %v1409, 0
  %v1445 = vsel %vm1416, %v1411, 0
  %v1448 = vsel %vm1416, %v1413, 0
  %v1451 = vsel %vm1416, %v1415, 0
  %vm1453 = vcmask 1043456
  %v1455 = vsel %vm1453, %v519, 0
  %1457 = vmatprep.subr.mxu0 0.0
  %1458 = vmatpush1.msra.mxu0 %v1455
  %1459 = vmatprep.subr.mxu0 0.0
  %1460 = vmatpush1.msra.mxu0 0.0
  %1461 = vmatprep.subr.mxu0 0.0
  %1462 = vmatpush1.msra.mxu0 0.0
  %1463 = vmatprep.subr.mxu0 0.0
  %1464 = vmatpush1.msra.mxu0 0.0
  %1465 = vmatprep.subr.mxu0 0.0
  %1466 = vmatpush1.msra.mxu0 0.0
  %1467 = vmatprep.subr.mxu0 0.0
  %1468 = vmatpush1.msra.mxu0 0.0
  %1469 = vmatprep.subr.mxu0 0.0
  %1470 = vmatpush1.msra.mxu0 0.0
  %1471 = vmatprep.subr.mxu0 0.0
  %1472 = vmatpush1.msra.mxu0 0.0
  %1473 = vmatprep.subr.mxu0 0.0
  %1474 = vmatpush1.msra.mxu0 0.0
  %1475 = vmatprep.subr.mxu0 0.0
  %1476 = vmatpush1.msra.mxu0 0.0
  %1477 = vmatprep.subr.mxu0 0.0
  %1478 = vmatpush1.msra.mxu0 0.0
  %1479 = vmatprep.subr.mxu0 0.0
  %1480 = vmatpush1.msra.mxu0 0.0
  %1481 = vmatprep.subr.mxu0 0.0
  %1482 = vmatpush1.msra.mxu0 0.0
  %1483 = vmatprep.subr.mxu0 0.0
  %1484 = vmatpush1.msra.mxu0 0.0
  %1485 = vmatprep.subr.mxu0 0.0
  %1486 = vmatpush1.msra.mxu0 0.0
  %1487 = vmatprep.subr.mxu0 0.0
  %1488 = vmatpush1.msra.mxu0 0.0
  %1489 = vmatprep.subr.mxu0 0.0
  %1490 = vmatpush1.msra.mxu0 0.0
  %1491 = vmatprep.subr.mxu0 0.0
  %1492 = vmatpush1.msra.mxu0 0.0
  %1493 = vmatprep.subr.mxu0 0.0
  %1494 = vmatpush1.msra.mxu0 0.0
  %1495 = vmatprep.subr.mxu0 0.0
  %1496 = vmatpush1.msra.mxu0 0.0
  %1497 = vmatprep.subr.mxu0 0.0
  %1498 = vmatpush1.msra.mxu0 0.0
  %1499 = vmatprep.subr.mxu0 0.0
  %1500 = vmatpush1.msra.mxu0 0.0
  %1501 = vmatprep.subr.mxu0 0.0
  %1502 = vmatpush1.msra.mxu0 0.0
  %1503 = vmatprep.subr.mxu0 0.0
  %1504 = vmatpush1.msra.mxu0 0.0
  %1505 = vmatprep.subr.mxu0 0.0
  %1506 = vmatpush1.msra.mxu0 0.0
  %1507 = vmatprep.subr.mxu0 0.0
  %1508 = vmatpush1.msra.mxu0 0.0
  %1509 = vmatprep.subr.mxu0 0.0
  %1510 = vmatpush1.msra.mxu0 0.0
  %1511 = vmatprep.subr.mxu0 0.0
  %1512 = vmatpush1.msra.mxu0 0.0
  %1513 = vmatprep.subr.mxu0 0.0
  %1514 = vmatpush1.msra.mxu0 0.0
  %1515 = vmatprep.subr.mxu0 0.0
  %1516 = vmatpush1.msra.mxu0 0.0
  %1517 = vmatprep.subr.mxu0 0.0
  %1518 = vmatpush1.msra.mxu0 0.0
  %1519 = vmatprep.subr.mxu0 0.0
  %1520 = vmatpush1.msra.mxu0 0.0
  %1521 = vmatprep.mubr.f32.mxu0 0.0
  %1522 = vmatmul.mubr.f32.gmra.mrb[0].mxu0 %v1418
  %v1523 = vpop.f32.mrb[0].mxu0
  %v1524 = vadd.f32 0.0, %v1523
  %v1525 = vpop.f32.mrb[0].mxu0
  %1526 = vmatprep.mubr.f32.mxu0 0.0
  %1527 = vmatmul.mubr.f32.gmra.mrb[0].mxu0 %v1421
  %v1528 = vpop.f32.mrb[0].mxu0
  %v1529 = vadd.f32 0.0, %v1528
  %v1530 = vpop.f32.mrb[0].mxu0
  %1531 = vmatprep.mubr.f32.mxu0 0.0
  %1532 = vmatmul.mubr.f32.gmra.mrb[0].mxu0 %v1424
  %v1533 = vpop.f32.mrb[0].mxu0
  %v1534 = vadd.f32 0.0, %v1533
  %v1535 = vpop.f32.mrb[0].mxu0
  %1536 = vmatprep.mubr.f32.mxu0 0.0
  %1537 = vmatmul.mubr.f32.gmra.mrb[0].mxu0 %v1427
  %v1538 = vpop.f32.mrb[0].mxu0
  %v1539 = vadd.f32 0.0, %v1538
  %v1540 = vpop.f32.mrb[0].mxu0
  %1541 = vmatprep.mubr.f32.mxu0 0.0
  %1542 = vmatmul.mubr.f32.gmra.mrb[0].mxu0 %v1430
  %v1543 = vpop.f32.mrb[0].mxu0
  %v1544 = vadd.f32 0.0, %v1543
  %v1545 = vpop.f32.mrb[0].mxu0
  %1546 = vmatprep.mubr.f32.mxu0 0.0
  %1547 = vmatmul.mubr.f32.gmra.mrb[0].mxu0 %v1433
  %v1548 = vpop.f32.mrb[0].mxu0
  %v1549 = vadd.f32 0.0, %v1548
  %v1550 = vpop.f32.mrb[0].mxu0
  %1551 = vmatprep.mubr.f32.mxu0 0.0
  %1552 = vmatmul.mubr.f32.gmra.mrb[0].mxu0 %v1436
  %v1553 = vpop.f32.mrb[0].mxu0
  %v1554 = vadd.f32 0.0, %v1553
  %v1555 = vpop.f32.mrb[0].mxu0
  %1556 = vmatprep.mubr.f32.mxu0 0.0
  %1557 = vmatmul.mubr.f32.gmra.mrb[0].mxu0 %v1439
  %v1558 = vpop.f32.mrb[0].mxu0
  %v1559 = vadd.f32 0.0, %v1558
  %v1560 = vpop.f32.mrb[0].mxu0
  %1561 = vmatprep.mubr.f32.mxu0 0.0
  %1562 = vmatmul.mubr.f32.gmra.mrb[0].mxu0 %v1442
  %v1563 = vpop.f32.mrb[0].mxu0
  %v1564 = vadd.f32 0.0, %v1563
  %v1565 = vpop.f32.mrb[0].mxu0
  %1566 = vmatprep.mubr.f32.mxu0 0.0
  %1567 = vmatmul.mubr.f32.gmra.mrb[0].mxu0 %v1445
  %v1568 = vpop.f32.mrb[0].mxu0
  %v1569 = vadd.f32 0.0, %v1568
  %v1570 = vpop.f32.mrb[0].mxu0
  %1571 = vmatprep.mubr.f32.mxu0 0.0
  %1572 = vmatmul.mubr.f32.gmra.mrb[0].mxu0 %v1448
  %v1573 = vpop.f32.mrb[0].mxu0
  %v1574 = vadd.f32 0.0, %v1573
  %v1575 = vpop.f32.mrb[0].mxu0
  %1576 = vmatprep.mubr.f32.mxu0 0.0
  %1577 = vmatmul.mubr.f32.gmra.mrb[0].mxu0 %v1451
  %v1578 = vpop.f32.mrb[0].mxu0
  %v1579 = vadd.f32 0.0, %v1578
  %v1580 = vpop.f32.mrb[0].mxu0
  %1581 = vdwg.mxu0
  %v1582 = vmul.f32 %v1524, %v820
  %v1583 = vmul.f32 %v1529, %v823
  %v1584 = vmul.f32 %v1534, %v828
  %v1585 = vmul.f32 %v1539, %v831
  %v1586 = vmul.f32 %v1544, %v836
  %v1587 = vmul.f32 %v1549, %v839
  %v1588 = vmul.f32 %v1554, %v844
  %v1589 = vmul.f32 %v1559, %v847
  %v1590 = vmul.f32 %v1564, %v852
  %v1591 = vmul.f32 %v1569, %v855
  %v1592 = vmul.f32 %v1574, %v860
  %v1593 = vmul.f32 %v1579, %v863
  %v1594 = vpack.c.bf16 %v1583, %v1582
  %v1595 = vpack.c.bf16 %v1585, %v1584
  %v1596 = vpack.c.bf16 %v1587, %v1586
  %v1597 = vpack.c.bf16 %v1589, %v1588
  %v1598 = vpack.c.bf16 %v1591, %v1590
  %v1599 = vpack.c.bf16 %v1593, %v1592
  %vm1600 = vcmask 785408
  %v1602 = vsel %vm1600, %v340, 0
  %v1605 = vsel %vm1600, %v341, 0
  %v1608 = vsel %vm1600, %v342, 0
  %1610 = vmatprep.subr.bf16.mxu0 0
  %1611 = vmatpush1.bf16.msra.mxu0 %v1594
  %1612 = vmatprep.subr.bf16.mxu0 0
  %1613 = vmatpush1.bf16.msra.mxu0 %v1595
  %1614 = vmatprep.subr.bf16.mxu0 0
  %1615 = vmatpush1.bf16.msra.mxu0 %v1596
  %1616 = vmatprep.subr.bf16.mxu0 0
  %1617 = vmatpush1.bf16.msra.mxu0 %v1597
  %1618 = vmatprep.subr.bf16.mxu0 0
  %1619 = vmatpush1.bf16.msra.mxu0 %v1598
  %1620 = vmatprep.subr.bf16.mxu0 0
  %1621 = vmatpush1.bf16.msra.mxu0 %v1599
  %1622 = vmatprep.subr.bf16.mxu0 0
  %1623 = vmatpush1.bf16.msra.mxu0 0
  %1624 = vmatprep.subr.bf16.mxu0 0
  %1625 = vmatpush1.bf16.msra.mxu0 0
  %1626 = vmatprep.subr.bf16.mxu0 0
  %1627 = vmatpush1.bf16.msra.mxu0 0
  %1628 = vmatprep.subr.bf16.mxu0 0
  %1629 = vmatpush1.bf16.msra.mxu0 0
  %1630 = vmatprep.subr.bf16.mxu0 0
  %1631 = vmatpush1.bf16.msra.mxu0 0
  %1632 = vmatprep.subr.bf16.mxu0 0
  %1633 = vmatpush1.bf16.msra.mxu0 0
  %1634 = vmatprep.subr.bf16.mxu0 0
  %1635 = vmatpush1.bf16.msra.mxu0 0
  %1636 = vmatprep.subr.bf16.mxu0 0
  %1637 = vmatpush1.bf16.msra.mxu0 0
  %1638 = vmatprep.subr.bf16.mxu0 0
  %1639 = vmatpush1.bf16.msra.mxu0 0
  %1640 = vmatprep.subr.bf16.mxu0 0
  %1641 = vmatpush1.bf16.msra.mxu0 0
  %1642 = vmatprep.mubr.bf16.mxu0 0
  %1643 = vmatmul.mubr.bf16.gmra.mrb[0].mxu0 %v1602
  %v1644 = vpop.f32.mrb[0].mxu0
  %v1645 = vadd.f32 0.0, %v1644
  %v1646 = vpop.f32.mrb[0].mxu0
  %v1647 = vpop.f32.mrb[0].mxu0
  %v1648 = vadd.f32 0.0, %v1647
  %v1649 = vpop.f32.mrb[0].mxu0
  %1650 = vmatprep.mubr.bf16.mxu0 0
  %1651 = vmatmul.mubr.bf16.gmra.mrb[0].mxu0 %v1605
  %v1652 = vpop.f32.mrb[0].mxu0
  %v1653 = vadd.f32 0.0, %v1652
  %v1654 = vpop.f32.mrb[0].mxu0
  %v1655 = vpop.f32.mrb[0].mxu0
  %v1656 = vadd.f32 0.0, %v1655
  %v1657 = vpop.f32.mrb[0].mxu0
  %1658 = vmatprep.mubr.bf16.mxu0 0
  %1659 = vmatmul.mubr.bf16.gmra.mrb[0].mxu0 %v1608
  %v1660 = vpop.f32.mrb[0].mxu0
  %v1661 = vadd.f32 0.0, %v1660
  %v1662 = vpop.f32.mrb[0].mxu0
  %v1663 = vpop.f32.mrb[0].mxu0
  %v1664 = vadd.f32 0.0, %v1663
  %v1665 = vpop.f32.mrb[0].mxu0
  %1666 = vdwg.mxu0
  %v1667 = vpack.c.bf16 %v1395, %v1393
  %v1668 = vpack.c.bf16 %v1399, %v1397
  %v1669 = vpack.c.bf16 %v1403, %v1401
  %v1670 = vpack.c.bf16 %v1407, %v1405
  %v1671 = vpack.c.bf16 %v1411, %v1409
  %v1672 = vpack.c.bf16 %v1415, %v1413
  %1673 = vmatprep.subr.bf16.mxu0 0
  %1674 = vmatpush1.bf16.msra.mxu0 %v1667
  %1675 = vmatprep.subr.bf16.mxu0 0
  %1676 = vmatpush1.bf16.msra.mxu0 %v1668
  %1677 = vmatprep.subr.bf16.mxu0 0
  %1678 = vmatpush1.bf16.msra.mxu0 %v1669
  %1679 = vmatprep.subr.bf16.mxu0 0
  %1680 = vmatpush1.bf16.msra.mxu0 %v1670
  %1681 = vmatprep.subr.bf16.mxu0 0
  %1682 = vmatpush1.bf16.msra.mxu0 %v1671
  %1683 = vmatprep.subr.bf16.mxu0 0
  %1684 = vmatpush1.bf16.msra.mxu0 %v1672
  %1685 = vmatprep.subr.bf16.mxu0 0
  %1686 = vmatpush1.bf16.msra.mxu0 0
  %1687 = vmatprep.subr.bf16.mxu0 0
  %1688 = vmatpush1.bf16.msra.mxu0 0
  %1689 = vmatprep.subr.bf16.mxu0 0
  %1690 = vmatpush1.bf16.msra.mxu0 0
  %1691 = vmatprep.subr.bf16.mxu0 0
  %1692 = vmatpush1.bf16.msra.mxu0 0
  %1693 = vmatprep.subr.bf16.mxu0 0
  %1694 = vmatpush1.bf16.msra.mxu0 0
  %1695 = vmatprep.subr.bf16.mxu0 0
  %1696 = vmatpush1.bf16.msra.mxu0 0
  %1697 = vmatprep.subr.bf16.mxu0 0
  %1698 = vmatpush1.bf16.msra.mxu0 0
  %1699 = vmatprep.subr.bf16.mxu0 0
  %1700 = vmatpush1.bf16.msra.mxu0 0
  %1701 = vmatprep.subr.bf16.mxu0 0
  %1702 = vmatpush1.bf16.msra.mxu0 0
  %1703 = vmatprep.subr.bf16.mxu0 0
  %1704 = vmatpush1.bf16.msra.mxu0 0
  %1705 = vmatprep.mubr.bf16.mxu0 0
  %1706 = vmatmul.mubr.bf16.gmra.mrb[0].mxu0 %v1602
  %v1707 = vpop.f32.mrb[0].mxu0
  %v1708 = vadd.f32 0.0, %v1707
  %v1709 = vpop.f32.mrb[0].mxu0
  %v1710 = vpop.f32.mrb[0].mxu0
  %v1711 = vadd.f32 0.0, %v1710
  %v1712 = vpop.f32.mrb[0].mxu0
  %1713 = vmatprep.mubr.bf16.mxu0 0
  %1714 = vmatmul.mubr.bf16.gmra.mrb[0].mxu0 %v1605
  %v1715 = vpop.f32.mrb[0].mxu0
  %v1716 = vadd.f32 0.0, %v1715
  %v1717 = vpop.f32.mrb[0].mxu0
  %v1718 = vpop.f32.mrb[0].mxu0
  %v1719 = vadd.f32 0.0, %v1718
  %v1720 = vpop.f32.mrb[0].mxu0
  %1721 = vmatprep.mubr.bf16.mxu0 0
  %1722 = vmatmul.mubr.bf16.gmra.mrb[0].mxu0 %v1608
  %v1723 = vpop.f32.mrb[0].mxu0
  %v1724 = vadd.f32 0.0, %v1723
  %v1725 = vpop.f32.mrb[0].mxu0
  %v1726 = vpop.f32.mrb[0].mxu0
  %v1727 = vadd.f32 0.0, %v1726
  %v1728 = vpop.f32.mrb[0].mxu0
  %1729 = vdwg.mxu0
  %vm1730 = vcmp.eq.f32.partialorder %v1708, 0.0
  %vm1731 = vcmp.eq.f32.partialorder %v1711, 0.0
  %vm1732 = vcmp.eq.f32.partialorder %v1716, 0.0
  %vm1733 = vcmp.eq.f32.partialorder %v1719, 0.0
  %vm1734 = vcmp.eq.f32.partialorder %v1724, 0.0
  %vm1735 = vcmp.eq.f32.partialorder %v1727, 0.0
  %v1736 = vsel %vm1730, 1.0, %v1708
  %v1737 = vsel %vm1731, 1.0, %v1711
  %v1738 = vsel %vm1732, 1.0, %v1716
  %v1739 = vsel %vm1733, 1.0, %v1719
  %v1740 = vsel %vm1734, 1.0, %v1724
  %v1741 = vsel %vm1735, 1.0, %v1727
  %v1742 = vrcp.pop %v1736
  %v1743 = vrcp.pop %v1737
  %v1744 = vrcp.pop %v1738
  %v1745 = vrcp.pop %v1739
  %v1746 = vrcp.pop %v1740
  %v1747 = vrcp.pop %v1741
  %v1749 = vsel %vm1416, %v1742, 0
  %v1752 = vsel %vm1416, %v1743, 0
  %v1755 = vsel %vm1416, %v1744, 0
  %v1758 = vsel %vm1416, %v1745, 0
  %v1761 = vsel %vm1416, %v1746, 0
  %v1764 = vsel %vm1416, %v1747, 0
  %1766 = vmatprep.subr.mxu0 0.0
  %1767 = vmatpush1.msra.mxu0 %v1455
  %1768 = vmatprep.subr.mxu0 0.0
  %1769 = vmatpush1.msra.mxu0 0.0
  %1770 = vmatprep.subr.mxu0 0.0
  %1771 = vmatpush1.msra.mxu0 0.0
  %1772 = vmatprep.subr.mxu0 0.0
  %1773 = vmatpush1.msra.mxu0 0.0
  %1774 = vmatprep.subr.mxu0 0.0
  %1775 = vmatpush1.msra.mxu0 0.0
  %1776 = vmatprep.subr.mxu0 0.0
  %1777 = vmatpush1.msra.mxu0 0.0
  %1778 = vmatprep.subr.mxu0 0.0
  %1779 = vmatpush1.msra.mxu0 0.0
  %1780 = vmatprep.subr.mxu0 0.0
  %1781 = vmatpush1.msra.mxu0 0.0
  %1782 = vmatprep.subr.mxu0 0.0
  %1783 = vmatpush1.msra.mxu0 0.0
  %1784 = vmatprep.subr.mxu0 0.0
  %1785 = vmatpush1.msra.mxu0 0.0
  %1786 = vmatprep.subr.mxu0 0.0
  %1787 = vmatpush1.msra.mxu0 0.0
  %1788 = vmatprep.subr.mxu0 0.0
  %1789 = vmatpush1.msra.mxu0 0.0
  %1790 = vmatprep.subr.mxu0 0.0
  %1791 = vmatpush1.msra.mxu0 0.0
  %1792 = vmatprep.subr.mxu0 0.0
  %1793 = vmatpush1.msra.mxu0 0.0
  %1794 = vmatprep.subr.mxu0 0.0
  %1795 = vmatpush1.msra.mxu0 0.0
  %1796 = vmatprep.subr.mxu0 0.0
  %1797 = vmatpush1.msra.mxu0 0.0
  %1798 = vmatprep.subr.mxu0 0.0
  %1799 = vmatpush1.msra.mxu0 0.0
  %1800 = vmatprep.subr.mxu0 0.0
  %1801 = vmatpush1.msra.mxu0 0.0
  %1802 = vmatprep.subr.mxu0 0.0
  %1803 = vmatpush1.msra.mxu0 0.0
  %1804 = vmatprep.subr.mxu0 0.0
  %1805 = vmatpush1.msra.mxu0 0.0
  %1806 = vmatprep.subr.mxu0 0.0
  %1807 = vmatpush1.msra.mxu0 0.0
  %1808 = vmatprep.subr.mxu0 0.0
  %1809 = vmatpush1.msra.mxu0 0.0
  %1810 = vmatprep.subr.mxu0 0.0
  %1811 = vmatpush1.msra.mxu0 0.0
  %1812 = vmatprep.subr.mxu0 0.0
  %1813 = vmatpush1.msra.mxu0 0.0
  %1814 = vmatprep.subr.mxu0 0.0
  %1815 = vmatpush1.msra.mxu0 0.0
  %1816 = vmatprep.subr.mxu0 0.0
  %1817 = vmatpush1.msra.mxu0 0.0
  %1818 = vmatprep.subr.mxu0 0.0
  %1819 = vmatpush1.msra.mxu0 0.0
  %1820 = vmatprep.subr.mxu0 0.0
  %1821 = vmatpush1.msra.mxu0 0.0
  %1822 = vmatprep.subr.mxu0 0.0
  %1823 = vmatpush1.msra.mxu0 0.0
  %1824 = vmatprep.subr.mxu0 0.0
  %1825 = vmatpush1.msra.mxu0 0.0
  %1826 = vmatprep.subr.mxu0 0.0
  %1827 = vmatpush1.msra.mxu0 0.0
  %1828 = vmatprep.subr.mxu0 0.0
  %1829 = vmatpush1.msra.mxu0 0.0
  %1830 = vmatprep.mubr.f32.mxu0 0.0
  %1831 = vmatmul.mubr.f32.gmra.mrb[0].mxu0 %v1749
  %v1832 = vpop.f32.mrb[0].mxu0
  %v1833 = vadd.f32 0.0, %v1832
  %v1834 = vpop.f32.mrb[0].mxu0
  %1835 = vmatprep.mubr.f32.mxu0 0.0
  %1836 = vmatmul.mubr.f32.gmra.mrb[0].mxu0 %v1752
  %v1837 = vpop.f32.mrb[0].mxu0
  %v1838 = vadd.f32 0.0, %v1837
  %v1839 = vpop.f32.mrb[0].mxu0
  %1840 = vmatprep.mubr.f32.mxu0 0.0
  %1841 = vmatmul.mubr.f32.gmra.mrb[0].mxu0 %v1755
  %v1842 = vpop.f32.mrb[0].mxu0
  %v1843 = vadd.f32 0.0, %v1842
  %v1844 = vpop.f32.mrb[0].mxu0
  %1845 = vmatprep.mubr.f32.mxu0 0.0
  %1846 = vmatmul.mubr.f32.gmra.mrb[0].mxu0 %v1758
  %v1847 = vpop.f32.mrb[0].mxu0
  %v1848 = vadd.f32 0.0, %v1847
  %v1849 = vpop.f32.mrb[0].mxu0
  %1850 = vmatprep.mubr.f32.mxu0 0.0
  %1851 = vmatmul.mubr.f32.gmra.mrb[0].mxu0 %v1761
  %v1852 = vpop.f32.mrb[0].mxu0
  %v1853 = vadd.f32 0.0, %v1852
  %v1854 = vpop.f32.mrb[0].mxu0
  %1855 = vmatprep.mubr.f32.mxu0 0.0
  %1856 = vmatmul.mubr.f32.gmra.mrb[0].mxu0 %v1764
  %v1857 = vpop.f32.mrb[0].mxu0
  %v1858 = vadd.f32 0.0, %v1857
  %v1859 = vpop.f32.mrb[0].mxu0
  %1860 = vdwg.mxu0
  %v1861 = vmul.f32 %v1645, %v1833
  %v1862 = vmul.f32 %v1648, %v1838
  %v1863 = vmul.f32 %v1653, %v1843
  %v1864 = vmul.f32 %v1656, %v1848
  %v1865 = vmul.f32 %v1661, %v1853
  %v1866 = vmul.f32 %v1664, %v1858
  %vm1867 = vcmp.gt.f32.partialorder %v1861, 0.0
  %vm1868 = vcmp.gt.f32.partialorder %v1862, 0.0
  %vm1869 = vcmp.gt.f32.partialorder %v1863, 0.0
  %vm1870 = vcmp.gt.f32.partialorder %v1864, 0.0
  %vm1871 = vcmp.gt.f32.partialorder %v1865, 0.0
  %vm1872 = vcmp.gt.f32.partialorder %v1866, 0.0
  %v1873 = vmin.f32 %v1861, 0.0
  %v1874 = vmin.f32 %v1862, 0.0
  %v1875 = vmin.f32 %v1863, 0.0
  %v1876 = vmin.f32 %v1864, 0.0
  %v1877 = vmin.f32 %v1865, 0.0
  %v1878 = vmin.f32 %v1866, 0.0
  %v1879 = vmul.f32 %v1873, 1.442695
  %v1880 = vpow.pop %v1879
  %v1881 = vmul.f32 %v1874, 1.442695
  %v1882 = vpow.pop %v1881
  %v1883 = vmul.f32 %v1875, 1.442695
  %v1884 = vpow.pop %v1883
  %v1885 = vmul.f32 %v1876, 1.442695
  %v1886 = vpow.pop %v1885
  %v1887 = vmul.f32 %v1877, 1.442695
  %v1888 = vpow.pop %v1887
  %v1889 = vmul.f32 %v1878, 1.442695
  %v1890 = vpow.pop %v1889
  %v1891 = vsub.f32 %v1880, 1.0
  %v1892 = vsub.f32 %v1882, 1.0
  %v1893 = vsub.f32 %v1884, 1.0
  %v1894 = vsub.f32 %v1886, 1.0
  %v1895 = vsub.f32 %v1888, 1.0
  %v1896 = vsub.f32 %v1890, 1.0
  %v1897 = vsel %vm1867, %v1861, %v1891
  %v1898 = vsel %vm1868, %v1862, %v1892
  %v1899 = vsel %vm1869, %v1863, %v1893
  %v1900 = vsel %vm1870, %v1864, %v1894
  %v1901 = vsel %vm1871, %v1865, %v1895
  %v1902 = vsel %vm1872, %v1866, %v1896
  %v1903 = vld [vmem:[%s37] sm:$0xff]
  %v1904 = vld [vmem:[%s37 + $0x8] sm:$0xff]
  %v1905 = vld [vmem:[%s37 + $0x10] sm:$0xff]
  %v1906 = vld [vmem:[%s37 + $0x18] sm:$0xff]
  %v1907 = vld [vmem:[%s37 + $0x20] sm:$0xff]
  %v1908 = vld [vmem:[%s37 + $0x28] sm:$0xff]
  %v1909 = vld [vmem:[%s37 + $0x30] sm:$0xff]
  %v1910 = vld [vmem:[%s37 + $0x38] sm:$0xff]
  %v1911 = vld [vmem:[%s39] sm:$0xff]
  %v1912 = vld [vmem:[%s39 + $0x8] sm:$0xff]
  %v1913 = vld [vmem:[%s39 + $0x10] sm:$0xff]
  %v1914 = vld [vmem:[%s39 + $0x18] sm:$0xff]
  %v1915 = vld [vmem:[%s39 + $0x20] sm:$0xff]
  %v1916 = vld [vmem:[%s39 + $0x28] sm:$0xff]
  %v1917 = vld [vmem:[%s39 + $0x30] sm:$0xff]
  %v1918 = vld [vmem:[%s39 + $0x38] sm:$0xff]
  %v1919 = vld [vmem:[%s41] sm:$0xff]
  %v1920 = vld [vmem:[%s41 + $0x8] sm:$0xff]
  %v1921 = vld [vmem:[%s41 + $0x10] sm:$0xff]
  %v1922 = vld [vmem:[%s41 + $0x18] sm:$0xff]
  %v1923 = vld [vmem:[%s41 + $0x20] sm:$0xff]
  %v1924 = vld [vmem:[%s41 + $0x28] sm:$0xff]
  %v1925 = vld [vmem:[%s41 + $0x30] sm:$0xff]
  %v1926 = vld [vmem:[%s41 + $0x38] sm:$0xff]
  %v1927 = vld [vmem:[#allocation2] sm:$0x1]
  %v1928 = vpack.c.bf16 %v1898, %v1897
  %v1929 = vpack.c.bf16 %v1900, %v1899
  %v1930 = vpack.c.bf16 %v1902, %v1901
  %v1931 = vpack.c.bf16 %v1904, %v1903
  %v1932 = vpack.c.bf16 %v1906, %v1905
  %v1933 = vpack.c.bf16 %v1908, %v1907
  %v1934 = vpack.c.bf16 %v1910, %v1909
  %v1936 = vsel %vm696, %v1928, 0
  %v1939 = vsel %vm696, %v1929, 0
  %v1942 = vsel %vm696, %v1930, 0
  %1944 = vmatprep.subr.bf16.mxu0 0
  %1945 = vmatpush1.bf16.msra.mxu0 %v1931
  %1946 = vmatprep.subr.bf16.mxu0 0
  %1947 = vmatpush1.bf16.msra.mxu0 %v1932
  %1948 = vmatprep.subr.bf16.mxu0 0
  %1949 = vmatpush1.bf16.msra.mxu0 %v1933
  %1950 = vmatprep.subr.bf16.mxu0 0
  %1951 = vmatpush1.bf16.msra.mxu0 %v1934
  %1952 = vmatprep.subr.bf16.mxu0 0
  %1953 = vmatpush1.bf16.msra.mxu0 0
  %1954 = vmatprep.subr.bf16.mxu0 0
  %1955 = vmatpush1.bf16.msra.mxu0 0
  %1956 = vmatprep.subr.bf16.mxu0 0
  %1957 = vmatpush1.bf16.msra.mxu0 0
  %1958 = vmatprep.subr.bf16.mxu0 0
  %1959 = vmatpush1.bf16.msra.mxu0 0
  %1960 = vmatprep.subr.bf16.mxu0 0
  %1961 = vmatpush1.bf16.msra.mxu0 0
  %1962 = vmatprep.subr.bf16.mxu0 0
  %1963 = vmatpush1.bf16.msra.mxu0 0
  %1964 = vmatprep.subr.bf16.mxu0 0
  %1965 = vmatpush1.bf16.msra.mxu0 0
  %1966 = vmatprep.subr.bf16.mxu0 0
  %1967 = vmatpush1.bf16.msra.mxu0 0
  %1968 = vmatprep.subr.bf16.mxu0 0
  %1969 = vmatpush1.bf16.msra.mxu0 0
  %1970 = vmatprep.subr.bf16.mxu0 0
  %1971 = vmatpush1.bf16.msra.mxu0 0
  %1972 = vmatprep.subr.bf16.mxu0 0
  %1973 = vmatpush1.bf16.msra.mxu0 0
  %1974 = vmatprep.subr.bf16.mxu0 0
  %1975 = vmatpush1.bf16.msra.mxu0 0
  %1976 = vmatprep.mubr.bf16.mxu0 0
  %1977 = vmatmul.mubr.bf16.gmra.mrb[0].mxu0 %v1936
  %v1978 = vpop.f32.mrb[0].mxu0
  %v1979 = vadd.f32 0.0, %v1978
  %v1980 = vpop.f32.mrb[0].mxu0
  %v1981 = vpop.f32.mrb[0].mxu0
  %v1982 = vadd.f32 0.0, %v1981
  %v1983 = vpop.f32.mrb[0].mxu0
  %1984 = vmatprep.mubr.bf16.mxu0 0
  %1985 = vmatmul.mubr.bf16.gmra.mrb[0].mxu0 %v1939
  %v1986 = vpop.f32.mrb[0].mxu0
  %v1987 = vadd.f32 0.0, %v1986
  %v1988 = vpop.f32.mrb[0].mxu0
  %v1989 = vpop.f32.mrb[0].mxu0
  %v1990 = vadd.f32 0.0, %v1989
  %v1991 = vpop.f32.mrb[0].mxu0
  %1992 = vmatprep.mubr.bf16.mxu0 0
  %1993 = vmatmul.mubr.bf16.gmra.mrb[0].mxu0 %v1942
  %v1994 = vpop.f32.mrb[0].mxu0
  %v1995 = vadd.f32 0.0, %v1994
  %v1996 = vpop.f32.mrb[0].mxu0
  %v1997 = vpop.f32.mrb[0].mxu0
  %v1998 = vadd.f32 0.0, %v1997
  %v1999 = vpop.f32.mrb[0].mxu0
  %2000 = vdwg.mxu0
  %v2001 = vpack.c.bf16 %v1982, %v1979
  %v2002 = vpack.c.bf16 %v1990, %v1987
  %v2003 = vpack.c.bf16 %v1998, %v1995
  %2004 = vmatprep.subr.bf16.mxu0 0
  %2005 = vmatpush1.bf16.msra.mxu0 %v2001
  %2006 = vmatprep.subr.bf16.mxu0 0
  %2007 = vmatpush1.bf16.msra.mxu0 %v2002
  %2008 = vmatprep.subr.bf16.mxu0 0
  %2009 = vmatpush1.bf16.msra.mxu0 %v2003
  %2010 = vmatprep.subr.bf16.mxu0 0
  %2011 = vmatpush1.bf16.msra.mxu0 0
  %2012 = vmatprep.subr.bf16.mxu0 0
  %2013 = vmatpush1.bf16.msra.mxu0 0
  %2014 = vmatprep.subr.bf16.mxu0 0
  %2015 = vmatpush1.bf16.msra.mxu0 0
  %2016 = vmatprep.subr.bf16.mxu0 0
  %2017 = vmatpush1.bf16.msra.mxu0 0
  %2018 = vmatprep.subr.bf16.mxu0 0
  %2019 = vmatpush1.bf16.msra.mxu0 0
  %2020 = vmatprep.subr.bf16.mxu0 0
  %2021 = vmatpush1.bf16.msra.mxu0 0
  %2022 = vmatprep.subr.bf16.mxu0 0
  %2023 = vmatpush1.bf16.msra.mxu0 0
  %2024 = vmatprep.subr.bf16.mxu0 0
  %2025 = vmatpush1.bf16.msra.mxu0 0
  %2026 = vmatprep.subr.bf16.mxu0 0
  %2027 = vmatpush1.bf16.msra.mxu0 0
  %2028 = vmatprep.subr.bf16.mxu0 0
  %2029 = vmatpush1.bf16.msra.mxu0 0
  %2030 = vmatprep.subr.bf16.mxu0 0
  %2031 = vmatpush1.bf16.msra.mxu0 0
  %2032 = vmatprep.subr.bf16.mxu0 0
  %2033 = vmatpush1.bf16.msra.mxu0 0
  %2034 = vmatprep.subr.bf16.mxu0 0
  %2035 = vmatpush1.bf16.msra.mxu0 0
  %2036 = vmatprep.mubr.bf16.mxu0 0
  %2037 = vmatmul.mubr.bf16.gmra.mrb[0].mxu0 %v768
  %v2038 = vpop.f32.mrb[0].mxu0
  %v2039 = vadd.f32 0.0, %v2038
  %v2040 = vpop.f32.mrb[0].mxu0
  %v2041 = vpop.f32.mrb[0].mxu0
  %v2042 = vadd.f32 0.0, %v2041
  %v2043 = vpop.f32.mrb[0].mxu0
  %2044 = vmatprep.mubr.bf16.mxu0 0
  %2045 = vmatmul.mubr.bf16.gmra.mrb[0].mxu0 %v771
  %v2046 = vpop.f32.mrb[0].mxu0
  %v2047 = vadd.f32 0.0, %v2046
  %v2048 = vpop.f32.mrb[0].mxu0
  %v2049 = vpop.f32.mrb[0].mxu0
  %v2050 = vadd.f32 0.0, %v2049
  %v2051 = vpop.f32.mrb[0].mxu0
  %2052 = vmatprep.mubr.bf16.mxu0 0
  %2053 = vmatmul.mubr.bf16.gmra.mrb[0].mxu0 %v774
  %v2054 = vpop.f32.mrb[0].mxu0
  %v2055 = vadd.f32 0.0, %v2054
  %v2056 = vpop.f32.mrb[0].mxu0
  %v2057 = vpop.f32.mrb[0].mxu0
  %v2058 = vadd.f32 0.0, %v2057
  %v2059 = vpop.f32.mrb[0].mxu0
  %2060 = vmatprep.mubr.bf16.mxu0 0
  %2061 = vmatmul.mubr.bf16.gmra.mrb[0].mxu0 %v777
  %v2062 = vpop.f32.mrb[0].mxu0
  %v2063 = vadd.f32 0.0, %v2062
  %v2064 = vpop.f32.mrb[0].mxu0
  %v2065 = vpop.f32.mrb[0].mxu0
  %v2066 = vadd.f32 0.0, %v2065
  %v2067 = vpop.f32.mrb[0].mxu0
  %2068 = vmatprep.mubr.bf16.mxu0 0
  %2069 = vmatmul.mubr.bf16.gmra.mrb[0].mxu0 %v780
  %v2070 = vpop.f32.mrb[0].mxu0
  %v2071 = vadd.f32 0.0, %v2070
  %v2072 = vpop.f32.mrb[0].mxu0
  %v2073 = vpop.f32.mrb[0].mxu0
  %v2074 = vadd.f32 0.0, %v2073
  %v2075 = vpop.f32.mrb[0].mxu0
  %2076 = vmatprep.mubr.bf16.mxu0 0
  %2077 = vmatmul.mubr.bf16.gmra.mrb[0].mxu0 %v783
  %v2078 = vpop.f32.mrb[0].mxu0
  %v2079 = vadd.f32 0.0, %v2078
  %v2080 = vpop.f32.mrb[0].mxu0
  %v2081 = vpop.f32.mrb[0].mxu0
  %v2082 = vadd.f32 0.0, %v2081
  %v2083 = vpop.f32.mrb[0].mxu0
  %2084 = vdwg.mxu0
  %v2086 = vsel %vm696, %v1979, 0
  %v2089 = vsel %vm696, %v1982, 0
  %v2092 = vsel %vm696, %v1987, 0
  %v2095 = vsel %vm696, %v1990, 0
  %v2098 = vsel %vm696, %v1995, 0
  %v2101 = vsel %vm696, %v1998, 0
  %2103 = vmatprep.subr.mxu0 0.0
  %2104 = vmatpush1.msra.mxu0 %v1911
  %2105 = vmatprep.subr.mxu0 0.0
  %2106 = vmatpush1.msra.mxu0 %v1912
  %2107 = vmatprep.subr.mxu0 0.0
  %2108 = vmatpush1.msra.mxu0 %v1913
  %2109 = vmatprep.subr.mxu0 0.0
  %2110 = vmatpush1.msra.mxu0 %v1914
  %2111 = vmatprep.subr.mxu0 0.0
  %2112 = vmatpush1.msra.mxu0 %v1915
  %2113 = vmatprep.subr.mxu0 0.0
  %2114 = vmatpush1.msra.mxu0 %v1916
  %2115 = vmatprep.subr.mxu0 0.0
  %2116 = vmatpush1.msra.mxu0 %v1917
  %2117 = vmatprep.subr.mxu0 0.0
  %2118 = vmatpush1.msra.mxu0 %v1918
  %2119 = vmatprep.subr.mxu0 0.0
  %2120 = vmatpush1.msra.mxu0 0.0
  %2121 = vmatprep.subr.mxu0 0.0
  %2122 = vmatpush1.msra.mxu0 0.0
  %2123 = vmatprep.subr.mxu0 0.0
  %2124 = vmatpush1.msra.mxu0 0.0
  %2125 = vmatprep.subr.mxu0 0.0
  %2126 = vmatpush1.msra.mxu0 0.0
  %2127 = vmatprep.subr.mxu0 0.0
  %2128 = vmatpush1.msra.mxu0 0.0
  %2129 = vmatprep.subr.mxu0 0.0
  %2130 = vmatpush1.msra.mxu0 0.0
  %2131 = vmatprep.subr.mxu0 0.0
  %2132 = vmatpush1.msra.mxu0 0.0
  %2133 = vmatprep.subr.mxu0 0.0
  %2134 = vmatpush1.msra.mxu0 0.0
  %2135 = vmatprep.subr.mxu0 0.0
  %2136 = vmatpush1.msra.mxu0 0.0
  %2137 = vmatprep.subr.mxu0 0.0
  %2138 = vmatpush1.msra.mxu0 0.0
  %2139 = vmatprep.subr.mxu0 0.0
  %2140 = vmatpush1.msra.mxu0 0.0
  %2141 = vmatprep.subr.mxu0 0.0
  %2142 = vmatpush1.msra.mxu0 0.0
  %2143 = vmatprep.subr.mxu0 0.0
  %2144 = vmatpush1.msra.mxu0 0.0
  %2145 = vmatprep.subr.mxu0 0.0
  %2146 = vmatpush1.msra.mxu0 0.0
  %2147 = vmatprep.subr.mxu0 0.0
  %2148 = vmatpush1.msra.mxu0 0.0
  %2149 = vmatprep.subr.mxu0 0.0
  %2150 = vmatpush1.msra.mxu0 0.0
  %2151 = vmatprep.subr.mxu0 0.0
  %2152 = vmatpush1.msra.mxu0 0.0
  %2153 = vmatprep.subr.mxu0 0.0
  %2154 = vmatpush1.msra.mxu0 0.0
  %2155 = vmatprep.subr.mxu0 0.0
  %2156 = vmatpush1.msra.mxu0 0.0
  %2157 = vmatprep.subr.mxu0 0.0
  %2158 = vmatpush1.msra.mxu0 0.0
  %2159 = vmatprep.subr.mxu0 0.0
  %2160 = vmatpush1.msra.mxu0 0.0
  %2161 = vmatprep.subr.mxu0 0.0
  %2162 = vmatpush1.msra.mxu0 0.0
  %2163 = vmatprep.subr.mxu0 0.0
  %2164 = vmatpush1.msra.mxu0 0.0
  %2165 = vmatprep.subr.mxu0 0.0
  %2166 = vmatpush1.msra.mxu0 0.0
  %2167 = vmatprep.mubr.f32.mxu0 0.0
  %2168 = vmatmul.mubr.f32.gmra.mrb[0].mxu0 %v2086
  %v2169 = vpop.f32.mrb[0].mxu0
  %v2170 = vadd.f32 0.0, %v2169
  %v2171 = vpop.f32.mrb[0].mxu0
  %2172 = vmatprep.mubr.f32.mxu0 0.0
  %2173 = vmatmul.mubr.f32.gmra.mrb[0].mxu0 %v2089
  %v2174 = vpop.f32.mrb[0].mxu0
  %v2175 = vadd.f32 0.0, %v2174
  %v2176 = vpop.f32.mrb[0].mxu0
  %2177 = vmatprep.mubr.f32.mxu0 0.0
  %2178 = vmatmul.mubr.f32.gmra.mrb[0].mxu0 %v2092
  %v2179 = vpop.f32.mrb[0].mxu0
  %v2180 = vadd.f32 0.0, %v2179
  %v2181 = vpop.f32.mrb[0].mxu0
  %2182 = vmatprep.mubr.f32.mxu0 0.0
  %2183 = vmatmul.mubr.f32.gmra.mrb[0].mxu0 %v2095
  %v2184 = vpop.f32.mrb[0].mxu0
  %v2185 = vadd.f32 0.0, %v2184
  %v2186 = vpop.f32.mrb[0].mxu0
  %2187 = vmatprep.mubr.f32.mxu0 0.0
  %2188 = vmatmul.mubr.f32.gmra.mrb[0].mxu0 %v2098
  %v2189 = vpop.f32.mrb[0].mxu0
  %v2190 = vadd.f32 0.0, %v2189
  %v2191 = vpop.f32.mrb[0].mxu0
  %2192 = vmatprep.mubr.f32.mxu0 0.0
  %2193 = vmatmul.mubr.f32.gmra.mrb[0].mxu0 %v2101
  %v2194 = vpop.f32.mrb[0].mxu0
  %v2195 = vadd.f32 0.0, %v2194
  %v2196 = vpop.f32.mrb[0].mxu0
  %2197 = vdwg.mxu0
  %v2198 = vpack.c.bf16 %v2175, %v2170
  %v2199 = vpack.c.bf16 %v2185, %v2180
  %v2200 = vpack.c.bf16 %v2195, %v2190
  %v2202 = vsel %vm696, %v2039, 0
  %v2205 = vsel %vm696, %v2042, 0
  %v2208 = vsel %vm696, %v2047, 0
  %v2211 = vsel %vm696, %v2050, 0
  %v2214 = vsel %vm696, %v2055, 0
  %v2217 = vsel %vm696, %v2058, 0
  %v2220 = vsel %vm696, %v2063, 0
  %v2223 = vsel %vm696, %v2066, 0
  %v2226 = vsel %vm696, %v2071, 0
  %v2229 = vsel %vm696, %v2074, 0
  %v2232 = vsel %vm696, %v2079, 0
  %v2235 = vsel %vm696, %v2082, 0
  %2237 = vmatprep.subr.mxu0 0.0
  %2238 = vmatpush1.msra.mxu0 %v1919
  %2239 = vmatprep.subr.mxu0 0.0
  %2240 = vmatpush1.msra.mxu0 %v1920
  %2241 = vmatprep.subr.mxu0 0.0
  %2242 = vmatpush1.msra.mxu0 %v1921
  %2243 = vmatprep.subr.mxu0 0.0
  %2244 = vmatpush1.msra.mxu0 %v1922
  %2245 = vmatprep.subr.mxu0 0.0
  %2246 = vmatpush1.msra.mxu0 %v1923
  %2247 = vmatprep.subr.mxu0 0.0
  %2248 = vmatpush1.msra.mxu0 %v1924
  %2249 = vmatprep.subr.mxu0 0.0
  %2250 = vmatpush1.msra.mxu0 %v1925
  %2251 = vmatprep.subr.mxu0 0.0
  %2252 = vmatpush1.msra.mxu0 %v1926
  %2253 = vmatprep.subr.mxu0 0.0
  %2254 = vmatpush1.msra.mxu0 0.0
  %2255 = vmatprep.subr.mxu0 0.0
  %2256 = vmatpush1.msra.mxu0 0.0
  %2257 = vmatprep.subr.mxu0 0.0
  %2258 = vmatpush1.msra.mxu0 0.0
  %2259 = vmatprep.subr.mxu0 0.0
  %2260 = vmatpush1.msra.mxu0 0.0
  %2261 = vmatprep.subr.mxu0 0.0
  %2262 = vmatpush1.msra.mxu0 0.0
  %2263 = vmatprep.subr.mxu0 0.0
  %2264 = vmatpush1.msra.mxu0 0.0
  %2265 = vmatprep.subr.mxu0 0.0
  %2266 = vmatpush1.msra.mxu0 0.0
  %2267 = vmatprep.subr.mxu0 0.0
  %2268 = vmatpush1.msra.mxu0 0.0
  %2269 = vmatprep.subr.mxu0 0.0
  %2270 = vmatpush1.msra.mxu0 0.0
  %2271 = vmatprep.subr.mxu0 0.0
  %2272 = vmatpush1.msra.mxu0 0.0
  %2273 = vmatprep.subr.mxu0 0.0
  %2274 = vmatpush1.msra.mxu0 0.0
  %2275 = vmatprep.subr.mxu0 0.0
  %2276 = vmatpush1.msra.mxu0 0.0
  %2277 = vmatprep.subr.mxu0 0.0
  %2278 = vmatpush1.msra.mxu0 0.0
  %2279 = vmatprep.subr.mxu0 0.0
  %2280 = vmatpush1.msra.mxu0 0.0
  %2281 = vmatprep.subr.mxu0 0.0
  %2282 = vmatpush1.msra.mxu0 0.0
  %2283 = vmatprep.subr.mxu0 0.0
  %2284 = vmatpush1.msra.mxu0 0.0
  %2285 = vmatprep.subr.mxu0 0.0
  %2286 = vmatpush1.msra.mxu0 0.0
  %2287 = vmatprep.subr.mxu0 0.0
  %2288 = vmatpush1.msra.mxu0 0.0
  %2289 = vmatprep.subr.mxu0 0.0
  %2290 = vmatpush1.msra.mxu0 0.0
  %2291 = vmatprep.subr.mxu0 0.0
  %2292 = vmatpush1.msra.mxu0 0.0
  %2293 = vmatprep.subr.mxu0 0.0
  %2294 = vmatpush1.msra.mxu0 0.0
  %2295 = vmatprep.subr.mxu0 0.0
  %2296 = vmatpush1.msra.mxu0 0.0
  %2297 = vmatprep.subr.mxu0 0.0
  %2298 = vmatpush1.msra.mxu0 0.0
  %2299 = vmatprep.subr.mxu0 0.0
  %2300 = vmatpush1.msra.mxu0 0.0
  %2301 = vmatprep.mubr.f32.mxu0 0.0
  %2302 = vmatmul.mubr.f32.gmra.mrb[0].mxu0 %v2202
  %v2303 = vpop.f32.mrb[0].mxu0
  %v2304 = vadd.f32 0.0, %v2303
  %v2305 = vpop.f32.mrb[0].mxu0
  %2306 = vmatprep.mubr.f32.mxu0 0.0
  %2307 = vmatmul.mubr.f32.gmra.mrb[0].mxu0 %v2205
  %v2308 = vpop.f32.mrb[0].mxu0
  %v2309 = vadd.f32 0.0, %v2308
  %v2310 = vpop.f32.mrb[0].mxu0
  %2311 = vmatprep.mubr.f32.mxu0 0.0
  %2312 = vmatmul.mubr.f32.gmra.mrb[0].mxu0 %v2208
  %v2313 = vpop.f32.mrb[0].mxu0
  %v2314 = vadd.f32 0.0, %v2313
  %v2315 = vpop.f32.mrb[0].mxu0
  %2316 = vmatprep.mubr.f32.mxu0 0.0
  %2317 = vmatmul.mubr.f32.gmra.mrb[0].mxu0 %v2211
  %v2318 = vpop.f32.mrb[0].mxu0
  %v2319 = vadd.f32 0.0, %v2318
  %v2320 = vpop.f32.mrb[0].mxu0
  %2321 = vmatprep.mubr.f32.mxu0 0.0
  %2322 = vmatmul.mubr.f32.gmra.mrb[0].mxu0 %v2214
  %v2323 = vpop.f32.mrb[0].mxu0
  %v2324 = vadd.f32 0.0, %v2323
  %v2325 = vpop.f32.mrb[0].mxu0
  %2326 = vmatprep.mubr.f32.mxu0 0.0
  %2327 = vmatmul.mubr.f32.gmra.mrb[0].mxu0 %v2217
  %v2328 = vpop.f32.mrb[0].mxu0
  %v2329 = vadd.f32 0.0, %v2328
  %v2330 = vpop.f32.mrb[0].mxu0
  %2331 = vmatprep.mubr.f32.mxu0 0.0
  %2332 = vmatmul.mubr.f32.gmra.mrb[0].mxu0 %v2220
  %v2333 = vpop.f32.mrb[0].mxu0
  %v2334 = vadd.f32 0.0, %v2333
  %v2335 = vpop.f32.mrb[0].mxu0
  %2336 = vmatprep.mubr.f32.mxu0 0.0
  %2337 = vmatmul.mubr.f32.gmra.mrb[0].mxu0 %v2223
  %v2338 = vpop.f32.mrb[0].mxu0
  %v2339 = vadd.f32 0.0, %v2338
  %v2340 = vpop.f32.mrb[0].mxu0
  %2341 = vmatprep.mubr.f32.mxu0 0.0
  %2342 = vmatmul.mubr.f32.gmra.mrb[0].mxu0 %v2226
  %v2343 = vpop.f32.mrb[0].mxu0
  %v2344 = vadd.f32 0.0, %v2343
  %v2345 = vpop.f32.mrb[0].mxu0
  %2346 = vmatprep.mubr.f32.mxu0 0.0
  %2347 = vmatmul.mubr.f32.gmra.mrb[0].mxu0 %v2229
  %v2348 = vpop.f32.mrb[0].mxu0
  %v2349 = vadd.f32 0.0, %v2348
  %v2350 = vpop.f32.mrb[0].mxu0
  %2351 = vmatprep.mubr.f32.mxu0 0.0
  %2352 = vmatmul.mubr.f32.gmra.mrb[0].mxu0 %v2232
  %v2353 = vpop.f32.mrb[0].mxu0
  %v2354 = vadd.f32 0.0, %v2353
  %v2355 = vpop.f32.mrb[0].mxu0
  %2356 = vmatprep.mubr.f32.mxu0 0.0
  %2357 = vmatmul.mubr.f32.gmra.mrb[0].mxu0 %v2235
  %v2358 = vpop.f32.mrb[0].mxu0
  %v2359 = vadd.f32 0.0, %v2358
  %v2360 = vpop.f32.mrb[0].mxu0
  %2361 = vdwg.mxu0
  %2362 = vmatprep.subr.bf16.mxu0 0
  %2363 = vmatpush1.bf16.msra.mxu0 %v2198
  %2364 = vmatprep.subr.bf16.mxu0 0
  %2365 = vmatpush1.bf16.msra.mxu0 %v2199
  %2366 = vmatprep.subr.bf16.mxu0 0
  %2367 = vmatpush1.bf16.msra.mxu0 %v2200
  %2368 = vmatprep.subr.bf16.mxu0 0
  %2369 = vmatpush1.bf16.msra.mxu0 0
  %2370 = vmatprep.subr.bf16.mxu0 0
  %2371 = vmatpush1.bf16.msra.mxu0 0
  %2372 = vmatprep.subr.bf16.mxu0 0
  %2373 = vmatpush1.bf16.msra.mxu0 0
  %2374 = vmatprep.subr.bf16.mxu0 0
  %2375 = vmatpush1.bf16.msra.mxu0 0
  %2376 = vmatprep.subr.bf16.mxu0 0
  %2377 = vmatpush1.bf16.msra.mxu0 0
  %2378 = vmatprep.subr.bf16.mxu0 0
  %2379 = vmatpush1.bf16.msra.mxu0 0
  %2380 = vmatprep.subr.bf16.mxu0 0
  %2381 = vmatpush1.bf16.msra.mxu0 0
  %2382 = vmatprep.subr.bf16.mxu0 0
  %2383 = vmatpush1.bf16.msra.mxu0 0
  %2384 = vmatprep.subr.bf16.mxu0 0
  %2385 = vmatpush1.bf16.msra.mxu0 0
  %2386 = vmatprep.subr.bf16.mxu0 0
  %2387 = vmatpush1.bf16.msra.mxu0 0
  %2388 = vmatprep.subr.bf16.mxu0 0
  %2389 = vmatpush1.bf16.msra.mxu0 0
  %2390 = vmatprep.subr.bf16.mxu0 0
  %2391 = vmatpush1.bf16.msra.mxu0 0
  %2392 = vmatprep.subr.bf16.mxu0 0
  %2393 = vmatpush1.bf16.msra.mxu0 0
  %2394 = vmatprep.mubr.bf16.mxu0 0
  %2395 = vmatmul.mubr.bf16.gmra.mrb[0].mxu0 %v1144
  %v2396 = vpop.f32.mrb[0].mxu0
  %v2397 = vadd.f32 %v2304, %v2396
  %v2398 = vpop.f32.mrb[0].mxu0
  %v2399 = vpop.f32.mrb[0].mxu0
  %v2400 = vadd.f32 %v2309, %v2399
  %v2401 = vpop.f32.mrb[0].mxu0
  %2402 = vmatprep.mubr.bf16.mxu0 0
  %2403 = vmatmul.mubr.bf16.gmra.mrb[0].mxu0 %v1147
  %v2404 = vpop.f32.mrb[0].mxu0
  %v2405 = vadd.f32 %v2314, %v2404
  %v2406 = vpop.f32.mrb[0].mxu0
  %v2407 = vpop.f32.mrb[0].mxu0
  %v2408 = vadd.f32 %v2319, %v2407
  %v2409 = vpop.f32.mrb[0].mxu0
  %2410 = vmatprep.mubr.bf16.mxu0 0
  %2411 = vmatmul.mubr.bf16.gmra.mrb[0].mxu0 %v1150
  %v2412 = vpop.f32.mrb[0].mxu0
  %v2413 = vadd.f32 %v2324, %v2412
  %v2414 = vpop.f32.mrb[0].mxu0
  %v2415 = vpop.f32.mrb[0].mxu0
  %v2416 = vadd.f32 %v2329, %v2415
  %v2417 = vpop.f32.mrb[0].mxu0
  %2418 = vmatprep.mubr.bf16.mxu0 0
  %2419 = vmatmul.mubr.bf16.gmra.mrb[0].mxu0 %v1153
  %v2420 = vpop.f32.mrb[0].mxu0
  %v2421 = vadd.f32 %v2334, %v2420
  %v2422 = vpop.f32.mrb[0].mxu0
  %v2423 = vpop.f32.mrb[0].mxu0
  %v2424 = vadd.f32 %v2339, %v2423
  %v2425 = vpop.f32.mrb[0].mxu0
  %2426 = vmatprep.mubr.bf16.mxu0 0
  %2427 = vmatmul.mubr.bf16.gmra.mrb[0].mxu0 %v1156
  %v2428 = vpop.f32.mrb[0].mxu0
  %v2429 = vadd.f32 %v2344, %v2428
  %v2430 = vpop.f32.mrb[0].mxu0
  %v2431 = vpop.f32.mrb[0].mxu0
  %v2432 = vadd.f32 %v2349, %v2431
  %v2433 = vpop.f32.mrb[0].mxu0
  %2434 = vmatprep.mubr.bf16.mxu0 0
  %2435 = vmatmul.mubr.bf16.gmra.mrb[0].mxu0 %v1159
  %v2436 = vpop.f32.mrb[0].mxu0
  %v2437 = vadd.f32 %v2354, %v2436
  %v2438 = vpop.f32.mrb[0].mxu0
  %v2439 = vpop.f32.mrb[0].mxu0
  %v2440 = vadd.f32 %v2359, %v2439
  %v2441 = vpop.f32.mrb[0].mxu0
  %2442 = vdwg.mxu0
  %v2444 = vlaneseq
  %v2445 = vshrl.u32 %v2444, 7
  %v2446 = vsub.s32 0, %v2445
  %v2447 = vrot.slane %v1927, %v2446
  %v2449 = vmul.f32 %v652, %v2447
  %v2450 = vmul.f32 %v653, %v2447
  %v2451 = vmul.f32 %v654, %v2447
  %v2452 = vmul.f32 %v655, %v2447
  %v2453 = vmul.f32 %v656, %v2447
  %v2454 = vmul.f32 %v657, %v2447
  %v2455 = vmul.f32 %v658, %v2447
  %v2456 = vmul.f32 %v659, %v2447
  %v2457 = vmul.f32 %v660, %v2447
  %v2458 = vmul.f32 %v661, %v2447
  %v2459 = vmul.f32 %v662, %v2447
  %v2460 = vmul.f32 %v663, %v2447
  %v2461 = vadd.f32 %v2397, %v2449
  %v2462 = vadd.f32 %v2400, %v2450
  %v2463 = vadd.f32 %v2405, %v2451
  %v2464 = vadd.f32 %v2408, %v2452
  %v2465 = vadd.f32 %v2413, %v2453
  %v2466 = vadd.f32 %v2416, %v2454
  %v2467 = vadd.f32 %v2421, %v2455
  %v2468 = vadd.f32 %v2424, %v2456
  %v2469 = vadd.f32 %v2429, %v2457
  %v2470 = vadd.f32 %v2432, %v2458
  %v2471 = vadd.f32 %v2437, %v2459
  %v2472 = vadd.f32 %v2440, %v2460
  %vm2473 = vcmp.gt.f32.partialorder %v2461, 0.0
  %vm2474 = vcmp.gt.f32.partialorder %v2462, 0.0
  %vm2475 = vcmp.gt.f32.partialorder %v2463, 0.0
  %vm2476 = vcmp.gt.f32.partialorder %v2464, 0.0
  %vm2477 = vcmp.gt.f32.partialorder %v2465, 0.0
  %vm2478 = vcmp.gt.f32.partialorder %v2466, 0.0
  %vm2479 = vcmp.gt.f32.partialorder %v2467, 0.0
  %vm2480 = vcmp.gt.f32.partialorder %v2468, 0.0
  %vm2481 = vcmp.gt.f32.partialorder %v2469, 0.0
  %vm2482 = vcmp.gt.f32.partialorder %v2470, 0.0
  %vm2483 = vcmp.gt.f32.partialorder %v2471, 0.0
  %vm2484 = vcmp.gt.f32.partialorder %v2472, 0.0
  %v2485 = vmul.f32 %v2461, 0.2
  %v2486 = vmul.f32 %v2462, 0.2
  %v2487 = vmul.f32 %v2463, 0.2
  %v2488 = vmul.f32 %v2464, 0.2
  %v2489 = vmul.f32 %v2465, 0.2
  %v2490 = vmul.f32 %v2466, 0.2
  %v2491 = vmul.f32 %v2467, 0.2
  %v2492 = vmul.f32 %v2468, 0.2
  %v2493 = vmul.f32 %v2469, 0.2
  %v2494 = vmul.f32 %v2470, 0.2
  %v2495 = vmul.f32 %v2471, 0.2
  %v2496 = vmul.f32 %v2472, 0.2
  %v2497 = vsel %vm2473, %v2461, %v2485
  %v2498 = vsel %vm2474, %v2462, %v2486
  %v2499 = vsel %vm2475, %v2463, %v2487
  %v2500 = vsel %vm2476, %v2464, %v2488
  %v2501 = vsel %vm2477, %v2465, %v2489
  %v2502 = vsel %vm2478, %v2466, %v2490
  %v2503 = vsel %vm2479, %v2467, %v2491
  %v2504 = vsel %vm2480, %v2468, %v2492
  %v2505 = vsel %vm2481, %v2469, %v2493
  %v2506 = vsel %vm2482, %v2470, %v2494
  %v2507 = vsel %vm2483, %v2471, %v2495
  %v2508 = vsel %vm2484, %v2472, %v2496
  %v2509 = vsub.f32 0.0, %v2497
  %v2510 = vsub.f32 0.0, %v2498
  %v2511 = vsub.f32 0.0, %v2499
  %v2512 = vsub.f32 0.0, %v2500
  %v2513 = vsub.f32 0.0, %v2501
  %v2514 = vsub.f32 0.0, %v2502
  %v2515 = vsub.f32 0.0, %v2503
  %v2516 = vsub.f32 0.0, %v2504
  %v2517 = vsub.f32 0.0, %v2505
  %v2518 = vsub.f32 0.0, %v2506
  %v2519 = vsub.f32 0.0, %v2507
  %v2520 = vsub.f32 0.0, %v2508
  %v2521 = vmin.f32 %v2509, 60.0
  %v2522 = vmin.f32 %v2510, 60.0
  %v2523 = vmin.f32 %v2511, 60.0
  %v2524 = vmin.f32 %v2512, 60.0
  %v2525 = vmin.f32 %v2513, 60.0
  %v2526 = vmin.f32 %v2514, 60.0
  %v2527 = vmin.f32 %v2515, 60.0
  %v2528 = vmin.f32 %v2516, 60.0
  %v2529 = vmin.f32 %v2517, 60.0
  %v2530 = vmin.f32 %v2518, 60.0
  %v2531 = vmin.f32 %v2519, 60.0
  %v2532 = vmin.f32 %v2520, 60.0
  %v2533 = vmul.f32 %v2521, 1.442695
  %v2534 = vpow.pop %v2533
  %v2535 = vmul.f32 %v2522, 1.442695
  %v2536 = vpow.pop %v2535
  %v2537 = vmul.f32 %v2523, 1.442695
  %v2538 = vpow.pop %v2537
  %v2539 = vmul.f32 %v2524, 1.442695
  %v2540 = vpow.pop %v2539
  %v2541 = vmul.f32 %v2525, 1.442695
  %v2542 = vpow.pop %v2541
  %v2543 = vmul.f32 %v2526, 1.442695
  %v2544 = vpow.pop %v2543
  %v2545 = vmul.f32 %v2527, 1.442695
  %v2546 = vpow.pop %v2545
  %v2547 = vmul.f32 %v2528, 1.442695
  %v2548 = vpow.pop %v2547
  %v2549 = vmul.f32 %v2529, 1.442695
  %v2550 = vpow.pop %v2549
  %v2551 = vmul.f32 %v2530, 1.442695
  %v2552 = vpow.pop %v2551
  %v2553 = vmul.f32 %v2531, 1.442695
  %v2554 = vpow.pop %v2553
  %v2555 = vmul.f32 %v2532, 1.442695
  %v2556 = vpow.pop %v2555
  %2558 = vset.pattern.permute.xlu0 0
  %2559 = vperm.xlu0 %2558, %v2534
  %v2560 = vpop.permute.xlu0 %2559
  %2563 = vset.pattern.permute.xlu0 0
  %2564 = vperm.xlu0 %2563, %v2536
  %v2565 = vpop.permute.xlu0 %2564
  %2568 = vset.pattern.permute.xlu0 0
  %2569 = vperm.xlu0 %2568, %v2538
  %v2570 = vpop.permute.xlu0 %2569
  %2573 = vset.pattern.permute.xlu0 0
  %2574 = vperm.xlu0 %2573, %v2540
  %v2575 = vpop.permute.xlu0 %2574
  %2578 = vset.pattern.permute.xlu0 0
  %2579 = vperm.xlu0 %2578, %v2542
  %v2580 = vpop.permute.xlu0 %2579
  %2583 = vset.pattern.permute.xlu0 0
  %2584 = vperm.xlu0 %2583, %v2544
  %v2585 = vpop.permute.xlu0 %2584
  %2588 = vset.pattern.permute.xlu0 0
  %2589 = vperm.xlu0 %2588, %v2546
  %v2590 = vpop.permute.xlu0 %2589
  %2593 = vset.pattern.permute.xlu0 0
  %2594 = vperm.xlu0 %2593, %v2548
  %v2595 = vpop.permute.xlu0 %2594
  %2598 = vset.pattern.permute.xlu0 0
  %2599 = vperm.xlu0 %2598, %v2550
  %v2600 = vpop.permute.xlu0 %2599
  %2603 = vset.pattern.permute.xlu0 0
  %2604 = vperm.xlu0 %2603, %v2552
  %v2605 = vpop.permute.xlu0 %2604
  %2608 = vset.pattern.permute.xlu0 0
  %2609 = vperm.xlu0 %2608, %v2554
  %v2610 = vpop.permute.xlu0 %2609
  %2613 = vset.pattern.permute.xlu0 0
  %2614 = vperm.xlu0 %2613, %v2556
  %v2615 = vpop.permute.xlu0 %2614
  %v2617 = vmul.f32 %v2560, %v2039
  %v2618 = vmul.f32 %v2565, %v2042
  %v2619 = vmul.f32 %v2570, %v2047
  %v2620 = vmul.f32 %v2575, %v2050
  %v2621 = vmul.f32 %v2580, %v2055
  %v2622 = vmul.f32 %v2585, %v2058
  %v2623 = vmul.f32 %v2590, %v2063
  %v2624 = vmul.f32 %v2595, %v2066
  %v2625 = vmul.f32 %v2600, %v2071
  %v2626 = vmul.f32 %v2605, %v2074
  %v2627 = vmul.f32 %v2610, %v2079
  %v2628 = vmul.f32 %v2615, %v2082
  %v2629 = vpack.c.bf16 %v2618, %v2617
  %v2630 = vpack.c.bf16 %v2620, %v2619
  %v2631 = vpack.c.bf16 %v2622, %v2621
  %v2632 = vpack.c.bf16 %v2624, %v2623
  %v2633 = vpack.c.bf16 %v2626, %v2625
  %v2634 = vpack.c.bf16 %v2628, %v2627
  %2635 = vmatprep.subr.bf16.mxu0 0
  %2636 = vmatpush1.bf16.msra.mxu0 %v2629
  %2637 = vmatprep.subr.bf16.mxu0 0
  %2638 = vmatpush1.bf16.msra.mxu0 %v2630
  %2639 = vmatprep.subr.bf16.mxu0 0
  %2640 = vmatpush1.bf16.msra.mxu0 %v2631
  %2641 = vmatprep.subr.bf16.mxu0 0
  %2642 = vmatpush1.bf16.msra.mxu0 %v2632
  %2643 = vmatprep.subr.bf16.mxu0 0
  %2644 = vmatpush1.bf16.msra.mxu0 %v2633
  %2645 = vmatprep.subr.bf16.mxu0 0
  %2646 = vmatpush1.bf16.msra.mxu0 %v2634
  %2647 = vmatprep.subr.bf16.mxu0 0
  %2648 = vmatpush1.bf16.msra.mxu0 0
  %2649 = vmatprep.subr.bf16.mxu0 0
  %2650 = vmatpush1.bf16.msra.mxu0 0
  %2651 = vmatprep.subr.bf16.mxu0 0
  %2652 = vmatpush1.bf16.msra.mxu0 0
  %2653 = vmatprep.subr.bf16.mxu0 0
  %2654 = vmatpush1.bf16.msra.mxu0 0
  %2655 = vmatprep.subr.bf16.mxu0 0
  %2656 = vmatpush1.bf16.msra.mxu0 0
  %2657 = vmatprep.subr.bf16.mxu0 0
  %2658 = vmatpush1.bf16.msra.mxu0 0
  %2659 = vmatprep.subr.bf16.mxu0 0
  %2660 = vmatpush1.bf16.msra.mxu0 0
  %2661 = vmatprep.subr.bf16.mxu0 0
  %2662 = vmatpush1.bf16.msra.mxu0 0
  %2663 = vmatprep.subr.bf16.mxu0 0
  %2664 = vmatpush1.bf16.msra.mxu0 0
  %2665 = vmatprep.subr.bf16.mxu0 0
  %2666 = vmatpush1.bf16.msra.mxu0 0
  %2667 = vmatprep.mubr.bf16.mxu0 0
  %2668 = vmatmul.mubr.bf16.gmra.mrb[0].mxu0 %v1602
  %v2669 = vpop.f32.mrb[0].mxu0
  %v2670 = vadd.f32 0.0, %v2669
  %v2671 = vpop.f32.mrb[0].mxu0
  %v2672 = vpop.f32.mrb[0].mxu0
  %v2673 = vadd.f32 0.0, %v2672
  %v2674 = vpop.f32.mrb[0].mxu0
  %2675 = vmatprep.mubr.bf16.mxu0 0
  %2676 = vmatmul.mubr.bf16.gmra.mrb[0].mxu0 %v1605
  %v2677 = vpop.f32.mrb[0].mxu0
  %v2678 = vadd.f32 0.0, %v2677
  %v2679 = vpop.f32.mrb[0].mxu0
  %v2680 = vpop.f32.mrb[0].mxu0
  %v2681 = vadd.f32 0.0, %v2680
  %v2682 = vpop.f32.mrb[0].mxu0
  %2683 = vmatprep.mubr.bf16.mxu0 0
  %2684 = vmatmul.mubr.bf16.gmra.mrb[0].mxu0 %v1608
  %v2685 = vpop.f32.mrb[0].mxu0
  %v2686 = vadd.f32 0.0, %v2685
  %v2687 = vpop.f32.mrb[0].mxu0
  %v2688 = vpop.f32.mrb[0].mxu0
  %v2689 = vadd.f32 0.0, %v2688
  %v2690 = vpop.f32.mrb[0].mxu0
  %2691 = vdwg.mxu0
  %v2692 = vpack.c.bf16 %v2536, %v2534
  %v2693 = vpack.c.bf16 %v2540, %v2538
  %v2694 = vpack.c.bf16 %v2544, %v2542
  %v2695 = vpack.c.bf16 %v2548, %v2546
  %v2696 = vpack.c.bf16 %v2552, %v2550
  %v2697 = vpack.c.bf16 %v2556, %v2554
  %2698 = vmatprep.subr.bf16.mxu0 0
  %2699 = vmatpush1.bf16.msra.mxu0 %v2692
  %2700 = vmatprep.subr.bf16.mxu0 0
  %2701 = vmatpush1.bf16.msra.mxu0 %v2693
  %2702 = vmatprep.subr.bf16.mxu0 0
  %2703 = vmatpush1.bf16.msra.mxu0 %v2694
  %2704 = vmatprep.subr.bf16.mxu0 0
  %2705 = vmatpush1.bf16.msra.mxu0 %v2695
  %2706 = vmatprep.subr.bf16.mxu0 0
  %2707 = vmatpush1.bf16.msra.mxu0 %v2696
  %2708 = vmatprep.subr.bf16.mxu0 0
  %2709 = vmatpush1.bf16.msra.mxu0 %v2697
  %2710 = vmatprep.subr.bf16.mxu0 0
  %2711 = vmatpush1.bf16.msra.mxu0 0
  %2712 = vmatprep.subr.bf16.mxu0 0
  %2713 = vmatpush1.bf16.msra.mxu0 0
  %2714 = vmatprep.subr.bf16.mxu0 0
  %2715 = vmatpush1.bf16.msra.mxu0 0
  %2716 = vmatprep.subr.bf16.mxu0 0
  %2717 = vmatpush1.bf16.msra.mxu0 0
  %2718 = vmatprep.subr.bf16.mxu0 0
  %2719 = vmatpush1.bf16.msra.mxu0 0
  %2720 = vmatprep.subr.bf16.mxu0 0
  %2721 = vmatpush1.bf16.msra.mxu0 0
  %2722 = vmatprep.subr.bf16.mxu0 0
  %2723 = vmatpush1.bf16.msra.mxu0 0
  %2724 = vmatprep.subr.bf16.mxu0 0
  %2725 = vmatpush1.bf16.msra.mxu0 0
  %2726 = vmatprep.subr.bf16.mxu0 0
  %2727 = vmatpush1.bf16.msra.mxu0 0
  %2728 = vmatprep.subr.bf16.mxu0 0
  %2729 = vmatpush1.bf16.msra.mxu0 0
  %2730 = vmatprep.mubr.bf16.mxu0 0
  %2731 = vmatmul.mubr.bf16.gmra.mrb[0].mxu0 %v1602
  %v2732 = vpop.f32.mrb[0].mxu0
  %v2733 = vadd.f32 0.0, %v2732
  %v2734 = vpop.f32.mrb[0].mxu0
  %v2735 = vpop.f32.mrb[0].mxu0
  %v2736 = vadd.f32 0.0, %v2735
  %v2737 = vpop.f32.mrb[0].mxu0
  %2738 = vmatprep.mubr.bf16.mxu0 0
  %2739 = vmatmul.mubr.bf16.gmra.mrb[0].mxu0 %v1605
  %v2740 = vpop.f32.mrb[0].mxu0
  %v2741 = vadd.f32 0.0, %v2740
  %v2742 = vpop.f32.mrb[0].mxu0
  %v2743 = vpop.f32.mrb[0].mxu0
  %v2744 = vadd.f32 0.0, %v2743
  %v2745 = vpop.f32.mrb[0].mxu0
  %2746 = vmatprep.mubr.bf16.mxu0 0
  %2747 = vmatmul.mubr.bf16.gmra.mrb[0].mxu0 %v1608
  %v2748 = vpop.f32.mrb[0].mxu0
  %v2749 = vadd.f32 0.0, %v2748
  %v2750 = vpop.f32.mrb[0].mxu0
  %v2751 = vpop.f32.mrb[0].mxu0
  %v2752 = vadd.f32 0.0, %v2751
  %v2753 = vpop.f32.mrb[0].mxu0
  %2754 = vdwg.mxu0
  %vm2755 = vcmp.eq.f32.partialorder %v2733, 0.0
  %vm2756 = vcmp.eq.f32.partialorder %v2736, 0.0
  %vm2757 = vcmp.eq.f32.partialorder %v2741, 0.0
  %vm2758 = vcmp.eq.f32.partialorder %v2744, 0.0
  %vm2759 = vcmp.eq.f32.partialorder %v2749, 0.0
  %vm2760 = vcmp.eq.f32.partialorder %v2752, 0.0
  %v2761 = vsel %vm2755, 1.0, %v2733
  %v2762 = vsel %vm2756, 1.0, %v2736
  %v2763 = vsel %vm2757, 1.0, %v2741
  %v2764 = vsel %vm2758, 1.0, %v2744
  %v2765 = vsel %vm2759, 1.0, %v2749
  %v2766 = vsel %vm2760, 1.0, %v2752
  %v2767 = vrcp.pop %v2761
  %v2768 = vrcp.pop %v2762
  %v2769 = vrcp.pop %v2763
  %v2770 = vrcp.pop %v2764
  %v2771 = vrcp.pop %v2765
  %v2772 = vrcp.pop %v2766
  %2774 = vset.pattern.permute.xlu0 0
  %2775 = vperm.xlu0 %2774, %v2767
  %v2776 = vpop.permute.xlu0 %2775
  %2779 = vset.pattern.permute.xlu0 0
  %2780 = vperm.xlu0 %2779, %v2768
  %v2781 = vpop.permute.xlu0 %2780
  %2784 = vset.pattern.permute.xlu0 0
  %2785 = vperm.xlu0 %2784, %v2769
  %v2786 = vpop.permute.xlu0 %2785
  %2789 = vset.pattern.permute.xlu0 0
  %2790 = vperm.xlu0 %2789, %v2770
  %v2791 = vpop.permute.xlu0 %2790
  %2794 = vset.pattern.permute.xlu0 0
  %2795 = vperm.xlu0 %2794, %v2771
  %v2796 = vpop.permute.xlu0 %2795
  %2799 = vset.pattern.permute.xlu0 0
  %2800 = vperm.xlu0 %2799, %v2772
  %v2801 = vpop.permute.xlu0 %2800
  %v2803 = vmul.f32 %v2670, %v2776
  %v2804 = vmul.f32 %v2673, %v2781
  %v2805 = vmul.f32 %v2678, %v2786
  %v2806 = vmul.f32 %v2681, %v2791
  %v2807 = vmul.f32 %v2686, %v2796
  %v2808 = vmul.f32 %v2689, %v2801
  %v2809 = vsel %vm1416, %v1393, 0.0
  %2810 = vadd.xlane.f32.xlu0 %v2809
  %v2811 = vpop.xlane.xlu0 %2810
  %v2812 = vsel %vm1416, %v1395, 0.0
  %2813 = vadd.xlane.f32.xlu0 %v2812
  %v2814 = vpop.xlane.xlu0 %2813
  %v2815 = vsel %vm1416, %v1397, 0.0
  %2816 = vadd.xlane.f32.xlu0 %v2815
  %v2817 = vpop.xlane.xlu0 %2816
  %v2818 = vsel %vm1416, %v1399, 0.0
  %2819 = vadd.xlane.f32.xlu0 %v2818
  %v2820 = vpop.xlane.xlu0 %2819
  %v2821 = vsel %vm1416, %v1401, 0.0
  %2822 = vadd.xlane.f32.xlu0 %v2821
  %v2823 = vpop.xlane.xlu0 %2822
  %v2824 = vsel %vm1416, %v1403, 0.0
  %2825 = vadd.xlane.f32.xlu0 %v2824
  %v2826 = vpop.xlane.xlu0 %2825
  %v2827 = vsel %vm1416, %v1405, 0.0
  %2828 = vadd.xlane.f32.xlu0 %v2827
  %v2829 = vpop.xlane.xlu0 %2828
  %v2830 = vsel %vm1416, %v1407, 0.0
  %2831 = vadd.xlane.f32.xlu0 %v2830
  %v2832 = vpop.xlane.xlu0 %2831
  %v2833 = vsel %vm1416, %v1409, 0.0
  %2834 = vadd.xlane.f32.xlu0 %v2833
  %v2835 = vpop.xlane.xlu0 %2834
  %v2836 = vsel %vm1416, %v1411, 0.0
  %2837 = vadd.xlane.f32.xlu0 %v2836
  %v2838 = vpop.xlane.xlu0 %2837
  %v2839 = vsel %vm1416, %v1413, 0.0
  %2840 = vadd.xlane.f32.xlu0 %v2839
  %v2841 = vpop.xlane.xlu0 %2840
  %v2842 = vsel %vm1416, %v1415, 0.0
  %2843 = vadd.xlane.f32.xlu0 %v2842
  %v2844 = vpop.xlane.xlu0 %2843
  %v2845 = vmul.f32 %v2811, 0.25
  %v2846 = vmul.f32 %v2814, 0.25
  %v2847 = vmul.f32 %v2817, 0.25
  %v2848 = vmul.f32 %v2820, 0.25
  %v2849 = vmul.f32 %v2823, 0.25
  %v2850 = vmul.f32 %v2826, 0.25
  %v2851 = vmul.f32 %v2829, 0.25
  %v2852 = vmul.f32 %v2832, 0.25
  %v2853 = vmul.f32 %v2835, 0.25
  %v2854 = vmul.f32 %v2838, 0.25
  %v2855 = vmul.f32 %v2841, 0.25
  %v2856 = vmul.f32 %v2844, 0.25
  %v2857 = vld [vmem:[%s29] sm:$0xff]
  %v2858 = vld [vmem:[%s29 + $0x8] sm:$0xff]
  %v2859 = vld [vmem:[%s29 + $0x10] sm:$0xff]
  %v2860 = vld [vmem:[%s29 + $0x18] sm:$0xff]
  %v2861 = vld [vmem:[%s29 + $0x20] sm:$0xff]
  %v2862 = vld [vmem:[%s29 + $0x28] sm:$0xff]
  %v2863 = vld [vmem:[%s29 + $0x30] sm:$0xff]
  %v2864 = vld [vmem:[%s29 + $0x38] sm:$0xff]
  %v2865 = vld [vmem:[%s31] sm:$0xff]
  %v2866 = vld [vmem:[%s31 + $0x8] sm:$0xff]
  %v2867 = vld [vmem:[%s31 + $0x10] sm:$0xff]
  %v2868 = vld [vmem:[%s31 + $0x18] sm:$0xff]
  %v2869 = vld [vmem:[%s31 + $0x20] sm:$0xff]
  %v2870 = vld [vmem:[%s31 + $0x28] sm:$0xff]
  %v2871 = vld [vmem:[%s31 + $0x30] sm:$0xff]
  %v2872 = vld [vmem:[%s31 + $0x38] sm:$0xff]
  %v2873 = vld [vmem:[%s33] sm:$0xff]
  %v2874 = vld [vmem:[%s33 + $0x8] sm:$0xff]
  %v2875 = vld [vmem:[%s33 + $0x10] sm:$0xff]
  %v2876 = vld [vmem:[%s33 + $0x18] sm:$0xff]
  %v2877 = vld [vmem:[%s33 + $0x20] sm:$0xff]
  %v2878 = vld [vmem:[%s33 + $0x28] sm:$0xff]
  %v2879 = vld [vmem:[%s33 + $0x30] sm:$0xff]
  %v2880 = vld [vmem:[%s33 + $0x38] sm:$0xff]
  %v2881 = vld [vmem:[%s35] sm:$0x1]
  %v2882 = vpack.c.bf16 %v2804, %v2803
  %v2883 = vpack.c.bf16 %v2806, %v2805
  %v2884 = vpack.c.bf16 %v2808, %v2807
  %v2885 = vpack.c.bf16 %v2858, %v2857
  %v2886 = vpack.c.bf16 %v2860, %v2859
  %v2887 = vpack.c.bf16 %v2862, %v2861
  %v2888 = vpack.c.bf16 %v2864, %v2863
  %v2890 = vsel %vm696, %v2882, 0
  %v2893 = vsel %vm696, %v2883, 0
  %v2896 = vsel %vm696, %v2884, 0
  %2898 = vmatprep.subr.bf16.mxu0 0
  %2899 = vmatpush1.bf16.msra.mxu0 %v2885
  %2900 = vmatprep.subr.bf16.mxu0 0
  %2901 = vmatpush1.bf16.msra.mxu0 %v2886
  %2902 = vmatprep.subr.bf16.mxu0 0
  %2903 = vmatpush1.bf16.msra.mxu0 %v2887
  %2904 = vmatprep.subr.bf16.mxu0 0
  %2905 = vmatpush1.bf16.msra.mxu0 %v2888
  %2906 = vmatprep.subr.bf16.mxu0 0
  %2907 = vmatpush1.bf16.msra.mxu0 0
  %2908 = vmatprep.subr.bf16.mxu0 0
  %2909 = vmatpush1.bf16.msra.mxu0 0
  %2910 = vmatprep.subr.bf16.mxu0 0
  %2911 = vmatpush1.bf16.msra.mxu0 0
  %2912 = vmatprep.subr.bf16.mxu0 0
  %2913 = vmatpush1.bf16.msra.mxu0 0
  %2914 = vmatprep.subr.bf16.mxu0 0
  %2915 = vmatpush1.bf16.msra.mxu0 0
  %2916 = vmatprep.subr.bf16.mxu0 0
  %2917 = vmatpush1.bf16.msra.mxu0 0
  %2918 = vmatprep.subr.bf16.mxu0 0
  %2919 = vmatpush1.bf16.msra.mxu0 0
  %2920 = vmatprep.subr.bf16.mxu0 0
  %2921 = vmatpush1.bf16.msra.mxu0 0
  %2922 = vmatprep.subr.bf16.mxu0 0
  %2923 = vmatpush1.bf16.msra.mxu0 0
  %2924 = vmatprep.subr.bf16.mxu0 0
  %2925 = vmatpush1.bf16.msra.mxu0 0
  %2926 = vmatprep.subr.bf16.mxu0 0
  %2927 = vmatpush1.bf16.msra.mxu0 0
  %2928 = vmatprep.subr.bf16.mxu0 0
  %2929 = vmatpush1.bf16.msra.mxu0 0
  %2930 = vmatprep.mubr.bf16.mxu0 0
  %2931 = vmatmul.mubr.bf16.gmra.mrb[0].mxu0 %v2890
  %v2932 = vpop.f32.mrb[0].mxu0
  %v2933 = vadd.f32 0.0, %v2932
  %v2934 = vpop.f32.mrb[0].mxu0
  %v2935 = vpop.f32.mrb[0].mxu0
  %v2936 = vadd.f32 0.0, %v2935
  %v2937 = vpop.f32.mrb[0].mxu0
  %2938 = vmatprep.mubr.bf16.mxu0 0
  %2939 = vmatmul.mubr.bf16.gmra.mrb[0].mxu0 %v2893
  %v2940 = vpop.f32.mrb[0].mxu0
  %v2941 = vadd.f32 0.0, %v2940
  %v2942 = vpop.f32.mrb[0].mxu0
  %v2943 = vpop.f32.mrb[0].mxu0
  %v2944 = vadd.f32 0.0, %v2943
  %v2945 = vpop.f32.mrb[0].mxu0
  %2946 = vmatprep.mubr.bf16.mxu0 0
  %2947 = vmatmul.mubr.bf16.gmra.mrb[0].mxu0 %v2896
  %v2948 = vpop.f32.mrb[0].mxu0
  %v2949 = vadd.f32 0.0, %v2948
  %v2950 = vpop.f32.mrb[0].mxu0
  %v2951 = vpop.f32.mrb[0].mxu0
  %v2952 = vadd.f32 0.0, %v2951
  %v2953 = vpop.f32.mrb[0].mxu0
  %2954 = vdwg.mxu0
  %v2955 = vpack.c.bf16 %v2936, %v2933
  %v2956 = vpack.c.bf16 %v2944, %v2941
  %v2957 = vpack.c.bf16 %v2952, %v2949
  %v2959 = vsel %vm766, %v494, 0
  %v2962 = vsel %vm766, %v495, 0
  %v2965 = vsel %vm766, %v496, 0
  %v2968 = vsel %vm766, %v497, 0
  %v2971 = vsel %vm766, %v498, 0
  %v2974 = vsel %vm766, %v499, 0
  %2976 = vmatprep.subr.bf16.mxu0 0
  %2977 = vmatpush1.bf16.msra.mxu0 %v2955
  %2978 = vmatprep.subr.bf16.mxu0 0
  %2979 = vmatpush1.bf16.msra.mxu0 %v2956
  %2980 = vmatprep.subr.bf16.mxu0 0
  %2981 = vmatpush1.bf16.msra.mxu0 %v2957
  %2982 = vmatprep.subr.bf16.mxu0 0
  %2983 = vmatpush1.bf16.msra.mxu0 0
  %2984 = vmatprep.subr.bf16.mxu0 0
  %2985 = vmatpush1.bf16.msra.mxu0 0
  %2986 = vmatprep.subr.bf16.mxu0 0
  %2987 = vmatpush1.bf16.msra.mxu0 0
  %2988 = vmatprep.subr.bf16.mxu0 0
  %2989 = vmatpush1.bf16.msra.mxu0 0
  %2990 = vmatprep.subr.bf16.mxu0 0
  %2991 = vmatpush1.bf16.msra.mxu0 0
  %2992 = vmatprep.subr.bf16.mxu0 0
  %2993 = vmatpush1.bf16.msra.mxu0 0
  %2994 = vmatprep.subr.bf16.mxu0 0
  %2995 = vmatpush1.bf16.msra.mxu0 0
  %2996 = vmatprep.subr.bf16.mxu0 0
  %2997 = vmatpush1.bf16.msra.mxu0 0
  %2998 = vmatprep.subr.bf16.mxu0 0
  %2999 = vmatpush1.bf16.msra.mxu0 0
  %3000 = vmatprep.subr.bf16.mxu0 0
  %3001 = vmatpush1.bf16.msra.mxu0 0
  %3002 = vmatprep.subr.bf16.mxu0 0
  %3003 = vmatpush1.bf16.msra.mxu0 0
  %3004 = vmatprep.subr.bf16.mxu0 0
  %3005 = vmatpush1.bf16.msra.mxu0 0
  %3006 = vmatprep.subr.bf16.mxu0 0
  %3007 = vmatpush1.bf16.msra.mxu0 0
  %3008 = vmatprep.mubr.bf16.mxu0 0
  %3009 = vmatmul.mubr.bf16.gmra.mrb[0].mxu0 %v2959
  %v3010 = vpop.f32.mrb[0].mxu0
  %v3011 = vadd.f32 0.0, %v3010
  %v3012 = vpop.f32.mrb[0].mxu0
  %v3013 = vpop.f32.mrb[0].mxu0
  %v3014 = vadd.f32 0.0, %v3013
  %v3015 = vpop.f32.mrb[0].mxu0
  %3016 = vmatprep.mubr.bf16.mxu0 0
  %3017 = vmatmul.mubr.bf16.gmra.mrb[0].mxu0 %v2962
  %v3018 = vpop.f32.mrb[0].mxu0
  %v3019 = vadd.f32 0.0, %v3018
  %v3020 = vpop.f32.mrb[0].mxu0
  %v3021 = vpop.f32.mrb[0].mxu0
  %v3022 = vadd.f32 0.0, %v3021
  %v3023 = vpop.f32.mrb[0].mxu0
  %3024 = vmatprep.mubr.bf16.mxu0 0
  %3025 = vmatmul.mubr.bf16.gmra.mrb[0].mxu0 %v2965
  %v3026 = vpop.f32.mrb[0].mxu0
  %v3027 = vadd.f32 0.0, %v3026
  %v3028 = vpop.f32.mrb[0].mxu0
  %v3029 = vpop.f32.mrb[0].mxu0
  %v3030 = vadd.f32 0.0, %v3029
  %v3031 = vpop.f32.mrb[0].mxu0
  %3032 = vmatprep.mubr.bf16.mxu0 0
  %3033 = vmatmul.mubr.bf16.gmra.mrb[0].mxu0 %v2968
  %v3034 = vpop.f32.mrb[0].mxu0
  %v3035 = vadd.f32 0.0, %v3034
  %v3036 = vpop.f32.mrb[0].mxu0
  %v3037 = vpop.f32.mrb[0].mxu0
  %v3038 = vadd.f32 0.0, %v3037
  %v3039 = vpop.f32.mrb[0].mxu0
  %3040 = vmatprep.mubr.bf16.mxu0 0
  %3041 = vmatmul.mubr.bf16.gmra.mrb[0].mxu0 %v2971
  %v3042 = vpop.f32.mrb[0].mxu0
  %v3043 = vadd.f32 0.0, %v3042
  %v3044 = vpop.f32.mrb[0].mxu0
  %v3045 = vpop.f32.mrb[0].mxu0
  %v3046 = vadd.f32 0.0, %v3045
  %v3047 = vpop.f32.mrb[0].mxu0
  %3048 = vmatprep.mubr.bf16.mxu0 0
  %3049 = vmatmul.mubr.bf16.gmra.mrb[0].mxu0 %v2974
  %v3050 = vpop.f32.mrb[0].mxu0
  %v3051 = vadd.f32 0.0, %v3050
  %v3052 = vpop.f32.mrb[0].mxu0
  %v3053 = vpop.f32.mrb[0].mxu0
  %v3054 = vadd.f32 0.0, %v3053
  %v3055 = vpop.f32.mrb[0].mxu0
  %3056 = vdwg.mxu0
  %v3058 = vsel %vm696, %v2933, 0
  %v3061 = vsel %vm696, %v2936, 0
  %v3064 = vsel %vm696, %v2941, 0
  %v3067 = vsel %vm696, %v2944, 0
  %v3070 = vsel %vm696, %v2949, 0
  %v3073 = vsel %vm696, %v2952, 0
  %3075 = vmatprep.subr.mxu0 0.0
  %3076 = vmatpush1.msra.mxu0 %v2865
  %3077 = vmatprep.subr.mxu0 0.0
  %3078 = vmatpush1.msra.mxu0 %v2866
  %3079 = vmatprep.subr.mxu0 0.0
  %3080 = vmatpush1.msra.mxu0 %v2867
  %3081 = vmatprep.subr.mxu0 0.0
  %3082 = vmatpush1.msra.mxu0 %v2868
  %3083 = vmatprep.subr.mxu0 0.0
  %3084 = vmatpush1.msra.mxu0 %v2869
  %3085 = vmatprep.subr.mxu0 0.0
  %3086 = vmatpush1.msra.mxu0 %v2870
  %3087 = vmatprep.subr.mxu0 0.0
  %3088 = vmatpush1.msra.mxu0 %v2871
  %3089 = vmatprep.subr.mxu0 0.0
  %3090 = vmatpush1.msra.mxu0 %v2872
  %3091 = vmatprep.subr.mxu0 0.0
  %3092 = vmatpush1.msra.mxu0 0.0
  %3093 = vmatprep.subr.mxu0 0.0
  %3094 = vmatpush1.msra.mxu0 0.0
  %3095 = vmatprep.subr.mxu0 0.0
  %3096 = vmatpush1.msra.mxu0 0.0
  %3097 = vmatprep.subr.mxu0 0.0
  %3098 = vmatpush1.msra.mxu0 0.0
  %3099 = vmatprep.subr.mxu0 0.0
  %3100 = vmatpush1.msra.mxu0 0.0
  %3101 = vmatprep.subr.mxu0 0.0
  %3102 = vmatpush1.msra.mxu0 0.0
  %3103 = vmatprep.subr.mxu0 0.0
  %3104 = vmatpush1.msra.mxu0 0.0
  %3105 = vmatprep.subr.mxu0 0.0
  %3106 = vmatpush1.msra.mxu0 0.0
  %3107 = vmatprep.subr.mxu0 0.0
  %3108 = vmatpush1.msra.mxu0 0.0
  %3109 = vmatprep.subr.mxu0 0.0
  %3110 = vmatpush1.msra.mxu0 0.0
  %3111 = vmatprep.subr.mxu0 0.0
  %3112 = vmatpush1.msra.mxu0 0.0
  %3113 = vmatprep.subr.mxu0 0.0
  %3114 = vmatpush1.msra.mxu0 0.0
  %3115 = vmatprep.subr.mxu0 0.0
  %3116 = vmatpush1.msra.mxu0 0.0
  %3117 = vmatprep.subr.mxu0 0.0
  %3118 = vmatpush1.msra.mxu0 0.0
  %3119 = vmatprep.subr.mxu0 0.0
  %3120 = vmatpush1.msra.mxu0 0.0
  %3121 = vmatprep.subr.mxu0 0.0
  %3122 = vmatpush1.msra.mxu0 0.0
  %3123 = vmatprep.subr.mxu0 0.0
  %3124 = vmatpush1.msra.mxu0 0.0
  %3125 = vmatprep.subr.mxu0 0.0
  %3126 = vmatpush1.msra.mxu0 0.0
  %3127 = vmatprep.subr.mxu0 0.0
  %3128 = vmatpush1.msra.mxu0 0.0
  %3129 = vmatprep.subr.mxu0 0.0
  %3130 = vmatpush1.msra.mxu0 0.0
  %3131 = vmatprep.subr.mxu0 0.0
  %3132 = vmatpush1.msra.mxu0 0.0
  %3133 = vmatprep.subr.mxu0 0.0
  %3134 = vmatpush1.msra.mxu0 0.0
  %3135 = vmatprep.subr.mxu0 0.0
  %3136 = vmatpush1.msra.mxu0 0.0
  %3137 = vmatprep.subr.mxu0 0.0
  %3138 = vmatpush1.msra.mxu0 0.0
  %3139 = vmatprep.mubr.f32.mxu0 0.0
  %3140 = vmatmul.mubr.f32.gmra.mrb[0].mxu0 %v3058
  %v3141 = vpop.f32.mrb[0].mxu0
  %v3142 = vadd.f32 0.0, %v3141
  %v3143 = vpop.f32.mrb[0].mxu0
  %3144 = vmatprep.mubr.f32.mxu0 0.0
  %3145 = vmatmul.mubr.f32.gmra.mrb[0].mxu0 %v3061
  %v3146 = vpop.f32.mrb[0].mxu0
  %v3147 = vadd.f32 0.0, %v3146
  %v3148 = vpop.f32.mrb[0].mxu0
  %3149 = vmatprep.mubr.f32.mxu0 0.0
  %3150 = vmatmul.mubr.f32.gmra.mrb[0].mxu0 %v3064
  %v3151 = vpop.f32.mrb[0].mxu0
  %v3152 = vadd.f32 0.0, %v3151
  %v3153 = vpop.f32.mrb[0].mxu0
  %3154 = vmatprep.mubr.f32.mxu0 0.0
  %3155 = vmatmul.mubr.f32.gmra.mrb[0].mxu0 %v3067
  %v3156 = vpop.f32.mrb[0].mxu0
  %v3157 = vadd.f32 0.0, %v3156
  %v3158 = vpop.f32.mrb[0].mxu0
  %3159 = vmatprep.mubr.f32.mxu0 0.0
  %3160 = vmatmul.mubr.f32.gmra.mrb[0].mxu0 %v3070
  %v3161 = vpop.f32.mrb[0].mxu0
  %v3162 = vadd.f32 0.0, %v3161
  %v3163 = vpop.f32.mrb[0].mxu0
  %3164 = vmatprep.mubr.f32.mxu0 0.0
  %3165 = vmatmul.mubr.f32.gmra.mrb[0].mxu0 %v3073
  %v3166 = vpop.f32.mrb[0].mxu0
  %v3167 = vadd.f32 0.0, %v3166
  %v3168 = vpop.f32.mrb[0].mxu0
  %3169 = vdwg.mxu0
  %v3170 = vpack.c.bf16 %v3147, %v3142
  %v3171 = vpack.c.bf16 %v3157, %v3152
  %v3172 = vpack.c.bf16 %v3167, %v3162
  %v3174 = vsel %vm696, %v3011, 0
  %v3177 = vsel %vm696, %v3014, 0
  %v3180 = vsel %vm696, %v3019, 0
  %v3183 = vsel %vm696, %v3022, 0
  %v3186 = vsel %vm696, %v3027, 0
  %v3189 = vsel %vm696, %v3030, 0
  %v3192 = vsel %vm696, %v3035, 0
  %v3195 = vsel %vm696, %v3038, 0
  %v3198 = vsel %vm696, %v3043, 0
  %v3201 = vsel %vm696, %v3046, 0
  %v3204 = vsel %vm696, %v3051, 0
  %v3207 = vsel %vm696, %v3054, 0
  %3209 = vmatprep.subr.mxu0 0.0
  %3210 = vmatpush1.msra.mxu0 %v2873
  %3211 = vmatprep.subr.mxu0 0.0
  %3212 = vmatpush1.msra.mxu0 %v2874
  %3213 = vmatprep.subr.mxu0 0.0
  %3214 = vmatpush1.msra.mxu0 %v2875
  %3215 = vmatprep.subr.mxu0 0.0
  %3216 = vmatpush1.msra.mxu0 %v2876
  %3217 = vmatprep.subr.mxu0 0.0
  %3218 = vmatpush1.msra.mxu0 %v2877
  %3219 = vmatprep.subr.mxu0 0.0
  %3220 = vmatpush1.msra.mxu0 %v2878
  %3221 = vmatprep.subr.mxu0 0.0
  %3222 = vmatpush1.msra.mxu0 %v2879
  %3223 = vmatprep.subr.mxu0 0.0
  %3224 = vmatpush1.msra.mxu0 %v2880
  %3225 = vmatprep.subr.mxu0 0.0
  %3226 = vmatpush1.msra.mxu0 0.0
  %3227 = vmatprep.subr.mxu0 0.0
  %3228 = vmatpush1.msra.mxu0 0.0
  %3229 = vmatprep.subr.mxu0 0.0
  %3230 = vmatpush1.msra.mxu0 0.0
  %3231 = vmatprep.subr.mxu0 0.0
  %3232 = vmatpush1.msra.mxu0 0.0
  %3233 = vmatprep.subr.mxu0 0.0
  %3234 = vmatpush1.msra.mxu0 0.0
  %3235 = vmatprep.subr.mxu0 0.0
  %3236 = vmatpush1.msra.mxu0 0.0
  %3237 = vmatprep.subr.mxu0 0.0
  %3238 = vmatpush1.msra.mxu0 0.0
  %3239 = vmatprep.subr.mxu0 0.0
  %3240 = vmatpush1.msra.mxu0 0.0
  %3241 = vmatprep.subr.mxu0 0.0
  %3242 = vmatpush1.msra.mxu0 0.0
  %3243 = vmatprep.subr.mxu0 0.0
  %3244 = vmatpush1.msra.mxu0 0.0
  %3245 = vmatprep.subr.mxu0 0.0
  %3246 = vmatpush1.msra.mxu0 0.0
  %3247 = vmatprep.subr.mxu0 0.0
  %3248 = vmatpush1.msra.mxu0 0.0
  %3249 = vmatprep.subr.mxu0 0.0
  %3250 = vmatpush1.msra.mxu0 0.0
  %3251 = vmatprep.subr.mxu0 0.0
  %3252 = vmatpush1.msra.mxu0 0.0
  %3253 = vmatprep.subr.mxu0 0.0
  %3254 = vmatpush1.msra.mxu0 0.0
  %3255 = vmatprep.subr.mxu0 0.0
  %3256 = vmatpush1.msra.mxu0 0.0
  %3257 = vmatprep.subr.mxu0 0.0
  %3258 = vmatpush1.msra.mxu0 0.0
  %3259 = vmatprep.subr.mxu0 0.0
  %3260 = vmatpush1.msra.mxu0 0.0
  %3261 = vmatprep.subr.mxu0 0.0
  %3262 = vmatpush1.msra.mxu0 0.0
  %3263 = vmatprep.subr.mxu0 0.0
  %3264 = vmatpush1.msra.mxu0 0.0
  %3265 = vmatprep.subr.mxu0 0.0
  %3266 = vmatpush1.msra.mxu0 0.0
  %3267 = vmatprep.subr.mxu0 0.0
  %3268 = vmatpush1.msra.mxu0 0.0
  %3269 = vmatprep.subr.mxu0 0.0
  %3270 = vmatpush1.msra.mxu0 0.0
  %3271 = vmatprep.subr.mxu0 0.0
  %3272 = vmatpush1.msra.mxu0 0.0
  %3273 = vmatprep.mubr.f32.mxu0 0.0
  %3274 = vmatmul.mubr.f32.gmra.mrb[0].mxu0 %v3174
  %v3275 = vpop.f32.mrb[0].mxu0
  %v3276 = vadd.f32 0.0, %v3275
  %v3277 = vpop.f32.mrb[0].mxu0
  %3278 = vmatprep.mubr.f32.mxu0 0.0
  %3279 = vmatmul.mubr.f32.gmra.mrb[0].mxu0 %v3177
  %v3280 = vpop.f32.mrb[0].mxu0
  %v3281 = vadd.f32 0.0, %v3280
  %v3282 = vpop.f32.mrb[0].mxu0
  %3283 = vmatprep.mubr.f32.mxu0 0.0
  %3284 = vmatmul.mubr.f32.gmra.mrb[0].mxu0 %v3180
  %v3285 = vpop.f32.mrb[0].mxu0
  %v3286 = vadd.f32 0.0, %v3285
  %v3287 = vpop.f32.mrb[0].mxu0
  %3288 = vmatprep.mubr.f32.mxu0 0.0
  %3289 = vmatmul.mubr.f32.gmra.mrb[0].mxu0 %v3183
  %v3290 = vpop.f32.mrb[0].mxu0
  %v3291 = vadd.f32 0.0, %v3290
  %v3292 = vpop.f32.mrb[0].mxu0
  %3293 = vmatprep.mubr.f32.mxu0 0.0
  %3294 = vmatmul.mubr.f32.gmra.mrb[0].mxu0 %v3186
  %v3295 = vpop.f32.mrb[0].mxu0
  %v3296 = vadd.f32 0.0, %v3295
  %v3297 = vpop.f32.mrb[0].mxu0
  %3298 = vmatprep.mubr.f32.mxu0 0.0
  %3299 = vmatmul.mubr.f32.gmra.mrb[0].mxu0 %v3189
  %v3300 = vpop.f32.mrb[0].mxu0
  %v3301 = vadd.f32 0.0, %v3300
  %v3302 = vpop.f32.mrb[0].mxu0
  %3303 = vmatprep.mubr.f32.mxu0 0.0
  %3304 = vmatmul.mubr.f32.gmra.mrb[0].mxu0 %v3192
  %v3305 = vpop.f32.mrb[0].mxu0
  %v3306 = vadd.f32 0.0, %v3305
  %v3307 = vpop.f32.mrb[0].mxu0
  %3308 = vmatprep.mubr.f32.mxu0 0.0
  %3309 = vmatmul.mubr.f32.gmra.mrb[0].mxu0 %v3195
  %v3310 = vpop.f32.mrb[0].mxu0
  %v3311 = vadd.f32 0.0, %v3310
  %v3312 = vpop.f32.mrb[0].mxu0
  %3313 = vmatprep.mubr.f32.mxu0 0.0
  %3314 = vmatmul.mubr.f32.gmra.mrb[0].mxu0 %v3198
  %v3315 = vpop.f32.mrb[0].mxu0
  %v3316 = vadd.f32 0.0, %v3315
  %v3317 = vpop.f32.mrb[0].mxu0
  %3318 = vmatprep.mubr.f32.mxu0 0.0
  %3319 = vmatmul.mubr.f32.gmra.mrb[0].mxu0 %v3201
  %v3320 = vpop.f32.mrb[0].mxu0
  %v3321 = vadd.f32 0.0, %v3320
  %v3322 = vpop.f32.mrb[0].mxu0
  %3323 = vmatprep.mubr.f32.mxu0 0.0
  %3324 = vmatmul.mubr.f32.gmra.mrb[0].mxu0 %v3204
  %v3325 = vpop.f32.mrb[0].mxu0
  %v3326 = vadd.f32 0.0, %v3325
  %v3327 = vpop.f32.mrb[0].mxu0
  %3328 = vmatprep.mubr.f32.mxu0 0.0
  %3329 = vmatmul.mubr.f32.gmra.mrb[0].mxu0 %v3207
  %v3330 = vpop.f32.mrb[0].mxu0
  %v3331 = vadd.f32 0.0, %v3330
  %v3332 = vpop.f32.mrb[0].mxu0
  %3333 = vdwg.mxu0
  %v3335 = vsel %vm766, %v428, 0
  %v3338 = vsel %vm766, %v429, 0
  %v3341 = vsel %vm766, %v430, 0
  %v3344 = vsel %vm766, %v431, 0
  %v3347 = vsel %vm766, %v432, 0
  %v3350 = vsel %vm766, %v433, 0
  %3352 = vmatprep.subr.bf16.mxu0 0
  %3353 = vmatpush1.bf16.msra.mxu0 %v3170
  %3354 = vmatprep.subr.bf16.mxu0 0
  %3355 = vmatpush1.bf16.msra.mxu0 %v3171
  %3356 = vmatprep.subr.bf16.mxu0 0
  %3357 = vmatpush1.bf16.msra.mxu0 %v3172
  %3358 = vmatprep.subr.bf16.mxu0 0
  %3359 = vmatpush1.bf16.msra.mxu0 0
  %3360 = vmatprep.subr.bf16.mxu0 0
  %3361 = vmatpush1.bf16.msra.mxu0 0
  %3362 = vmatprep.subr.bf16.mxu0 0
  %3363 = vmatpush1.bf16.msra.mxu0 0
  %3364 = vmatprep.subr.bf16.mxu0 0
  %3365 = vmatpush1.bf16.msra.mxu0 0
  %3366 = vmatprep.subr.bf16.mxu0 0
  %3367 = vmatpush1.bf16.msra.mxu0 0
  %3368 = vmatprep.subr.bf16.mxu0 0
  %3369 = vmatpush1.bf16.msra.mxu0 0
  %3370 = vmatprep.subr.bf16.mxu0 0
  %3371 = vmatpush1.bf16.msra.mxu0 0
  %3372 = vmatprep.subr.bf16.mxu0 0
  %3373 = vmatpush1.bf16.msra.mxu0 0
  %3374 = vmatprep.subr.bf16.mxu0 0
  %3375 = vmatpush1.bf16.msra.mxu0 0
  %3376 = vmatprep.subr.bf16.mxu0 0
  %3377 = vmatpush1.bf16.msra.mxu0 0
  %3378 = vmatprep.subr.bf16.mxu0 0
  %3379 = vmatpush1.bf16.msra.mxu0 0
  %3380 = vmatprep.subr.bf16.mxu0 0
  %3381 = vmatpush1.bf16.msra.mxu0 0
  %3382 = vmatprep.subr.bf16.mxu0 0
  %3383 = vmatpush1.bf16.msra.mxu0 0
  %3384 = vmatprep.mubr.bf16.mxu0 0
  %3385 = vmatmul.mubr.bf16.gmra.mrb[0].mxu0 %v3335
  %v3386 = vpop.f32.mrb[0].mxu0
  %v3387 = vadd.f32 %v3276, %v3386
  %v3388 = vpop.f32.mrb[0].mxu0
  %v3389 = vpop.f32.mrb[0].mxu0
  %v3390 = vadd.f32 %v3281, %v3389
  %v3391 = vpop.f32.mrb[0].mxu0
  %3392 = vmatprep.mubr.bf16.mxu0 0
  %3393 = vmatmul.mubr.bf16.gmra.mrb[0].mxu0 %v3338
  %v3394 = vpop.f32.mrb[0].mxu0
  %v3395 = vadd.f32 %v3286, %v3394
  %v3396 = vpop.f32.mrb[0].mxu0
  %v3397 = vpop.f32.mrb[0].mxu0
  %v3398 = vadd.f32 %v3291, %v3397
  %v3399 = vpop.f32.mrb[0].mxu0
  %3400 = vmatprep.mubr.bf16.mxu0 0
  %3401 = vmatmul.mubr.bf16.gmra.mrb[0].mxu0 %v3341
  %v3402 = vpop.f32.mrb[0].mxu0
  %v3403 = vadd.f32 %v3296, %v3402
  %v3404 = vpop.f32.mrb[0].mxu0
  %v3405 = vpop.f32.mrb[0].mxu0
  %v3406 = vadd.f32 %v3301, %v3405
  %v3407 = vpop.f32.mrb[0].mxu0
  %3408 = vmatprep.mubr.bf16.mxu0 0
  %3409 = vmatmul.mubr.bf16.gmra.mrb[0].mxu0 %v3344
  %v3410 = vpop.f32.mrb[0].mxu0
  %v3411 = vadd.f32 %v3306, %v3410
  %v3412 = vpop.f32.mrb[0].mxu0
  %v3413 = vpop.f32.mrb[0].mxu0
  %v3414 = vadd.f32 %v3311, %v3413
  %v3415 = vpop.f32.mrb[0].mxu0
  %3416 = vmatprep.mubr.bf16.mxu0 0
  %3417 = vmatmul.mubr.bf16.gmra.mrb[0].mxu0 %v3347
  %v3418 = vpop.f32.mrb[0].mxu0
  %v3419 = vadd.f32 %v3316, %v3418
  %v3420 = vpop.f32.mrb[0].mxu0
  %v3421 = vpop.f32.mrb[0].mxu0
  %v3422 = vadd.f32 %v3321, %v3421
  %v3423 = vpop.f32.mrb[0].mxu0
  %3424 = vmatprep.mubr.bf16.mxu0 0
  %3425 = vmatmul.mubr.bf16.gmra.mrb[0].mxu0 %v3350
  %v3426 = vpop.f32.mrb[0].mxu0
  %v3427 = vadd.f32 %v3326, %v3426
  %v3428 = vpop.f32.mrb[0].mxu0
  %v3429 = vpop.f32.mrb[0].mxu0
  %v3430 = vadd.f32 %v3331, %v3429
  %v3431 = vpop.f32.mrb[0].mxu0
  %3432 = vdwg.mxu0
  %v3434 = vlaneseq
  %v3435 = vshrl.u32 %v3434, 7
  %v3436 = vsub.s32 0, %v3435
  %v3437 = vrot.slane %v2881, %v3436
  %v3439 = vmul.f32 %v2845, %v3437
  %v3440 = vmul.f32 %v2846, %v3437
  %v3441 = vmul.f32 %v2847, %v3437
  %v3442 = vmul.f32 %v2848, %v3437
  %v3443 = vmul.f32 %v2849, %v3437
  %v3444 = vmul.f32 %v2850, %v3437
  %v3445 = vmul.f32 %v2851, %v3437
  %v3446 = vmul.f32 %v2852, %v3437
  %v3447 = vmul.f32 %v2853, %v3437
  %v3448 = vmul.f32 %v2854, %v3437
  %v3449 = vmul.f32 %v2855, %v3437
  %v3450 = vmul.f32 %v2856, %v3437
  %v3451 = vadd.f32 %v3387, %v3439
  %v3452 = vadd.f32 %v3390, %v3440
  %v3453 = vadd.f32 %v3395, %v3441
  %v3454 = vadd.f32 %v3398, %v3442
  %v3455 = vadd.f32 %v3403, %v3443
  %v3456 = vadd.f32 %v3406, %v3444
  %v3457 = vadd.f32 %v3411, %v3445
  %v3458 = vadd.f32 %v3414, %v3446
  %v3459 = vadd.f32 %v3419, %v3447
  %v3460 = vadd.f32 %v3422, %v3448
  %v3461 = vadd.f32 %v3427, %v3449
  %v3462 = vadd.f32 %v3430, %v3450
  %vm3463 = vcmp.gt.f32.partialorder %v3451, 0.0
  %vm3464 = vcmp.gt.f32.partialorder %v3452, 0.0
  %vm3465 = vcmp.gt.f32.partialorder %v3453, 0.0
  %vm3466 = vcmp.gt.f32.partialorder %v3454, 0.0
  %vm3467 = vcmp.gt.f32.partialorder %v3455, 0.0
  %vm3468 = vcmp.gt.f32.partialorder %v3456, 0.0
  %vm3469 = vcmp.gt.f32.partialorder %v3457, 0.0
  %vm3470 = vcmp.gt.f32.partialorder %v3458, 0.0
  %vm3471 = vcmp.gt.f32.partialorder %v3459, 0.0
  %vm3472 = vcmp.gt.f32.partialorder %v3460, 0.0
  %vm3473 = vcmp.gt.f32.partialorder %v3461, 0.0
  %vm3474 = vcmp.gt.f32.partialorder %v3462, 0.0
  %v3475 = vmul.f32 %v3451, 0.2
  %v3476 = vmul.f32 %v3452, 0.2
  %v3477 = vmul.f32 %v3453, 0.2
  %v3478 = vmul.f32 %v3454, 0.2
  %v3479 = vmul.f32 %v3455, 0.2
  %v3480 = vmul.f32 %v3456, 0.2
  %v3481 = vmul.f32 %v3457, 0.2
  %v3482 = vmul.f32 %v3458, 0.2
  %v3483 = vmul.f32 %v3459, 0.2
  %v3484 = vmul.f32 %v3460, 0.2
  %v3485 = vmul.f32 %v3461, 0.2
  %v3486 = vmul.f32 %v3462, 0.2
  %v3487 = vsel %vm3463, %v3451, %v3475
  %v3488 = vsel %vm3464, %v3452, %v3476
  %v3489 = vsel %vm3465, %v3453, %v3477
  %v3490 = vsel %vm3466, %v3454, %v3478
  %v3491 = vsel %vm3467, %v3455, %v3479
  %v3492 = vsel %vm3468, %v3456, %v3480
  %v3493 = vsel %vm3469, %v3457, %v3481
  %v3494 = vsel %vm3470, %v3458, %v3482
  %v3495 = vsel %vm3471, %v3459, %v3483
  %v3496 = vsel %vm3472, %v3460, %v3484
  %v3497 = vsel %vm3473, %v3461, %v3485
  %v3498 = vsel %vm3474, %v3462, %v3486
  %v3499 = vsub.f32 0.0, %v3487
  %v3500 = vsub.f32 0.0, %v3488
  %v3501 = vsub.f32 0.0, %v3489
  %v3502 = vsub.f32 0.0, %v3490
  %v3503 = vsub.f32 0.0, %v3491
  %v3504 = vsub.f32 0.0, %v3492
  %v3505 = vsub.f32 0.0, %v3493
  %v3506 = vsub.f32 0.0, %v3494
  %v3507 = vsub.f32 0.0, %v3495
  %v3508 = vsub.f32 0.0, %v3496
  %v3509 = vsub.f32 0.0, %v3497
  %v3510 = vsub.f32 0.0, %v3498
  %v3511 = vmin.f32 %v3499, 60.0
  %v3512 = vmin.f32 %v3500, 60.0
  %v3513 = vmin.f32 %v3501, 60.0
  %v3514 = vmin.f32 %v3502, 60.0
  %v3515 = vmin.f32 %v3503, 60.0
  %v3516 = vmin.f32 %v3504, 60.0
  %v3517 = vmin.f32 %v3505, 60.0
  %v3518 = vmin.f32 %v3506, 60.0
  %v3519 = vmin.f32 %v3507, 60.0
  %v3520 = vmin.f32 %v3508, 60.0
  %v3521 = vmin.f32 %v3509, 60.0
  %v3522 = vmin.f32 %v3510, 60.0
  %v3523 = vmul.f32 %v3511, 1.442695
  %v3524 = vpow.pop %v3523
  %v3525 = vmul.f32 %v3512, 1.442695
  %v3526 = vpow.pop %v3525
  %v3527 = vmul.f32 %v3513, 1.442695
  %v3528 = vpow.pop %v3527
  %v3529 = vmul.f32 %v3514, 1.442695
  %v3530 = vpow.pop %v3529
  %v3531 = vmul.f32 %v3515, 1.442695
  %v3532 = vpow.pop %v3531
  %v3533 = vmul.f32 %v3516, 1.442695
  %v3534 = vpow.pop %v3533
  %v3535 = vmul.f32 %v3517, 1.442695
  %v3536 = vpow.pop %v3535
  %v3537 = vmul.f32 %v3518, 1.442695
  %v3538 = vpow.pop %v3537
  %v3539 = vmul.f32 %v3519, 1.442695
  %v3540 = vpow.pop %v3539
  %v3541 = vmul.f32 %v3520, 1.442695
  %v3542 = vpow.pop %v3541
  %v3543 = vmul.f32 %v3521, 1.442695
  %v3544 = vpow.pop %v3543
  %v3545 = vmul.f32 %v3522, 1.442695
  %v3546 = vpow.pop %v3545
  %v3548 = vsel %vm1416, %v3524, 0
  %v3551 = vsel %vm1416, %v3526, 0
  %v3554 = vsel %vm1416, %v3528, 0
  %v3557 = vsel %vm1416, %v3530, 0
  %v3560 = vsel %vm1416, %v3532, 0
  %v3563 = vsel %vm1416, %v3534, 0
  %v3566 = vsel %vm1416, %v3536, 0
  %v3569 = vsel %vm1416, %v3538, 0
  %v3572 = vsel %vm1416, %v3540, 0
  %v3575 = vsel %vm1416, %v3542, 0
  %v3578 = vsel %vm1416, %v3544, 0
  %v3581 = vsel %vm1416, %v3546, 0
  %3583 = vmatprep.subr.mxu0 0.0
  %3584 = vmatpush1.msra.mxu0 %v1455
  %3585 = vmatprep.subr.mxu0 0.0
  %3586 = vmatpush1.msra.mxu0 0.0
  %3587 = vmatprep.subr.mxu0 0.0
  %3588 = vmatpush1.msra.mxu0 0.0
  %3589 = vmatprep.subr.mxu0 0.0
  %3590 = vmatpush1.msra.mxu0 0.0
  %3591 = vmatprep.subr.mxu0 0.0
  %3592 = vmatpush1.msra.mxu0 0.0
  %3593 = vmatprep.subr.mxu0 0.0
  %3594 = vmatpush1.msra.mxu0 0.0
  %3595 = vmatprep.subr.mxu0 0.0
  %3596 = vmatpush1.msra.mxu0 0.0
  %3597 = vmatprep.subr.mxu0 0.0
  %3598 = vmatpush1.msra.mxu0 0.0
  %3599 = vmatprep.subr.mxu0 0.0
  %3600 = vmatpush1.msra.mxu0 0.0
  %3601 = vmatprep.subr.mxu0 0.0
  %3602 = vmatpush1.msra.mxu0 0.0
  %3603 = vmatprep.subr.mxu0 0.0
  %3604 = vmatpush1.msra.mxu0 0.0
  %3605 = vmatprep.subr.mxu0 0.0
  %3606 = vmatpush1.msra.mxu0 0.0
  %3607 = vmatprep.subr.mxu0 0.0
  %3608 = vmatpush1.msra.mxu0 0.0
  %3609 = vmatprep.subr.mxu0 0.0
  %3610 = vmatpush1.msra.mxu0 0.0
  %3611 = vmatprep.subr.mxu0 0.0
  %3612 = vmatpush1.msra.mxu0 0.0
  %3613 = vmatprep.subr.mxu0 0.0
  %3614 = vmatpush1.msra.mxu0 0.0
  %3615 = vmatprep.subr.mxu0 0.0
  %3616 = vmatpush1.msra.mxu0 0.0
  %3617 = vmatprep.subr.mxu0 0.0
  %3618 = vmatpush1.msra.mxu0 0.0
  %3619 = vmatprep.subr.mxu0 0.0
  %3620 = vmatpush1.msra.mxu0 0.0
  %3621 = vmatprep.subr.mxu0 0.0
  %3622 = vmatpush1.msra.mxu0 0.0
  %3623 = vmatprep.subr.mxu0 0.0
  %3624 = vmatpush1.msra.mxu0 0.0
  %3625 = vmatprep.subr.mxu0 0.0
  %3626 = vmatpush1.msra.mxu0 0.0
  %3627 = vmatprep.subr.mxu0 0.0
  %3628 = vmatpush1.msra.mxu0 0.0
  %3629 = vmatprep.subr.mxu0 0.0
  %3630 = vmatpush1.msra.mxu0 0.0
  %3631 = vmatprep.subr.mxu0 0.0
  %3632 = vmatpush1.msra.mxu0 0.0
  %3633 = vmatprep.subr.mxu0 0.0
  %3634 = vmatpush1.msra.mxu0 0.0
  %3635 = vmatprep.subr.mxu0 0.0
  %3636 = vmatpush1.msra.mxu0 0.0
  %3637 = vmatprep.subr.mxu0 0.0
  %3638 = vmatpush1.msra.mxu0 0.0
  %3639 = vmatprep.subr.mxu0 0.0
  %3640 = vmatpush1.msra.mxu0 0.0
  %3641 = vmatprep.subr.mxu0 0.0
  %3642 = vmatpush1.msra.mxu0 0.0
  %3643 = vmatprep.subr.mxu0 0.0
  %3644 = vmatpush1.msra.mxu0 0.0
  %3645 = vmatprep.subr.mxu0 0.0
  %3646 = vmatpush1.msra.mxu0 0.0
  %3647 = vmatprep.mubr.f32.mxu0 0.0
  %3648 = vmatmul.mubr.f32.gmra.mrb[0].mxu0 %v3548
  %v3649 = vpop.f32.mrb[0].mxu0
  %v3650 = vadd.f32 0.0, %v3649
  %v3651 = vpop.f32.mrb[0].mxu0
  %3652 = vmatprep.mubr.f32.mxu0 0.0
  %3653 = vmatmul.mubr.f32.gmra.mrb[0].mxu0 %v3551
  %v3654 = vpop.f32.mrb[0].mxu0
  %v3655 = vadd.f32 0.0, %v3654
  %v3656 = vpop.f32.mrb[0].mxu0
  %3657 = vmatprep.mubr.f32.mxu0 0.0
  %3658 = vmatmul.mubr.f32.gmra.mrb[0].mxu0 %v3554
  %v3659 = vpop.f32.mrb[0].mxu0
  %v3660 = vadd.f32 0.0, %v3659
  %v3661 = vpop.f32.mrb[0].mxu0
  %3662 = vmatprep.mubr.f32.mxu0 0.0
  %3663 = vmatmul.mubr.f32.gmra.mrb[0].mxu0 %v3557
  %v3664 = vpop.f32.mrb[0].mxu0
  %v3665 = vadd.f32 0.0, %v3664
  %v3666 = vpop.f32.mrb[0].mxu0
  %3667 = vmatprep.mubr.f32.mxu0 0.0
  %3668 = vmatmul.mubr.f32.gmra.mrb[0].mxu0 %v3560
  %v3669 = vpop.f32.mrb[0].mxu0
  %v3670 = vadd.f32 0.0, %v3669
  %v3671 = vpop.f32.mrb[0].mxu0
  %3672 = vmatprep.mubr.f32.mxu0 0.0
  %3673 = vmatmul.mubr.f32.gmra.mrb[0].mxu0 %v3563
  %v3674 = vpop.f32.mrb[0].mxu0
  %v3675 = vadd.f32 0.0, %v3674
  %v3676 = vpop.f32.mrb[0].mxu0
  %3677 = vmatprep.mubr.f32.mxu0 0.0
  %3678 = vmatmul.mubr.f32.gmra.mrb[0].mxu0 %v3566
  %v3679 = vpop.f32.mrb[0].mxu0
  %v3680 = vadd.f32 0.0, %v3679
  %v3681 = vpop.f32.mrb[0].mxu0
  %3682 = vmatprep.mubr.f32.mxu0 0.0
  %3683 = vmatmul.mubr.f32.gmra.mrb[0].mxu0 %v3569
  %v3684 = vpop.f32.mrb[0].mxu0
  %v3685 = vadd.f32 0.0, %v3684
  %v3686 = vpop.f32.mrb[0].mxu0
  %3687 = vmatprep.mubr.f32.mxu0 0.0
  %3688 = vmatmul.mubr.f32.gmra.mrb[0].mxu0 %v3572
  %v3689 = vpop.f32.mrb[0].mxu0
  %v3690 = vadd.f32 0.0, %v3689
  %v3691 = vpop.f32.mrb[0].mxu0
  %3692 = vmatprep.mubr.f32.mxu0 0.0
  %3693 = vmatmul.mubr.f32.gmra.mrb[0].mxu0 %v3575
  %v3694 = vpop.f32.mrb[0].mxu0
  %v3695 = vadd.f32 0.0, %v3694
  %v3696 = vpop.f32.mrb[0].mxu0
  %3697 = vmatprep.mubr.f32.mxu0 0.0
  %3698 = vmatmul.mubr.f32.gmra.mrb[0].mxu0 %v3578
  %v3699 = vpop.f32.mrb[0].mxu0
  %v3700 = vadd.f32 0.0, %v3699
  %v3701 = vpop.f32.mrb[0].mxu0
  %3702 = vmatprep.mubr.f32.mxu0 0.0
  %3703 = vmatmul.mubr.f32.gmra.mrb[0].mxu0 %v3581
  %v3704 = vpop.f32.mrb[0].mxu0
  %v3705 = vadd.f32 0.0, %v3704
  %v3706 = vpop.f32.mrb[0].mxu0
  %3707 = vdwg.mxu0
  %v3708 = vmul.f32 %v3650, %v3011
  %v3709 = vmul.f32 %v3655, %v3014
  %v3710 = vmul.f32 %v3660, %v3019
  %v3711 = vmul.f32 %v3665, %v3022
  %v3712 = vmul.f32 %v3670, %v3027
  %v3713 = vmul.f32 %v3675, %v3030
  %v3714 = vmul.f32 %v3680, %v3035
  %v3715 = vmul.f32 %v3685, %v3038
  %v3716 = vmul.f32 %v3690, %v3043
  %v3717 = vmul.f32 %v3695, %v3046
  %v3718 = vmul.f32 %v3700, %v3051
  %v3719 = vmul.f32 %v3705, %v3054
  %v3720 = vpack.c.bf16 %v3709, %v3708
  %v3721 = vpack.c.bf16 %v3711, %v3710
  %v3722 = vpack.c.bf16 %v3713, %v3712
  %v3723 = vpack.c.bf16 %v3715, %v3714
  %v3724 = vpack.c.bf16 %v3717, %v3716
  %v3725 = vpack.c.bf16 %v3719, %v3718
  %v3727 = vsel %vm1600, %v516, 0
  %v3730 = vsel %vm1600, %v517, 0
  %v3733 = vsel %vm1600, %v518, 0
  %3735 = vmatprep.subr.bf16.mxu0 0
  %3736 = vmatpush1.bf16.msra.mxu0 %v3720
  %3737 = vmatprep.subr.bf16.mxu0 0
  %3738 = vmatpush1.bf16.msra.mxu0 %v3721
  %3739 = vmatprep.subr.bf16.mxu0 0
  %3740 = vmatpush1.bf16.msra.mxu0 %v3722
  %3741 = vmatprep.subr.bf16.mxu0 0
  %3742 = vmatpush1.bf16.msra.mxu0 %v3723
  %3743 = vmatprep.subr.bf16.mxu0 0
  %3744 = vmatpush1.bf16.msra.mxu0 %v3724
  %3745 = vmatprep.subr.bf16.mxu0 0
  %3746 = vmatpush1.bf16.msra.mxu0 %v3725
  %3747 = vmatprep.subr.bf16.mxu0 0
  %3748 = vmatpush1.bf16.msra.mxu0 0
  %3749 = vmatprep.subr.bf16.mxu0 0
  %3750 = vmatpush1.bf16.msra.mxu0 0
  %3751 = vmatprep.subr.bf16.mxu0 0
  %3752 = vmatpush1.bf16.msra.mxu0 0
  %3753 = vmatprep.subr.bf16.mxu0 0
  %3754 = vmatpush1.bf16.msra.mxu0 0
  %3755 = vmatprep.subr.bf16.mxu0 0
  %3756 = vmatpush1.bf16.msra.mxu0 0
  %3757 = vmatprep.subr.bf16.mxu0 0
  %3758 = vmatpush1.bf16.msra.mxu0 0
  %3759 = vmatprep.subr.bf16.mxu0 0
  %3760 = vmatpush1.bf16.msra.mxu0 0
  %3761 = vmatprep.subr.bf16.mxu0 0
  %3762 = vmatpush1.bf16.msra.mxu0 0
  %3763 = vmatprep.subr.bf16.mxu0 0
  %3764 = vmatpush1.bf16.msra.mxu0 0
  %3765 = vmatprep.subr.bf16.mxu0 0
  %3766 = vmatpush1.bf16.msra.mxu0 0
  %3767 = vmatprep.mubr.bf16.mxu0 0
  %3768 = vmatmul.mubr.bf16.gmra.mrb[0].mxu0 %v3727
  %v3769 = vpop.f32.mrb[0].mxu0
  %v3770 = vadd.f32 0.0, %v3769
  %v3771 = vpop.f32.mrb[0].mxu0
  %v3772 = vpop.f32.mrb[0].mxu0
  %v3773 = vadd.f32 0.0, %v3772
  %v3774 = vpop.f32.mrb[0].mxu0
  %3775 = vmatprep.mubr.bf16.mxu0 0
  %3776 = vmatmul.mubr.bf16.gmra.mrb[0].mxu0 %v3730
  %v3777 = vpop.f32.mrb[0].mxu0
  %v3778 = vadd.f32 0.0, %v3777
  %v3779 = vpop.f32.mrb[0].mxu0
  %v3780 = vpop.f32.mrb[0].mxu0
  %v3781 = vadd.f32 0.0, %v3780
  %v3782 = vpop.f32.mrb[0].mxu0
  %3783 = vmatprep.mubr.bf16.mxu0 0
  %3784 = vmatmul.mubr.bf16.gmra.mrb[0].mxu0 %v3733
  %v3785 = vpop.f32.mrb[0].mxu0
  %v3786 = vadd.f32 0.0, %v3785
  %v3787 = vpop.f32.mrb[0].mxu0
  %v3788 = vpop.f32.mrb[0].mxu0
  %v3789 = vadd.f32 0.0, %v3788
  %v3790 = vpop.f32.mrb[0].mxu0
  %3791 = vdwg.mxu0
  %v3792 = vpack.c.bf16 %v3526, %v3524
  %v3793 = vpack.c.bf16 %v3530, %v3528
  %v3794 = vpack.c.bf16 %v3534, %v3532
  %v3795 = vpack.c.bf16 %v3538, %v3536
  %v3796 = vpack.c.bf16 %v3542, %v3540
  %v3797 = vpack.c.bf16 %v3546, %v3544
  %3798 = vmatprep.subr.bf16.mxu0 0
  %3799 = vmatpush1.bf16.msra.mxu0 %v3792
  %3800 = vmatprep.subr.bf16.mxu0 0
  %3801 = vmatpush1.bf16.msra.mxu0 %v3793
  %3802 = vmatprep.subr.bf16.mxu0 0
  %3803 = vmatpush1.bf16.msra.mxu0 %v3794
  %3804 = vmatprep.subr.bf16.mxu0 0
  %3805 = vmatpush1.bf16.msra.mxu0 %v3795
  %3806 = vmatprep.subr.bf16.mxu0 0
  %3807 = vmatpush1.bf16.msra.mxu0 %v3796
  %3808 = vmatprep.subr.bf16.mxu0 0
  %3809 = vmatpush1.bf16.msra.mxu0 %v3797
  %3810 = vmatprep.subr.bf16.mxu0 0
  %3811 = vmatpush1.bf16.msra.mxu0 0
  %3812 = vmatprep.subr.bf16.mxu0 0
  %3813 = vmatpush1.bf16.msra.mxu0 0
  %3814 = vmatprep.subr.bf16.mxu0 0
  %3815 = vmatpush1.bf16.msra.mxu0 0
  %3816 = vmatprep.subr.bf16.mxu0 0
  %3817 = vmatpush1.bf16.msra.mxu0 0
  %3818 = vmatprep.subr.bf16.mxu0 0
  %3819 = vmatpush1.bf16.msra.mxu0 0
  %3820 = vmatprep.subr.bf16.mxu0 0
  %3821 = vmatpush1.bf16.msra.mxu0 0
  %3822 = vmatprep.subr.bf16.mxu0 0
  %3823 = vmatpush1.bf16.msra.mxu0 0
  %3824 = vmatprep.subr.bf16.mxu0 0
  %3825 = vmatpush1.bf16.msra.mxu0 0
  %3826 = vmatprep.subr.bf16.mxu0 0
  %3827 = vmatpush1.bf16.msra.mxu0 0
  %3828 = vmatprep.subr.bf16.mxu0 0
  %3829 = vmatpush1.bf16.msra.mxu0 0
  %3830 = vmatprep.mubr.bf16.mxu0 0
  %3831 = vmatmul.mubr.bf16.gmra.mrb[0].mxu0 %v3727
  %v3832 = vpop.f32.mrb[0].mxu0
  %v3833 = vadd.f32 0.0, %v3832
  %v3834 = vpop.f32.mrb[0].mxu0
  %v3835 = vpop.f32.mrb[0].mxu0
  %v3836 = vadd.f32 0.0, %v3835
  %v3837 = vpop.f32.mrb[0].mxu0
  %3838 = vmatprep.mubr.bf16.mxu0 0
  %3839 = vmatmul.mubr.bf16.gmra.mrb[0].mxu0 %v3730
  %v3840 = vpop.f32.mrb[0].mxu0
  %v3841 = vadd.f32 0.0, %v3840
  %v3842 = vpop.f32.mrb[0].mxu0
  %v3843 = vpop.f32.mrb[0].mxu0
  %v3844 = vadd.f32 0.0, %v3843
  %v3845 = vpop.f32.mrb[0].mxu0
  %3846 = vmatprep.mubr.bf16.mxu0 0
  %3847 = vmatmul.mubr.bf16.gmra.mrb[0].mxu0 %v3733
  %v3848 = vpop.f32.mrb[0].mxu0
  %v3849 = vadd.f32 0.0, %v3848
  %v3850 = vpop.f32.mrb[0].mxu0
  %v3851 = vpop.f32.mrb[0].mxu0
  %v3852 = vadd.f32 0.0, %v3851
  %v3853 = vpop.f32.mrb[0].mxu0
  %3854 = vdwg.mxu0
  %vm3855 = vcmp.eq.f32.partialorder %v3833, 0.0
  %vm3856 = vcmp.eq.f32.partialorder %v3836, 0.0
  %vm3857 = vcmp.eq.f32.partialorder %v3841, 0.0
  %vm3858 = vcmp.eq.f32.partialorder %v3844, 0.0
  %vm3859 = vcmp.eq.f32.partialorder %v3849, 0.0
  %vm3860 = vcmp.eq.f32.partialorder %v3852, 0.0
  %v3861 = vsel %vm3855, 1.0, %v3833
  %v3862 = vsel %vm3856, 1.0, %v3836
  %v3863 = vsel %vm3857, 1.0, %v3841
  %v3864 = vsel %vm3858, 1.0, %v3844
  %v3865 = vsel %vm3859, 1.0, %v3849
  %v3866 = vsel %vm3860, 1.0, %v3852
  %v3867 = vrcp.pop %v3861
  %v3868 = vrcp.pop %v3862
  %v3869 = vrcp.pop %v3863
  %v3870 = vrcp.pop %v3864
  %v3871 = vrcp.pop %v3865
  %v3872 = vrcp.pop %v3866
  %v3874 = vsel %vm1416, %v3867, 0
  %v3877 = vsel %vm1416, %v3868, 0
  %v3880 = vsel %vm1416, %v3869, 0
  %v3883 = vsel %vm1416, %v3870, 0
  %v3886 = vsel %vm1416, %v3871, 0
  %v3889 = vsel %vm1416, %v3872, 0
  %3891 = vmatprep.subr.mxu0 0.0
  %3892 = vmatpush1.msra.mxu0 %v1455
  %3893 = vmatprep.subr.mxu0 0.0
  %3894 = vmatpush1.msra.mxu0 0.0
  %3895 = vmatprep.subr.mxu0 0.0
  %3896 = vmatpush1.msra.mxu0 0.0
  %3897 = vmatprep.subr.mxu0 0.0
  %3898 = vmatpush1.msra.mxu0 0.0
  %3899 = vmatprep.subr.mxu0 0.0
  %3900 = vmatpush1.msra.mxu0 0.0
  %3901 = vmatprep.subr.mxu0 0.0
  %3902 = vmatpush1.msra.mxu0 0.0
  %3903 = vmatprep.subr.mxu0 0.0
  %3904 = vmatpush1.msra.mxu0 0.0
  %3905 = vmatprep.subr.mxu0 0.0
  %3906 = vmatpush1.msra.mxu0 0.0
  %3907 = vmatprep.subr.mxu0 0.0
  %3908 = vmatpush1.msra.mxu0 0.0
  %3909 = vmatprep.subr.mxu0 0.0
  %3910 = vmatpush1.msra.mxu0 0.0
  %3911 = vmatprep.subr.mxu0 0.0
  %3912 = vmatpush1.msra.mxu0 0.0
  %3913 = vmatprep.subr.mxu0 0.0
  %3914 = vmatpush1.msra.mxu0 0.0
  %3915 = vmatprep.subr.mxu0 0.0
  %3916 = vmatpush1.msra.mxu0 0.0
  %3917 = vmatprep.subr.mxu0 0.0
  %3918 = vmatpush1.msra.mxu0 0.0
  %3919 = vmatprep.subr.mxu0 0.0
  %3920 = vmatpush1.msra.mxu0 0.0
  %3921 = vmatprep.subr.mxu0 0.0
  %3922 = vmatpush1.msra.mxu0 0.0
  %3923 = vmatprep.subr.mxu0 0.0
  %3924 = vmatpush1.msra.mxu0 0.0
  %3925 = vmatprep.subr.mxu0 0.0
  %3926 = vmatpush1.msra.mxu0 0.0
  %3927 = vmatprep.subr.mxu0 0.0
  %3928 = vmatpush1.msra.mxu0 0.0
  %3929 = vmatprep.subr.mxu0 0.0
  %3930 = vmatpush1.msra.mxu0 0.0
  %3931 = vmatprep.subr.mxu0 0.0
  %3932 = vmatpush1.msra.mxu0 0.0
  %3933 = vmatprep.subr.mxu0 0.0
  %3934 = vmatpush1.msra.mxu0 0.0
  %3935 = vmatprep.subr.mxu0 0.0
  %3936 = vmatpush1.msra.mxu0 0.0
  %3937 = vmatprep.subr.mxu0 0.0
  %3938 = vmatpush1.msra.mxu0 0.0
  %3939 = vmatprep.subr.mxu0 0.0
  %3940 = vmatpush1.msra.mxu0 0.0
  %3941 = vmatprep.subr.mxu0 0.0
  %3942 = vmatpush1.msra.mxu0 0.0
  %3943 = vmatprep.subr.mxu0 0.0
  %3944 = vmatpush1.msra.mxu0 0.0
  %3945 = vmatprep.subr.mxu0 0.0
  %3946 = vmatpush1.msra.mxu0 0.0
  %3947 = vmatprep.subr.mxu0 0.0
  %3948 = vmatpush1.msra.mxu0 0.0
  %3949 = vmatprep.subr.mxu0 0.0
  %3950 = vmatpush1.msra.mxu0 0.0
  %3951 = vmatprep.subr.mxu0 0.0
  %3952 = vmatpush1.msra.mxu0 0.0
  %3953 = vmatprep.subr.mxu0 0.0
  %3954 = vmatpush1.msra.mxu0 0.0
  %3955 = vmatprep.mubr.f32.mxu0 0.0
  %3956 = vmatmul.mubr.f32.gmra.mrb[0].mxu0 %v3874
  %v3957 = vpop.f32.mrb[0].mxu0
  %v3958 = vadd.f32 0.0, %v3957
  %v3959 = vpop.f32.mrb[0].mxu0
  %3960 = vmatprep.mubr.f32.mxu0 0.0
  %3961 = vmatmul.mubr.f32.gmra.mrb[0].mxu0 %v3877
  %v3962 = vpop.f32.mrb[0].mxu0
  %v3963 = vadd.f32 0.0, %v3962
  %v3964 = vpop.f32.mrb[0].mxu0
  %3965 = vmatprep.mubr.f32.mxu0 0.0
  %3966 = vmatmul.mubr.f32.gmra.mrb[0].mxu0 %v3880
  %v3967 = vpop.f32.mrb[0].mxu0
  %v3968 = vadd.f32 0.0, %v3967
  %v3969 = vpop.f32.mrb[0].mxu0
  %3970 = vmatprep.mubr.f32.mxu0 0.0
  %3971 = vmatmul.mubr.f32.gmra.mrb[0].mxu0 %v3883
  %v3972 = vpop.f32.mrb[0].mxu0
  %v3973 = vadd.f32 0.0, %v3972
  %v3974 = vpop.f32.mrb[0].mxu0
  %3975 = vmatprep.mubr.f32.mxu0 0.0
  %3976 = vmatmul.mubr.f32.gmra.mrb[0].mxu0 %v3886
  %v3977 = vpop.f32.mrb[0].mxu0
  %v3978 = vadd.f32 0.0, %v3977
  %v3979 = vpop.f32.mrb[0].mxu0
  %3980 = vmatprep.mubr.f32.mxu0 0.0
  %3981 = vmatmul.mubr.f32.gmra.mrb[0].mxu0 %v3889
  %v3982 = vpop.f32.mrb[0].mxu0
  %v3983 = vadd.f32 0.0, %v3982
  %v3984 = vpop.f32.mrb[0].mxu0
  %3985 = vdwg.mxu0
  %v3986 = vmul.f32 %v3770, %v3958
  %v3987 = vmul.f32 %v3773, %v3963
  %v3988 = vmul.f32 %v3778, %v3968
  %v3989 = vmul.f32 %v3781, %v3973
  %v3990 = vmul.f32 %v3786, %v3978
  %v3991 = vmul.f32 %v3789, %v3983
  %vm3992 = vcmp.gt.f32.partialorder %v3986, 0.0
  %vm3993 = vcmp.gt.f32.partialorder %v3987, 0.0
  %vm3994 = vcmp.gt.f32.partialorder %v3988, 0.0
  %vm3995 = vcmp.gt.f32.partialorder %v3989, 0.0
  %vm3996 = vcmp.gt.f32.partialorder %v3990, 0.0
  %vm3997 = vcmp.gt.f32.partialorder %v3991, 0.0
  %v3998 = vmin.f32 %v3986, 0.0
  %v3999 = vmin.f32 %v3987, 0.0
  %v4000 = vmin.f32 %v3988, 0.0
  %v4001 = vmin.f32 %v3989, 0.0
  %v4002 = vmin.f32 %v3990, 0.0
  %v4003 = vmin.f32 %v3991, 0.0
  %v4004 = vmul.f32 %v3998, 1.442695
  %v4005 = vpow.pop %v4004
  %v4006 = vmul.f32 %v3999, 1.442695
  %v4007 = vpow.pop %v4006
  %v4008 = vmul.f32 %v4000, 1.442695
  %v4009 = vpow.pop %v4008
  %v4010 = vmul.f32 %v4001, 1.442695
  %v4011 = vpow.pop %v4010
  %v4012 = vmul.f32 %v4002, 1.442695
  %v4013 = vpow.pop %v4012
  %v4014 = vmul.f32 %v4003, 1.442695
  %v4015 = vpow.pop %v4014
  %v4016 = vsub.f32 %v4005, 1.0
  %v4017 = vsub.f32 %v4007, 1.0
  %v4018 = vsub.f32 %v4009, 1.0
  %v4019 = vsub.f32 %v4011, 1.0
  %v4020 = vsub.f32 %v4013, 1.0
  %v4021 = vsub.f32 %v4015, 1.0
  %v4022 = vsel %vm3992, %v3986, %v4016
  %v4023 = vsel %vm3993, %v3987, %v4017
  %v4024 = vsel %vm3994, %v3988, %v4018
  %v4025 = vsel %vm3995, %v3989, %v4019
  %v4026 = vsel %vm3996, %v3990, %v4020
  %v4027 = vsel %vm3997, %v3991, %v4021
  %v4028 = vld [vmem:[%s45] sm:$0xff]
  %v4029 = vld [vmem:[%s45 + $0x8] sm:$0xff]
  %v4030 = vld [vmem:[%s45 + $0x10] sm:$0xff]
  %v4031 = vld [vmem:[%s45 + $0x18] sm:$0xff]
  %v4032 = vld [vmem:[%s45 + $0x20] sm:$0xff]
  %v4033 = vld [vmem:[%s45 + $0x28] sm:$0xff]
  %v4034 = vld [vmem:[%s45 + $0x30] sm:$0xff]
  %v4035 = vld [vmem:[%s45 + $0x38] sm:$0xff]
  %v4036 = vld [vmem:[%s47] sm:$0xff]
  %v4037 = vld [vmem:[%s47 + $0x8] sm:$0xff]
  %v4038 = vld [vmem:[%s47 + $0x10] sm:$0xff]
  %v4039 = vld [vmem:[%s47 + $0x18] sm:$0xff]
  %v4040 = vld [vmem:[%s47 + $0x20] sm:$0xff]
  %v4041 = vld [vmem:[%s47 + $0x28] sm:$0xff]
  %v4042 = vld [vmem:[%s47 + $0x30] sm:$0xff]
  %v4043 = vld [vmem:[%s47 + $0x38] sm:$0xff]
  %v4044 = vld [vmem:[%s49] sm:$0xff]
  %v4045 = vld [vmem:[%s49 + $0x8] sm:$0xff]
  %v4046 = vld [vmem:[%s49 + $0x10] sm:$0xff]
  %v4047 = vld [vmem:[%s49 + $0x18] sm:$0xff]
  %v4048 = vld [vmem:[%s49 + $0x20] sm:$0xff]
  %v4049 = vld [vmem:[%s49 + $0x28] sm:$0xff]
  %v4050 = vld [vmem:[%s49 + $0x30] sm:$0xff]
  %v4051 = vld [vmem:[%s49 + $0x38] sm:$0xff]
  %v4052 = vld [vmem:[#allocation3] sm:$0x1]
  %v4053 = vpack.c.bf16 %v4023, %v4022
  %v4054 = vpack.c.bf16 %v4025, %v4024
  %v4055 = vpack.c.bf16 %v4027, %v4026
  %v4056 = vpack.c.bf16 %v4029, %v4028
  %v4057 = vpack.c.bf16 %v4031, %v4030
  %v4058 = vpack.c.bf16 %v4033, %v4032
  %v4059 = vpack.c.bf16 %v4035, %v4034
  %v4061 = vsel %vm696, %v4053, 0
  %v4064 = vsel %vm696, %v4054, 0
  %v4067 = vsel %vm696, %v4055, 0
  %4069 = vmatprep.subr.bf16.mxu0 0
  %4070 = vmatpush1.bf16.msra.mxu0 %v4056
  %4071 = vmatprep.subr.bf16.mxu0 0
  %4072 = vmatpush1.bf16.msra.mxu0 %v4057
  %4073 = vmatprep.subr.bf16.mxu0 0
  %4074 = vmatpush1.bf16.msra.mxu0 %v4058
  %4075 = vmatprep.subr.bf16.mxu0 0
  %4076 = vmatpush1.bf16.msra.mxu0 %v4059
  %4077 = vmatprep.subr.bf16.mxu0 0
  %4078 = vmatpush1.bf16.msra.mxu0 0
  %4079 = vmatprep.subr.bf16.mxu0 0
  %4080 = vmatpush1.bf16.msra.mxu0 0
  %4081 = vmatprep.subr.bf16.mxu0 0
  %4082 = vmatpush1.bf16.msra.mxu0 0
  %4083 = vmatprep.subr.bf16.mxu0 0
  %4084 = vmatpush1.bf16.msra.mxu0 0
  %4085 = vmatprep.subr.bf16.mxu0 0
  %4086 = vmatpush1.bf16.msra.mxu0 0
  %4087 = vmatprep.subr.bf16.mxu0 0
  %4088 = vmatpush1.bf16.msra.mxu0 0
  %4089 = vmatprep.subr.bf16.mxu0 0
  %4090 = vmatpush1.bf16.msra.mxu0 0
  %4091 = vmatprep.subr.bf16.mxu0 0
  %4092 = vmatpush1.bf16.msra.mxu0 0
  %4093 = vmatprep.subr.bf16.mxu0 0
  %4094 = vmatpush1.bf16.msra.mxu0 0
  %4095 = vmatprep.subr.bf16.mxu0 0
  %4096 = vmatpush1.bf16.msra.mxu0 0
  %4097 = vmatprep.subr.bf16.mxu0 0
  %4098 = vmatpush1.bf16.msra.mxu0 0
  %4099 = vmatprep.subr.bf16.mxu0 0
  %4100 = vmatpush1.bf16.msra.mxu0 0
  %4101 = vmatprep.mubr.bf16.mxu0 0
  %4102 = vmatmul.mubr.bf16.gmra.mrb[0].mxu0 %v4061
  %v4103 = vpop.f32.mrb[0].mxu0
  %v4104 = vadd.f32 0.0, %v4103
  %v4105 = vpop.f32.mrb[0].mxu0
  %v4106 = vpop.f32.mrb[0].mxu0
  %v4107 = vadd.f32 0.0, %v4106
  %v4108 = vpop.f32.mrb[0].mxu0
  %4109 = vmatprep.mubr.bf16.mxu0 0
  %4110 = vmatmul.mubr.bf16.gmra.mrb[0].mxu0 %v4064
  %v4111 = vpop.f32.mrb[0].mxu0
  %v4112 = vadd.f32 0.0, %v4111
  %v4113 = vpop.f32.mrb[0].mxu0
  %v4114 = vpop.f32.mrb[0].mxu0
  %v4115 = vadd.f32 0.0, %v4114
  %v4116 = vpop.f32.mrb[0].mxu0
  %4117 = vmatprep.mubr.bf16.mxu0 0
  %4118 = vmatmul.mubr.bf16.gmra.mrb[0].mxu0 %v4067
  %v4119 = vpop.f32.mrb[0].mxu0
  %v4120 = vadd.f32 0.0, %v4119
  %v4121 = vpop.f32.mrb[0].mxu0
  %v4122 = vpop.f32.mrb[0].mxu0
  %v4123 = vadd.f32 0.0, %v4122
  %v4124 = vpop.f32.mrb[0].mxu0
  %4125 = vdwg.mxu0
  %v4126 = vpack.c.bf16 %v4107, %v4104
  %v4127 = vpack.c.bf16 %v4115, %v4112
  %v4128 = vpack.c.bf16 %v4123, %v4120
  %4129 = vmatprep.subr.bf16.mxu0 0
  %4130 = vmatpush1.bf16.msra.mxu0 %v4126
  %4131 = vmatprep.subr.bf16.mxu0 0
  %4132 = vmatpush1.bf16.msra.mxu0 %v4127
  %4133 = vmatprep.subr.bf16.mxu0 0
  %4134 = vmatpush1.bf16.msra.mxu0 %v4128
  %4135 = vmatprep.subr.bf16.mxu0 0
  %4136 = vmatpush1.bf16.msra.mxu0 0
  %4137 = vmatprep.subr.bf16.mxu0 0
  %4138 = vmatpush1.bf16.msra.mxu0 0
  %4139 = vmatprep.subr.bf16.mxu0 0
  %4140 = vmatpush1.bf16.msra.mxu0 0
  %4141 = vmatprep.subr.bf16.mxu0 0
  %4142 = vmatpush1.bf16.msra.mxu0 0
  %4143 = vmatprep.subr.bf16.mxu0 0
  %4144 = vmatpush1.bf16.msra.mxu0 0
  %4145 = vmatprep.subr.bf16.mxu0 0
  %4146 = vmatpush1.bf16.msra.mxu0 0
  %4147 = vmatprep.subr.bf16.mxu0 0
  %4148 = vmatpush1.bf16.msra.mxu0 0
  %4149 = vmatprep.subr.bf16.mxu0 0
  %4150 = vmatpush1.bf16.msra.mxu0 0
  %4151 = vmatprep.subr.bf16.mxu0 0
  %4152 = vmatpush1.bf16.msra.mxu0 0
  %4153 = vmatprep.subr.bf16.mxu0 0
  %4154 = vmatpush1.bf16.msra.mxu0 0
  %4155 = vmatprep.subr.bf16.mxu0 0
  %4156 = vmatpush1.bf16.msra.mxu0 0
  %4157 = vmatprep.subr.bf16.mxu0 0
  %4158 = vmatpush1.bf16.msra.mxu0 0
  %4159 = vmatprep.subr.bf16.mxu0 0
  %4160 = vmatpush1.bf16.msra.mxu0 0
  %4161 = vmatprep.mubr.bf16.mxu0 0
  %4162 = vmatmul.mubr.bf16.gmra.mrb[0].mxu0 %v2959
  %v4163 = vpop.f32.mrb[0].mxu0
  %v4164 = vadd.f32 0.0, %v4163
  %v4165 = vpop.f32.mrb[0].mxu0
  %v4166 = vpop.f32.mrb[0].mxu0
  %v4167 = vadd.f32 0.0, %v4166
  %v4168 = vpop.f32.mrb[0].mxu0
  %4169 = vmatprep.mubr.bf16.mxu0 0
  %4170 = vmatmul.mubr.bf16.gmra.mrb[0].mxu0 %v2962
  %v4171 = vpop.f32.mrb[0].mxu0
  %v4172 = vadd.f32 0.0, %v4171
  %v4173 = vpop.f32.mrb[0].mxu0
  %v4174 = vpop.f32.mrb[0].mxu0
  %v4175 = vadd.f32 0.0, %v4174
  %v4176 = vpop.f32.mrb[0].mxu0
  %4177 = vmatprep.mubr.bf16.mxu0 0
  %4178 = vmatmul.mubr.bf16.gmra.mrb[0].mxu0 %v2965
  %v4179 = vpop.f32.mrb[0].mxu0
  %v4180 = vadd.f32 0.0, %v4179
  %v4181 = vpop.f32.mrb[0].mxu0
  %v4182 = vpop.f32.mrb[0].mxu0
  %v4183 = vadd.f32 0.0, %v4182
  %v4184 = vpop.f32.mrb[0].mxu0
  %4185 = vmatprep.mubr.bf16.mxu0 0
  %4186 = vmatmul.mubr.bf16.gmra.mrb[0].mxu0 %v2968
  %v4187 = vpop.f32.mrb[0].mxu0
  %v4188 = vadd.f32 0.0, %v4187
  %v4189 = vpop.f32.mrb[0].mxu0
  %v4190 = vpop.f32.mrb[0].mxu0
  %v4191 = vadd.f32 0.0, %v4190
  %v4192 = vpop.f32.mrb[0].mxu0
  %4193 = vmatprep.mubr.bf16.mxu0 0
  %4194 = vmatmul.mubr.bf16.gmra.mrb[0].mxu0 %v2971
  %v4195 = vpop.f32.mrb[0].mxu0
  %v4196 = vadd.f32 0.0, %v4195
  %v4197 = vpop.f32.mrb[0].mxu0
  %v4198 = vpop.f32.mrb[0].mxu0
  %v4199 = vadd.f32 0.0, %v4198
  %v4200 = vpop.f32.mrb[0].mxu0
  %4201 = vmatprep.mubr.bf16.mxu0 0
  %4202 = vmatmul.mubr.bf16.gmra.mrb[0].mxu0 %v2974
  %v4203 = vpop.f32.mrb[0].mxu0
  %v4204 = vadd.f32 0.0, %v4203
  %v4205 = vpop.f32.mrb[0].mxu0
  %v4206 = vpop.f32.mrb[0].mxu0
  %v4207 = vadd.f32 0.0, %v4206
  %v4208 = vpop.f32.mrb[0].mxu0
  %4209 = vdwg.mxu0
  %v4211 = vsel %vm696, %v4104, 0
  %v4214 = vsel %vm696, %v4107, 0
  %v4217 = vsel %vm696, %v4112, 0
  %v4220 = vsel %vm696, %v4115, 0
  %v4223 = vsel %vm696, %v4120, 0
  %v4226 = vsel %vm696, %v4123, 0
  %4228 = vmatprep.subr.mxu0 0.0
  %4229 = vmatpush1.msra.mxu0 %v4036
  %4230 = vmatprep.subr.mxu0 0.0
  %4231 = vmatpush1.msra.mxu0 %v4037
  %4232 = vmatprep.subr.mxu0 0.0
  %4233 = vmatpush1.msra.mxu0 %v4038
  %4234 = vmatprep.subr.mxu0 0.0
  %4235 = vmatpush1.msra.mxu0 %v4039
  %4236 = vmatprep.subr.mxu0 0.0
  %4237 = vmatpush1.msra.mxu0 %v4040
  %4238 = vmatprep.subr.mxu0 0.0
  %4239 = vmatpush1.msra.mxu0 %v4041
  %4240 = vmatprep.subr.mxu0 0.0
  %4241 = vmatpush1.msra.mxu0 %v4042
  %4242 = vmatprep.subr.mxu0 0.0
  %4243 = vmatpush1.msra.mxu0 %v4043
  %4244 = vmatprep.subr.mxu0 0.0
  %4245 = vmatpush1.msra.mxu0 0.0
  %4246 = vmatprep.subr.mxu0 0.0
  %4247 = vmatpush1.msra.mxu0 0.0
  %4248 = vmatprep.subr.mxu0 0.0
  %4249 = vmatpush1.msra.mxu0 0.0
  %4250 = vmatprep.subr.mxu0 0.0
  %4251 = vmatpush1.msra.mxu0 0.0
  %4252 = vmatprep.subr.mxu0 0.0
  %4253 = vmatpush1.msra.mxu0 0.0
  %4254 = vmatprep.subr.mxu0 0.0
  %4255 = vmatpush1.msra.mxu0 0.0
  %4256 = vmatprep.subr.mxu0 0.0
  %4257 = vmatpush1.msra.mxu0 0.0
  %4258 = vmatprep.subr.mxu0 0.0
  %4259 = vmatpush1.msra.mxu0 0.0
  %4260 = vmatprep.subr.mxu0 0.0
  %4261 = vmatpush1.msra.mxu0 0.0
  %4262 = vmatprep.subr.mxu0 0.0
  %4263 = vmatpush1.msra.mxu0 0.0
  %4264 = vmatprep.subr.mxu0 0.0
  %4265 = vmatpush1.msra.mxu0 0.0
  %4266 = vmatprep.subr.mxu0 0.0
  %4267 = vmatpush1.msra.mxu0 0.0
  %4268 = vmatprep.subr.mxu0 0.0
  %4269 = vmatpush1.msra.mxu0 0.0
  %4270 = vmatprep.subr.mxu0 0.0
  %4271 = vmatpush1.msra.mxu0 0.0
  %4272 = vmatprep.subr.mxu0 0.0
  %4273 = vmatpush1.msra.mxu0 0.0
  %4274 = vmatprep.subr.mxu0 0.0
  %4275 = vmatpush1.msra.mxu0 0.0
  %4276 = vmatprep.subr.mxu0 0.0
  %4277 = vmatpush1.msra.mxu0 0.0
  %4278 = vmatprep.subr.mxu0 0.0
  %4279 = vmatpush1.msra.mxu0 0.0
  %4280 = vmatprep.subr.mxu0 0.0
  %4281 = vmatpush1.msra.mxu0 0.0
  %4282 = vmatprep.subr.mxu0 0.0
  %4283 = vmatpush1.msra.mxu0 0.0
  %4284 = vmatprep.subr.mxu0 0.0
  %4285 = vmatpush1.msra.mxu0 0.0
  %4286 = vmatprep.subr.mxu0 0.0
  %4287 = vmatpush1.msra.mxu0 0.0
  %4288 = vmatprep.subr.mxu0 0.0
  %4289 = vmatpush1.msra.mxu0 0.0
  %4290 = vmatprep.subr.mxu0 0.0
  %4291 = vmatpush1.msra.mxu0 0.0
  %4292 = vmatprep.mubr.f32.mxu0 0.0
  %4293 = vmatmul.mubr.f32.gmra.mrb[0].mxu0 %v4211
  %v4294 = vpop.f32.mrb[0].mxu0
  %v4295 = vadd.f32 0.0, %v4294
  %v4296 = vpop.f32.mrb[0].mxu0
  %4297 = vmatprep.mubr.f32.mxu0 0.0
  %4298 = vmatmul.mubr.f32.gmra.mrb[0].mxu0 %v4214
  %v4299 = vpop.f32.mrb[0].mxu0
  %v4300 = vadd.f32 0.0, %v4299
  %v4301 = vpop.f32.mrb[0].mxu0
  %4302 = vmatprep.mubr.f32.mxu0 0.0
  %4303 = vmatmul.mubr.f32.gmra.mrb[0].mxu0 %v4217
  %v4304 = vpop.f32.mrb[0].mxu0
  %v4305 = vadd.f32 0.0, %v4304
  %v4306 = vpop.f32.mrb[0].mxu0
  %4307 = vmatprep.mubr.f32.mxu0 0.0
  %4308 = vmatmul.mubr.f32.gmra.mrb[0].mxu0 %v4220
  %v4309 = vpop.f32.mrb[0].mxu0
  %v4310 = vadd.f32 0.0, %v4309
  %v4311 = vpop.f32.mrb[0].mxu0
  %4312 = vmatprep.mubr.f32.mxu0 0.0
  %4313 = vmatmul.mubr.f32.gmra.mrb[0].mxu0 %v4223
  %v4314 = vpop.f32.mrb[0].mxu0
  %v4315 = vadd.f32 0.0, %v4314
  %v4316 = vpop.f32.mrb[0].mxu0
  %4317 = vmatprep.mubr.f32.mxu0 0.0
  %4318 = vmatmul.mubr.f32.gmra.mrb[0].mxu0 %v4226
  %v4319 = vpop.f32.mrb[0].mxu0
  %v4320 = vadd.f32 0.0, %v4319
  %v4321 = vpop.f32.mrb[0].mxu0
  %4322 = vdwg.mxu0
  %v4323 = vpack.c.bf16 %v4300, %v4295
  %v4324 = vpack.c.bf16 %v4310, %v4305
  %v4325 = vpack.c.bf16 %v4320, %v4315
  %v4327 = vsel %vm696, %v4164, 0
  %v4330 = vsel %vm696, %v4167, 0
  %v4333 = vsel %vm696, %v4172, 0
  %v4336 = vsel %vm696, %v4175, 0
  %v4339 = vsel %vm696, %v4180, 0
  %v4342 = vsel %vm696, %v4183, 0
  %v4345 = vsel %vm696, %v4188, 0
  %v4348 = vsel %vm696, %v4191, 0
  %v4351 = vsel %vm696, %v4196, 0
  %v4354 = vsel %vm696, %v4199, 0
  %v4357 = vsel %vm696, %v4204, 0
  %v4360 = vsel %vm696, %v4207, 0
  %4362 = vmatprep.subr.mxu0 0.0
  %4363 = vmatpush1.msra.mxu0 %v4044
  %4364 = vmatprep.subr.mxu0 0.0
  %4365 = vmatpush1.msra.mxu0 %v4045
  %4366 = vmatprep.subr.mxu0 0.0
  %4367 = vmatpush1.msra.mxu0 %v4046
  %4368 = vmatprep.subr.mxu0 0.0
  %4369 = vmatpush1.msra.mxu0 %v4047
  %4370 = vmatprep.subr.mxu0 0.0
  %4371 = vmatpush1.msra.mxu0 %v4048
  %4372 = vmatprep.subr.mxu0 0.0
  %4373 = vmatpush1.msra.mxu0 %v4049
  %4374 = vmatprep.subr.mxu0 0.0
  %4375 = vmatpush1.msra.mxu0 %v4050
  %4376 = vmatprep.subr.mxu0 0.0
  %4377 = vmatpush1.msra.mxu0 %v4051
  %4378 = vmatprep.subr.mxu0 0.0
  %4379 = vmatpush1.msra.mxu0 0.0
  %4380 = vmatprep.subr.mxu0 0.0
  %4381 = vmatpush1.msra.mxu0 0.0
  %4382 = vmatprep.subr.mxu0 0.0
  %4383 = vmatpush1.msra.mxu0 0.0
  %4384 = vmatprep.subr.mxu0 0.0
  %4385 = vmatpush1.msra.mxu0 0.0
  %4386 = vmatprep.subr.mxu0 0.0
  %4387 = vmatpush1.msra.mxu0 0.0
  %4388 = vmatprep.subr.mxu0 0.0
  %4389 = vmatpush1.msra.mxu0 0.0
  %4390 = vmatprep.subr.mxu0 0.0
  %4391 = vmatpush1.msra.mxu0 0.0
  %4392 = vmatprep.subr.mxu0 0.0
  %4393 = vmatpush1.msra.mxu0 0.0
  %4394 = vmatprep.subr.mxu0 0.0
  %4395 = vmatpush1.msra.mxu0 0.0
  %4396 = vmatprep.subr.mxu0 0.0
  %4397 = vmatpush1.msra.mxu0 0.0
  %4398 = vmatprep.subr.mxu0 0.0
  %4399 = vmatpush1.msra.mxu0 0.0
  %4400 = vmatprep.subr.mxu0 0.0
  %4401 = vmatpush1.msra.mxu0 0.0
  %4402 = vmatprep.subr.mxu0 0.0
  %4403 = vmatpush1.msra.mxu0 0.0
  %4404 = vmatprep.subr.mxu0 0.0
  %4405 = vmatpush1.msra.mxu0 0.0
  %4406 = vmatprep.subr.mxu0 0.0
  %4407 = vmatpush1.msra.mxu0 0.0
  %4408 = vmatprep.subr.mxu0 0.0
  %4409 = vmatpush1.msra.mxu0 0.0
  %4410 = vmatprep.subr.mxu0 0.0
  %4411 = vmatpush1.msra.mxu0 0.0
  %4412 = vmatprep.subr.mxu0 0.0
  %4413 = vmatpush1.msra.mxu0 0.0
  %4414 = vmatprep.subr.mxu0 0.0
  %4415 = vmatpush1.msra.mxu0 0.0
  %4416 = vmatprep.subr.mxu0 0.0
  %4417 = vmatpush1.msra.mxu0 0.0
  %4418 = vmatprep.subr.mxu0 0.0
  %4419 = vmatpush1.msra.mxu0 0.0
  %4420 = vmatprep.subr.mxu0 0.0
  %4421 = vmatpush1.msra.mxu0 0.0
  %4422 = vmatprep.subr.mxu0 0.0
  %4423 = vmatpush1.msra.mxu0 0.0
  %4424 = vmatprep.subr.mxu0 0.0
  %4425 = vmatpush1.msra.mxu0 0.0
  %4426 = vmatprep.mubr.f32.mxu0 0.0
  %4427 = vmatmul.mubr.f32.gmra.mrb[0].mxu0 %v4327
  %v4428 = vpop.f32.mrb[0].mxu0
  %v4429 = vadd.f32 0.0, %v4428
  %v4430 = vpop.f32.mrb[0].mxu0
  %4431 = vmatprep.mubr.f32.mxu0 0.0
  %4432 = vmatmul.mubr.f32.gmra.mrb[0].mxu0 %v4330
  %v4433 = vpop.f32.mrb[0].mxu0
  %v4434 = vadd.f32 0.0, %v4433
  %v4435 = vpop.f32.mrb[0].mxu0
  %4436 = vmatprep.mubr.f32.mxu0 0.0
  %4437 = vmatmul.mubr.f32.gmra.mrb[0].mxu0 %v4333
  %v4438 = vpop.f32.mrb[0].mxu0
  %v4439 = vadd.f32 0.0, %v4438
  %v4440 = vpop.f32.mrb[0].mxu0
  %4441 = vmatprep.mubr.f32.mxu0 0.0
  %4442 = vmatmul.mubr.f32.gmra.mrb[0].mxu0 %v4336
  %v4443 = vpop.f32.mrb[0].mxu0
  %v4444 = vadd.f32 0.0, %v4443
  %v4445 = vpop.f32.mrb[0].mxu0
  %4446 = vmatprep.mubr.f32.mxu0 0.0
  %4447 = vmatmul.mubr.f32.gmra.mrb[0].mxu0 %v4339
  %v4448 = vpop.f32.mrb[0].mxu0
  %v4449 = vadd.f32 0.0, %v4448
  %v4450 = vpop.f32.mrb[0].mxu0
  %4451 = vmatprep.mubr.f32.mxu0 0.0
  %4452 = vmatmul.mubr.f32.gmra.mrb[0].mxu0 %v4342
  %v4453 = vpop.f32.mrb[0].mxu0
  %v4454 = vadd.f32 0.0, %v4453
  %v4455 = vpop.f32.mrb[0].mxu0
  %4456 = vmatprep.mubr.f32.mxu0 0.0
  %4457 = vmatmul.mubr.f32.gmra.mrb[0].mxu0 %v4345
  %v4458 = vpop.f32.mrb[0].mxu0
  %v4459 = vadd.f32 0.0, %v4458
  %v4460 = vpop.f32.mrb[0].mxu0
  %4461 = vmatprep.mubr.f32.mxu0 0.0
  %4462 = vmatmul.mubr.f32.gmra.mrb[0].mxu0 %v4348
  %v4463 = vpop.f32.mrb[0].mxu0
  %v4464 = vadd.f32 0.0, %v4463
  %v4465 = vpop.f32.mrb[0].mxu0
  %4466 = vmatprep.mubr.f32.mxu0 0.0
  %4467 = vmatmul.mubr.f32.gmra.mrb[0].mxu0 %v4351
  %v4468 = vpop.f32.mrb[0].mxu0
  %v4469 = vadd.f32 0.0, %v4468
  %v4470 = vpop.f32.mrb[0].mxu0
  %4471 = vmatprep.mubr.f32.mxu0 0.0
  %4472 = vmatmul.mubr.f32.gmra.mrb[0].mxu0 %v4354
  %v4473 = vpop.f32.mrb[0].mxu0
  %v4474 = vadd.f32 0.0, %v4473
  %v4475 = vpop.f32.mrb[0].mxu0
  %4476 = vmatprep.mubr.f32.mxu0 0.0
  %4477 = vmatmul.mubr.f32.gmra.mrb[0].mxu0 %v4357
  %v4478 = vpop.f32.mrb[0].mxu0
  %v4479 = vadd.f32 0.0, %v4478
  %v4480 = vpop.f32.mrb[0].mxu0
  %4481 = vmatprep.mubr.f32.mxu0 0.0
  %4482 = vmatmul.mubr.f32.gmra.mrb[0].mxu0 %v4360
  %v4483 = vpop.f32.mrb[0].mxu0
  %v4484 = vadd.f32 0.0, %v4483
  %v4485 = vpop.f32.mrb[0].mxu0
  %4486 = vdwg.mxu0
  %4487 = vmatprep.subr.bf16.mxu0 0
  %4488 = vmatpush1.bf16.msra.mxu0 %v4323
  %4489 = vmatprep.subr.bf16.mxu0 0
  %4490 = vmatpush1.bf16.msra.mxu0 %v4324
  %4491 = vmatprep.subr.bf16.mxu0 0
  %4492 = vmatpush1.bf16.msra.mxu0 %v4325
  %4493 = vmatprep.subr.bf16.mxu0 0
  %4494 = vmatpush1.bf16.msra.mxu0 0
  %4495 = vmatprep.subr.bf16.mxu0 0
  %4496 = vmatpush1.bf16.msra.mxu0 0
  %4497 = vmatprep.subr.bf16.mxu0 0
  %4498 = vmatpush1.bf16.msra.mxu0 0
  %4499 = vmatprep.subr.bf16.mxu0 0
  %4500 = vmatpush1.bf16.msra.mxu0 0
  %4501 = vmatprep.subr.bf16.mxu0 0
  %4502 = vmatpush1.bf16.msra.mxu0 0
  %4503 = vmatprep.subr.bf16.mxu0 0
  %4504 = vmatpush1.bf16.msra.mxu0 0
  %4505 = vmatprep.subr.bf16.mxu0 0
  %4506 = vmatpush1.bf16.msra.mxu0 0
  %4507 = vmatprep.subr.bf16.mxu0 0
  %4508 = vmatpush1.bf16.msra.mxu0 0
  %4509 = vmatprep.subr.bf16.mxu0 0
  %4510 = vmatpush1.bf16.msra.mxu0 0
  %4511 = vmatprep.subr.bf16.mxu0 0
  %4512 = vmatpush1.bf16.msra.mxu0 0
  %4513 = vmatprep.subr.bf16.mxu0 0
  %4514 = vmatpush1.bf16.msra.mxu0 0
  %4515 = vmatprep.subr.bf16.mxu0 0
  %4516 = vmatpush1.bf16.msra.mxu0 0
  %4517 = vmatprep.subr.bf16.mxu0 0
  %4518 = vmatpush1.bf16.msra.mxu0 0
  %4519 = vmatprep.mubr.bf16.mxu0 0
  %4520 = vmatmul.mubr.bf16.gmra.mrb[0].mxu0 %v3335
  %v4521 = vpop.f32.mrb[0].mxu0
  %v4522 = vadd.f32 %v4429, %v4521
  %v4523 = vpop.f32.mrb[0].mxu0
  %v4524 = vpop.f32.mrb[0].mxu0
  %v4525 = vadd.f32 %v4434, %v4524
  %v4526 = vpop.f32.mrb[0].mxu0
  %4527 = vmatprep.mubr.bf16.mxu0 0
  %4528 = vmatmul.mubr.bf16.gmra.mrb[0].mxu0 %v3338
  %v4529 = vpop.f32.mrb[0].mxu0
  %v4530 = vadd.f32 %v4439, %v4529
  %v4531 = vpop.f32.mrb[0].mxu0
  %v4532 = vpop.f32.mrb[0].mxu0
  %v4533 = vadd.f32 %v4444, %v4532
  %v4534 = vpop.f32.mrb[0].mxu0
  %4535 = vmatprep.mubr.bf16.mxu0 0
  %4536 = vmatmul.mubr.bf16.gmra.mrb[0].mxu0 %v3341
  %v4537 = vpop.f32.mrb[0].mxu0
  %v4538 = vadd.f32 %v4449, %v4537
  %v4539 = vpop.f32.mrb[0].mxu0
  %v4540 = vpop.f32.mrb[0].mxu0
  %v4541 = vadd.f32 %v4454, %v4540
  %v4542 = vpop.f32.mrb[0].mxu0
  %4543 = vmatprep.mubr.bf16.mxu0 0
  %4544 = vmatmul.mubr.bf16.gmra.mrb[0].mxu0 %v3344
  %v4545 = vpop.f32.mrb[0].mxu0
  %v4546 = vadd.f32 %v4459, %v4545
  %v4547 = vpop.f32.mrb[0].mxu0
  %v4548 = vpop.f32.mrb[0].mxu0
  %v4549 = vadd.f32 %v4464, %v4548
  %v4550 = vpop.f32.mrb[0].mxu0
  %4551 = vmatprep.mubr.bf16.mxu0 0
  %4552 = vmatmul.mubr.bf16.gmra.mrb[0].mxu0 %v3347
  %v4553 = vpop.f32.mrb[0].mxu0
  %v4554 = vadd.f32 %v4469, %v4553
  %v4555 = vpop.f32.mrb[0].mxu0
  %v4556 = vpop.f32.mrb[0].mxu0
  %v4557 = vadd.f32 %v4474, %v4556
  %v4558 = vpop.f32.mrb[0].mxu0
  %4559 = vmatprep.mubr.bf16.mxu0 0
  %4560 = vmatmul.mubr.bf16.gmra.mrb[0].mxu0 %v3350
  %v4561 = vpop.f32.mrb[0].mxu0
  %v4562 = vadd.f32 %v4479, %v4561
  %v4563 = vpop.f32.mrb[0].mxu0
  %v4564 = vpop.f32.mrb[0].mxu0
  %v4565 = vadd.f32 %v4484, %v4564
  %v4566 = vpop.f32.mrb[0].mxu0
  %4567 = vdwg.mxu0
  %v4569 = vlaneseq
  %v4570 = vshrl.u32 %v4569, 7
  %v4571 = vsub.s32 0, %v4570
  %v4572 = vrot.slane %v4052, %v4571
  %v4574 = vmul.f32 %v2845, %v4572
  %v4575 = vmul.f32 %v2846, %v4572
  %v4576 = vmul.f32 %v2847, %v4572
  %v4577 = vmul.f32 %v2848, %v4572
  %v4578 = vmul.f32 %v2849, %v4572
  %v4579 = vmul.f32 %v2850, %v4572
  %v4580 = vmul.f32 %v2851, %v4572
  %v4581 = vmul.f32 %v2852, %v4572
  %v4582 = vmul.f32 %v2853, %v4572
  %v4583 = vmul.f32 %v2854, %v4572
  %v4584 = vmul.f32 %v2855, %v4572
  %v4585 = vmul.f32 %v2856, %v4572
  %v4586 = vadd.f32 %v4522, %v4574
  %v4587 = vadd.f32 %v4525, %v4575
  %v4588 = vadd.f32 %v4530, %v4576
  %v4589 = vadd.f32 %v4533, %v4577
  %v4590 = vadd.f32 %v4538, %v4578
  %v4591 = vadd.f32 %v4541, %v4579
  %v4592 = vadd.f32 %v4546, %v4580
  %v4593 = vadd.f32 %v4549, %v4581
  %v4594 = vadd.f32 %v4554, %v4582
  %v4595 = vadd.f32 %v4557, %v4583
  %v4596 = vadd.f32 %v4562, %v4584
  %v4597 = vadd.f32 %v4565, %v4585
  %vm4598 = vcmp.gt.f32.partialorder %v4586, 0.0
  %vm4599 = vcmp.gt.f32.partialorder %v4587, 0.0
  %vm4600 = vcmp.gt.f32.partialorder %v4588, 0.0
  %vm4601 = vcmp.gt.f32.partialorder %v4589, 0.0
  %vm4602 = vcmp.gt.f32.partialorder %v4590, 0.0
  %vm4603 = vcmp.gt.f32.partialorder %v4591, 0.0
  %vm4604 = vcmp.gt.f32.partialorder %v4592, 0.0
  %vm4605 = vcmp.gt.f32.partialorder %v4593, 0.0
  %vm4606 = vcmp.gt.f32.partialorder %v4594, 0.0
  %vm4607 = vcmp.gt.f32.partialorder %v4595, 0.0
  %vm4608 = vcmp.gt.f32.partialorder %v4596, 0.0
  %vm4609 = vcmp.gt.f32.partialorder %v4597, 0.0
  %v4610 = vmul.f32 %v4586, 0.2
  %v4611 = vmul.f32 %v4587, 0.2
  %v4612 = vmul.f32 %v4588, 0.2
  %v4613 = vmul.f32 %v4589, 0.2
  %v4614 = vmul.f32 %v4590, 0.2
  %v4615 = vmul.f32 %v4591, 0.2
  %v4616 = vmul.f32 %v4592, 0.2
  %v4617 = vmul.f32 %v4593, 0.2
  %v4618 = vmul.f32 %v4594, 0.2
  %v4619 = vmul.f32 %v4595, 0.2
  %v4620 = vmul.f32 %v4596, 0.2
  %v4621 = vmul.f32 %v4597, 0.2
  %v4622 = vsel %vm4598, %v4586, %v4610
  %v4623 = vsel %vm4599, %v4587, %v4611
  %v4624 = vsel %vm4600, %v4588, %v4612
  %v4625 = vsel %vm4601, %v4589, %v4613
  %v4626 = vsel %vm4602, %v4590, %v4614
  %v4627 = vsel %vm4603, %v4591, %v4615
  %v4628 = vsel %vm4604, %v4592, %v4616
  %v4629 = vsel %vm4605, %v4593, %v4617
  %v4630 = vsel %vm4606, %v4594, %v4618
  %v4631 = vsel %vm4607, %v4595, %v4619
  %v4632 = vsel %vm4608, %v4596, %v4620
  %v4633 = vsel %vm4609, %v4597, %v4621
  %v4634 = vsub.f32 0.0, %v4622
  %v4635 = vsub.f32 0.0, %v4623
  %v4636 = vsub.f32 0.0, %v4624
  %v4637 = vsub.f32 0.0, %v4625
  %v4638 = vsub.f32 0.0, %v4626
  %v4639 = vsub.f32 0.0, %v4627
  %v4640 = vsub.f32 0.0, %v4628
  %v4641 = vsub.f32 0.0, %v4629
  %v4642 = vsub.f32 0.0, %v4630
  %v4643 = vsub.f32 0.0, %v4631
  %v4644 = vsub.f32 0.0, %v4632
  %v4645 = vsub.f32 0.0, %v4633
  %v4646 = vmin.f32 %v4634, 60.0
  %v4647 = vmin.f32 %v4635, 60.0
  %v4648 = vmin.f32 %v4636, 60.0
  %v4649 = vmin.f32 %v4637, 60.0
  %v4650 = vmin.f32 %v4638, 60.0
  %v4651 = vmin.f32 %v4639, 60.0
  %v4652 = vmin.f32 %v4640, 60.0
  %v4653 = vmin.f32 %v4641, 60.0
  %v4654 = vmin.f32 %v4642, 60.0
  %v4655 = vmin.f32 %v4643, 60.0
  %v4656 = vmin.f32 %v4644, 60.0
  %v4657 = vmin.f32 %v4645, 60.0
  %v4658 = vmul.f32 %v4646, 1.442695
  %v4659 = vpow.pop %v4658
  %v4660 = vmul.f32 %v4647, 1.442695
  %v4661 = vpow.pop %v4660
  %v4662 = vmul.f32 %v4648, 1.442695
  %v4663 = vpow.pop %v4662
  %v4664 = vmul.f32 %v4649, 1.442695
  %v4665 = vpow.pop %v4664
  %v4666 = vmul.f32 %v4650, 1.442695
  %v4667 = vpow.pop %v4666
  %v4668 = vmul.f32 %v4651, 1.442695
  %v4669 = vpow.pop %v4668
  %v4670 = vmul.f32 %v4652, 1.442695
  %v4671 = vpow.pop %v4670
  %v4672 = vmul.f32 %v4653, 1.442695
  %v4673 = vpow.pop %v4672
  %v4674 = vmul.f32 %v4654, 1.442695
  %v4675 = vpow.pop %v4674
  %v4676 = vmul.f32 %v4655, 1.442695
  %v4677 = vpow.pop %v4676
  %v4678 = vmul.f32 %v4656, 1.442695
  %v4679 = vpow.pop %v4678
  %v4680 = vmul.f32 %v4657, 1.442695
  %v4681 = vpow.pop %v4680
  %4683 = vset.pattern.permute.xlu0 0
  %4684 = vperm.xlu0 %4683, %v4659
  %v4685 = vpop.permute.xlu0 %4684
  %4688 = vset.pattern.permute.xlu0 0
  %4689 = vperm.xlu0 %4688, %v4661
  %v4690 = vpop.permute.xlu0 %4689
  %4693 = vset.pattern.permute.xlu0 0
  %4694 = vperm.xlu0 %4693, %v4663
  %v4695 = vpop.permute.xlu0 %4694
  %4698 = vset.pattern.permute.xlu0 0
  %4699 = vperm.xlu0 %4698, %v4665
  %v4700 = vpop.permute.xlu0 %4699
  %4703 = vset.pattern.permute.xlu0 0
  %4704 = vperm.xlu0 %4703, %v4667
  %v4705 = vpop.permute.xlu0 %4704
  %4708 = vset.pattern.permute.xlu0 0
  %4709 = vperm.xlu0 %4708, %v4669
  %v4710 = vpop.permute.xlu0 %4709
  %4713 = vset.pattern.permute.xlu0 0
  %4714 = vperm.xlu0 %4713, %v4671
  %v4715 = vpop.permute.xlu0 %4714
  %4718 = vset.pattern.permute.xlu0 0
  %4719 = vperm.xlu0 %4718, %v4673
  %v4720 = vpop.permute.xlu0 %4719
  %4723 = vset.pattern.permute.xlu0 0
  %4724 = vperm.xlu0 %4723, %v4675
  %v4725 = vpop.permute.xlu0 %4724
  %4728 = vset.pattern.permute.xlu0 0
  %4729 = vperm.xlu0 %4728, %v4677
  %v4730 = vpop.permute.xlu0 %4729
  %4733 = vset.pattern.permute.xlu0 0
  %4734 = vperm.xlu0 %4733, %v4679
  %v4735 = vpop.permute.xlu0 %4734
  %4738 = vset.pattern.permute.xlu0 0
  %4739 = vperm.xlu0 %4738, %v4681
  %v4740 = vpop.permute.xlu0 %4739
  %v4742 = vmul.f32 %v4685, %v4164
  %v4743 = vmul.f32 %v4690, %v4167
  %v4744 = vmul.f32 %v4695, %v4172
  %v4745 = vmul.f32 %v4700, %v4175
  %v4746 = vmul.f32 %v4705, %v4180
  %v4747 = vmul.f32 %v4710, %v4183
  %v4748 = vmul.f32 %v4715, %v4188
  %v4749 = vmul.f32 %v4720, %v4191
  %v4750 = vmul.f32 %v4725, %v4196
  %v4751 = vmul.f32 %v4730, %v4199
  %v4752 = vmul.f32 %v4735, %v4204
  %v4753 = vmul.f32 %v4740, %v4207
  %v4754 = vpack.c.bf16 %v4743, %v4742
  %v4755 = vpack.c.bf16 %v4745, %v4744
  %v4756 = vpack.c.bf16 %v4747, %v4746
  %v4757 = vpack.c.bf16 %v4749, %v4748
  %v4758 = vpack.c.bf16 %v4751, %v4750
  %v4759 = vpack.c.bf16 %v4753, %v4752
  %4760 = vmatprep.subr.bf16.mxu0 0
  %4761 = vmatpush1.bf16.msra.mxu0 %v4754
  %4762 = vmatprep.subr.bf16.mxu0 0
  %4763 = vmatpush1.bf16.msra.mxu0 %v4755
  %4764 = vmatprep.subr.bf16.mxu0 0
  %4765 = vmatpush1.bf16.msra.mxu0 %v4756
  %4766 = vmatprep.subr.bf16.mxu0 0
  %4767 = vmatpush1.bf16.msra.mxu0 %v4757
  %4768 = vmatprep.subr.bf16.mxu0 0
  %4769 = vmatpush1.bf16.msra.mxu0 %v4758
  %4770 = vmatprep.subr.bf16.mxu0 0
  %4771 = vmatpush1.bf16.msra.mxu0 %v4759
  %4772 = vmatprep.subr.bf16.mxu0 0
  %4773 = vmatpush1.bf16.msra.mxu0 0
  %4774 = vmatprep.subr.bf16.mxu0 0
  %4775 = vmatpush1.bf16.msra.mxu0 0
  %4776 = vmatprep.subr.bf16.mxu0 0
  %4777 = vmatpush1.bf16.msra.mxu0 0
  %4778 = vmatprep.subr.bf16.mxu0 0
  %4779 = vmatpush1.bf16.msra.mxu0 0
  %4780 = vmatprep.subr.bf16.mxu0 0
  %4781 = vmatpush1.bf16.msra.mxu0 0
  %4782 = vmatprep.subr.bf16.mxu0 0
  %4783 = vmatpush1.bf16.msra.mxu0 0
  %4784 = vmatprep.subr.bf16.mxu0 0
  %4785 = vmatpush1.bf16.msra.mxu0 0
  %4786 = vmatprep.subr.bf16.mxu0 0
  %4787 = vmatpush1.bf16.msra.mxu0 0
  %4788 = vmatprep.subr.bf16.mxu0 0
  %4789 = vmatpush1.bf16.msra.mxu0 0
  %4790 = vmatprep.subr.bf16.mxu0 0
  %4791 = vmatpush1.bf16.msra.mxu0 0
  %4792 = vmatprep.mubr.bf16.mxu0 0
  %4793 = vmatmul.mubr.bf16.gmra.mrb[0].mxu0 %v3727
  %v4794 = vpop.f32.mrb[0].mxu0
  %v4795 = vadd.f32 0.0, %v4794
  %v4796 = vpop.f32.mrb[0].mxu0
  %v4797 = vpop.f32.mrb[0].mxu0
  %v4798 = vadd.f32 0.0, %v4797
  %v4799 = vpop.f32.mrb[0].mxu0
  %4800 = vmatprep.mubr.bf16.mxu0 0
  %4801 = vmatmul.mubr.bf16.gmra.mrb[0].mxu0 %v3730
  %v4802 = vpop.f32.mrb[0].mxu0
  %v4803 = vadd.f32 0.0, %v4802
  %v4804 = vpop.f32.mrb[0].mxu0
  %v4805 = vpop.f32.mrb[0].mxu0
  %v4806 = vadd.f32 0.0, %v4805
  %v4807 = vpop.f32.mrb[0].mxu0
  %4808 = vmatprep.mubr.bf16.mxu0 0
  %4809 = vmatmul.mubr.bf16.gmra.mrb[0].mxu0 %v3733
  %v4810 = vpop.f32.mrb[0].mxu0
  %v4811 = vadd.f32 0.0, %v4810
  %v4812 = vpop.f32.mrb[0].mxu0
  %v4813 = vpop.f32.mrb[0].mxu0
  %v4814 = vadd.f32 0.0, %v4813
  %v4815 = vpop.f32.mrb[0].mxu0
  %4816 = vdwg.mxu0
  %v4817 = vpack.c.bf16 %v4661, %v4659
  %v4818 = vpack.c.bf16 %v4665, %v4663
  %v4819 = vpack.c.bf16 %v4669, %v4667
  %v4820 = vpack.c.bf16 %v4673, %v4671
  %v4821 = vpack.c.bf16 %v4677, %v4675
  %v4822 = vpack.c.bf16 %v4681, %v4679
  %4823 = vmatprep.subr.bf16.mxu0 0
  %4824 = vmatpush1.bf16.msra.mxu0 %v4817
  %4825 = vmatprep.subr.bf16.mxu0 0
  %4826 = vmatpush1.bf16.msra.mxu0 %v4818
  %4827 = vmatprep.subr.bf16.mxu0 0
  %4828 = vmatpush1.bf16.msra.mxu0 %v4819
  %4829 = vmatprep.subr.bf16.mxu0 0
  %4830 = vmatpush1.bf16.msra.mxu0 %v4820
  %4831 = vmatprep.subr.bf16.mxu0 0
  %4832 = vmatpush1.bf16.msra.mxu0 %v4821
  %4833 = vmatprep.subr.bf16.mxu0 0
  %4834 = vmatpush1.bf16.msra.mxu0 %v4822
  %4835 = vmatprep.subr.bf16.mxu0 0
  %4836 = vmatpush1.bf16.msra.mxu0 0
  %4837 = vmatprep.subr.bf16.mxu0 0
  %4838 = vmatpush1.bf16.msra.mxu0 0
  %4839 = vmatprep.subr.bf16.mxu0 0
  %4840 = vmatpush1.bf16.msra.mxu0 0
  %4841 = vmatprep.subr.bf16.mxu0 0
  %4842 = vmatpush1.bf16.msra.mxu0 0
  %4843 = vmatprep.subr.bf16.mxu0 0
  %4844 = vmatpush1.bf16.msra.mxu0 0
  %4845 = vmatprep.subr.bf16.mxu0 0
  %4846 = vmatpush1.bf16.msra.mxu0 0
  %4847 = vmatprep.subr.bf16.mxu0 0
  %4848 = vmatpush1.bf16.msra.mxu0 0
  %4849 = vmatprep.subr.bf16.mxu0 0
  %4850 = vmatpush1.bf16.msra.mxu0 0
  %4851 = vmatprep.subr.bf16.mxu0 0
  %4852 = vmatpush1.bf16.msra.mxu0 0
  %4853 = vmatprep.subr.bf16.mxu0 0
  %4854 = vmatpush1.bf16.msra.mxu0 0
  %4855 = vmatprep.mubr.bf16.mxu0 0
  %4856 = vmatmul.mubr.bf16.gmra.mrb[0].mxu0 %v3727
  %v4857 = vpop.f32.mrb[0].mxu0
  %v4858 = vadd.f32 0.0, %v4857
  %v4859 = vpop.f32.mrb[0].mxu0
  %v4860 = vpop.f32.mrb[0].mxu0
  %v4861 = vadd.f32 0.0, %v4860
  %v4862 = vpop.f32.mrb[0].mxu0
  %4863 = vmatprep.mubr.bf16.mxu0 0
  %4864 = vmatmul.mubr.bf16.gmra.mrb[0].mxu0 %v3730
  %v4865 = vpop.f32.mrb[0].mxu0
  %v4866 = vadd.f32 0.0, %v4865
  %v4867 = vpop.f32.mrb[0].mxu0
  %v4868 = vpop.f32.mrb[0].mxu0
  %v4869 = vadd.f32 0.0, %v4868
  %v4870 = vpop.f32.mrb[0].mxu0
  %4871 = vmatprep.mubr.bf16.mxu0 0
  %4872 = vmatmul.mubr.bf16.gmra.mrb[0].mxu0 %v3733
  %v4873 = vpop.f32.mrb[0].mxu0
  %v4874 = vadd.f32 0.0, %v4873
  %v4875 = vpop.f32.mrb[0].mxu0
  %v4876 = vpop.f32.mrb[0].mxu0
  %v4877 = vadd.f32 0.0, %v4876
  %v4878 = vpop.f32.mrb[0].mxu0
  %4879 = vdwg.mxu0
  %vm4880 = vcmp.eq.f32.partialorder %v4858, 0.0
  %vm4881 = vcmp.eq.f32.partialorder %v4861, 0.0
  %vm4882 = vcmp.eq.f32.partialorder %v4866, 0.0
  %vm4883 = vcmp.eq.f32.partialorder %v4869, 0.0
  %vm4884 = vcmp.eq.f32.partialorder %v4874, 0.0
  %vm4885 = vcmp.eq.f32.partialorder %v4877, 0.0
  %v4886 = vsel %vm4880, 1.0, %v4858
  %v4887 = vsel %vm4881, 1.0, %v4861
  %v4888 = vsel %vm4882, 1.0, %v4866
  %v4889 = vsel %vm4883, 1.0, %v4869
  %v4890 = vsel %vm4884, 1.0, %v4874
  %v4891 = vsel %vm4885, 1.0, %v4877
  %v4892 = vrcp.pop %v4886
  %v4893 = vrcp.pop %v4887
  %v4894 = vrcp.pop %v4888
  %v4895 = vrcp.pop %v4889
  %v4896 = vrcp.pop %v4890
  %v4897 = vrcp.pop %v4891
  %4899 = vset.pattern.permute.xlu0 0
  %4900 = vperm.xlu0 %4899, %v4892
  %v4901 = vpop.permute.xlu0 %4900
  %4904 = vset.pattern.permute.xlu0 0
  %4905 = vperm.xlu0 %4904, %v4893
  %v4906 = vpop.permute.xlu0 %4905
  %4909 = vset.pattern.permute.xlu0 0
  %4910 = vperm.xlu0 %4909, %v4894
  %v4911 = vpop.permute.xlu0 %4910
  %4914 = vset.pattern.permute.xlu0 0
  %4915 = vperm.xlu0 %4914, %v4895
  %v4916 = vpop.permute.xlu0 %4915
  %4919 = vset.pattern.permute.xlu0 0
  %4920 = vperm.xlu0 %4919, %v4896
  %v4921 = vpop.permute.xlu0 %4920
  %4924 = vset.pattern.permute.xlu0 0
  %4925 = vperm.xlu0 %4924, %v4897
  %v4926 = vpop.permute.xlu0 %4925
  %v4928 = vmul.f32 %v4795, %v4901
  %v4929 = vmul.f32 %v4798, %v4906
  %v4930 = vmul.f32 %v4803, %v4911
  %v4931 = vmul.f32 %v4806, %v4916
  %v4932 = vmul.f32 %v4811, %v4921
  %v4933 = vmul.f32 %v4814, %v4926
  %v4934 = vpack.c.bf16 %v4929, %v4928
  %v4935 = vpack.c.bf16 %v4931, %v4930
  %v4936 = vpack.c.bf16 %v4933, %v4932
  %v4938 = vsel %vm696, %v4934, 0
  %v4941 = vsel %vm696, %v4935, 0
  %v4944 = vsel %vm696, %v4936, 0
  %4946 = vmatprep.subr.bf16.mxu0 0
  %4947 = vmatpush1.bf16.msra.mxu0 %v692
  %4948 = vmatprep.subr.bf16.mxu0 0
  %4949 = vmatpush1.bf16.msra.mxu0 %v693
  %4950 = vmatprep.subr.bf16.mxu0 0
  %4951 = vmatpush1.bf16.msra.mxu0 %v694
  %4952 = vmatprep.subr.bf16.mxu0 0
  %4953 = vmatpush1.bf16.msra.mxu0 %v695
  %4954 = vmatprep.subr.bf16.mxu0 0
  %4955 = vmatpush1.bf16.msra.mxu0 0
  %4956 = vmatprep.subr.bf16.mxu0 0
  %4957 = vmatpush1.bf16.msra.mxu0 0
  %4958 = vmatprep.subr.bf16.mxu0 0
  %4959 = vmatpush1.bf16.msra.mxu0 0
  %4960 = vmatprep.subr.bf16.mxu0 0
  %4961 = vmatpush1.bf16.msra.mxu0 0
  %4962 = vmatprep.subr.bf16.mxu0 0
  %4963 = vmatpush1.bf16.msra.mxu0 0
  %4964 = vmatprep.subr.bf16.mxu0 0
  %4965 = vmatpush1.bf16.msra.mxu0 0
  %4966 = vmatprep.subr.bf16.mxu0 0
  %4967 = vmatpush1.bf16.msra.mxu0 0
  %4968 = vmatprep.subr.bf16.mxu0 0
  %4969 = vmatpush1.bf16.msra.mxu0 0
  %4970 = vmatprep.subr.bf16.mxu0 0
  %4971 = vmatpush1.bf16.msra.mxu0 0
  %4972 = vmatprep.subr.bf16.mxu0 0
  %4973 = vmatpush1.bf16.msra.mxu0 0
  %4974 = vmatprep.subr.bf16.mxu0 0
  %4975 = vmatpush1.bf16.msra.mxu0 0
  %4976 = vmatprep.subr.bf16.mxu0 0
  %4977 = vmatpush1.bf16.msra.mxu0 0
  %4978 = vmatprep.mubr.bf16.mxu0 0
  %4979 = vmatmul.mubr.bf16.gmra.mrb[0].mxu0 %v4938
  %v4980 = vpop.f32.mrb[0].mxu0
  %v4981 = vadd.f32 0.0, %v4980
  %v4982 = vpop.f32.mrb[0].mxu0
  %v4983 = vpop.f32.mrb[0].mxu0
  %v4984 = vadd.f32 0.0, %v4983
  %v4985 = vpop.f32.mrb[0].mxu0
  %4986 = vmatprep.mubr.bf16.mxu0 0
  %4987 = vmatmul.mubr.bf16.gmra.mrb[0].mxu0 %v4941
  %v4988 = vpop.f32.mrb[0].mxu0
  %v4989 = vadd.f32 0.0, %v4988
  %v4990 = vpop.f32.mrb[0].mxu0
  %v4991 = vpop.f32.mrb[0].mxu0
  %v4992 = vadd.f32 0.0, %v4991
  %v4993 = vpop.f32.mrb[0].mxu0
  %4994 = vmatprep.mubr.bf16.mxu0 0
  %4995 = vmatmul.mubr.bf16.gmra.mrb[0].mxu0 %v4944
  %v4996 = vpop.f32.mrb[0].mxu0
  %v4997 = vadd.f32 0.0, %v4996
  %v4998 = vpop.f32.mrb[0].mxu0
  %v4999 = vpop.f32.mrb[0].mxu0
  %v5000 = vadd.f32 0.0, %v4999
  %v5001 = vpop.f32.mrb[0].mxu0
  %5002 = vdwg.mxu0
  %v5003 = vpack.c.bf16 %v4984, %v4981
  %v5004 = vpack.c.bf16 %v4992, %v4989
  %v5005 = vpack.c.bf16 %v5000, %v4997
  %5006 = vmatprep.subr.bf16.mxu0 0
  %5007 = vmatpush1.bf16.msra.mxu0 %v5003
  %5008 = vmatprep.subr.bf16.mxu0 0
  %5009 = vmatpush1.bf16.msra.mxu0 %v5004
  %5010 = vmatprep.subr.bf16.mxu0 0
  %5011 = vmatpush1.bf16.msra.mxu0 %v5005
  %5012 = vmatprep.subr.bf16.mxu0 0
  %5013 = vmatpush1.bf16.msra.mxu0 0
  %5014 = vmatprep.subr.bf16.mxu0 0
  %5015 = vmatpush1.bf16.msra.mxu0 0
  %5016 = vmatprep.subr.bf16.mxu0 0
  %5017 = vmatpush1.bf16.msra.mxu0 0
  %5018 = vmatprep.subr.bf16.mxu0 0
  %5019 = vmatpush1.bf16.msra.mxu0 0
  %5020 = vmatprep.subr.bf16.mxu0 0
  %5021 = vmatpush1.bf16.msra.mxu0 0
  %5022 = vmatprep.subr.bf16.mxu0 0
  %5023 = vmatpush1.bf16.msra.mxu0 0
  %5024 = vmatprep.subr.bf16.mxu0 0
  %5025 = vmatpush1.bf16.msra.mxu0 0
  %5026 = vmatprep.subr.bf16.mxu0 0
  %5027 = vmatpush1.bf16.msra.mxu0 0
  %5028 = vmatprep.subr.bf16.mxu0 0
  %5029 = vmatpush1.bf16.msra.mxu0 0
  %5030 = vmatprep.subr.bf16.mxu0 0
  %5031 = vmatpush1.bf16.msra.mxu0 0
  %5032 = vmatprep.subr.bf16.mxu0 0
  %5033 = vmatpush1.bf16.msra.mxu0 0
  %5034 = vmatprep.subr.bf16.mxu0 0
  %5035 = vmatpush1.bf16.msra.mxu0 0
  %5036 = vmatprep.subr.bf16.mxu0 0
  %5037 = vmatpush1.bf16.msra.mxu0 0
  %5038 = vmatprep.mubr.bf16.mxu0 0
  %5039 = vmatmul.mubr.bf16.gmra.mrb[0].mxu0 %v768
  %v5040 = vpop.f32.mrb[0].mxu0
  %v5041 = vadd.f32 0.0, %v5040
  %v5042 = vpop.f32.mrb[0].mxu0
  %v5043 = vpop.f32.mrb[0].mxu0
  %v5044 = vadd.f32 0.0, %v5043
  %v5045 = vpop.f32.mrb[0].mxu0
  %5046 = vmatprep.mubr.bf16.mxu0 0
  %5047 = vmatmul.mubr.bf16.gmra.mrb[0].mxu0 %v771
  %v5048 = vpop.f32.mrb[0].mxu0
  %v5049 = vadd.f32 0.0, %v5048
  %v5050 = vpop.f32.mrb[0].mxu0
  %v5051 = vpop.f32.mrb[0].mxu0
  %v5052 = vadd.f32 0.0, %v5051
  %v5053 = vpop.f32.mrb[0].mxu0
  %5054 = vmatprep.mubr.bf16.mxu0 0
  %5055 = vmatmul.mubr.bf16.gmra.mrb[0].mxu0 %v774
  %v5056 = vpop.f32.mrb[0].mxu0
  %v5057 = vadd.f32 0.0, %v5056
  %v5058 = vpop.f32.mrb[0].mxu0
  %v5059 = vpop.f32.mrb[0].mxu0
  %v5060 = vadd.f32 0.0, %v5059
  %v5061 = vpop.f32.mrb[0].mxu0
  %5062 = vmatprep.mubr.bf16.mxu0 0
  %5063 = vmatmul.mubr.bf16.gmra.mrb[0].mxu0 %v777
  %v5064 = vpop.f32.mrb[0].mxu0
  %v5065 = vadd.f32 0.0, %v5064
  %v5066 = vpop.f32.mrb[0].mxu0
  %v5067 = vpop.f32.mrb[0].mxu0
  %v5068 = vadd.f32 0.0, %v5067
  %v5069 = vpop.f32.mrb[0].mxu0
  %5070 = vmatprep.mubr.bf16.mxu0 0
  %5071 = vmatmul.mubr.bf16.gmra.mrb[0].mxu0 %v780
  %v5072 = vpop.f32.mrb[0].mxu0
  %v5073 = vadd.f32 0.0, %v5072
  %v5074 = vpop.f32.mrb[0].mxu0
  %v5075 = vpop.f32.mrb[0].mxu0
  %v5076 = vadd.f32 0.0, %v5075
  %v5077 = vpop.f32.mrb[0].mxu0
  %5078 = vmatprep.mubr.bf16.mxu0 0
  %5079 = vmatmul.mubr.bf16.gmra.mrb[0].mxu0 %v783
  %v5080 = vpop.f32.mrb[0].mxu0
  %v5081 = vadd.f32 0.0, %v5080
  %v5082 = vpop.f32.mrb[0].mxu0
  %v5083 = vpop.f32.mrb[0].mxu0
  %v5084 = vadd.f32 0.0, %v5083
  %v5085 = vpop.f32.mrb[0].mxu0
  %5086 = vdwg.mxu0
  %v5088 = vsel %vm696, %v4981, 0
  %v5091 = vsel %vm696, %v4984, 0
  %v5094 = vsel %vm696, %v4989, 0
  %v5097 = vsel %vm696, %v4992, 0
  %v5100 = vsel %vm696, %v4997, 0
  %v5103 = vsel %vm696, %v5000, 0
  %5105 = vmatprep.subr.mxu0 0.0
  %5106 = vmatpush1.msra.mxu0 %v672
  %5107 = vmatprep.subr.mxu0 0.0
  %5108 = vmatpush1.msra.mxu0 %v673
  %5109 = vmatprep.subr.mxu0 0.0
  %5110 = vmatpush1.msra.mxu0 %v674
  %5111 = vmatprep.subr.mxu0 0.0
  %5112 = vmatpush1.msra.mxu0 %v675
  %5113 = vmatprep.subr.mxu0 0.0
  %5114 = vmatpush1.msra.mxu0 %v676
  %5115 = vmatprep.subr.mxu0 0.0
  %5116 = vmatpush1.msra.mxu0 %v677
  %5117 = vmatprep.subr.mxu0 0.0
  %5118 = vmatpush1.msra.mxu0 %v678
  %5119 = vmatprep.subr.mxu0 0.0
  %5120 = vmatpush1.msra.mxu0 %v679
  %5121 = vmatprep.subr.mxu0 0.0
  %5122 = vmatpush1.msra.mxu0 0.0
  %5123 = vmatprep.subr.mxu0 0.0
  %5124 = vmatpush1.msra.mxu0 0.0
  %5125 = vmatprep.subr.mxu0 0.0
  %5126 = vmatpush1.msra.mxu0 0.0
  %5127 = vmatprep.subr.mxu0 0.0
  %5128 = vmatpush1.msra.mxu0 0.0
  %5129 = vmatprep.subr.mxu0 0.0
  %5130 = vmatpush1.msra.mxu0 0.0
  %5131 = vmatprep.subr.mxu0 0.0
  %5132 = vmatpush1.msra.mxu0 0.0
  %5133 = vmatprep.subr.mxu0 0.0
  %5134 = vmatpush1.msra.mxu0 0.0
  %5135 = vmatprep.subr.mxu0 0.0
  %5136 = vmatpush1.msra.mxu0 0.0
  %5137 = vmatprep.subr.mxu0 0.0
  %5138 = vmatpush1.msra.mxu0 0.0
  %5139 = vmatprep.subr.mxu0 0.0
  %5140 = vmatpush1.msra.mxu0 0.0
  %5141 = vmatprep.subr.mxu0 0.0
  %5142 = vmatpush1.msra.mxu0 0.0
  %5143 = vmatprep.subr.mxu0 0.0
  %5144 = vmatpush1.msra.mxu0 0.0
  %5145 = vmatprep.subr.mxu0 0.0
  %5146 = vmatpush1.msra.mxu0 0.0
  %5147 = vmatprep.subr.mxu0 0.0
  %5148 = vmatpush1.msra.mxu0 0.0
  %5149 = vmatprep.subr.mxu0 0.0
  %5150 = vmatpush1.msra.mxu0 0.0
  %5151 = vmatprep.subr.mxu0 0.0
  %5152 = vmatpush1.msra.mxu0 0.0
  %5153 = vmatprep.subr.mxu0 0.0
  %5154 = vmatpush1.msra.mxu0 0.0
  %5155 = vmatprep.subr.mxu0 0.0
  %5156 = vmatpush1.msra.mxu0 0.0
  %5157 = vmatprep.subr.mxu0 0.0
  %5158 = vmatpush1.msra.mxu0 0.0
  %5159 = vmatprep.subr.mxu0 0.0
  %5160 = vmatpush1.msra.mxu0 0.0
  %5161 = vmatprep.subr.mxu0 0.0
  %5162 = vmatpush1.msra.mxu0 0.0
  %5163 = vmatprep.subr.mxu0 0.0
  %5164 = vmatpush1.msra.mxu0 0.0
  %5165 = vmatprep.subr.mxu0 0.0
  %5166 = vmatpush1.msra.mxu0 0.0
  %5167 = vmatprep.subr.mxu0 0.0
  %5168 = vmatpush1.msra.mxu0 0.0
  %5169 = vmatprep.mubr.f32.mxu0 0.0
  %5170 = vmatmul.mubr.f32.gmra.mrb[0].mxu0 %v5088
  %v5171 = vpop.f32.mrb[0].mxu0
  %v5172 = vadd.f32 0.0, %v5171
  %v5173 = vpop.f32.mrb[0].mxu0
  %5174 = vmatprep.mubr.f32.mxu0 0.0
  %5175 = vmatmul.mubr.f32.gmra.mrb[0].mxu0 %v5091
  %v5176 = vpop.f32.mrb[0].mxu0
  %v5177 = vadd.f32 0.0, %v5176
  %v5178 = vpop.f32.mrb[0].mxu0
  %5179 = vmatprep.mubr.f32.mxu0 0.0
  %5180 = vmatmul.mubr.f32.gmra.mrb[0].mxu0 %v5094
  %v5181 = vpop.f32.mrb[0].mxu0
  %v5182 = vadd.f32 0.0, %v5181
  %v5183 = vpop.f32.mrb[0].mxu0
  %5184 = vmatprep.mubr.f32.mxu0 0.0
  %5185 = vmatmul.mubr.f32.gmra.mrb[0].mxu0 %v5097
  %v5186 = vpop.f32.mrb[0].mxu0
  %v5187 = vadd.f32 0.0, %v5186
  %v5188 = vpop.f32.mrb[0].mxu0
  %5189 = vmatprep.mubr.f32.mxu0 0.0
  %5190 = vmatmul.mubr.f32.gmra.mrb[0].mxu0 %v5100
  %v5191 = vpop.f32.mrb[0].mxu0
  %v5192 = vadd.f32 0.0, %v5191
  %v5193 = vpop.f32.mrb[0].mxu0
  %5194 = vmatprep.mubr.f32.mxu0 0.0
  %5195 = vmatmul.mubr.f32.gmra.mrb[0].mxu0 %v5103
  %v5196 = vpop.f32.mrb[0].mxu0
  %v5197 = vadd.f32 0.0, %v5196
  %v5198 = vpop.f32.mrb[0].mxu0
  %5199 = vdwg.mxu0
  %v5200 = vpack.c.bf16 %v5177, %v5172
  %v5201 = vpack.c.bf16 %v5187, %v5182
  %v5202 = vpack.c.bf16 %v5197, %v5192
  %v5204 = vsel %vm696, %v5041, 0
  %v5207 = vsel %vm696, %v5044, 0
  %v5210 = vsel %vm696, %v5049, 0
  %v5213 = vsel %vm696, %v5052, 0
  %v5216 = vsel %vm696, %v5057, 0
  %v5219 = vsel %vm696, %v5060, 0
  %v5222 = vsel %vm696, %v5065, 0
  %v5225 = vsel %vm696, %v5068, 0
  %v5228 = vsel %vm696, %v5073, 0
  %v5231 = vsel %vm696, %v5076, 0
  %v5234 = vsel %vm696, %v5081, 0
  %v5237 = vsel %vm696, %v5084, 0
  %5239 = vmatprep.subr.mxu0 0.0
  %5240 = vmatpush1.msra.mxu0 %v680
  %5241 = vmatprep.subr.mxu0 0.0
  %5242 = vmatpush1.msra.mxu0 %v681
  %5243 = vmatprep.subr.mxu0 0.0
  %5244 = vmatpush1.msra.mxu0 %v682
  %5245 = vmatprep.subr.mxu0 0.0
  %5246 = vmatpush1.msra.mxu0 %v683
  %5247 = vmatprep.subr.mxu0 0.0
  %5248 = vmatpush1.msra.mxu0 %v684
  %5249 = vmatprep.subr.mxu0 0.0
  %5250 = vmatpush1.msra.mxu0 %v685
  %5251 = vmatprep.subr.mxu0 0.0
  %5252 = vmatpush1.msra.mxu0 %v686
  %5253 = vmatprep.subr.mxu0 0.0
  %5254 = vmatpush1.msra.mxu0 %v687
  %5255 = vmatprep.subr.mxu0 0.0
  %5256 = vmatpush1.msra.mxu0 0.0
  %5257 = vmatprep.subr.mxu0 0.0
  %5258 = vmatpush1.msra.mxu0 0.0
  %5259 = vmatprep.subr.mxu0 0.0
  %5260 = vmatpush1.msra.mxu0 0.0
  %5261 = vmatprep.subr.mxu0 0.0
  %5262 = vmatpush1.msra.mxu0 0.0
  %5263 = vmatprep.subr.mxu0 0.0
  %5264 = vmatpush1.msra.mxu0 0.0
  %5265 = vmatprep.subr.mxu0 0.0
  %5266 = vmatpush1.msra.mxu0 0.0
  %5267 = vmatprep.subr.mxu0 0.0
  %5268 = vmatpush1.msra.mxu0 0.0
  %5269 = vmatprep.subr.mxu0 0.0
  %5270 = vmatpush1.msra.mxu0 0.0
  %5271 = vmatprep.subr.mxu0 0.0
  %5272 = vmatpush1.msra.mxu0 0.0
  %5273 = vmatprep.subr.mxu0 0.0
  %5274 = vmatpush1.msra.mxu0 0.0
  %5275 = vmatprep.subr.mxu0 0.0
  %5276 = vmatpush1.msra.mxu0 0.0
  %5277 = vmatprep.subr.mxu0 0.0
  %5278 = vmatpush1.msra.mxu0 0.0
  %5279 = vmatprep.subr.mxu0 0.0
  %5280 = vmatpush1.msra.mxu0 0.0
  %5281 = vmatprep.subr.mxu0 0.0
  %5282 = vmatpush1.msra.mxu0 0.0
  %5283 = vmatprep.subr.mxu0 0.0
  %5284 = vmatpush1.msra.mxu0 0.0
  %5285 = vmatprep.subr.mxu0 0.0
  %5286 = vmatpush1.msra.mxu0 0.0
  %5287 = vmatprep.subr.mxu0 0.0
  %5288 = vmatpush1.msra.mxu0 0.0
  %5289 = vmatprep.subr.mxu0 0.0
  %5290 = vmatpush1.msra.mxu0 0.0
  %5291 = vmatprep.subr.mxu0 0.0
  %5292 = vmatpush1.msra.mxu0 0.0
  %5293 = vmatprep.subr.mxu0 0.0
  %5294 = vmatpush1.msra.mxu0 0.0
  %5295 = vmatprep.subr.mxu0 0.0
  %5296 = vmatpush1.msra.mxu0 0.0
  %5297 = vmatprep.subr.mxu0 0.0
  %5298 = vmatpush1.msra.mxu0 0.0
  %5299 = vmatprep.subr.mxu0 0.0
  %5300 = vmatpush1.msra.mxu0 0.0
  %5301 = vmatprep.subr.mxu0 0.0
  %5302 = vmatpush1.msra.mxu0 0.0
  %5303 = vmatprep.mubr.f32.mxu0 0.0
  %5304 = vmatmul.mubr.f32.gmra.mrb[0].mxu0 %v5204
  %v5305 = vpop.f32.mrb[0].mxu0
  %v5306 = vadd.f32 0.0, %v5305
  %v5307 = vpop.f32.mrb[0].mxu0
  %5308 = vmatprep.mubr.f32.mxu0 0.0
  %5309 = vmatmul.mubr.f32.gmra.mrb[0].mxu0 %v5207
  %v5310 = vpop.f32.mrb[0].mxu0
  %v5311 = vadd.f32 0.0, %v5310
  %v5312 = vpop.f32.mrb[0].mxu0
  %5313 = vmatprep.mubr.f32.mxu0 0.0
  %5314 = vmatmul.mubr.f32.gmra.mrb[0].mxu0 %v5210
  %v5315 = vpop.f32.mrb[0].mxu0
  %v5316 = vadd.f32 0.0, %v5315
  %v5317 = vpop.f32.mrb[0].mxu0
  %5318 = vmatprep.mubr.f32.mxu0 0.0
  %5319 = vmatmul.mubr.f32.gmra.mrb[0].mxu0 %v5213
  %v5320 = vpop.f32.mrb[0].mxu0
  %v5321 = vadd.f32 0.0, %v5320
  %v5322 = vpop.f32.mrb[0].mxu0
  %5323 = vmatprep.mubr.f32.mxu0 0.0
  %5324 = vmatmul.mubr.f32.gmra.mrb[0].mxu0 %v5216
  %v5325 = vpop.f32.mrb[0].mxu0
  %v5326 = vadd.f32 0.0, %v5325
  %v5327 = vpop.f32.mrb[0].mxu0
  %5328 = vmatprep.mubr.f32.mxu0 0.0
  %5329 = vmatmul.mubr.f32.gmra.mrb[0].mxu0 %v5219
  %v5330 = vpop.f32.mrb[0].mxu0
  %v5331 = vadd.f32 0.0, %v5330
  %v5332 = vpop.f32.mrb[0].mxu0
  %5333 = vmatprep.mubr.f32.mxu0 0.0
  %5334 = vmatmul.mubr.f32.gmra.mrb[0].mxu0 %v5222
  %v5335 = vpop.f32.mrb[0].mxu0
  %v5336 = vadd.f32 0.0, %v5335
  %v5337 = vpop.f32.mrb[0].mxu0
  %5338 = vmatprep.mubr.f32.mxu0 0.0
  %5339 = vmatmul.mubr.f32.gmra.mrb[0].mxu0 %v5225
  %v5340 = vpop.f32.mrb[0].mxu0
  %v5341 = vadd.f32 0.0, %v5340
  %v5342 = vpop.f32.mrb[0].mxu0
  %5343 = vmatprep.mubr.f32.mxu0 0.0
  %5344 = vmatmul.mubr.f32.gmra.mrb[0].mxu0 %v5228
  %v5345 = vpop.f32.mrb[0].mxu0
  %v5346 = vadd.f32 0.0, %v5345
  %v5347 = vpop.f32.mrb[0].mxu0
  %5348 = vmatprep.mubr.f32.mxu0 0.0
  %5349 = vmatmul.mubr.f32.gmra.mrb[0].mxu0 %v5231
  %v5350 = vpop.f32.mrb[0].mxu0
  %v5351 = vadd.f32 0.0, %v5350
  %v5352 = vpop.f32.mrb[0].mxu0
  %5353 = vmatprep.mubr.f32.mxu0 0.0
  %5354 = vmatmul.mubr.f32.gmra.mrb[0].mxu0 %v5234
  %v5355 = vpop.f32.mrb[0].mxu0
  %v5356 = vadd.f32 0.0, %v5355
  %v5357 = vpop.f32.mrb[0].mxu0
  %5358 = vmatprep.mubr.f32.mxu0 0.0
  %5359 = vmatmul.mubr.f32.gmra.mrb[0].mxu0 %v5237
  %v5360 = vpop.f32.mrb[0].mxu0
  %v5361 = vadd.f32 0.0, %v5360
  %v5362 = vpop.f32.mrb[0].mxu0
  %5363 = vdwg.mxu0
  %5364 = vmatprep.subr.bf16.mxu0 0
  %5365 = vmatpush1.bf16.msra.mxu0 %v5200
  %5366 = vmatprep.subr.bf16.mxu0 0
  %5367 = vmatpush1.bf16.msra.mxu0 %v5201
  %5368 = vmatprep.subr.bf16.mxu0 0
  %5369 = vmatpush1.bf16.msra.mxu0 %v5202
  %5370 = vmatprep.subr.bf16.mxu0 0
  %5371 = vmatpush1.bf16.msra.mxu0 0
  %5372 = vmatprep.subr.bf16.mxu0 0
  %5373 = vmatpush1.bf16.msra.mxu0 0
  %5374 = vmatprep.subr.bf16.mxu0 0
  %5375 = vmatpush1.bf16.msra.mxu0 0
  %5376 = vmatprep.subr.bf16.mxu0 0
  %5377 = vmatpush1.bf16.msra.mxu0 0
  %5378 = vmatprep.subr.bf16.mxu0 0
  %5379 = vmatpush1.bf16.msra.mxu0 0
  %5380 = vmatprep.subr.bf16.mxu0 0
  %5381 = vmatpush1.bf16.msra.mxu0 0
  %5382 = vmatprep.subr.bf16.mxu0 0
  %5383 = vmatpush1.bf16.msra.mxu0 0
  %5384 = vmatprep.subr.bf16.mxu0 0
  %5385 = vmatpush1.bf16.msra.mxu0 0
  %5386 = vmatprep.subr.bf16.mxu0 0
  %5387 = vmatpush1.bf16.msra.mxu0 0
  %5388 = vmatprep.subr.bf16.mxu0 0
  %5389 = vmatpush1.bf16.msra.mxu0 0
  %5390 = vmatprep.subr.bf16.mxu0 0
  %5391 = vmatpush1.bf16.msra.mxu0 0
  %5392 = vmatprep.subr.bf16.mxu0 0
  %5393 = vmatpush1.bf16.msra.mxu0 0
  %5394 = vmatprep.subr.bf16.mxu0 0
  %5395 = vmatpush1.bf16.msra.mxu0 0
  %5396 = vmatprep.mubr.bf16.mxu0 0
  %5397 = vmatmul.mubr.bf16.gmra.mrb[0].mxu0 %v1144
  %v5398 = vpop.f32.mrb[0].mxu0
  %v5399 = vadd.f32 %v5306, %v5398
  %v5400 = vpop.f32.mrb[0].mxu0
  %v5401 = vpop.f32.mrb[0].mxu0
  %v5402 = vadd.f32 %v5311, %v5401
  %v5403 = vpop.f32.mrb[0].mxu0
  %5404 = vmatprep.mubr.bf16.mxu0 0
  %5405 = vmatmul.mubr.bf16.gmra.mrb[0].mxu0 %v1147
  %v5406 = vpop.f32.mrb[0].mxu0
  %v5407 = vadd.f32 %v5316, %v5406
  %v5408 = vpop.f32.mrb[0].mxu0
  %v5409 = vpop.f32.mrb[0].mxu0
  %v5410 = vadd.f32 %v5321, %v5409
  %v5411 = vpop.f32.mrb[0].mxu0
  %5412 = vmatprep.mubr.bf16.mxu0 0
  %5413 = vmatmul.mubr.bf16.gmra.mrb[0].mxu0 %v1150
  %v5414 = vpop.f32.mrb[0].mxu0
  %v5415 = vadd.f32 %v5326, %v5414
  %v5416 = vpop.f32.mrb[0].mxu0
  %v5417 = vpop.f32.mrb[0].mxu0
  %v5418 = vadd.f32 %v5331, %v5417
  %v5419 = vpop.f32.mrb[0].mxu0
  %5420 = vmatprep.mubr.bf16.mxu0 0
  %5421 = vmatmul.mubr.bf16.gmra.mrb[0].mxu0 %v1153
  %v5422 = vpop.f32.mrb[0].mxu0
  %v5423 = vadd.f32 %v5336, %v5422
  %v5424 = vpop.f32.mrb[0].mxu0
  %v5425 = vpop.f32.mrb[0].mxu0
  %v5426 = vadd.f32 %v5341, %v5425
  %v5427 = vpop.f32.mrb[0].mxu0
  %5428 = vmatprep.mubr.bf16.mxu0 0
  %5429 = vmatmul.mubr.bf16.gmra.mrb[0].mxu0 %v1156
  %v5430 = vpop.f32.mrb[0].mxu0
  %v5431 = vadd.f32 %v5346, %v5430
  %v5432 = vpop.f32.mrb[0].mxu0
  %v5433 = vpop.f32.mrb[0].mxu0
  %v5434 = vadd.f32 %v5351, %v5433
  %v5435 = vpop.f32.mrb[0].mxu0
  %5436 = vmatprep.mubr.bf16.mxu0 0
  %5437 = vmatmul.mubr.bf16.gmra.mrb[0].mxu0 %v1159
  %v5438 = vpop.f32.mrb[0].mxu0
  %v5439 = vadd.f32 %v5356, %v5438
  %v5440 = vpop.f32.mrb[0].mxu0
  %v5441 = vpop.f32.mrb[0].mxu0
  %v5442 = vadd.f32 %v5361, %v5441
  %v5443 = vpop.f32.mrb[0].mxu0
  %5444 = vdwg.mxu0
  %v5445 = vadd.f32 %v5399, %v1308
  %v5446 = vadd.f32 %v5402, %v1309
  %v5447 = vadd.f32 %v5407, %v1310
  %v5448 = vadd.f32 %v5410, %v1311
  %v5449 = vadd.f32 %v5415, %v1312
  %v5450 = vadd.f32 %v5418, %v1313
  %v5451 = vadd.f32 %v5423, %v1314
  %v5452 = vadd.f32 %v5426, %v1315
  %v5453 = vadd.f32 %v5431, %v1316
  %v5454 = vadd.f32 %v5434, %v1317
  %v5455 = vadd.f32 %v5439, %v1318
  %v5456 = vadd.f32 %v5442, %v1319
  %vm5457 = vcmp.gt.f32.partialorder %v5445, 0.0
  %vm5458 = vcmp.gt.f32.partialorder %v5446, 0.0
  %vm5459 = vcmp.gt.f32.partialorder %v5447, 0.0
  %vm5460 = vcmp.gt.f32.partialorder %v5448, 0.0
  %vm5461 = vcmp.gt.f32.partialorder %v5449, 0.0
  %vm5462 = vcmp.gt.f32.partialorder %v5450, 0.0
  %vm5463 = vcmp.gt.f32.partialorder %v5451, 0.0
  %vm5464 = vcmp.gt.f32.partialorder %v5452, 0.0
  %vm5465 = vcmp.gt.f32.partialorder %v5453, 0.0
  %vm5466 = vcmp.gt.f32.partialorder %v5454, 0.0
  %vm5467 = vcmp.gt.f32.partialorder %v5455, 0.0
  %vm5468 = vcmp.gt.f32.partialorder %v5456, 0.0
  %v5469 = vmul.f32 %v5445, 0.2
  %v5470 = vmul.f32 %v5446, 0.2
  %v5471 = vmul.f32 %v5447, 0.2
  %v5472 = vmul.f32 %v5448, 0.2
  %v5473 = vmul.f32 %v5449, 0.2
  %v5474 = vmul.f32 %v5450, 0.2
  %v5475 = vmul.f32 %v5451, 0.2
  %v5476 = vmul.f32 %v5452, 0.2
  %v5477 = vmul.f32 %v5453, 0.2
  %v5478 = vmul.f32 %v5454, 0.2
  %v5479 = vmul.f32 %v5455, 0.2
  %v5480 = vmul.f32 %v5456, 0.2
  %v5481 = vsel %vm5457, %v5445, %v5469
  %v5482 = vsel %vm5458, %v5446, %v5470
  %v5483 = vsel %vm5459, %v5447, %v5471
  %v5484 = vsel %vm5460, %v5448, %v5472
  %v5485 = vsel %vm5461, %v5449, %v5473
  %v5486 = vsel %vm5462, %v5450, %v5474
  %v5487 = vsel %vm5463, %v5451, %v5475
  %v5488 = vsel %vm5464, %v5452, %v5476
  %v5489 = vsel %vm5465, %v5453, %v5477
  %v5490 = vsel %vm5466, %v5454, %v5478
  %v5491 = vsel %vm5467, %v5455, %v5479
  %v5492 = vsel %vm5468, %v5456, %v5480
  %v5493 = vsub.f32 0.0, %v5481
  %v5494 = vsub.f32 0.0, %v5482
  %v5495 = vsub.f32 0.0, %v5483
  %v5496 = vsub.f32 0.0, %v5484
  %v5497 = vsub.f32 0.0, %v5485
  %v5498 = vsub.f32 0.0, %v5486
  %v5499 = vsub.f32 0.0, %v5487
  %v5500 = vsub.f32 0.0, %v5488
  %v5501 = vsub.f32 0.0, %v5489
  %v5502 = vsub.f32 0.0, %v5490
  %v5503 = vsub.f32 0.0, %v5491
  %v5504 = vsub.f32 0.0, %v5492
  %v5505 = vmin.f32 %v5493, 60.0
  %v5506 = vmin.f32 %v5494, 60.0
  %v5507 = vmin.f32 %v5495, 60.0
  %v5508 = vmin.f32 %v5496, 60.0
  %v5509 = vmin.f32 %v5497, 60.0
  %v5510 = vmin.f32 %v5498, 60.0
  %v5511 = vmin.f32 %v5499, 60.0
  %v5512 = vmin.f32 %v5500, 60.0
  %v5513 = vmin.f32 %v5501, 60.0
  %v5514 = vmin.f32 %v5502, 60.0
  %v5515 = vmin.f32 %v5503, 60.0
  %v5516 = vmin.f32 %v5504, 60.0
  %v5517 = vmul.f32 %v5505, 1.442695
  %v5518 = vpow.pop %v5517
  %v5519 = vmul.f32 %v5506, 1.442695
  %v5520 = vpow.pop %v5519
  %v5521 = vmul.f32 %v5507, 1.442695
  %v5522 = vpow.pop %v5521
  %v5523 = vmul.f32 %v5508, 1.442695
  %v5524 = vpow.pop %v5523
  %v5525 = vmul.f32 %v5509, 1.442695
  %v5526 = vpow.pop %v5525
  %v5527 = vmul.f32 %v5510, 1.442695
  %v5528 = vpow.pop %v5527
  %v5529 = vmul.f32 %v5511, 1.442695
  %v5530 = vpow.pop %v5529
  %v5531 = vmul.f32 %v5512, 1.442695
  %v5532 = vpow.pop %v5531
  %v5533 = vmul.f32 %v5513, 1.442695
  %v5534 = vpow.pop %v5533
  %v5535 = vmul.f32 %v5514, 1.442695
  %v5536 = vpow.pop %v5535
  %v5537 = vmul.f32 %v5515, 1.442695
  %v5538 = vpow.pop %v5537
  %v5539 = vmul.f32 %v5516, 1.442695
  %v5540 = vpow.pop %v5539
  %v5542 = vsel %vm1416, %v5518, 0
  %v5545 = vsel %vm1416, %v5520, 0
  %v5548 = vsel %vm1416, %v5522, 0
  %v5551 = vsel %vm1416, %v5524, 0
  %v5554 = vsel %vm1416, %v5526, 0
  %v5557 = vsel %vm1416, %v5528, 0
  %v5560 = vsel %vm1416, %v5530, 0
  %v5563 = vsel %vm1416, %v5532, 0
  %v5566 = vsel %vm1416, %v5534, 0
  %v5569 = vsel %vm1416, %v5536, 0
  %v5572 = vsel %vm1416, %v5538, 0
  %v5575 = vsel %vm1416, %v5540, 0
  %5577 = vmatprep.subr.mxu0 0.0
  %5578 = vmatpush1.msra.mxu0 %v1455
  %5579 = vmatprep.subr.mxu0 0.0
  %5580 = vmatpush1.msra.mxu0 0.0
  %5581 = vmatprep.subr.mxu0 0.0
  %5582 = vmatpush1.msra.mxu0 0.0
  %5583 = vmatprep.subr.mxu0 0.0
  %5584 = vmatpush1.msra.mxu0 0.0
  %5585 = vmatprep.subr.mxu0 0.0
  %5586 = vmatpush1.msra.mxu0 0.0
  %5587 = vmatprep.subr.mxu0 0.0
  %5588 = vmatpush1.msra.mxu0 0.0
  %5589 = vmatprep.subr.mxu0 0.0
  %5590 = vmatpush1.msra.mxu0 0.0
  %5591 = vmatprep.subr.mxu0 0.0
  %5592 = vmatpush1.msra.mxu0 0.0
  %5593 = vmatprep.subr.mxu0 0.0
  %5594 = vmatpush1.msra.mxu0 0.0
  %5595 = vmatprep.subr.mxu0 0.0
  %5596 = vmatpush1.msra.mxu0 0.0
  %5597 = vmatprep.subr.mxu0 0.0
  %5598 = vmatpush1.msra.mxu0 0.0
  %5599 = vmatprep.subr.mxu0 0.0
  %5600 = vmatpush1.msra.mxu0 0.0
  %5601 = vmatprep.subr.mxu0 0.0
  %5602 = vmatpush1.msra.mxu0 0.0
  %5603 = vmatprep.subr.mxu0 0.0
  %5604 = vmatpush1.msra.mxu0 0.0
  %5605 = vmatprep.subr.mxu0 0.0
  %5606 = vmatpush1.msra.mxu0 0.0
  %5607 = vmatprep.subr.mxu0 0.0
  %5608 = vmatpush1.msra.mxu0 0.0
  %5609 = vmatprep.subr.mxu0 0.0
  %5610 = vmatpush1.msra.mxu0 0.0
  %5611 = vmatprep.subr.mxu0 0.0
  %5612 = vmatpush1.msra.mxu0 0.0
  %5613 = vmatprep.subr.mxu0 0.0
  %5614 = vmatpush1.msra.mxu0 0.0
  %5615 = vmatprep.subr.mxu0 0.0
  %5616 = vmatpush1.msra.mxu0 0.0
  %5617 = vmatprep.subr.mxu0 0.0
  %5618 = vmatpush1.msra.mxu0 0.0
  %5619 = vmatprep.subr.mxu0 0.0
  %5620 = vmatpush1.msra.mxu0 0.0
  %5621 = vmatprep.subr.mxu0 0.0
  %5622 = vmatpush1.msra.mxu0 0.0
  %5623 = vmatprep.subr.mxu0 0.0
  %5624 = vmatpush1.msra.mxu0 0.0
  %5625 = vmatprep.subr.mxu0 0.0
  %5626 = vmatpush1.msra.mxu0 0.0
  %5627 = vmatprep.subr.mxu0 0.0
  %5628 = vmatpush1.msra.mxu0 0.0
  %5629 = vmatprep.subr.mxu0 0.0
  %5630 = vmatpush1.msra.mxu0 0.0
  %5631 = vmatprep.subr.mxu0 0.0
  %5632 = vmatpush1.msra.mxu0 0.0
  %5633 = vmatprep.subr.mxu0 0.0
  %5634 = vmatpush1.msra.mxu0 0.0
  %5635 = vmatprep.subr.mxu0 0.0
  %5636 = vmatpush1.msra.mxu0 0.0
  %5637 = vmatprep.subr.mxu0 0.0
  %5638 = vmatpush1.msra.mxu0 0.0
  %5639 = vmatprep.subr.mxu0 0.0
  %5640 = vmatpush1.msra.mxu0 0.0
  %5641 = vmatprep.mubr.f32.mxu0 0.0
  %5642 = vmatmul.mubr.f32.gmra.mrb[0].mxu0 %v5542
  %v5643 = vpop.f32.mrb[0].mxu0
  %v5644 = vadd.f32 0.0, %v5643
  %v5645 = vpop.f32.mrb[0].mxu0
  %5646 = vmatprep.mubr.f32.mxu0 0.0
  %5647 = vmatmul.mubr.f32.gmra.mrb[0].mxu0 %v5545
  %v5648 = vpop.f32.mrb[0].mxu0
  %v5649 = vadd.f32 0.0, %v5648
  %v5650 = vpop.f32.mrb[0].mxu0
  %5651 = vmatprep.mubr.f32.mxu0 0.0
  %5652 = vmatmul.mubr.f32.gmra.mrb[0].mxu0 %v5548
  %v5653 = vpop.f32.mrb[0].mxu0
  %v5654 = vadd.f32 0.0, %v5653
  %v5655 = vpop.f32.mrb[0].mxu0
  %5656 = vmatprep.mubr.f32.mxu0 0.0
  %5657 = vmatmul.mubr.f32.gmra.mrb[0].mxu0 %v5551
  %v5658 = vpop.f32.mrb[0].mxu0
  %v5659 = vadd.f32 0.0, %v5658
  %v5660 = vpop.f32.mrb[0].mxu0
  %5661 = vmatprep.mubr.f32.mxu0 0.0
  %5662 = vmatmul.mubr.f32.gmra.mrb[0].mxu0 %v5554
  %v5663 = vpop.f32.mrb[0].mxu0
  %v5664 = vadd.f32 0.0, %v5663
  %v5665 = vpop.f32.mrb[0].mxu0
  %5666 = vmatprep.mubr.f32.mxu0 0.0
  %5667 = vmatmul.mubr.f32.gmra.mrb[0].mxu0 %v5557
  %v5668 = vpop.f32.mrb[0].mxu0
  %v5669 = vadd.f32 0.0, %v5668
  %v5670 = vpop.f32.mrb[0].mxu0
  %5671 = vmatprep.mubr.f32.mxu0 0.0
  %5672 = vmatmul.mubr.f32.gmra.mrb[0].mxu0 %v5560
  %v5673 = vpop.f32.mrb[0].mxu0
  %v5674 = vadd.f32 0.0, %v5673
  %v5675 = vpop.f32.mrb[0].mxu0
  %5676 = vmatprep.mubr.f32.mxu0 0.0
  %5677 = vmatmul.mubr.f32.gmra.mrb[0].mxu0 %v5563
  %v5678 = vpop.f32.mrb[0].mxu0
  %v5679 = vadd.f32 0.0, %v5678
  %v5680 = vpop.f32.mrb[0].mxu0
  %5681 = vmatprep.mubr.f32.mxu0 0.0
  %5682 = vmatmul.mubr.f32.gmra.mrb[0].mxu0 %v5566
  %v5683 = vpop.f32.mrb[0].mxu0
  %v5684 = vadd.f32 0.0, %v5683
  %v5685 = vpop.f32.mrb[0].mxu0
  %5686 = vmatprep.mubr.f32.mxu0 0.0
  %5687 = vmatmul.mubr.f32.gmra.mrb[0].mxu0 %v5569
  %v5688 = vpop.f32.mrb[0].mxu0
  %v5689 = vadd.f32 0.0, %v5688
  %v5690 = vpop.f32.mrb[0].mxu0
  %5691 = vmatprep.mubr.f32.mxu0 0.0
  %5692 = vmatmul.mubr.f32.gmra.mrb[0].mxu0 %v5572
  %v5693 = vpop.f32.mrb[0].mxu0
  %v5694 = vadd.f32 0.0, %v5693
  %v5695 = vpop.f32.mrb[0].mxu0
  %5696 = vmatprep.mubr.f32.mxu0 0.0
  %5697 = vmatmul.mubr.f32.gmra.mrb[0].mxu0 %v5575
  %v5698 = vpop.f32.mrb[0].mxu0
  %v5699 = vadd.f32 0.0, %v5698
  %v5700 = vpop.f32.mrb[0].mxu0
  %5701 = vdwg.mxu0
  %v5702 = vmul.f32 %v5644, %v5041
  %v5703 = vmul.f32 %v5649, %v5044
  %v5704 = vmul.f32 %v5654, %v5049
  %v5705 = vmul.f32 %v5659, %v5052
  %v5706 = vmul.f32 %v5664, %v5057
  %v5707 = vmul.f32 %v5669, %v5060
  %v5708 = vmul.f32 %v5674, %v5065
  %v5709 = vmul.f32 %v5679, %v5068
  %v5710 = vmul.f32 %v5684, %v5073
  %v5711 = vmul.f32 %v5689, %v5076
  %v5712 = vmul.f32 %v5694, %v5081
  %v5713 = vmul.f32 %v5699, %v5084
  %v5714 = vpack.c.bf16 %v5703, %v5702
  %v5715 = vpack.c.bf16 %v5705, %v5704
  %v5716 = vpack.c.bf16 %v5707, %v5706
  %v5717 = vpack.c.bf16 %v5709, %v5708
  %v5718 = vpack.c.bf16 %v5711, %v5710
  %v5719 = vpack.c.bf16 %v5713, %v5712
  %5720 = vmatprep.subr.bf16.mxu0 0
  %5721 = vmatpush1.bf16.msra.mxu0 %v5714
  %5722 = vmatprep.subr.bf16.mxu0 0
  %5723 = vmatpush1.bf16.msra.mxu0 %v5715
  %5724 = vmatprep.subr.bf16.mxu0 0
  %5725 = vmatpush1.bf16.msra.mxu0 %v5716
  %5726 = vmatprep.subr.bf16.mxu0 0
  %5727 = vmatpush1.bf16.msra.mxu0 %v5717
  %5728 = vmatprep.subr.bf16.mxu0 0
  %5729 = vmatpush1.bf16.msra.mxu0 %v5718
  %5730 = vmatprep.subr.bf16.mxu0 0
  %5731 = vmatpush1.bf16.msra.mxu0 %v5719
  %5732 = vmatprep.subr.bf16.mxu0 0
  %5733 = vmatpush1.bf16.msra.mxu0 0
  %5734 = vmatprep.subr.bf16.mxu0 0
  %5735 = vmatpush1.bf16.msra.mxu0 0
  %5736 = vmatprep.subr.bf16.mxu0 0
  %5737 = vmatpush1.bf16.msra.mxu0 0
  %5738 = vmatprep.subr.bf16.mxu0 0
  %5739 = vmatpush1.bf16.msra.mxu0 0
  %5740 = vmatprep.subr.bf16.mxu0 0
  %5741 = vmatpush1.bf16.msra.mxu0 0
  %5742 = vmatprep.subr.bf16.mxu0 0
  %5743 = vmatpush1.bf16.msra.mxu0 0
  %5744 = vmatprep.subr.bf16.mxu0 0
  %5745 = vmatpush1.bf16.msra.mxu0 0
  %5746 = vmatprep.subr.bf16.mxu0 0
  %5747 = vmatpush1.bf16.msra.mxu0 0
  %5748 = vmatprep.subr.bf16.mxu0 0
  %5749 = vmatpush1.bf16.msra.mxu0 0
  %5750 = vmatprep.subr.bf16.mxu0 0
  %5751 = vmatpush1.bf16.msra.mxu0 0
  %5752 = vmatprep.mubr.bf16.mxu0 0
  %5753 = vmatmul.mubr.bf16.gmra.mrb[0].mxu0 %v1602
  %v5754 = vpop.f32.mrb[0].mxu0
  %v5755 = vadd.f32 0.0, %v5754
  %v5756 = vpop.f32.mrb[0].mxu0
  %v5757 = vpop.f32.mrb[0].mxu0
  %v5758 = vadd.f32 0.0, %v5757
  %v5759 = vpop.f32.mrb[0].mxu0
  %5760 = vmatprep.mubr.bf16.mxu0 0
  %5761 = vmatmul.mubr.bf16.gmra.mrb[0].mxu0 %v1605
  %v5762 = vpop.f32.mrb[0].mxu0
  %v5763 = vadd.f32 0.0, %v5762
  %v5764 = vpop.f32.mrb[0].mxu0
  %v5765 = vpop.f32.mrb[0].mxu0
  %v5766 = vadd.f32 0.0, %v5765
  %v5767 = vpop.f32.mrb[0].mxu0
  %5768 = vmatprep.mubr.bf16.mxu0 0
  %5769 = vmatmul.mubr.bf16.gmra.mrb[0].mxu0 %v1608
  %v5770 = vpop.f32.mrb[0].mxu0
  %v5771 = vadd.f32 0.0, %v5770
  %v5772 = vpop.f32.mrb[0].mxu0
  %v5773 = vpop.f32.mrb[0].mxu0
  %v5774 = vadd.f32 0.0, %v5773
  %v5775 = vpop.f32.mrb[0].mxu0
  %5776 = vdwg.mxu0
  %v5777 = vpack.c.bf16 %v5520, %v5518
  %v5778 = vpack.c.bf16 %v5524, %v5522
  %v5779 = vpack.c.bf16 %v5528, %v5526
  %v5780 = vpack.c.bf16 %v5532, %v5530
  %v5781 = vpack.c.bf16 %v5536, %v5534
  %v5782 = vpack.c.bf16 %v5540, %v5538
  %5783 = vmatprep.subr.bf16.mxu0 0
  %5784 = vmatpush1.bf16.msra.mxu0 %v5777
  %5785 = vmatprep.subr.bf16.mxu0 0
  %5786 = vmatpush1.bf16.msra.mxu0 %v5778
  %5787 = vmatprep.subr.bf16.mxu0 0
  %5788 = vmatpush1.bf16.msra.mxu0 %v5779
  %5789 = vmatprep.subr.bf16.mxu0 0
  %5790 = vmatpush1.bf16.msra.mxu0 %v5780
  %5791 = vmatprep.subr.bf16.mxu0 0
  %5792 = vmatpush1.bf16.msra.mxu0 %v5781
  %5793 = vmatprep.subr.bf16.mxu0 0
  %5794 = vmatpush1.bf16.msra.mxu0 %v5782
  %5795 = vmatprep.subr.bf16.mxu0 0
  %5796 = vmatpush1.bf16.msra.mxu0 0
  %5797 = vmatprep.subr.bf16.mxu0 0
  %5798 = vmatpush1.bf16.msra.mxu0 0
  %5799 = vmatprep.subr.bf16.mxu0 0
  %5800 = vmatpush1.bf16.msra.mxu0 0
  %5801 = vmatprep.subr.bf16.mxu0 0
  %5802 = vmatpush1.bf16.msra.mxu0 0
  %5803 = vmatprep.subr.bf16.mxu0 0
  %5804 = vmatpush1.bf16.msra.mxu0 0
  %5805 = vmatprep.subr.bf16.mxu0 0
  %5806 = vmatpush1.bf16.msra.mxu0 0
  %5807 = vmatprep.subr.bf16.mxu0 0
  %5808 = vmatpush1.bf16.msra.mxu0 0
  %5809 = vmatprep.subr.bf16.mxu0 0
  %5810 = vmatpush1.bf16.msra.mxu0 0
  %5811 = vmatprep.subr.bf16.mxu0 0
  %5812 = vmatpush1.bf16.msra.mxu0 0
  %5813 = vmatprep.subr.bf16.mxu0 0
  %5814 = vmatpush1.bf16.msra.mxu0 0
  %5815 = vmatprep.mubr.bf16.mxu0 0
  %5816 = vmatmul.mubr.bf16.gmra.mrb[0].mxu0 %v1602
  %v5817 = vpop.f32.mrb[0].mxu0
  %v5818 = vadd.f32 0.0, %v5817
  %v5819 = vpop.f32.mrb[0].mxu0
  %v5820 = vpop.f32.mrb[0].mxu0
  %v5821 = vadd.f32 0.0, %v5820
  %v5822 = vpop.f32.mrb[0].mxu0
  %5823 = vmatprep.mubr.bf16.mxu0 0
  %5824 = vmatmul.mubr.bf16.gmra.mrb[0].mxu0 %v1605
  %v5825 = vpop.f32.mrb[0].mxu0
  %v5826 = vadd.f32 0.0, %v5825
  %v5827 = vpop.f32.mrb[0].mxu0
  %v5828 = vpop.f32.mrb[0].mxu0
  %v5829 = vadd.f32 0.0, %v5828
  %v5830 = vpop.f32.mrb[0].mxu0
  %5831 = vmatprep.mubr.bf16.mxu0 0
  %5832 = vmatmul.mubr.bf16.gmra.mrb[0].mxu0 %v1608
  %v5833 = vpop.f32.mrb[0].mxu0
  %v5834 = vadd.f32 0.0, %v5833
  %v5835 = vpop.f32.mrb[0].mxu0
  %v5836 = vpop.f32.mrb[0].mxu0
  %v5837 = vadd.f32 0.0, %v5836
  %v5838 = vpop.f32.mrb[0].mxu0
  %5839 = vdwg.mxu0
  %vm5840 = vcmp.eq.f32.partialorder %v5818, 0.0
  %vm5841 = vcmp.eq.f32.partialorder %v5821, 0.0
  %vm5842 = vcmp.eq.f32.partialorder %v5826, 0.0
  %vm5843 = vcmp.eq.f32.partialorder %v5829, 0.0
  %vm5844 = vcmp.eq.f32.partialorder %v5834, 0.0
  %vm5845 = vcmp.eq.f32.partialorder %v5837, 0.0
  %v5846 = vsel %vm5840, 1.0, %v5818
  %v5847 = vsel %vm5841, 1.0, %v5821
  %v5848 = vsel %vm5842, 1.0, %v5826
  %v5849 = vsel %vm5843, 1.0, %v5829
  %v5850 = vsel %vm5844, 1.0, %v5834
  %v5851 = vsel %vm5845, 1.0, %v5837
  %v5852 = vrcp.pop %v5846
  %v5853 = vrcp.pop %v5847
  %v5854 = vrcp.pop %v5848
  %v5855 = vrcp.pop %v5849
  %v5856 = vrcp.pop %v5850
  %v5857 = vrcp.pop %v5851
  %v5859 = vsel %vm1416, %v5852, 0
  %v5862 = vsel %vm1416, %v5853, 0
  %v5865 = vsel %vm1416, %v5854, 0
  %v5868 = vsel %vm1416, %v5855, 0
  %v5871 = vsel %vm1416, %v5856, 0
  %v5874 = vsel %vm1416, %v5857, 0
  %5876 = vmatprep.subr.mxu0 0.0
  %5877 = vmatpush1.msra.mxu0 %v1455
  %5878 = vmatprep.subr.mxu0 0.0
  %5879 = vmatpush1.msra.mxu0 0.0
  %5880 = vmatprep.subr.mxu0 0.0
  %5881 = vmatpush1.msra.mxu0 0.0
  %5882 = vmatprep.subr.mxu0 0.0
  %5883 = vmatpush1.msra.mxu0 0.0
  %5884 = vmatprep.subr.mxu0 0.0
  %5885 = vmatpush1.msra.mxu0 0.0
  %5886 = vmatprep.subr.mxu0 0.0
  %5887 = vmatpush1.msra.mxu0 0.0
  %5888 = vmatprep.subr.mxu0 0.0
  %5889 = vmatpush1.msra.mxu0 0.0
  %5890 = vmatprep.subr.mxu0 0.0
  %5891 = vmatpush1.msra.mxu0 0.0
  %5892 = vmatprep.subr.mxu0 0.0
  %5893 = vmatpush1.msra.mxu0 0.0
  %5894 = vmatprep.subr.mxu0 0.0
  %5895 = vmatpush1.msra.mxu0 0.0
  %5896 = vmatprep.subr.mxu0 0.0
  %5897 = vmatpush1.msra.mxu0 0.0
  %5898 = vmatprep.subr.mxu0 0.0
  %5899 = vmatpush1.msra.mxu0 0.0
  %5900 = vmatprep.subr.mxu0 0.0
  %5901 = vmatpush1.msra.mxu0 0.0
  %5902 = vmatprep.subr.mxu0 0.0
  %5903 = vmatpush1.msra.mxu0 0.0
  %5904 = vmatprep.subr.mxu0 0.0
  %5905 = vmatpush1.msra.mxu0 0.0
  %5906 = vmatprep.subr.mxu0 0.0
  %5907 = vmatpush1.msra.mxu0 0.0
  %5908 = vmatprep.subr.mxu0 0.0
  %5909 = vmatpush1.msra.mxu0 0.0
  %5910 = vmatprep.subr.mxu0 0.0
  %5911 = vmatpush1.msra.mxu0 0.0
  %5912 = vmatprep.subr.mxu0 0.0
  %5913 = vmatpush1.msra.mxu0 0.0
  %5914 = vmatprep.subr.mxu0 0.0
  %5915 = vmatpush1.msra.mxu0 0.0
  %5916 = vmatprep.subr.mxu0 0.0
  %5917 = vmatpush1.msra.mxu0 0.0
  %5918 = vmatprep.subr.mxu0 0.0
  %5919 = vmatpush1.msra.mxu0 0.0
  %5920 = vmatprep.subr.mxu0 0.0
  %5921 = vmatpush1.msra.mxu0 0.0
  %5922 = vmatprep.subr.mxu0 0.0
  %5923 = vmatpush1.msra.mxu0 0.0
  %5924 = vmatprep.subr.mxu0 0.0
  %5925 = vmatpush1.msra.mxu0 0.0
  %5926 = vmatprep.subr.mxu0 0.0
  %5927 = vmatpush1.msra.mxu0 0.0
  %5928 = vmatprep.subr.mxu0 0.0
  %5929 = vmatpush1.msra.mxu0 0.0
  %5930 = vmatprep.subr.mxu0 0.0
  %5931 = vmatpush1.msra.mxu0 0.0
  %5932 = vmatprep.subr.mxu0 0.0
  %5933 = vmatpush1.msra.mxu0 0.0
  %5934 = vmatprep.subr.mxu0 0.0
  %5935 = vmatpush1.msra.mxu0 0.0
  %5936 = vmatprep.subr.mxu0 0.0
  %5937 = vmatpush1.msra.mxu0 0.0
  %5938 = vmatprep.subr.mxu0 0.0
  %5939 = vmatpush1.msra.mxu0 0.0
  %5940 = vmatprep.mubr.f32.mxu0 0.0
  %5941 = vmatmul.mubr.f32.gmra.mrb[0].mxu0 %v5859
  %v5942 = vpop.f32.mrb[0].mxu0
  %v5943 = vadd.f32 0.0, %v5942
  %v5944 = vpop.f32.mrb[0].mxu0
  %5945 = vmatprep.mubr.f32.mxu0 0.0
  %5946 = vmatmul.mubr.f32.gmra.mrb[0].mxu0 %v5862
  %v5947 = vpop.f32.mrb[0].mxu0
  %v5948 = vadd.f32 0.0, %v5947
  %v5949 = vpop.f32.mrb[0].mxu0
  %5950 = vmatprep.mubr.f32.mxu0 0.0
  %5951 = vmatmul.mubr.f32.gmra.mrb[0].mxu0 %v5865
  %v5952 = vpop.f32.mrb[0].mxu0
  %v5953 = vadd.f32 0.0, %v5952
  %v5954 = vpop.f32.mrb[0].mxu0
  %5955 = vmatprep.mubr.f32.mxu0 0.0
  %5956 = vmatmul.mubr.f32.gmra.mrb[0].mxu0 %v5868
  %v5957 = vpop.f32.mrb[0].mxu0
  %v5958 = vadd.f32 0.0, %v5957
  %v5959 = vpop.f32.mrb[0].mxu0
  %5960 = vmatprep.mubr.f32.mxu0 0.0
  %5961 = vmatmul.mubr.f32.gmra.mrb[0].mxu0 %v5871
  %v5962 = vpop.f32.mrb[0].mxu0
  %v5963 = vadd.f32 0.0, %v5962
  %v5964 = vpop.f32.mrb[0].mxu0
  %5965 = vmatprep.mubr.f32.mxu0 0.0
  %5966 = vmatmul.mubr.f32.gmra.mrb[0].mxu0 %v5874
  %v5967 = vpop.f32.mrb[0].mxu0
  %v5968 = vadd.f32 0.0, %v5967
  %v5969 = vpop.f32.mrb[0].mxu0
  %5970 = vdwg.mxu0
  %v5971 = vmul.f32 %v5755, %v5943
  %v5972 = vmul.f32 %v5758, %v5948
  %v5973 = vmul.f32 %v5763, %v5953
  %v5974 = vmul.f32 %v5766, %v5958
  %v5975 = vmul.f32 %v5771, %v5963
  %v5976 = vmul.f32 %v5774, %v5968
  %vm5977 = vcmp.gt.f32.partialorder %v5971, 0.0
  %vm5978 = vcmp.gt.f32.partialorder %v5972, 0.0
  %vm5979 = vcmp.gt.f32.partialorder %v5973, 0.0
  %vm5980 = vcmp.gt.f32.partialorder %v5974, 0.0
  %vm5981 = vcmp.gt.f32.partialorder %v5975, 0.0
  %vm5982 = vcmp.gt.f32.partialorder %v5976, 0.0
  %v5983 = vmin.f32 %v5971, 0.0
  %v5984 = vmin.f32 %v5972, 0.0
  %v5985 = vmin.f32 %v5973, 0.0
  %v5986 = vmin.f32 %v5974, 0.0
  %v5987 = vmin.f32 %v5975, 0.0
  %v5988 = vmin.f32 %v5976, 0.0
  %v5989 = vmul.f32 %v5983, 1.442695
  %v5990 = vpow.pop %v5989
  %v5991 = vmul.f32 %v5984, 1.442695
  %v5992 = vpow.pop %v5991
  %v5993 = vmul.f32 %v5985, 1.442695
  %v5994 = vpow.pop %v5993
  %v5995 = vmul.f32 %v5986, 1.442695
  %v5996 = vpow.pop %v5995
  %v5997 = vmul.f32 %v5987, 1.442695
  %v5998 = vpow.pop %v5997
  %v5999 = vmul.f32 %v5988, 1.442695
  %v6000 = vpow.pop %v5999
  %v6001 = vsub.f32 %v5990, 1.0
  %v6002 = vsub.f32 %v5992, 1.0
  %v6003 = vsub.f32 %v5994, 1.0
  %v6004 = vsub.f32 %v5996, 1.0
  %v6005 = vsub.f32 %v5998, 1.0
  %v6006 = vsub.f32 %v6000, 1.0
  %v6007 = vsel %vm5977, %v5971, %v6001
  %v6008 = vsel %vm5978, %v5972, %v6002
  %v6009 = vsel %vm5979, %v5973, %v6003
  %v6010 = vsel %vm5980, %v5974, %v6004
  %v6011 = vsel %vm5981, %v5975, %v6005
  %v6012 = vsel %vm5982, %v5976, %v6006
  %v6013 = vpack.c.bf16 %v6008, %v6007
  %v6014 = vpack.c.bf16 %v6010, %v6009
  %v6015 = vpack.c.bf16 %v6012, %v6011
  %v6017 = vsel %vm696, %v6013, 0
  %v6020 = vsel %vm696, %v6014, 0
  %v6023 = vsel %vm696, %v6015, 0
  %6025 = vmatprep.subr.bf16.mxu0 0
  %6026 = vmatpush1.bf16.msra.mxu0 %v1931
  %6027 = vmatprep.subr.bf16.mxu0 0
  %6028 = vmatpush1.bf16.msra.mxu0 %v1932
  %6029 = vmatprep.subr.bf16.mxu0 0
  %6030 = vmatpush1.bf16.msra.mxu0 %v1933
  %6031 = vmatprep.subr.bf16.mxu0 0
  %6032 = vmatpush1.bf16.msra.mxu0 %v1934
  %6033 = vmatprep.subr.bf16.mxu0 0
  %6034 = vmatpush1.bf16.msra.mxu0 0
  %6035 = vmatprep.subr.bf16.mxu0 0
  %6036 = vmatpush1.bf16.msra.mxu0 0
  %6037 = vmatprep.subr.bf16.mxu0 0
  %6038 = vmatpush1.bf16.msra.mxu0 0
  %6039 = vmatprep.subr.bf16.mxu0 0
  %6040 = vmatpush1.bf16.msra.mxu0 0
  %6041 = vmatprep.subr.bf16.mxu0 0
  %6042 = vmatpush1.bf16.msra.mxu0 0
  %6043 = vmatprep.subr.bf16.mxu0 0
  %6044 = vmatpush1.bf16.msra.mxu0 0
  %6045 = vmatprep.subr.bf16.mxu0 0
  %6046 = vmatpush1.bf16.msra.mxu0 0
  %6047 = vmatprep.subr.bf16.mxu0 0
  %6048 = vmatpush1.bf16.msra.mxu0 0
  %6049 = vmatprep.subr.bf16.mxu0 0
  %6050 = vmatpush1.bf16.msra.mxu0 0
  %6051 = vmatprep.subr.bf16.mxu0 0
  %6052 = vmatpush1.bf16.msra.mxu0 0
  %6053 = vmatprep.subr.bf16.mxu0 0
  %6054 = vmatpush1.bf16.msra.mxu0 0
  %6055 = vmatprep.subr.bf16.mxu0 0
  %6056 = vmatpush1.bf16.msra.mxu0 0
  %6057 = vmatprep.mubr.bf16.mxu0 0
  %6058 = vmatmul.mubr.bf16.gmra.mrb[0].mxu0 %v6017
  %v6059 = vpop.f32.mrb[0].mxu0
  %v6060 = vadd.f32 0.0, %v6059
  %v6061 = vpop.f32.mrb[0].mxu0
  %v6062 = vpop.f32.mrb[0].mxu0
  %v6063 = vadd.f32 0.0, %v6062
  %v6064 = vpop.f32.mrb[0].mxu0
  %6065 = vmatprep.mubr.bf16.mxu0 0
  %6066 = vmatmul.mubr.bf16.gmra.mrb[0].mxu0 %v6020
  %v6067 = vpop.f32.mrb[0].mxu0
  %v6068 = vadd.f32 0.0, %v6067
  %v6069 = vpop.f32.mrb[0].mxu0
  %v6070 = vpop.f32.mrb[0].mxu0
  %v6071 = vadd.f32 0.0, %v6070
  %v6072 = vpop.f32.mrb[0].mxu0
  %6073 = vmatprep.mubr.bf16.mxu0 0
  %6074 = vmatmul.mubr.bf16.gmra.mrb[0].mxu0 %v6023
  %v6075 = vpop.f32.mrb[0].mxu0
  %v6076 = vadd.f32 0.0, %v6075
  %v6077 = vpop.f32.mrb[0].mxu0
  %v6078 = vpop.f32.mrb[0].mxu0
  %v6079 = vadd.f32 0.0, %v6078
  %v6080 = vpop.f32.mrb[0].mxu0
  %6081 = vdwg.mxu0
  %v6082 = vpack.c.bf16 %v6063, %v6060
  %v6083 = vpack.c.bf16 %v6071, %v6068
  %v6084 = vpack.c.bf16 %v6079, %v6076
  %6085 = vmatprep.subr.bf16.mxu0 0
  %6086 = vmatpush1.bf16.msra.mxu0 %v6082
  %6087 = vmatprep.subr.bf16.mxu0 0
  %6088 = vmatpush1.bf16.msra.mxu0 %v6083
  %6089 = vmatprep.subr.bf16.mxu0 0
  %6090 = vmatpush1.bf16.msra.mxu0 %v6084
  %6091 = vmatprep.subr.bf16.mxu0 0
  %6092 = vmatpush1.bf16.msra.mxu0 0
  %6093 = vmatprep.subr.bf16.mxu0 0
  %6094 = vmatpush1.bf16.msra.mxu0 0
  %6095 = vmatprep.subr.bf16.mxu0 0
  %6096 = vmatpush1.bf16.msra.mxu0 0
  %6097 = vmatprep.subr.bf16.mxu0 0
  %6098 = vmatpush1.bf16.msra.mxu0 0
  %6099 = vmatprep.subr.bf16.mxu0 0
  %6100 = vmatpush1.bf16.msra.mxu0 0
  %6101 = vmatprep.subr.bf16.mxu0 0
  %6102 = vmatpush1.bf16.msra.mxu0 0
  %6103 = vmatprep.subr.bf16.mxu0 0
  %6104 = vmatpush1.bf16.msra.mxu0 0
  %6105 = vmatprep.subr.bf16.mxu0 0
  %6106 = vmatpush1.bf16.msra.mxu0 0
  %6107 = vmatprep.subr.bf16.mxu0 0
  %6108 = vmatpush1.bf16.msra.mxu0 0
  %6109 = vmatprep.subr.bf16.mxu0 0
  %6110 = vmatpush1.bf16.msra.mxu0 0
  %6111 = vmatprep.subr.bf16.mxu0 0
  %6112 = vmatpush1.bf16.msra.mxu0 0
  %6113 = vmatprep.subr.bf16.mxu0 0
  %6114 = vmatpush1.bf16.msra.mxu0 0
  %6115 = vmatprep.subr.bf16.mxu0 0
  %6116 = vmatpush1.bf16.msra.mxu0 0
  %6117 = vmatprep.mubr.bf16.mxu0 0
  %6118 = vmatmul.mubr.bf16.gmra.mrb[0].mxu0 %v768
  %v6119 = vpop.f32.mrb[0].mxu0
  %v6120 = vadd.f32 0.0, %v6119
  %v6121 = vpop.f32.mrb[0].mxu0
  %v6122 = vpop.f32.mrb[0].mxu0
  %v6123 = vadd.f32 0.0, %v6122
  %v6124 = vpop.f32.mrb[0].mxu0
  %6125 = vmatprep.mubr.bf16.mxu0 0
  %6126 = vmatmul.mubr.bf16.gmra.mrb[0].mxu0 %v771
  %v6127 = vpop.f32.mrb[0].mxu0
  %v6128 = vadd.f32 0.0, %v6127
  %v6129 = vpop.f32.mrb[0].mxu0
  %v6130 = vpop.f32.mrb[0].mxu0
  %v6131 = vadd.f32 0.0, %v6130
  %v6132 = vpop.f32.mrb[0].mxu0
  %6133 = vmatprep.mubr.bf16.mxu0 0
  %6134 = vmatmul.mubr.bf16.gmra.mrb[0].mxu0 %v774
  %v6135 = vpop.f32.mrb[0].mxu0
  %v6136 = vadd.f32 0.0, %v6135
  %v6137 = vpop.f32.mrb[0].mxu0
  %v6138 = vpop.f32.mrb[0].mxu0
  %v6139 = vadd.f32 0.0, %v6138
  %v6140 = vpop.f32.mrb[0].mxu0
  %6141 = vmatprep.mubr.bf16.mxu0 0
  %6142 = vmatmul.mubr.bf16.gmra.mrb[0].mxu0 %v777
  %v6143 = vpop.f32.mrb[0].mxu0
  %v6144 = vadd.f32 0.0, %v6143
  %v6145 = vpop.f32.mrb[0].mxu0
  %v6146 = vpop.f32.mrb[0].mxu0
  %v6147 = vadd.f32 0.0, %v6146
  %v6148 = vpop.f32.mrb[0].mxu0
  %6149 = vmatprep.mubr.bf16.mxu0 0
  %6150 = vmatmul.mubr.bf16.gmra.mrb[0].mxu0 %v780
  %v6151 = vpop.f32.mrb[0].mxu0
  %v6152 = vadd.f32 0.0, %v6151
  %v6153 = vpop.f32.mrb[0].mxu0
  %v6154 = vpop.f32.mrb[0].mxu0
  %v6155 = vadd.f32 0.0, %v6154
  %v6156 = vpop.f32.mrb[0].mxu0
  %6157 = vmatprep.mubr.bf16.mxu0 0
  %6158 = vmatmul.mubr.bf16.gmra.mrb[0].mxu0 %v783
  %v6159 = vpop.f32.mrb[0].mxu0
  %v6160 = vadd.f32 0.0, %v6159
  %v6161 = vpop.f32.mrb[0].mxu0
  %v6162 = vpop.f32.mrb[0].mxu0
  %v6163 = vadd.f32 0.0, %v6162
  %v6164 = vpop.f32.mrb[0].mxu0
  %6165 = vdwg.mxu0
  %v6167 = vsel %vm696, %v6060, 0
  %v6170 = vsel %vm696, %v6063, 0
  %v6173 = vsel %vm696, %v6068, 0
  %v6176 = vsel %vm696, %v6071, 0
  %v6179 = vsel %vm696, %v6076, 0
  %v6182 = vsel %vm696, %v6079, 0
  %6184 = vmatprep.subr.mxu0 0.0
  %6185 = vmatpush1.msra.mxu0 %v1911
  %6186 = vmatprep.subr.mxu0 0.0
  %6187 = vmatpush1.msra.mxu0 %v1912
  %6188 = vmatprep.subr.mxu0 0.0
  %6189 = vmatpush1.msra.mxu0 %v1913
  %6190 = vmatprep.subr.mxu0 0.0
  %6191 = vmatpush1.msra.mxu0 %v1914
  %6192 = vmatprep.subr.mxu0 0.0
  %6193 = vmatpush1.msra.mxu0 %v1915
  %6194 = vmatprep.subr.mxu0 0.0
  %6195 = vmatpush1.msra.mxu0 %v1916
  %6196 = vmatprep.subr.mxu0 0.0
  %6197 = vmatpush1.msra.mxu0 %v1917
  %6198 = vmatprep.subr.mxu0 0.0
  %6199 = vmatpush1.msra.mxu0 %v1918
  %6200 = vmatprep.subr.mxu0 0.0
  %6201 = vmatpush1.msra.mxu0 0.0
  %6202 = vmatprep.subr.mxu0 0.0
  %6203 = vmatpush1.msra.mxu0 0.0
  %6204 = vmatprep.subr.mxu0 0.0
  %6205 = vmatpush1.msra.mxu0 0.0
  %6206 = vmatprep.subr.mxu0 0.0
  %6207 = vmatpush1.msra.mxu0 0.0
  %6208 = vmatprep.subr.mxu0 0.0
  %6209 = vmatpush1.msra.mxu0 0.0
  %6210 = vmatprep.subr.mxu0 0.0
  %6211 = vmatpush1.msra.mxu0 0.0
  %6212 = vmatprep.subr.mxu0 0.0
  %6213 = vmatpush1.msra.mxu0 0.0
  %6214 = vmatprep.subr.mxu0 0.0
  %6215 = vmatpush1.msra.mxu0 0.0
  %6216 = vmatprep.subr.mxu0 0.0
  %6217 = vmatpush1.msra.mxu0 0.0
  %6218 = vmatprep.subr.mxu0 0.0
  %6219 = vmatpush1.msra.mxu0 0.0
  %6220 = vmatprep.subr.mxu0 0.0
  %6221 = vmatpush1.msra.mxu0 0.0
  %6222 = vmatprep.subr.mxu0 0.0
  %6223 = vmatpush1.msra.mxu0 0.0
  %6224 = vmatprep.subr.mxu0 0.0
  %6225 = vmatpush1.msra.mxu0 0.0
  %6226 = vmatprep.subr.mxu0 0.0
  %6227 = vmatpush1.msra.mxu0 0.0
  %6228 = vmatprep.subr.mxu0 0.0
  %6229 = vmatpush1.msra.mxu0 0.0
  %6230 = vmatprep.subr.mxu0 0.0
  %6231 = vmatpush1.msra.mxu0 0.0
  %6232 = vmatprep.subr.mxu0 0.0
  %6233 = vmatpush1.msra.mxu0 0.0
  %6234 = vmatprep.subr.mxu0 0.0
  %6235 = vmatpush1.msra.mxu0 0.0
  %6236 = vmatprep.subr.mxu0 0.0
  %6237 = vmatpush1.msra.mxu0 0.0
  %6238 = vmatprep.subr.mxu0 0.0
  %6239 = vmatpush1.msra.mxu0 0.0
  %6240 = vmatprep.subr.mxu0 0.0
  %6241 = vmatpush1.msra.mxu0 0.0
  %6242 = vmatprep.subr.mxu0 0.0
  %6243 = vmatpush1.msra.mxu0 0.0
  %6244 = vmatprep.subr.mxu0 0.0
  %6245 = vmatpush1.msra.mxu0 0.0
  %6246 = vmatprep.subr.mxu0 0.0
  %6247 = vmatpush1.msra.mxu0 0.0
  %6248 = vmatprep.mubr.f32.mxu0 0.0
  %6249 = vmatmul.mubr.f32.gmra.mrb[0].mxu0 %v6167
  %v6250 = vpop.f32.mrb[0].mxu0
  %v6251 = vadd.f32 0.0, %v6250
  %v6252 = vpop.f32.mrb[0].mxu0
  %6253 = vmatprep.mubr.f32.mxu0 0.0
  %6254 = vmatmul.mubr.f32.gmra.mrb[0].mxu0 %v6170
  %v6255 = vpop.f32.mrb[0].mxu0
  %v6256 = vadd.f32 0.0, %v6255
  %v6257 = vpop.f32.mrb[0].mxu0
  %6258 = vmatprep.mubr.f32.mxu0 0.0
  %6259 = vmatmul.mubr.f32.gmra.mrb[0].mxu0 %v6173
  %v6260 = vpop.f32.mrb[0].mxu0
  %v6261 = vadd.f32 0.0, %v6260
  %v6262 = vpop.f32.mrb[0].mxu0
  %6263 = vmatprep.mubr.f32.mxu0 0.0
  %6264 = vmatmul.mubr.f32.gmra.mrb[0].mxu0 %v6176
  %v6265 = vpop.f32.mrb[0].mxu0
  %v6266 = vadd.f32 0.0, %v6265
  %v6267 = vpop.f32.mrb[0].mxu0
  %6268 = vmatprep.mubr.f32.mxu0 0.0
  %6269 = vmatmul.mubr.f32.gmra.mrb[0].mxu0 %v6179
  %v6270 = vpop.f32.mrb[0].mxu0
  %v6271 = vadd.f32 0.0, %v6270
  %v6272 = vpop.f32.mrb[0].mxu0
  %6273 = vmatprep.mubr.f32.mxu0 0.0
  %6274 = vmatmul.mubr.f32.gmra.mrb[0].mxu0 %v6182
  %v6275 = vpop.f32.mrb[0].mxu0
  %v6276 = vadd.f32 0.0, %v6275
  %v6277 = vpop.f32.mrb[0].mxu0
  %6278 = vdwg.mxu0
  %v6279 = vpack.c.bf16 %v6256, %v6251
  %v6280 = vpack.c.bf16 %v6266, %v6261
  %v6281 = vpack.c.bf16 %v6276, %v6271
  %v6283 = vsel %vm696, %v6120, 0
  %v6286 = vsel %vm696, %v6123, 0
  %v6289 = vsel %vm696, %v6128, 0
  %v6292 = vsel %vm696, %v6131, 0
  %v6295 = vsel %vm696, %v6136, 0
  %v6298 = vsel %vm696, %v6139, 0
  %v6301 = vsel %vm696, %v6144, 0
  %v6304 = vsel %vm696, %v6147, 0
  %v6307 = vsel %vm696, %v6152, 0
  %v6310 = vsel %vm696, %v6155, 0
  %v6313 = vsel %vm696, %v6160, 0
  %v6316 = vsel %vm696, %v6163, 0
  %6318 = vmatprep.subr.mxu0 0.0
  %6319 = vmatpush1.msra.mxu0 %v1919
  %6320 = vmatprep.subr.mxu0 0.0
  %6321 = vmatpush1.msra.mxu0 %v1920
  %6322 = vmatprep.subr.mxu0 0.0
  %6323 = vmatpush1.msra.mxu0 %v1921
  %6324 = vmatprep.subr.mxu0 0.0
  %6325 = vmatpush1.msra.mxu0 %v1922
  %6326 = vmatprep.subr.mxu0 0.0
  %6327 = vmatpush1.msra.mxu0 %v1923
  %6328 = vmatprep.subr.mxu0 0.0
  %6329 = vmatpush1.msra.mxu0 %v1924
  %6330 = vmatprep.subr.mxu0 0.0
  %6331 = vmatpush1.msra.mxu0 %v1925
  %6332 = vmatprep.subr.mxu0 0.0
  %6333 = vmatpush1.msra.mxu0 %v1926
  %6334 = vmatprep.subr.mxu0 0.0
  %6335 = vmatpush1.msra.mxu0 0.0
  %6336 = vmatprep.subr.mxu0 0.0
  %6337 = vmatpush1.msra.mxu0 0.0
  %6338 = vmatprep.subr.mxu0 0.0
  %6339 = vmatpush1.msra.mxu0 0.0
  %6340 = vmatprep.subr.mxu0 0.0
  %6341 = vmatpush1.msra.mxu0 0.0
  %6342 = vmatprep.subr.mxu0 0.0
  %6343 = vmatpush1.msra.mxu0 0.0
  %6344 = vmatprep.subr.mxu0 0.0
  %6345 = vmatpush1.msra.mxu0 0.0
  %6346 = vmatprep.subr.mxu0 0.0
  %6347 = vmatpush1.msra.mxu0 0.0
  %6348 = vmatprep.subr.mxu0 0.0
  %6349 = vmatpush1.msra.mxu0 0.0
  %6350 = vmatprep.subr.mxu0 0.0
  %6351 = vmatpush1.msra.mxu0 0.0
  %6352 = vmatprep.subr.mxu0 0.0
  %6353 = vmatpush1.msra.mxu0 0.0
  %6354 = vmatprep.subr.mxu0 0.0
  %6355 = vmatpush1.msra.mxu0 0.0
  %6356 = vmatprep.subr.mxu0 0.0
  %6357 = vmatpush1.msra.mxu0 0.0
  %6358 = vmatprep.subr.mxu0 0.0
  %6359 = vmatpush1.msra.mxu0 0.0
  %6360 = vmatprep.subr.mxu0 0.0
  %6361 = vmatpush1.msra.mxu0 0.0
  %6362 = vmatprep.subr.mxu0 0.0
  %6363 = vmatpush1.msra.mxu0 0.0
  %6364 = vmatprep.subr.mxu0 0.0
  %6365 = vmatpush1.msra.mxu0 0.0
  %6366 = vmatprep.subr.mxu0 0.0
  %6367 = vmatpush1.msra.mxu0 0.0
  %6368 = vmatprep.subr.mxu0 0.0
  %6369 = vmatpush1.msra.mxu0 0.0
  %6370 = vmatprep.subr.mxu0 0.0
  %6371 = vmatpush1.msra.mxu0 0.0
  %6372 = vmatprep.subr.mxu0 0.0
  %6373 = vmatpush1.msra.mxu0 0.0
  %6374 = vmatprep.subr.mxu0 0.0
  %6375 = vmatpush1.msra.mxu0 0.0
  %6376 = vmatprep.subr.mxu0 0.0
  %6377 = vmatpush1.msra.mxu0 0.0
  %6378 = vmatprep.subr.mxu0 0.0
  %6379 = vmatpush1.msra.mxu0 0.0
  %6380 = vmatprep.subr.mxu0 0.0
  %6381 = vmatpush1.msra.mxu0 0.0
  %6382 = vmatprep.mubr.f32.mxu0 0.0
  %6383 = vmatmul.mubr.f32.gmra.mrb[0].mxu0 %v6283
  %v6384 = vpop.f32.mrb[0].mxu0
  %v6385 = vadd.f32 0.0, %v6384
  %v6386 = vpop.f32.mrb[0].mxu0
  %6387 = vmatprep.mubr.f32.mxu0 0.0
  %6388 = vmatmul.mubr.f32.gmra.mrb[0].mxu0 %v6286
  %v6389 = vpop.f32.mrb[0].mxu0
  %v6390 = vadd.f32 0.0, %v6389
  %v6391 = vpop.f32.mrb[0].mxu0
  %6392 = vmatprep.mubr.f32.mxu0 0.0
  %6393 = vmatmul.mubr.f32.gmra.mrb[0].mxu0 %v6289
  %v6394 = vpop.f32.mrb[0].mxu0
  %v6395 = vadd.f32 0.0, %v6394
  %v6396 = vpop.f32.mrb[0].mxu0
  %6397 = vmatprep.mubr.f32.mxu0 0.0
  %6398 = vmatmul.mubr.f32.gmra.mrb[0].mxu0 %v6292
  %v6399 = vpop.f32.mrb[0].mxu0
  %v6400 = vadd.f32 0.0, %v6399
  %v6401 = vpop.f32.mrb[0].mxu0
  %6402 = vmatprep.mubr.f32.mxu0 0.0
  %6403 = vmatmul.mubr.f32.gmra.mrb[0].mxu0 %v6295
  %v6404 = vpop.f32.mrb[0].mxu0
  %v6405 = vadd.f32 0.0, %v6404
  %v6406 = vpop.f32.mrb[0].mxu0
  %6407 = vmatprep.mubr.f32.mxu0 0.0
  %6408 = vmatmul.mubr.f32.gmra.mrb[0].mxu0 %v6298
  %v6409 = vpop.f32.mrb[0].mxu0
  %v6410 = vadd.f32 0.0, %v6409
  %v6411 = vpop.f32.mrb[0].mxu0
  %6412 = vmatprep.mubr.f32.mxu0 0.0
  %6413 = vmatmul.mubr.f32.gmra.mrb[0].mxu0 %v6301
  %v6414 = vpop.f32.mrb[0].mxu0
  %v6415 = vadd.f32 0.0, %v6414
  %v6416 = vpop.f32.mrb[0].mxu0
  %6417 = vmatprep.mubr.f32.mxu0 0.0
  %6418 = vmatmul.mubr.f32.gmra.mrb[0].mxu0 %v6304
  %v6419 = vpop.f32.mrb[0].mxu0
  %v6420 = vadd.f32 0.0, %v6419
  %v6421 = vpop.f32.mrb[0].mxu0
  %6422 = vmatprep.mubr.f32.mxu0 0.0
  %6423 = vmatmul.mubr.f32.gmra.mrb[0].mxu0 %v6307
  %v6424 = vpop.f32.mrb[0].mxu0
  %v6425 = vadd.f32 0.0, %v6424
  %v6426 = vpop.f32.mrb[0].mxu0
  %6427 = vmatprep.mubr.f32.mxu0 0.0
  %6428 = vmatmul.mubr.f32.gmra.mrb[0].mxu0 %v6310
  %v6429 = vpop.f32.mrb[0].mxu0
  %v6430 = vadd.f32 0.0, %v6429
  %v6431 = vpop.f32.mrb[0].mxu0
  %6432 = vmatprep.mubr.f32.mxu0 0.0
  %6433 = vmatmul.mubr.f32.gmra.mrb[0].mxu0 %v6313
  %v6434 = vpop.f32.mrb[0].mxu0
  %v6435 = vadd.f32 0.0, %v6434
  %v6436 = vpop.f32.mrb[0].mxu0
  %6437 = vmatprep.mubr.f32.mxu0 0.0
  %6438 = vmatmul.mubr.f32.gmra.mrb[0].mxu0 %v6316
  %v6439 = vpop.f32.mrb[0].mxu0
  %v6440 = vadd.f32 0.0, %v6439
  %v6441 = vpop.f32.mrb[0].mxu0
  %6442 = vdwg.mxu0
  %6443 = vmatprep.subr.bf16.mxu0 0
  %6444 = vmatpush1.bf16.msra.mxu0 %v6279
  %6445 = vmatprep.subr.bf16.mxu0 0
  %6446 = vmatpush1.bf16.msra.mxu0 %v6280
  %6447 = vmatprep.subr.bf16.mxu0 0
  %6448 = vmatpush1.bf16.msra.mxu0 %v6281
  %6449 = vmatprep.subr.bf16.mxu0 0
  %6450 = vmatpush1.bf16.msra.mxu0 0
  %6451 = vmatprep.subr.bf16.mxu0 0
  %6452 = vmatpush1.bf16.msra.mxu0 0
  %6453 = vmatprep.subr.bf16.mxu0 0
  %6454 = vmatpush1.bf16.msra.mxu0 0
  %6455 = vmatprep.subr.bf16.mxu0 0
  %6456 = vmatpush1.bf16.msra.mxu0 0
  %6457 = vmatprep.subr.bf16.mxu0 0
  %6458 = vmatpush1.bf16.msra.mxu0 0
  %6459 = vmatprep.subr.bf16.mxu0 0
  %6460 = vmatpush1.bf16.msra.mxu0 0
  %6461 = vmatprep.subr.bf16.mxu0 0
  %6462 = vmatpush1.bf16.msra.mxu0 0
  %6463 = vmatprep.subr.bf16.mxu0 0
  %6464 = vmatpush1.bf16.msra.mxu0 0
  %6465 = vmatprep.subr.bf16.mxu0 0
  %6466 = vmatpush1.bf16.msra.mxu0 0
  %6467 = vmatprep.subr.bf16.mxu0 0
  %6468 = vmatpush1.bf16.msra.mxu0 0
  %6469 = vmatprep.subr.bf16.mxu0 0
  %6470 = vmatpush1.bf16.msra.mxu0 0
  %6471 = vmatprep.subr.bf16.mxu0 0
  %6472 = vmatpush1.bf16.msra.mxu0 0
  %6473 = vmatprep.subr.bf16.mxu0 0
  %6474 = vmatpush1.bf16.msra.mxu0 0
  %6475 = vmatprep.mubr.bf16.mxu0 0
  %6476 = vmatmul.mubr.bf16.gmra.mrb[0].mxu0 %v1144
  %v6477 = vpop.f32.mrb[0].mxu0
  %v6478 = vadd.f32 %v6385, %v6477
  %v6479 = vpop.f32.mrb[0].mxu0
  %v6480 = vpop.f32.mrb[0].mxu0
  %v6481 = vadd.f32 %v6390, %v6480
  %v6482 = vpop.f32.mrb[0].mxu0
  %6483 = vmatprep.mubr.bf16.mxu0 0
  %6484 = vmatmul.mubr.bf16.gmra.mrb[0].mxu0 %v1147
  %v6485 = vpop.f32.mrb[0].mxu0
  %v6486 = vadd.f32 %v6395, %v6485
  %v6487 = vpop.f32.mrb[0].mxu0
  %v6488 = vpop.f32.mrb[0].mxu0
  %v6489 = vadd.f32 %v6400, %v6488
  %v6490 = vpop.f32.mrb[0].mxu0
  %6491 = vmatprep.mubr.bf16.mxu0 0
  %6492 = vmatmul.mubr.bf16.gmra.mrb[0].mxu0 %v1150
  %v6493 = vpop.f32.mrb[0].mxu0
  %v6494 = vadd.f32 %v6405, %v6493
  %v6495 = vpop.f32.mrb[0].mxu0
  %v6496 = vpop.f32.mrb[0].mxu0
  %v6497 = vadd.f32 %v6410, %v6496
  %v6498 = vpop.f32.mrb[0].mxu0
  %6499 = vmatprep.mubr.bf16.mxu0 0
  %6500 = vmatmul.mubr.bf16.gmra.mrb[0].mxu0 %v1153
  %v6501 = vpop.f32.mrb[0].mxu0
  %v6502 = vadd.f32 %v6415, %v6501
  %v6503 = vpop.f32.mrb[0].mxu0
  %v6504 = vpop.f32.mrb[0].mxu0
  %v6505 = vadd.f32 %v6420, %v6504
  %v6506 = vpop.f32.mrb[0].mxu0
  %6507 = vmatprep.mubr.bf16.mxu0 0
  %6508 = vmatmul.mubr.bf16.gmra.mrb[0].mxu0 %v1156
  %v6509 = vpop.f32.mrb[0].mxu0
  %v6510 = vadd.f32 %v6425, %v6509
  %v6511 = vpop.f32.mrb[0].mxu0
  %v6512 = vpop.f32.mrb[0].mxu0
  %v6513 = vadd.f32 %v6430, %v6512
  %v6514 = vpop.f32.mrb[0].mxu0
  %6515 = vmatprep.mubr.bf16.mxu0 0
  %6516 = vmatmul.mubr.bf16.gmra.mrb[0].mxu0 %v1159
  %v6517 = vpop.f32.mrb[0].mxu0
  %v6518 = vadd.f32 %v6435, %v6517
  %v6519 = vpop.f32.mrb[0].mxu0
  %v6520 = vpop.f32.mrb[0].mxu0
  %v6521 = vadd.f32 %v6440, %v6520
  %v6522 = vpop.f32.mrb[0].mxu0
  %6523 = vdwg.mxu0
  %v6524 = vadd.f32 %v6478, %v2449
  %v6525 = vadd.f32 %v6481, %v2450
  %v6526 = vadd.f32 %v6486, %v2451
  %v6527 = vadd.f32 %v6489, %v2452
  %v6528 = vadd.f32 %v6494, %v2453
  %v6529 = vadd.f32 %v6497, %v2454
  %v6530 = vadd.f32 %v6502, %v2455
  %v6531 = vadd.f32 %v6505, %v2456
  %v6532 = vadd.f32 %v6510, %v2457
  %v6533 = vadd.f32 %v6513, %v2458
  %v6534 = vadd.f32 %v6518, %v2459
  %v6535 = vadd.f32 %v6521, %v2460
  %vm6536 = vcmp.gt.f32.partialorder %v6524, 0.0
  %vm6537 = vcmp.gt.f32.partialorder %v6525, 0.0
  %vm6538 = vcmp.gt.f32.partialorder %v6526, 0.0
  %vm6539 = vcmp.gt.f32.partialorder %v6527, 0.0
  %vm6540 = vcmp.gt.f32.partialorder %v6528, 0.0
  %vm6541 = vcmp.gt.f32.partialorder %v6529, 0.0
  %vm6542 = vcmp.gt.f32.partialorder %v6530, 0.0
  %vm6543 = vcmp.gt.f32.partialorder %v6531, 0.0
  %vm6544 = vcmp.gt.f32.partialorder %v6532, 0.0
  %vm6545 = vcmp.gt.f32.partialorder %v6533, 0.0
  %vm6546 = vcmp.gt.f32.partialorder %v6534, 0.0
  %vm6547 = vcmp.gt.f32.partialorder %v6535, 0.0
  %v6548 = vmul.f32 %v6524, 0.2
  %v6549 = vmul.f32 %v6525, 0.2
  %v6550 = vmul.f32 %v6526, 0.2
  %v6551 = vmul.f32 %v6527, 0.2
  %v6552 = vmul.f32 %v6528, 0.2
  %v6553 = vmul.f32 %v6529, 0.2
  %v6554 = vmul.f32 %v6530, 0.2
  %v6555 = vmul.f32 %v6531, 0.2
  %v6556 = vmul.f32 %v6532, 0.2
  %v6557 = vmul.f32 %v6533, 0.2
  %v6558 = vmul.f32 %v6534, 0.2
  %v6559 = vmul.f32 %v6535, 0.2
  %v6560 = vsel %vm6536, %v6524, %v6548
  %v6561 = vsel %vm6537, %v6525, %v6549
  %v6562 = vsel %vm6538, %v6526, %v6550
  %v6563 = vsel %vm6539, %v6527, %v6551
  %v6564 = vsel %vm6540, %v6528, %v6552
  %v6565 = vsel %vm6541, %v6529, %v6553
  %v6566 = vsel %vm6542, %v6530, %v6554
  %v6567 = vsel %vm6543, %v6531, %v6555
  %v6568 = vsel %vm6544, %v6532, %v6556
  %v6569 = vsel %vm6545, %v6533, %v6557
  %v6570 = vsel %vm6546, %v6534, %v6558
  %v6571 = vsel %vm6547, %v6535, %v6559
  %v6572 = vsub.f32 0.0, %v6560
  %v6573 = vsub.f32 0.0, %v6561
  %v6574 = vsub.f32 0.0, %v6562
  %v6575 = vsub.f32 0.0, %v6563
  %v6576 = vsub.f32 0.0, %v6564
  %v6577 = vsub.f32 0.0, %v6565
  %v6578 = vsub.f32 0.0, %v6566
  %v6579 = vsub.f32 0.0, %v6567
  %v6580 = vsub.f32 0.0, %v6568
  %v6581 = vsub.f32 0.0, %v6569
  %v6582 = vsub.f32 0.0, %v6570
  %v6583 = vsub.f32 0.0, %v6571
  %v6584 = vmin.f32 %v6572, 60.0
  %v6585 = vmin.f32 %v6573, 60.0
  %v6586 = vmin.f32 %v6574, 60.0
  %v6587 = vmin.f32 %v6575, 60.0
  %v6588 = vmin.f32 %v6576, 60.0
  %v6589 = vmin.f32 %v6577, 60.0
  %v6590 = vmin.f32 %v6578, 60.0
  %v6591 = vmin.f32 %v6579, 60.0
  %v6592 = vmin.f32 %v6580, 60.0
  %v6593 = vmin.f32 %v6581, 60.0
  %v6594 = vmin.f32 %v6582, 60.0
  %v6595 = vmin.f32 %v6583, 60.0
  %v6596 = vmul.f32 %v6584, 1.442695
  %v6597 = vpow.pop %v6596
  %v6598 = vmul.f32 %v6585, 1.442695
  %v6599 = vpow.pop %v6598
  %v6600 = vmul.f32 %v6586, 1.442695
  %v6601 = vpow.pop %v6600
  %v6602 = vmul.f32 %v6587, 1.442695
  %v6603 = vpow.pop %v6602
  %v6604 = vmul.f32 %v6588, 1.442695
  %v6605 = vpow.pop %v6604
  %v6606 = vmul.f32 %v6589, 1.442695
  %v6607 = vpow.pop %v6606
  %v6608 = vmul.f32 %v6590, 1.442695
  %v6609 = vpow.pop %v6608
  %v6610 = vmul.f32 %v6591, 1.442695
  %v6611 = vpow.pop %v6610
  %v6612 = vmul.f32 %v6592, 1.442695
  %v6613 = vpow.pop %v6612
  %v6614 = vmul.f32 %v6593, 1.442695
  %v6615 = vpow.pop %v6614
  %v6616 = vmul.f32 %v6594, 1.442695
  %v6617 = vpow.pop %v6616
  %v6618 = vmul.f32 %v6595, 1.442695
  %v6619 = vpow.pop %v6618
  %6621 = vset.pattern.permute.xlu0 0
  %6622 = vperm.xlu0 %6621, %v6597
  %v6623 = vpop.permute.xlu0 %6622
  %6626 = vset.pattern.permute.xlu0 0
  %6627 = vperm.xlu0 %6626, %v6599
  %v6628 = vpop.permute.xlu0 %6627
  %6631 = vset.pattern.permute.xlu0 0
  %6632 = vperm.xlu0 %6631, %v6601
  %v6633 = vpop.permute.xlu0 %6632
  %6636 = vset.pattern.permute.xlu0 0
  %6637 = vperm.xlu0 %6636, %v6603
  %v6638 = vpop.permute.xlu0 %6637
  %6641 = vset.pattern.permute.xlu0 0
  %6642 = vperm.xlu0 %6641, %v6605
  %v6643 = vpop.permute.xlu0 %6642
  %6646 = vset.pattern.permute.xlu0 0
  %6647 = vperm.xlu0 %6646, %v6607
  %v6648 = vpop.permute.xlu0 %6647
  %6651 = vset.pattern.permute.xlu0 0
  %6652 = vperm.xlu0 %6651, %v6609
  %v6653 = vpop.permute.xlu0 %6652
  %6656 = vset.pattern.permute.xlu0 0
  %6657 = vperm.xlu0 %6656, %v6611
  %v6658 = vpop.permute.xlu0 %6657
  %6661 = vset.pattern.permute.xlu0 0
  %6662 = vperm.xlu0 %6661, %v6613
  %v6663 = vpop.permute.xlu0 %6662
  %6666 = vset.pattern.permute.xlu0 0
  %6667 = vperm.xlu0 %6666, %v6615
  %v6668 = vpop.permute.xlu0 %6667
  %6671 = vset.pattern.permute.xlu0 0
  %6672 = vperm.xlu0 %6671, %v6617
  %v6673 = vpop.permute.xlu0 %6672
  %6676 = vset.pattern.permute.xlu0 0
  %6677 = vperm.xlu0 %6676, %v6619
  %v6678 = vpop.permute.xlu0 %6677
  %v6680 = vmul.f32 %v6623, %v6120
  %v6681 = vmul.f32 %v6628, %v6123
  %v6682 = vmul.f32 %v6633, %v6128
  %v6683 = vmul.f32 %v6638, %v6131
  %v6684 = vmul.f32 %v6643, %v6136
  %v6685 = vmul.f32 %v6648, %v6139
  %v6686 = vmul.f32 %v6653, %v6144
  %v6687 = vmul.f32 %v6658, %v6147
  %v6688 = vmul.f32 %v6663, %v6152
  %v6689 = vmul.f32 %v6668, %v6155
  %v6690 = vmul.f32 %v6673, %v6160
  %v6691 = vmul.f32 %v6678, %v6163
  %v6692 = vpack.c.bf16 %v6681, %v6680
  %v6693 = vpack.c.bf16 %v6683, %v6682
  %v6694 = vpack.c.bf16 %v6685, %v6684
  %v6695 = vpack.c.bf16 %v6687, %v6686
  %v6696 = vpack.c.bf16 %v6689, %v6688
  %v6697 = vpack.c.bf16 %v6691, %v6690
  %6698 = vmatprep.subr.bf16.mxu0 0
  %6699 = vmatpush1.bf16.msra.mxu0 %v6692
  %6700 = vmatprep.subr.bf16.mxu0 0
  %6701 = vmatpush1.bf16.msra.mxu0 %v6693
  %6702 = vmatprep.subr.bf16.mxu0 0
  %6703 = vmatpush1.bf16.msra.mxu0 %v6694
  %6704 = vmatprep.subr.bf16.mxu0 0
  %6705 = vmatpush1.bf16.msra.mxu0 %v6695
  %6706 = vmatprep.subr.bf16.mxu0 0
  %6707 = vmatpush1.bf16.msra.mxu0 %v6696
  %6708 = vmatprep.subr.bf16.mxu0 0
  %6709 = vmatpush1.bf16.msra.mxu0 %v6697
  %6710 = vmatprep.subr.bf16.mxu0 0
  %6711 = vmatpush1.bf16.msra.mxu0 0
  %6712 = vmatprep.subr.bf16.mxu0 0
  %6713 = vmatpush1.bf16.msra.mxu0 0
  %6714 = vmatprep.subr.bf16.mxu0 0
  %6715 = vmatpush1.bf16.msra.mxu0 0
  %6716 = vmatprep.subr.bf16.mxu0 0
  %6717 = vmatpush1.bf16.msra.mxu0 0
  %6718 = vmatprep.subr.bf16.mxu0 0
  %6719 = vmatpush1.bf16.msra.mxu0 0
  %6720 = vmatprep.subr.bf16.mxu0 0
  %6721 = vmatpush1.bf16.msra.mxu0 0
  %6722 = vmatprep.subr.bf16.mxu0 0
  %6723 = vmatpush1.bf16.msra.mxu0 0
  %6724 = vmatprep.subr.bf16.mxu0 0
  %6725 = vmatpush1.bf16.msra.mxu0 0
  %6726 = vmatprep.subr.bf16.mxu0 0
  %6727 = vmatpush1.bf16.msra.mxu0 0
  %6728 = vmatprep.subr.bf16.mxu0 0
  %6729 = vmatpush1.bf16.msra.mxu0 0
  %6730 = vmatprep.mubr.bf16.mxu0 0
  %6731 = vmatmul.mubr.bf16.gmra.mrb[0].mxu0 %v1602
  %v6732 = vpop.f32.mrb[0].mxu0
  %v6733 = vadd.f32 0.0, %v6732
  %v6734 = vpop.f32.mrb[0].mxu0
  %v6735 = vpop.f32.mrb[0].mxu0
  %v6736 = vadd.f32 0.0, %v6735
  %v6737 = vpop.f32.mrb[0].mxu0
  %6738 = vmatprep.mubr.bf16.mxu0 0
  %6739 = vmatmul.mubr.bf16.gmra.mrb[0].mxu0 %v1605
  %v6740 = vpop.f32.mrb[0].mxu0
  %v6741 = vadd.f32 0.0, %v6740
  %v6742 = vpop.f32.mrb[0].mxu0
  %v6743 = vpop.f32.mrb[0].mxu0
  %v6744 = vadd.f32 0.0, %v6743
  %v6745 = vpop.f32.mrb[0].mxu0
  %6746 = vmatprep.mubr.bf16.mxu0 0
  %6747 = vmatmul.mubr.bf16.gmra.mrb[0].mxu0 %v1608
  %v6748 = vpop.f32.mrb[0].mxu0
  %v6749 = vadd.f32 0.0, %v6748
  %v6750 = vpop.f32.mrb[0].mxu0
  %v6751 = vpop.f32.mrb[0].mxu0
  %v6752 = vadd.f32 0.0, %v6751
  %v6753 = vpop.f32.mrb[0].mxu0
  %6754 = vdwg.mxu0
  %v6755 = vpack.c.bf16 %v6599, %v6597
  %v6756 = vpack.c.bf16 %v6603, %v6601
  %v6757 = vpack.c.bf16 %v6607, %v6605
  %v6758 = vpack.c.bf16 %v6611, %v6609
  %v6759 = vpack.c.bf16 %v6615, %v6613
  %v6760 = vpack.c.bf16 %v6619, %v6617
  %6761 = vmatprep.subr.bf16.mxu0 0
  %6762 = vmatpush1.bf16.msra.mxu0 %v6755
  %6763 = vmatprep.subr.bf16.mxu0 0
  %6764 = vmatpush1.bf16.msra.mxu0 %v6756
  %6765 = vmatprep.subr.bf16.mxu0 0
  %6766 = vmatpush1.bf16.msra.mxu0 %v6757
  %6767 = vmatprep.subr.bf16.mxu0 0
  %6768 = vmatpush1.bf16.msra.mxu0 %v6758
  %6769 = vmatprep.subr.bf16.mxu0 0
  %6770 = vmatpush1.bf16.msra.mxu0 %v6759
  %6771 = vmatprep.subr.bf16.mxu0 0
  %6772 = vmatpush1.bf16.msra.mxu0 %v6760
  %6773 = vmatprep.subr.bf16.mxu0 0
  %6774 = vmatpush1.bf16.msra.mxu0 0
  %6775 = vmatprep.subr.bf16.mxu0 0
  %6776 = vmatpush1.bf16.msra.mxu0 0
  %6777 = vmatprep.subr.bf16.mxu0 0
  %6778 = vmatpush1.bf16.msra.mxu0 0
  %6779 = vmatprep.subr.bf16.mxu0 0
  %6780 = vmatpush1.bf16.msra.mxu0 0
  %6781 = vmatprep.subr.bf16.mxu0 0
  %6782 = vmatpush1.bf16.msra.mxu0 0
  %6783 = vmatprep.subr.bf16.mxu0 0
  %6784 = vmatpush1.bf16.msra.mxu0 0
  %6785 = vmatprep.subr.bf16.mxu0 0
  %6786 = vmatpush1.bf16.msra.mxu0 0
  %6787 = vmatprep.subr.bf16.mxu0 0
  %6788 = vmatpush1.bf16.msra.mxu0 0
  %6789 = vmatprep.subr.bf16.mxu0 0
  %6790 = vmatpush1.bf16.msra.mxu0 0
  %6791 = vmatprep.subr.bf16.mxu0 0
  %6792 = vmatpush1.bf16.msra.mxu0 0
  %6793 = vmatprep.mubr.bf16.mxu0 0
  %6794 = vmatmul.mubr.bf16.gmra.mrb[0].mxu0 %v1602
  %v6795 = vpop.f32.mrb[0].mxu0
  %v6796 = vadd.f32 0.0, %v6795
  %v6797 = vpop.f32.mrb[0].mxu0
  %v6798 = vpop.f32.mrb[0].mxu0
  %v6799 = vadd.f32 0.0, %v6798
  %v6800 = vpop.f32.mrb[0].mxu0
  %6801 = vmatprep.mubr.bf16.mxu0 0
  %6802 = vmatmul.mubr.bf16.gmra.mrb[0].mxu0 %v1605
  %v6803 = vpop.f32.mrb[0].mxu0
  %v6804 = vadd.f32 0.0, %v6803
  %v6805 = vpop.f32.mrb[0].mxu0
  %v6806 = vpop.f32.mrb[0].mxu0
  %v6807 = vadd.f32 0.0, %v6806
  %v6808 = vpop.f32.mrb[0].mxu0
  %6809 = vmatprep.mubr.bf16.mxu0 0
  %6810 = vmatmul.mubr.bf16.gmra.mrb[0].mxu0 %v1608
  %v6811 = vpop.f32.mrb[0].mxu0
  %v6812 = vadd.f32 0.0, %v6811
  %v6813 = vpop.f32.mrb[0].mxu0
  %v6814 = vpop.f32.mrb[0].mxu0
  %v6815 = vadd.f32 0.0, %v6814
  %v6816 = vpop.f32.mrb[0].mxu0
  %6817 = vdwg.mxu0
  %vm6818 = vcmp.eq.f32.partialorder %v6796, 0.0
  %vm6819 = vcmp.eq.f32.partialorder %v6799, 0.0
  %vm6820 = vcmp.eq.f32.partialorder %v6804, 0.0
  %vm6821 = vcmp.eq.f32.partialorder %v6807, 0.0
  %vm6822 = vcmp.eq.f32.partialorder %v6812, 0.0
  %vm6823 = vcmp.eq.f32.partialorder %v6815, 0.0
  %v6824 = vsel %vm6818, 1.0, %v6796
  %v6825 = vsel %vm6819, 1.0, %v6799
  %v6826 = vsel %vm6820, 1.0, %v6804
  %v6827 = vsel %vm6821, 1.0, %v6807
  %v6828 = vsel %vm6822, 1.0, %v6812
  %v6829 = vsel %vm6823, 1.0, %v6815
  %v6830 = vrcp.pop %v6824
  %v6831 = vrcp.pop %v6825
  %v6832 = vrcp.pop %v6826
  %v6833 = vrcp.pop %v6827
  %v6834 = vrcp.pop %v6828
  %v6835 = vrcp.pop %v6829
  %6837 = vset.pattern.permute.xlu0 0
  %6838 = vperm.xlu0 %6837, %v6830
  %v6839 = vpop.permute.xlu0 %6838
  %6842 = vset.pattern.permute.xlu0 0
  %6843 = vperm.xlu0 %6842, %v6831
  %v6844 = vpop.permute.xlu0 %6843
  %6847 = vset.pattern.permute.xlu0 0
  %6848 = vperm.xlu0 %6847, %v6832
  %v6849 = vpop.permute.xlu0 %6848
  %6852 = vset.pattern.permute.xlu0 0
  %6853 = vperm.xlu0 %6852, %v6833
  %v6854 = vpop.permute.xlu0 %6853
  %6857 = vset.pattern.permute.xlu0 0
  %6858 = vperm.xlu0 %6857, %v6834
  %v6859 = vpop.permute.xlu0 %6858
  %6862 = vset.pattern.permute.xlu0 0
  %6863 = vperm.xlu0 %6862, %v6835
  %v6864 = vpop.permute.xlu0 %6863
  %v6866 = vmul.f32 %v6733, %v6839
  %v6867 = vmul.f32 %v6736, %v6844
  %v6868 = vmul.f32 %v6741, %v6849
  %v6869 = vmul.f32 %v6744, %v6854
  %v6870 = vmul.f32 %v6749, %v6859
  %v6871 = vmul.f32 %v6752, %v6864
  %v6872 = vsel %vm1416, %v5518, 0.0
  %6873 = vadd.xlane.f32.xlu0 %v6872
  %v6874 = vpop.xlane.xlu0 %6873
  %v6875 = vsel %vm1416, %v5520, 0.0
  %6876 = vadd.xlane.f32.xlu0 %v6875
  %v6877 = vpop.xlane.xlu0 %6876
  %v6878 = vsel %vm1416, %v5522, 0.0
  %6879 = vadd.xlane.f32.xlu0 %v6878
  %v6880 = vpop.xlane.xlu0 %6879
  %v6881 = vsel %vm1416, %v5524, 0.0
  %6882 = vadd.xlane.f32.xlu0 %v6881
  %v6883 = vpop.xlane.xlu0 %6882
  %v6884 = vsel %vm1416, %v5526, 0.0
  %6885 = vadd.xlane.f32.xlu0 %v6884
  %v6886 = vpop.xlane.xlu0 %6885
  %v6887 = vsel %vm1416, %v5528, 0.0
  %6888 = vadd.xlane.f32.xlu0 %v6887
  %v6889 = vpop.xlane.xlu0 %6888
  %v6890 = vsel %vm1416, %v5530, 0.0
  %6891 = vadd.xlane.f32.xlu0 %v6890
  %v6892 = vpop.xlane.xlu0 %6891
  %v6893 = vsel %vm1416, %v5532, 0.0
  %6894 = vadd.xlane.f32.xlu0 %v6893
  %v6895 = vpop.xlane.xlu0 %6894
  %v6896 = vsel %vm1416, %v5534, 0.0
  %6897 = vadd.xlane.f32.xlu0 %v6896
  %v6898 = vpop.xlane.xlu0 %6897
  %v6899 = vsel %vm1416, %v5536, 0.0
  %6900 = vadd.xlane.f32.xlu0 %v6899
  %v6901 = vpop.xlane.xlu0 %6900
  %v6902 = vsel %vm1416, %v5538, 0.0
  %6903 = vadd.xlane.f32.xlu0 %v6902
  %v6904 = vpop.xlane.xlu0 %6903
  %v6905 = vsel %vm1416, %v5540, 0.0
  %6906 = vadd.xlane.f32.xlu0 %v6905
  %v6907 = vpop.xlane.xlu0 %6906
  %v6908 = vmul.f32 %v6874, 0.25
  %v6909 = vmul.f32 %v6877, 0.25
  %v6910 = vmul.f32 %v6880, 0.25
  %v6911 = vmul.f32 %v6883, 0.25
  %v6912 = vmul.f32 %v6886, 0.25
  %v6913 = vmul.f32 %v6889, 0.25
  %v6914 = vmul.f32 %v6892, 0.25
  %v6915 = vmul.f32 %v6895, 0.25
  %v6916 = vmul.f32 %v6898, 0.25
  %v6917 = vmul.f32 %v6901, 0.25
  %v6918 = vmul.f32 %v6904, 0.25
  %v6919 = vmul.f32 %v6907, 0.25
  %v6920 = vpack.c.bf16 %v6867, %v6866
  %v6921 = vpack.c.bf16 %v6869, %v6868
  %v6922 = vpack.c.bf16 %v6871, %v6870
  %v6924 = vsel %vm696, %v6920, 0
  %v6927 = vsel %vm696, %v6921, 0
  %v6930 = vsel %vm696, %v6922, 0
  %6932 = vmatprep.subr.bf16.mxu0 0
  %6933 = vmatpush1.bf16.msra.mxu0 %v2885
  %6934 = vmatprep.subr.bf16.mxu0 0
  %6935 = vmatpush1.bf16.msra.mxu0 %v2886
  %6936 = vmatprep.subr.bf16.mxu0 0
  %6937 = vmatpush1.bf16.msra.mxu0 %v2887
  %6938 = vmatprep.subr.bf16.mxu0 0
  %6939 = vmatpush1.bf16.msra.mxu0 %v2888
  %6940 = vmatprep.subr.bf16.mxu0 0
  %6941 = vmatpush1.bf16.msra.mxu0 0
  %6942 = vmatprep.subr.bf16.mxu0 0
  %6943 = vmatpush1.bf16.msra.mxu0 0
  %6944 = vmatprep.subr.bf16.mxu0 0
  %6945 = vmatpush1.bf16.msra.mxu0 0
  %6946 = vmatprep.subr.bf16.mxu0 0
  %6947 = vmatpush1.bf16.msra.mxu0 0
  %6948 = vmatprep.subr.bf16.mxu0 0
  %6949 = vmatpush1.bf16.msra.mxu0 0
  %6950 = vmatprep.subr.bf16.mxu0 0
  %6951 = vmatpush1.bf16.msra.mxu0 0
  %6952 = vmatprep.subr.bf16.mxu0 0
  %6953 = vmatpush1.bf16.msra.mxu0 0
  %6954 = vmatprep.subr.bf16.mxu0 0
  %6955 = vmatpush1.bf16.msra.mxu0 0
  %6956 = vmatprep.subr.bf16.mxu0 0
  %6957 = vmatpush1.bf16.msra.mxu0 0
  %6958 = vmatprep.subr.bf16.mxu0 0
  %6959 = vmatpush1.bf16.msra.mxu0 0
  %6960 = vmatprep.subr.bf16.mxu0 0
  %6961 = vmatpush1.bf16.msra.mxu0 0
  %6962 = vmatprep.subr.bf16.mxu0 0
  %6963 = vmatpush1.bf16.msra.mxu0 0
  %6964 = vmatprep.mubr.bf16.mxu0 0
  %6965 = vmatmul.mubr.bf16.gmra.mrb[0].mxu0 %v6924
  %v6966 = vpop.f32.mrb[0].mxu0
  %v6967 = vadd.f32 0.0, %v6966
  %v6968 = vpop.f32.mrb[0].mxu0
  %v6969 = vpop.f32.mrb[0].mxu0
  %v6970 = vadd.f32 0.0, %v6969
  %v6971 = vpop.f32.mrb[0].mxu0
  %6972 = vmatprep.mubr.bf16.mxu0 0
  %6973 = vmatmul.mubr.bf16.gmra.mrb[0].mxu0 %v6927
  %v6974 = vpop.f32.mrb[0].mxu0
  %v6975 = vadd.f32 0.0, %v6974
  %v6976 = vpop.f32.mrb[0].mxu0
  %v6977 = vpop.f32.mrb[0].mxu0
  %v6978 = vadd.f32 0.0, %v6977
  %v6979 = vpop.f32.mrb[0].mxu0
  %6980 = vmatprep.mubr.bf16.mxu0 0
  %6981 = vmatmul.mubr.bf16.gmra.mrb[0].mxu0 %v6930
  %v6982 = vpop.f32.mrb[0].mxu0
  %v6983 = vadd.f32 0.0, %v6982
  %v6984 = vpop.f32.mrb[0].mxu0
  %v6985 = vpop.f32.mrb[0].mxu0
  %v6986 = vadd.f32 0.0, %v6985
  %v6987 = vpop.f32.mrb[0].mxu0
  %6988 = vdwg.mxu0
  %v6989 = vpack.c.bf16 %v6970, %v6967
  %v6990 = vpack.c.bf16 %v6978, %v6975
  %v6991 = vpack.c.bf16 %v6986, %v6983
  %6992 = vmatprep.subr.bf16.mxu0 0
  %6993 = vmatpush1.bf16.msra.mxu0 %v6989
  %6994 = vmatprep.subr.bf16.mxu0 0
  %6995 = vmatpush1.bf16.msra.mxu0 %v6990
  %6996 = vmatprep.subr.bf16.mxu0 0
  %6997 = vmatpush1.bf16.msra.mxu0 %v6991
  %6998 = vmatprep.subr.bf16.mxu0 0
  %6999 = vmatpush1.bf16.msra.mxu0 0
  %7000 = vmatprep.subr.bf16.mxu0 0
  %7001 = vmatpush1.bf16.msra.mxu0 0
  %7002 = vmatprep.subr.bf16.mxu0 0
  %7003 = vmatpush1.bf16.msra.mxu0 0
  %7004 = vmatprep.subr.bf16.mxu0 0
  %7005 = vmatpush1.bf16.msra.mxu0 0
  %7006 = vmatprep.subr.bf16.mxu0 0
  %7007 = vmatpush1.bf16.msra.mxu0 0
  %7008 = vmatprep.subr.bf16.mxu0 0
  %7009 = vmatpush1.bf16.msra.mxu0 0
  %7010 = vmatprep.subr.bf16.mxu0 0
  %7011 = vmatpush1.bf16.msra.mxu0 0
  %7012 = vmatprep.subr.bf16.mxu0 0
  %7013 = vmatpush1.bf16.msra.mxu0 0
  %7014 = vmatprep.subr.bf16.mxu0 0
  %7015 = vmatpush1.bf16.msra.mxu0 0
  %7016 = vmatprep.subr.bf16.mxu0 0
  %7017 = vmatpush1.bf16.msra.mxu0 0
  %7018 = vmatprep.subr.bf16.mxu0 0
  %7019 = vmatpush1.bf16.msra.mxu0 0
  %7020 = vmatprep.subr.bf16.mxu0 0
  %7021 = vmatpush1.bf16.msra.mxu0 0
  %7022 = vmatprep.subr.bf16.mxu0 0
  %7023 = vmatpush1.bf16.msra.mxu0 0
  %7024 = vmatprep.mubr.bf16.mxu0 0
  %7025 = vmatmul.mubr.bf16.gmra.mrb[0].mxu0 %v2959
  %v7026 = vpop.f32.mrb[0].mxu0
  %v7027 = vadd.f32 0.0, %v7026
  %v7028 = vpop.f32.mrb[0].mxu0
  %v7029 = vpop.f32.mrb[0].mxu0
  %v7030 = vadd.f32 0.0, %v7029
  %v7031 = vpop.f32.mrb[0].mxu0
  %7032 = vmatprep.mubr.bf16.mxu0 0
  %7033 = vmatmul.mubr.bf16.gmra.mrb[0].mxu0 %v2962
  %v7034 = vpop.f32.mrb[0].mxu0
  %v7035 = vadd.f32 0.0, %v7034
  %v7036 = vpop.f32.mrb[0].mxu0
  %v7037 = vpop.f32.mrb[0].mxu0
  %v7038 = vadd.f32 0.0, %v7037
  %v7039 = vpop.f32.mrb[0].mxu0
  %7040 = vmatprep.mubr.bf16.mxu0 0
  %7041 = vmatmul.mubr.bf16.gmra.mrb[0].mxu0 %v2965
  %v7042 = vpop.f32.mrb[0].mxu0
  %v7043 = vadd.f32 0.0, %v7042
  %v7044 = vpop.f32.mrb[0].mxu0
  %v7045 = vpop.f32.mrb[0].mxu0
  %v7046 = vadd.f32 0.0, %v7045
  %v7047 = vpop.f32.mrb[0].mxu0
  %7048 = vmatprep.mubr.bf16.mxu0 0
  %7049 = vmatmul.mubr.bf16.gmra.mrb[0].mxu0 %v2968
  %v7050 = vpop.f32.mrb[0].mxu0
  %v7051 = vadd.f32 0.0, %v7050
  %v7052 = vpop.f32.mrb[0].mxu0
  %v7053 = vpop.f32.mrb[0].mxu0
  %v7054 = vadd.f32 0.0, %v7053
  %v7055 = vpop.f32.mrb[0].mxu0
  %7056 = vmatprep.mubr.bf16.mxu0 0
  %7057 = vmatmul.mubr.bf16.gmra.mrb[0].mxu0 %v2971
  %v7058 = vpop.f32.mrb[0].mxu0
  %v7059 = vadd.f32 0.0, %v7058
  %v7060 = vpop.f32.mrb[0].mxu0
  %v7061 = vpop.f32.mrb[0].mxu0
  %v7062 = vadd.f32 0.0, %v7061
  %v7063 = vpop.f32.mrb[0].mxu0
  %7064 = vmatprep.mubr.bf16.mxu0 0
  %7065 = vmatmul.mubr.bf16.gmra.mrb[0].mxu0 %v2974
  %v7066 = vpop.f32.mrb[0].mxu0
  %v7067 = vadd.f32 0.0, %v7066
  %v7068 = vpop.f32.mrb[0].mxu0
  %v7069 = vpop.f32.mrb[0].mxu0
  %v7070 = vadd.f32 0.0, %v7069
  %v7071 = vpop.f32.mrb[0].mxu0
  %7072 = vdwg.mxu0
  %v7074 = vsel %vm696, %v6967, 0
  %v7077 = vsel %vm696, %v6970, 0
  %v7080 = vsel %vm696, %v6975, 0
  %v7083 = vsel %vm696, %v6978, 0
  %v7086 = vsel %vm696, %v6983, 0
  %v7089 = vsel %vm696, %v6986, 0
  %7091 = vmatprep.subr.mxu0 0.0
  %7092 = vmatpush1.msra.mxu0 %v2865
  %7093 = vmatprep.subr.mxu0 0.0
  %7094 = vmatpush1.msra.mxu0 %v2866
  %7095 = vmatprep.subr.mxu0 0.0
  %7096 = vmatpush1.msra.mxu0 %v2867
  %7097 = vmatprep.subr.mxu0 0.0
  %7098 = vmatpush1.msra.mxu0 %v2868
  %7099 = vmatprep.subr.mxu0 0.0
  %7100 = vmatpush1.msra.mxu0 %v2869
  %7101 = vmatprep.subr.mxu0 0.0
  %7102 = vmatpush1.msra.mxu0 %v2870
  %7103 = vmatprep.subr.mxu0 0.0
  %7104 = vmatpush1.msra.mxu0 %v2871
  %7105 = vmatprep.subr.mxu0 0.0
  %7106 = vmatpush1.msra.mxu0 %v2872
  %7107 = vmatprep.subr.mxu0 0.0
  %7108 = vmatpush1.msra.mxu0 0.0
  %7109 = vmatprep.subr.mxu0 0.0
  %7110 = vmatpush1.msra.mxu0 0.0
  %7111 = vmatprep.subr.mxu0 0.0
  %7112 = vmatpush1.msra.mxu0 0.0
  %7113 = vmatprep.subr.mxu0 0.0
  %7114 = vmatpush1.msra.mxu0 0.0
  %7115 = vmatprep.subr.mxu0 0.0
  %7116 = vmatpush1.msra.mxu0 0.0
  %7117 = vmatprep.subr.mxu0 0.0
  %7118 = vmatpush1.msra.mxu0 0.0
  %7119 = vmatprep.subr.mxu0 0.0
  %7120 = vmatpush1.msra.mxu0 0.0
  %7121 = vmatprep.subr.mxu0 0.0
  %7122 = vmatpush1.msra.mxu0 0.0
  %7123 = vmatprep.subr.mxu0 0.0
  %7124 = vmatpush1.msra.mxu0 0.0
  %7125 = vmatprep.subr.mxu0 0.0
  %7126 = vmatpush1.msra.mxu0 0.0
  %7127 = vmatprep.subr.mxu0 0.0
  %7128 = vmatpush1.msra.mxu0 0.0
  %7129 = vmatprep.subr.mxu0 0.0
  %7130 = vmatpush1.msra.mxu0 0.0
  %7131 = vmatprep.subr.mxu0 0.0
  %7132 = vmatpush1.msra.mxu0 0.0
  %7133 = vmatprep.subr.mxu0 0.0
  %7134 = vmatpush1.msra.mxu0 0.0
  %7135 = vmatprep.subr.mxu0 0.0
  %7136 = vmatpush1.msra.mxu0 0.0
  %7137 = vmatprep.subr.mxu0 0.0
  %7138 = vmatpush1.msra.mxu0 0.0
  %7139 = vmatprep.subr.mxu0 0.0
  %7140 = vmatpush1.msra.mxu0 0.0
  %7141 = vmatprep.subr.mxu0 0.0
  %7142 = vmatpush1.msra.mxu0 0.0
  %7143 = vmatprep.subr.mxu0 0.0
  %7144 = vmatpush1.msra.mxu0 0.0
  %7145 = vmatprep.subr.mxu0 0.0
  %7146 = vmatpush1.msra.mxu0 0.0
  %7147 = vmatprep.subr.mxu0 0.0
  %7148 = vmatpush1.msra.mxu0 0.0
  %7149 = vmatprep.subr.mxu0 0.0
  %7150 = vmatpush1.msra.mxu0 0.0
  %7151 = vmatprep.subr.mxu0 0.0
  %7152 = vmatpush1.msra.mxu0 0.0
  %7153 = vmatprep.subr.mxu0 0.0
  %7154 = vmatpush1.msra.mxu0 0.0
  %7155 = vmatprep.mubr.f32.mxu0 0.0
  %7156 = vmatmul.mubr.f32.gmra.mrb[0].mxu0 %v7074
  %v7157 = vpop.f32.mrb[0].mxu0
  %v7158 = vadd.f32 0.0, %v7157
  %v7159 = vpop.f32.mrb[0].mxu0
  %7160 = vmatprep.mubr.f32.mxu0 0.0
  %7161 = vmatmul.mubr.f32.gmra.mrb[0].mxu0 %v7077
  %v7162 = vpop.f32.mrb[0].mxu0
  %v7163 = vadd.f32 0.0, %v7162
  %v7164 = vpop.f32.mrb[0].mxu0
  %7165 = vmatprep.mubr.f32.mxu0 0.0
  %7166 = vmatmul.mubr.f32.gmra.mrb[0].mxu0 %v7080
  %v7167 = vpop.f32.mrb[0].mxu0
  %v7168 = vadd.f32 0.0, %v7167
  %v7169 = vpop.f32.mrb[0].mxu0
  %7170 = vmatprep.mubr.f32.mxu0 0.0
  %7171 = vmatmul.mubr.f32.gmra.mrb[0].mxu0 %v7083
  %v7172 = vpop.f32.mrb[0].mxu0
  %v7173 = vadd.f32 0.0, %v7172
  %v7174 = vpop.f32.mrb[0].mxu0
  %7175 = vmatprep.mubr.f32.mxu0 0.0
  %7176 = vmatmul.mubr.f32.gmra.mrb[0].mxu0 %v7086
  %v7177 = vpop.f32.mrb[0].mxu0
  %v7178 = vadd.f32 0.0, %v7177
  %v7179 = vpop.f32.mrb[0].mxu0
  %7180 = vmatprep.mubr.f32.mxu0 0.0
  %7181 = vmatmul.mubr.f32.gmra.mrb[0].mxu0 %v7089
  %v7182 = vpop.f32.mrb[0].mxu0
  %v7183 = vadd.f32 0.0, %v7182
  %v7184 = vpop.f32.mrb[0].mxu0
  %7185 = vdwg.mxu0
  %v7186 = vpack.c.bf16 %v7163, %v7158
  %v7187 = vpack.c.bf16 %v7173, %v7168
  %v7188 = vpack.c.bf16 %v7183, %v7178
  %v7190 = vsel %vm696, %v7027, 0
  %v7193 = vsel %vm696, %v7030, 0
  %v7196 = vsel %vm696, %v7035, 0
  %v7199 = vsel %vm696, %v7038, 0
  %v7202 = vsel %vm696, %v7043, 0
  %v7205 = vsel %vm696, %v7046, 0
  %v7208 = vsel %vm696, %v7051, 0
  %v7211 = vsel %vm696, %v7054, 0
  %v7214 = vsel %vm696, %v7059, 0
  %v7217 = vsel %vm696, %v7062, 0
  %v7220 = vsel %vm696, %v7067, 0
  %v7223 = vsel %vm696, %v7070, 0
  %7225 = vmatprep.subr.mxu0 0.0
  %7226 = vmatpush1.msra.mxu0 %v2873
  %7227 = vmatprep.subr.mxu0 0.0
  %7228 = vmatpush1.msra.mxu0 %v2874
  %7229 = vmatprep.subr.mxu0 0.0
  %7230 = vmatpush1.msra.mxu0 %v2875
  %7231 = vmatprep.subr.mxu0 0.0
  %7232 = vmatpush1.msra.mxu0 %v2876
  %7233 = vmatprep.subr.mxu0 0.0
  %7234 = vmatpush1.msra.mxu0 %v2877
  %7235 = vmatprep.subr.mxu0 0.0
  %7236 = vmatpush1.msra.mxu0 %v2878
  %7237 = vmatprep.subr.mxu0 0.0
  %7238 = vmatpush1.msra.mxu0 %v2879
  %7239 = vmatprep.subr.mxu0 0.0
  %7240 = vmatpush1.msra.mxu0 %v2880
  %7241 = vmatprep.subr.mxu0 0.0
  %7242 = vmatpush1.msra.mxu0 0.0
  %7243 = vmatprep.subr.mxu0 0.0
  %7244 = vmatpush1.msra.mxu0 0.0
  %7245 = vmatprep.subr.mxu0 0.0
  %7246 = vmatpush1.msra.mxu0 0.0
  %7247 = vmatprep.subr.mxu0 0.0
  %7248 = vmatpush1.msra.mxu0 0.0
  %7249 = vmatprep.subr.mxu0 0.0
  %7250 = vmatpush1.msra.mxu0 0.0
  %7251 = vmatprep.subr.mxu0 0.0
  %7252 = vmatpush1.msra.mxu0 0.0
  %7253 = vmatprep.subr.mxu0 0.0
  %7254 = vmatpush1.msra.mxu0 0.0
  %7255 = vmatprep.subr.mxu0 0.0
  %7256 = vmatpush1.msra.mxu0 0.0
  %7257 = vmatprep.subr.mxu0 0.0
  %7258 = vmatpush1.msra.mxu0 0.0
  %7259 = vmatprep.subr.mxu0 0.0
  %7260 = vmatpush1.msra.mxu0 0.0
  %7261 = vmatprep.subr.mxu0 0.0
  %7262 = vmatpush1.msra.mxu0 0.0
  %7263 = vmatprep.subr.mxu0 0.0
  %7264 = vmatpush1.msra.mxu0 0.0
  %7265 = vmatprep.subr.mxu0 0.0
  %7266 = vmatpush1.msra.mxu0 0.0
  %7267 = vmatprep.subr.mxu0 0.0
  %7268 = vmatpush1.msra.mxu0 0.0
  %7269 = vmatprep.subr.mxu0 0.0
  %7270 = vmatpush1.msra.mxu0 0.0
  %7271 = vmatprep.subr.mxu0 0.0
  %7272 = vmatpush1.msra.mxu0 0.0
  %7273 = vmatprep.subr.mxu0 0.0
  %7274 = vmatpush1.msra.mxu0 0.0
  %7275 = vmatprep.subr.mxu0 0.0
  %7276 = vmatpush1.msra.mxu0 0.0
  %7277 = vmatprep.subr.mxu0 0.0
  %7278 = vmatpush1.msra.mxu0 0.0
  %7279 = vmatprep.subr.mxu0 0.0
  %7280 = vmatpush1.msra.mxu0 0.0
  %7281 = vmatprep.subr.mxu0 0.0
  %7282 = vmatpush1.msra.mxu0 0.0
  %7283 = vmatprep.subr.mxu0 0.0
  %7284 = vmatpush1.msra.mxu0 0.0
  %7285 = vmatprep.subr.mxu0 0.0
  %7286 = vmatpush1.msra.mxu0 0.0
  %7287 = vmatprep.subr.mxu0 0.0
  %7288 = vmatpush1.msra.mxu0 0.0
  %7289 = vmatprep.mubr.f32.mxu0 0.0
  %7290 = vmatmul.mubr.f32.gmra.mrb[0].mxu0 %v7190
  %v7291 = vpop.f32.mrb[0].mxu0
  %v7292 = vadd.f32 0.0, %v7291
  %v7293 = vpop.f32.mrb[0].mxu0
  %7294 = vmatprep.mubr.f32.mxu0 0.0
  %7295 = vmatmul.mubr.f32.gmra.mrb[0].mxu0 %v7193
  %v7296 = vpop.f32.mrb[0].mxu0
  %v7297 = vadd.f32 0.0, %v7296
  %v7298 = vpop.f32.mrb[0].mxu0
  %7299 = vmatprep.mubr.f32.mxu0 0.0
  %7300 = vmatmul.mubr.f32.gmra.mrb[0].mxu0 %v7196
  %v7301 = vpop.f32.mrb[0].mxu0
  %v7302 = vadd.f32 0.0, %v7301
  %v7303 = vpop.f32.mrb[0].mxu0
  %7304 = vmatprep.mubr.f32.mxu0 0.0
  %7305 = vmatmul.mubr.f32.gmra.mrb[0].mxu0 %v7199
  %v7306 = vpop.f32.mrb[0].mxu0
  %v7307 = vadd.f32 0.0, %v7306
  %v7308 = vpop.f32.mrb[0].mxu0
  %7309 = vmatprep.mubr.f32.mxu0 0.0
  %7310 = vmatmul.mubr.f32.gmra.mrb[0].mxu0 %v7202
  %v7311 = vpop.f32.mrb[0].mxu0
  %v7312 = vadd.f32 0.0, %v7311
  %v7313 = vpop.f32.mrb[0].mxu0
  %7314 = vmatprep.mubr.f32.mxu0 0.0
  %7315 = vmatmul.mubr.f32.gmra.mrb[0].mxu0 %v7205
  %v7316 = vpop.f32.mrb[0].mxu0
  %v7317 = vadd.f32 0.0, %v7316
  %v7318 = vpop.f32.mrb[0].mxu0
  %7319 = vmatprep.mubr.f32.mxu0 0.0
  %7320 = vmatmul.mubr.f32.gmra.mrb[0].mxu0 %v7208
  %v7321 = vpop.f32.mrb[0].mxu0
  %v7322 = vadd.f32 0.0, %v7321
  %v7323 = vpop.f32.mrb[0].mxu0
  %7324 = vmatprep.mubr.f32.mxu0 0.0
  %7325 = vmatmul.mubr.f32.gmra.mrb[0].mxu0 %v7211
  %v7326 = vpop.f32.mrb[0].mxu0
  %v7327 = vadd.f32 0.0, %v7326
  %v7328 = vpop.f32.mrb[0].mxu0
  %7329 = vmatprep.mubr.f32.mxu0 0.0
  %7330 = vmatmul.mubr.f32.gmra.mrb[0].mxu0 %v7214
  %v7331 = vpop.f32.mrb[0].mxu0
  %v7332 = vadd.f32 0.0, %v7331
  %v7333 = vpop.f32.mrb[0].mxu0
  %7334 = vmatprep.mubr.f32.mxu0 0.0
  %7335 = vmatmul.mubr.f32.gmra.mrb[0].mxu0 %v7217
  %v7336 = vpop.f32.mrb[0].mxu0
  %v7337 = vadd.f32 0.0, %v7336
  %v7338 = vpop.f32.mrb[0].mxu0
  %7339 = vmatprep.mubr.f32.mxu0 0.0
  %7340 = vmatmul.mubr.f32.gmra.mrb[0].mxu0 %v7220
  %v7341 = vpop.f32.mrb[0].mxu0
  %v7342 = vadd.f32 0.0, %v7341
  %v7343 = vpop.f32.mrb[0].mxu0
  %7344 = vmatprep.mubr.f32.mxu0 0.0
  %7345 = vmatmul.mubr.f32.gmra.mrb[0].mxu0 %v7223
  %v7346 = vpop.f32.mrb[0].mxu0
  %v7347 = vadd.f32 0.0, %v7346
  %v7348 = vpop.f32.mrb[0].mxu0
  %7349 = vdwg.mxu0
  %7350 = vmatprep.subr.bf16.mxu0 0
  %7351 = vmatpush1.bf16.msra.mxu0 %v7186
  %7352 = vmatprep.subr.bf16.mxu0 0
  %7353 = vmatpush1.bf16.msra.mxu0 %v7187
  %7354 = vmatprep.subr.bf16.mxu0 0
  %7355 = vmatpush1.bf16.msra.mxu0 %v7188
  %7356 = vmatprep.subr.bf16.mxu0 0
  %7357 = vmatpush1.bf16.msra.mxu0 0
  %7358 = vmatprep.subr.bf16.mxu0 0
  %7359 = vmatpush1.bf16.msra.mxu0 0
  %7360 = vmatprep.subr.bf16.mxu0 0
  %7361 = vmatpush1.bf16.msra.mxu0 0
  %7362 = vmatprep.subr.bf16.mxu0 0
  %7363 = vmatpush1.bf16.msra.mxu0 0
  %7364 = vmatprep.subr.bf16.mxu0 0
  %7365 = vmatpush1.bf16.msra.mxu0 0
  %7366 = vmatprep.subr.bf16.mxu0 0
  %7367 = vmatpush1.bf16.msra.mxu0 0
  %7368 = vmatprep.subr.bf16.mxu0 0
  %7369 = vmatpush1.bf16.msra.mxu0 0
  %7370 = vmatprep.subr.bf16.mxu0 0
  %7371 = vmatpush1.bf16.msra.mxu0 0
  %7372 = vmatprep.subr.bf16.mxu0 0
  %7373 = vmatpush1.bf16.msra.mxu0 0
  %7374 = vmatprep.subr.bf16.mxu0 0
  %7375 = vmatpush1.bf16.msra.mxu0 0
  %7376 = vmatprep.subr.bf16.mxu0 0
  %7377 = vmatpush1.bf16.msra.mxu0 0
  %7378 = vmatprep.subr.bf16.mxu0 0
  %7379 = vmatpush1.bf16.msra.mxu0 0
  %7380 = vmatprep.subr.bf16.mxu0 0
  %7381 = vmatpush1.bf16.msra.mxu0 0
  %7382 = vmatprep.mubr.bf16.mxu0 0
  %7383 = vmatmul.mubr.bf16.gmra.mrb[0].mxu0 %v3335
  %v7384 = vpop.f32.mrb[0].mxu0
  %v7385 = vadd.f32 %v7292, %v7384
  %v7386 = vpop.f32.mrb[0].mxu0
  %v7387 = vpop.f32.mrb[0].mxu0
  %v7388 = vadd.f32 %v7297, %v7387
  %v7389 = vpop.f32.mrb[0].mxu0
  %7390 = vmatprep.mubr.bf16.mxu0 0
  %7391 = vmatmul.mubr.bf16.gmra.mrb[0].mxu0 %v3338
  %v7392 = vpop.f32.mrb[0].mxu0
  %v7393 = vadd.f32 %v7302, %v7392
  %v7394 = vpop.f32.mrb[0].mxu0
  %v7395 = vpop.f32.mrb[0].mxu0
  %v7396 = vadd.f32 %v7307, %v7395
  %v7397 = vpop.f32.mrb[0].mxu0
  %7398 = vmatprep.mubr.bf16.mxu0 0
  %7399 = vmatmul.mubr.bf16.gmra.mrb[0].mxu0 %v3341
  %v7400 = vpop.f32.mrb[0].mxu0
  %v7401 = vadd.f32 %v7312, %v7400
  %v7402 = vpop.f32.mrb[0].mxu0
  %v7403 = vpop.f32.mrb[0].mxu0
  %v7404 = vadd.f32 %v7317, %v7403
  %v7405 = vpop.f32.mrb[0].mxu0
  %7406 = vmatprep.mubr.bf16.mxu0 0
  %7407 = vmatmul.mubr.bf16.gmra.mrb[0].mxu0 %v3344
  %v7408 = vpop.f32.mrb[0].mxu0
  %v7409 = vadd.f32 %v7322, %v7408
  %v7410 = vpop.f32.mrb[0].mxu0
  %v7411 = vpop.f32.mrb[0].mxu0
  %v7412 = vadd.f32 %v7327, %v7411
  %v7413 = vpop.f32.mrb[0].mxu0
  %7414 = vmatprep.mubr.bf16.mxu0 0
  %7415 = vmatmul.mubr.bf16.gmra.mrb[0].mxu0 %v3347
  %v7416 = vpop.f32.mrb[0].mxu0
  %v7417 = vadd.f32 %v7332, %v7416
  %v7418 = vpop.f32.mrb[0].mxu0
  %v7419 = vpop.f32.mrb[0].mxu0
  %v7420 = vadd.f32 %v7337, %v7419
  %v7421 = vpop.f32.mrb[0].mxu0
  %7422 = vmatprep.mubr.bf16.mxu0 0
  %7423 = vmatmul.mubr.bf16.gmra.mrb[0].mxu0 %v3350
  %v7424 = vpop.f32.mrb[0].mxu0
  %v7425 = vadd.f32 %v7342, %v7424
  %v7426 = vpop.f32.mrb[0].mxu0
  %v7427 = vpop.f32.mrb[0].mxu0
  %v7428 = vadd.f32 %v7347, %v7427
  %v7429 = vpop.f32.mrb[0].mxu0
  %7430 = vdwg.mxu0
  %v7431 = vmul.f32 %v6908, %v3437
  %v7432 = vmul.f32 %v6909, %v3437
  %v7433 = vmul.f32 %v6910, %v3437
  %v7434 = vmul.f32 %v6911, %v3437
  %v7435 = vmul.f32 %v6912, %v3437
  %v7436 = vmul.f32 %v6913, %v3437
  %v7437 = vmul.f32 %v6914, %v3437
  %v7438 = vmul.f32 %v6915, %v3437
  %v7439 = vmul.f32 %v6916, %v3437
  %v7440 = vmul.f32 %v6917, %v3437
  %v7441 = vmul.f32 %v6918, %v3437
  %v7442 = vmul.f32 %v6919, %v3437
  %v7443 = vadd.f32 %v7385, %v7431
  %v7444 = vadd.f32 %v7388, %v7432
  %v7445 = vadd.f32 %v7393, %v7433
  %v7446 = vadd.f32 %v7396, %v7434
  %v7447 = vadd.f32 %v7401, %v7435
  %v7448 = vadd.f32 %v7404, %v7436
  %v7449 = vadd.f32 %v7409, %v7437
  %v7450 = vadd.f32 %v7412, %v7438
  %v7451 = vadd.f32 %v7417, %v7439
  %v7452 = vadd.f32 %v7420, %v7440
  %v7453 = vadd.f32 %v7425, %v7441
  %v7454 = vadd.f32 %v7428, %v7442
  %vm7455 = vcmp.gt.f32.partialorder %v7443, 0.0
  %vm7456 = vcmp.gt.f32.partialorder %v7444, 0.0
  %vm7457 = vcmp.gt.f32.partialorder %v7445, 0.0
  %vm7458 = vcmp.gt.f32.partialorder %v7446, 0.0
  %vm7459 = vcmp.gt.f32.partialorder %v7447, 0.0
  %vm7460 = vcmp.gt.f32.partialorder %v7448, 0.0
  %vm7461 = vcmp.gt.f32.partialorder %v7449, 0.0
  %vm7462 = vcmp.gt.f32.partialorder %v7450, 0.0
  %vm7463 = vcmp.gt.f32.partialorder %v7451, 0.0
  %vm7464 = vcmp.gt.f32.partialorder %v7452, 0.0
  %vm7465 = vcmp.gt.f32.partialorder %v7453, 0.0
  %vm7466 = vcmp.gt.f32.partialorder %v7454, 0.0
  %v7467 = vmul.f32 %v7443, 0.2
  %v7468 = vmul.f32 %v7444, 0.2
  %v7469 = vmul.f32 %v7445, 0.2
  %v7470 = vmul.f32 %v7446, 0.2
  %v7471 = vmul.f32 %v7447, 0.2
  %v7472 = vmul.f32 %v7448, 0.2
  %v7473 = vmul.f32 %v7449, 0.2
  %v7474 = vmul.f32 %v7450, 0.2
  %v7475 = vmul.f32 %v7451, 0.2
  %v7476 = vmul.f32 %v7452, 0.2
  %v7477 = vmul.f32 %v7453, 0.2
  %v7478 = vmul.f32 %v7454, 0.2
  %v7479 = vsel %vm7455, %v7443, %v7467
  %v7480 = vsel %vm7456, %v7444, %v7468
  %v7481 = vsel %vm7457, %v7445, %v7469
  %v7482 = vsel %vm7458, %v7446, %v7470
  %v7483 = vsel %vm7459, %v7447, %v7471
  %v7484 = vsel %vm7460, %v7448, %v7472
  %v7485 = vsel %vm7461, %v7449, %v7473
  %v7486 = vsel %vm7462, %v7450, %v7474
  %v7487 = vsel %vm7463, %v7451, %v7475
  %v7488 = vsel %vm7464, %v7452, %v7476
  %v7489 = vsel %vm7465, %v7453, %v7477
  %v7490 = vsel %vm7466, %v7454, %v7478
  %v7491 = vsub.f32 0.0, %v7479
  %v7492 = vsub.f32 0.0, %v7480
  %v7493 = vsub.f32 0.0, %v7481
  %v7494 = vsub.f32 0.0, %v7482
  %v7495 = vsub.f32 0.0, %v7483
  %v7496 = vsub.f32 0.0, %v7484
  %v7497 = vsub.f32 0.0, %v7485
  %v7498 = vsub.f32 0.0, %v7486
  %v7499 = vsub.f32 0.0, %v7487
  %v7500 = vsub.f32 0.0, %v7488
  %v7501 = vsub.f32 0.0, %v7489
  %v7502 = vsub.f32 0.0, %v7490
  %v7503 = vmin.f32 %v7491, 60.0
  %v7504 = vmin.f32 %v7492, 60.0
  %v7505 = vmin.f32 %v7493, 60.0
  %v7506 = vmin.f32 %v7494, 60.0
  %v7507 = vmin.f32 %v7495, 60.0
  %v7508 = vmin.f32 %v7496, 60.0
  %v7509 = vmin.f32 %v7497, 60.0
  %v7510 = vmin.f32 %v7498, 60.0
  %v7511 = vmin.f32 %v7499, 60.0
  %v7512 = vmin.f32 %v7500, 60.0
  %v7513 = vmin.f32 %v7501, 60.0
  %v7514 = vmin.f32 %v7502, 60.0
  %v7515 = vmul.f32 %v7503, 1.442695
  %v7516 = vpow.pop %v7515
  %v7517 = vmul.f32 %v7504, 1.442695
  %v7518 = vpow.pop %v7517
  %v7519 = vmul.f32 %v7505, 1.442695
  %v7520 = vpow.pop %v7519
  %v7521 = vmul.f32 %v7506, 1.442695
  %v7522 = vpow.pop %v7521
  %v7523 = vmul.f32 %v7507, 1.442695
  %v7524 = vpow.pop %v7523
  %v7525 = vmul.f32 %v7508, 1.442695
  %v7526 = vpow.pop %v7525
  %v7527 = vmul.f32 %v7509, 1.442695
  %v7528 = vpow.pop %v7527
  %v7529 = vmul.f32 %v7510, 1.442695
  %v7530 = vpow.pop %v7529
  %v7531 = vmul.f32 %v7511, 1.442695
  %v7532 = vpow.pop %v7531
  %v7533 = vmul.f32 %v7512, 1.442695
  %v7534 = vpow.pop %v7533
  %v7535 = vmul.f32 %v7513, 1.442695
  %v7536 = vpow.pop %v7535
  %v7537 = vmul.f32 %v7514, 1.442695
  %v7538 = vpow.pop %v7537
  %v7540 = vsel %vm1416, %v7516, 0
  %v7543 = vsel %vm1416, %v7518, 0
  %v7546 = vsel %vm1416, %v7520, 0
  %v7549 = vsel %vm1416, %v7522, 0
  %v7552 = vsel %vm1416, %v7524, 0
  %v7555 = vsel %vm1416, %v7526, 0
  %v7558 = vsel %vm1416, %v7528, 0
  %v7561 = vsel %vm1416, %v7530, 0
  %v7564 = vsel %vm1416, %v7532, 0
  %v7567 = vsel %vm1416, %v7534, 0
  %v7570 = vsel %vm1416, %v7536, 0
  %v7573 = vsel %vm1416, %v7538, 0
  %7575 = vmatprep.subr.mxu0 0.0
  %7576 = vmatpush1.msra.mxu0 %v1455
  %7577 = vmatprep.subr.mxu0 0.0
  %7578 = vmatpush1.msra.mxu0 0.0
  %7579 = vmatprep.subr.mxu0 0.0
  %7580 = vmatpush1.msra.mxu0 0.0
  %7581 = vmatprep.subr.mxu0 0.0
  %7582 = vmatpush1.msra.mxu0 0.0
  %7583 = vmatprep.subr.mxu0 0.0
  %7584 = vmatpush1.msra.mxu0 0.0
  %7585 = vmatprep.subr.mxu0 0.0
  %7586 = vmatpush1.msra.mxu0 0.0
  %7587 = vmatprep.subr.mxu0 0.0
  %7588 = vmatpush1.msra.mxu0 0.0
  %7589 = vmatprep.subr.mxu0 0.0
  %7590 = vmatpush1.msra.mxu0 0.0
  %7591 = vmatprep.subr.mxu0 0.0
  %7592 = vmatpush1.msra.mxu0 0.0
  %7593 = vmatprep.subr.mxu0 0.0
  %7594 = vmatpush1.msra.mxu0 0.0
  %7595 = vmatprep.subr.mxu0 0.0
  %7596 = vmatpush1.msra.mxu0 0.0
  %7597 = vmatprep.subr.mxu0 0.0
  %7598 = vmatpush1.msra.mxu0 0.0
  %7599 = vmatprep.subr.mxu0 0.0
  %7600 = vmatpush1.msra.mxu0 0.0
  %7601 = vmatprep.subr.mxu0 0.0
  %7602 = vmatpush1.msra.mxu0 0.0
  %7603 = vmatprep.subr.mxu0 0.0
  %7604 = vmatpush1.msra.mxu0 0.0
  %7605 = vmatprep.subr.mxu0 0.0
  %7606 = vmatpush1.msra.mxu0 0.0
  %7607 = vmatprep.subr.mxu0 0.0
  %7608 = vmatpush1.msra.mxu0 0.0
  %7609 = vmatprep.subr.mxu0 0.0
  %7610 = vmatpush1.msra.mxu0 0.0
  %7611 = vmatprep.subr.mxu0 0.0
  %7612 = vmatpush1.msra.mxu0 0.0
  %7613 = vmatprep.subr.mxu0 0.0
  %7614 = vmatpush1.msra.mxu0 0.0
  %7615 = vmatprep.subr.mxu0 0.0
  %7616 = vmatpush1.msra.mxu0 0.0
  %7617 = vmatprep.subr.mxu0 0.0
  %7618 = vmatpush1.msra.mxu0 0.0
  %7619 = vmatprep.subr.mxu0 0.0
  %7620 = vmatpush1.msra.mxu0 0.0
  %7621 = vmatprep.subr.mxu0 0.0
  %7622 = vmatpush1.msra.mxu0 0.0
  %7623 = vmatprep.subr.mxu0 0.0
  %7624 = vmatpush1.msra.mxu0 0.0
  %7625 = vmatprep.subr.mxu0 0.0
  %7626 = vmatpush1.msra.mxu0 0.0
  %7627 = vmatprep.subr.mxu0 0.0
  %7628 = vmatpush1.msra.mxu0 0.0
  %7629 = vmatprep.subr.mxu0 0.0
  %7630 = vmatpush1.msra.mxu0 0.0
  %7631 = vmatprep.subr.mxu0 0.0
  %7632 = vmatpush1.msra.mxu0 0.0
  %7633 = vmatprep.subr.mxu0 0.0
  %7634 = vmatpush1.msra.mxu0 0.0
  %7635 = vmatprep.subr.mxu0 0.0
  %7636 = vmatpush1.msra.mxu0 0.0
  %7637 = vmatprep.subr.mxu0 0.0
  %7638 = vmatpush1.msra.mxu0 0.0
  %7639 = vmatprep.mubr.f32.mxu0 0.0
  %7640 = vmatmul.mubr.f32.gmra.mrb[0].mxu0 %v7540
  %v7641 = vpop.f32.mrb[0].mxu0
  %v7642 = vadd.f32 0.0, %v7641
  %v7643 = vpop.f32.mrb[0].mxu0
  %7644 = vmatprep.mubr.f32.mxu0 0.0
  %7645 = vmatmul.mubr.f32.gmra.mrb[0].mxu0 %v7543
  %v7646 = vpop.f32.mrb[0].mxu0
  %v7647 = vadd.f32 0.0, %v7646
  %v7648 = vpop.f32.mrb[0].mxu0
  %7649 = vmatprep.mubr.f32.mxu0 0.0
  %7650 = vmatmul.mubr.f32.gmra.mrb[0].mxu0 %v7546
  %v7651 = vpop.f32.mrb[0].mxu0
  %v7652 = vadd.f32 0.0, %v7651
  %v7653 = vpop.f32.mrb[0].mxu0
  %7654 = vmatprep.mubr.f32.mxu0 0.0
  %7655 = vmatmul.mubr.f32.gmra.mrb[0].mxu0 %v7549
  %v7656 = vpop.f32.mrb[0].mxu0
  %v7657 = vadd.f32 0.0, %v7656
  %v7658 = vpop.f32.mrb[0].mxu0
  %7659 = vmatprep.mubr.f32.mxu0 0.0
  %7660 = vmatmul.mubr.f32.gmra.mrb[0].mxu0 %v7552
  %v7661 = vpop.f32.mrb[0].mxu0
  %v7662 = vadd.f32 0.0, %v7661
  %v7663 = vpop.f32.mrb[0].mxu0
  %7664 = vmatprep.mubr.f32.mxu0 0.0
  %7665 = vmatmul.mubr.f32.gmra.mrb[0].mxu0 %v7555
  %v7666 = vpop.f32.mrb[0].mxu0
  %v7667 = vadd.f32 0.0, %v7666
  %v7668 = vpop.f32.mrb[0].mxu0
  %7669 = vmatprep.mubr.f32.mxu0 0.0
  %7670 = vmatmul.mubr.f32.gmra.mrb[0].mxu0 %v7558
  %v7671 = vpop.f32.mrb[0].mxu0
  %v7672 = vadd.f32 0.0, %v7671
  %v7673 = vpop.f32.mrb[0].mxu0
  %7674 = vmatprep.mubr.f32.mxu0 0.0
  %7675 = vmatmul.mubr.f32.gmra.mrb[0].mxu0 %v7561
  %v7676 = vpop.f32.mrb[0].mxu0
  %v7677 = vadd.f32 0.0, %v7676
  %v7678 = vpop.f32.mrb[0].mxu0
  %7679 = vmatprep.mubr.f32.mxu0 0.0
  %7680 = vmatmul.mubr.f32.gmra.mrb[0].mxu0 %v7564
  %v7681 = vpop.f32.mrb[0].mxu0
  %v7682 = vadd.f32 0.0, %v7681
  %v7683 = vpop.f32.mrb[0].mxu0
  %7684 = vmatprep.mubr.f32.mxu0 0.0
  %7685 = vmatmul.mubr.f32.gmra.mrb[0].mxu0 %v7567
  %v7686 = vpop.f32.mrb[0].mxu0
  %v7687 = vadd.f32 0.0, %v7686
  %v7688 = vpop.f32.mrb[0].mxu0
  %7689 = vmatprep.mubr.f32.mxu0 0.0
  %7690 = vmatmul.mubr.f32.gmra.mrb[0].mxu0 %v7570
  %v7691 = vpop.f32.mrb[0].mxu0
  %v7692 = vadd.f32 0.0, %v7691
  %v7693 = vpop.f32.mrb[0].mxu0
  %7694 = vmatprep.mubr.f32.mxu0 0.0
  %7695 = vmatmul.mubr.f32.gmra.mrb[0].mxu0 %v7573
  %v7696 = vpop.f32.mrb[0].mxu0
  %v7697 = vadd.f32 0.0, %v7696
  %v7698 = vpop.f32.mrb[0].mxu0
  %7699 = vdwg.mxu0
  %v7700 = vmul.f32 %v7642, %v7027
  %v7701 = vmul.f32 %v7647, %v7030
  %v7702 = vmul.f32 %v7652, %v7035
  %v7703 = vmul.f32 %v7657, %v7038
  %v7704 = vmul.f32 %v7662, %v7043
  %v7705 = vmul.f32 %v7667, %v7046
  %v7706 = vmul.f32 %v7672, %v7051
  %v7707 = vmul.f32 %v7677, %v7054
  %v7708 = vmul.f32 %v7682, %v7059
  %v7709 = vmul.f32 %v7687, %v7062
  %v7710 = vmul.f32 %v7692, %v7067
  %v7711 = vmul.f32 %v7697, %v7070
  %v7712 = vpack.c.bf16 %v7701, %v7700
  %v7713 = vpack.c.bf16 %v7703, %v7702
  %v7714 = vpack.c.bf16 %v7705, %v7704
  %v7715 = vpack.c.bf16 %v7707, %v7706
  %v7716 = vpack.c.bf16 %v7709, %v7708
  %v7717 = vpack.c.bf16 %v7711, %v7710
  %7718 = vmatprep.subr.bf16.mxu0 0
  %7719 = vmatpush1.bf16.msra.mxu0 %v7712
  %7720 = vmatprep.subr.bf16.mxu0 0
  %7721 = vmatpush1.bf16.msra.mxu0 %v7713
  %7722 = vmatprep.subr.bf16.mxu0 0
  %7723 = vmatpush1.bf16.msra.mxu0 %v7714
  %7724 = vmatprep.subr.bf16.mxu0 0
  %7725 = vmatpush1.bf16.msra.mxu0 %v7715
  %7726 = vmatprep.subr.bf16.mxu0 0
  %7727 = vmatpush1.bf16.msra.mxu0 %v7716
  %7728 = vmatprep.subr.bf16.mxu0 0
  %7729 = vmatpush1.bf16.msra.mxu0 %v7717
  %7730 = vmatprep.subr.bf16.mxu0 0
  %7731 = vmatpush1.bf16.msra.mxu0 0
  %7732 = vmatprep.subr.bf16.mxu0 0
  %7733 = vmatpush1.bf16.msra.mxu0 0
  %7734 = vmatprep.subr.bf16.mxu0 0
  %7735 = vmatpush1.bf16.msra.mxu0 0
  %7736 = vmatprep.subr.bf16.mxu0 0
  %7737 = vmatpush1.bf16.msra.mxu0 0
  %7738 = vmatprep.subr.bf16.mxu0 0
  %7739 = vmatpush1.bf16.msra.mxu0 0
  %7740 = vmatprep.subr.bf16.mxu0 0
  %7741 = vmatpush1.bf16.msra.mxu0 0
  %7742 = vmatprep.subr.bf16.mxu0 0
  %7743 = vmatpush1.bf16.msra.mxu0 0
  %7744 = vmatprep.subr.bf16.mxu0 0
  %7745 = vmatpush1.bf16.msra.mxu0 0
  %7746 = vmatprep.subr.bf16.mxu0 0
  %7747 = vmatpush1.bf16.msra.mxu0 0
  %7748 = vmatprep.subr.bf16.mxu0 0
  %7749 = vmatpush1.bf16.msra.mxu0 0
  %7750 = vmatprep.mubr.bf16.mxu0 0
  %7751 = vmatmul.mubr.bf16.gmra.mrb[0].mxu0 %v3727
  %v7752 = vpop.f32.mrb[0].mxu0
  %v7753 = vadd.f32 0.0, %v7752
  %v7754 = vpop.f32.mrb[0].mxu0
  %v7755 = vpop.f32.mrb[0].mxu0
  %v7756 = vadd.f32 0.0, %v7755
  %v7757 = vpop.f32.mrb[0].mxu0
  %7758 = vmatprep.mubr.bf16.mxu0 0
  %7759 = vmatmul.mubr.bf16.gmra.mrb[0].mxu0 %v3730
  %v7760 = vpop.f32.mrb[0].mxu0
  %v7761 = vadd.f32 0.0, %v7760
  %v7762 = vpop.f32.mrb[0].mxu0
  %v7763 = vpop.f32.mrb[0].mxu0
  %v7764 = vadd.f32 0.0, %v7763
  %v7765 = vpop.f32.mrb[0].mxu0
  %7766 = vmatprep.mubr.bf16.mxu0 0
  %7767 = vmatmul.mubr.bf16.gmra.mrb[0].mxu0 %v3733
  %v7768 = vpop.f32.mrb[0].mxu0
  %v7769 = vadd.f32 0.0, %v7768
  %v7770 = vpop.f32.mrb[0].mxu0
  %v7771 = vpop.f32.mrb[0].mxu0
  %v7772 = vadd.f32 0.0, %v7771
  %v7773 = vpop.f32.mrb[0].mxu0
  %7774 = vdwg.mxu0
  %v7775 = vpack.c.bf16 %v7518, %v7516
  %v7776 = vpack.c.bf16 %v7522, %v7520
  %v7777 = vpack.c.bf16 %v7526, %v7524
  %v7778 = vpack.c.bf16 %v7530, %v7528
  %v7779 = vpack.c.bf16 %v7534, %v7532
  %v7780 = vpack.c.bf16 %v7538, %v7536
  %7781 = vmatprep.subr.bf16.mxu0 0
  %7782 = vmatpush1.bf16.msra.mxu0 %v7775
  %7783 = vmatprep.subr.bf16.mxu0 0
  %7784 = vmatpush1.bf16.msra.mxu0 %v7776
  %7785 = vmatprep.subr.bf16.mxu0 0
  %7786 = vmatpush1.bf16.msra.mxu0 %v7777
  %7787 = vmatprep.subr.bf16.mxu0 0
  %7788 = vmatpush1.bf16.msra.mxu0 %v7778
  %7789 = vmatprep.subr.bf16.mxu0 0
  %7790 = vmatpush1.bf16.msra.mxu0 %v7779
  %7791 = vmatprep.subr.bf16.mxu0 0
  %7792 = vmatpush1.bf16.msra.mxu0 %v7780
  %7793 = vmatprep.subr.bf16.mxu0 0
  %7794 = vmatpush1.bf16.msra.mxu0 0
  %7795 = vmatprep.subr.bf16.mxu0 0
  %7796 = vmatpush1.bf16.msra.mxu0 0
  %7797 = vmatprep.subr.bf16.mxu0 0
  %7798 = vmatpush1.bf16.msra.mxu0 0
  %7799 = vmatprep.subr.bf16.mxu0 0
  %7800 = vmatpush1.bf16.msra.mxu0 0
  %7801 = vmatprep.subr.bf16.mxu0 0
  %7802 = vmatpush1.bf16.msra.mxu0 0
  %7803 = vmatprep.subr.bf16.mxu0 0
  %7804 = vmatpush1.bf16.msra.mxu0 0
  %7805 = vmatprep.subr.bf16.mxu0 0
  %7806 = vmatpush1.bf16.msra.mxu0 0
  %7807 = vmatprep.subr.bf16.mxu0 0
  %7808 = vmatpush1.bf16.msra.mxu0 0
  %7809 = vmatprep.subr.bf16.mxu0 0
  %7810 = vmatpush1.bf16.msra.mxu0 0
  %7811 = vmatprep.subr.bf16.mxu0 0
  %7812 = vmatpush1.bf16.msra.mxu0 0
  %7813 = vmatprep.mubr.bf16.mxu0 0
  %7814 = vmatmul.mubr.bf16.gmra.mrb[0].mxu0 %v3727
  %v7815 = vpop.f32.mrb[0].mxu0
  %v7816 = vadd.f32 0.0, %v7815
  %v7817 = vpop.f32.mrb[0].mxu0
  %v7818 = vpop.f32.mrb[0].mxu0
  %v7819 = vadd.f32 0.0, %v7818
  %v7820 = vpop.f32.mrb[0].mxu0
  %7821 = vmatprep.mubr.bf16.mxu0 0
  %7822 = vmatmul.mubr.bf16.gmra.mrb[0].mxu0 %v3730
  %v7823 = vpop.f32.mrb[0].mxu0
  %v7824 = vadd.f32 0.0, %v7823
  %v7825 = vpop.f32.mrb[0].mxu0
  %v7826 = vpop.f32.mrb[0].mxu0
  %v7827 = vadd.f32 0.0, %v7826
  %v7828 = vpop.f32.mrb[0].mxu0
  %7829 = vmatprep.mubr.bf16.mxu0 0
  %7830 = vmatmul.mubr.bf16.gmra.mrb[0].mxu0 %v3733
  %v7831 = vpop.f32.mrb[0].mxu0
  %v7832 = vadd.f32 0.0, %v7831
  %v7833 = vpop.f32.mrb[0].mxu0
  %v7834 = vpop.f32.mrb[0].mxu0
  %v7835 = vadd.f32 0.0, %v7834
  %v7836 = vpop.f32.mrb[0].mxu0
  %7837 = vdwg.mxu0
  %vm7838 = vcmp.eq.f32.partialorder %v7816, 0.0
  %vm7839 = vcmp.eq.f32.partialorder %v7819, 0.0
  %vm7840 = vcmp.eq.f32.partialorder %v7824, 0.0
  %vm7841 = vcmp.eq.f32.partialorder %v7827, 0.0
  %vm7842 = vcmp.eq.f32.partialorder %v7832, 0.0
  %vm7843 = vcmp.eq.f32.partialorder %v7835, 0.0
  %v7844 = vsel %vm7838, 1.0, %v7816
  %v7845 = vsel %vm7839, 1.0, %v7819
  %v7846 = vsel %vm7840, 1.0, %v7824
  %v7847 = vsel %vm7841, 1.0, %v7827
  %v7848 = vsel %vm7842, 1.0, %v7832
  %v7849 = vsel %vm7843, 1.0, %v7835
  %v7850 = vrcp.pop %v7844
  %v7851 = vrcp.pop %v7845
  %v7852 = vrcp.pop %v7846
  %v7853 = vrcp.pop %v7847
  %v7854 = vrcp.pop %v7848
  %v7855 = vrcp.pop %v7849
  %v7857 = vsel %vm1416, %v7850, 0
  %v7860 = vsel %vm1416, %v7851, 0
  %v7863 = vsel %vm1416, %v7852, 0
  %v7866 = vsel %vm1416, %v7853, 0
  %v7869 = vsel %vm1416, %v7854, 0
  %v7872 = vsel %vm1416, %v7855, 0
  %7874 = vmatprep.subr.mxu0 0.0
  %7875 = vmatpush1.msra.mxu0 %v1455
  %7876 = vmatprep.subr.mxu0 0.0
  %7877 = vmatpush1.msra.mxu0 0.0
  %7878 = vmatprep.subr.mxu0 0.0
  %7879 = vmatpush1.msra.mxu0 0.0
  %7880 = vmatprep.subr.mxu0 0.0
  %7881 = vmatpush1.msra.mxu0 0.0
  %7882 = vmatprep.subr.mxu0 0.0
  %7883 = vmatpush1.msra.mxu0 0.0
  %7884 = vmatprep.subr.mxu0 0.0
  %7885 = vmatpush1.msra.mxu0 0.0
  %7886 = vmatprep.subr.mxu0 0.0
  %7887 = vmatpush1.msra.mxu0 0.0
  %7888 = vmatprep.subr.mxu0 0.0
  %7889 = vmatpush1.msra.mxu0 0.0
  %7890 = vmatprep.subr.mxu0 0.0
  %7891 = vmatpush1.msra.mxu0 0.0
  %7892 = vmatprep.subr.mxu0 0.0
  %7893 = vmatpush1.msra.mxu0 0.0
  %7894 = vmatprep.subr.mxu0 0.0
  %7895 = vmatpush1.msra.mxu0 0.0
  %7896 = vmatprep.subr.mxu0 0.0
  %7897 = vmatpush1.msra.mxu0 0.0
  %7898 = vmatprep.subr.mxu0 0.0
  %7899 = vmatpush1.msra.mxu0 0.0
  %7900 = vmatprep.subr.mxu0 0.0
  %7901 = vmatpush1.msra.mxu0 0.0
  %7902 = vmatprep.subr.mxu0 0.0
  %7903 = vmatpush1.msra.mxu0 0.0
  %7904 = vmatprep.subr.mxu0 0.0
  %7905 = vmatpush1.msra.mxu0 0.0
  %7906 = vmatprep.subr.mxu0 0.0
  %7907 = vmatpush1.msra.mxu0 0.0
  %7908 = vmatprep.subr.mxu0 0.0
  %7909 = vmatpush1.msra.mxu0 0.0
  %7910 = vmatprep.subr.mxu0 0.0
  %7911 = vmatpush1.msra.mxu0 0.0
  %7912 = vmatprep.subr.mxu0 0.0
  %7913 = vmatpush1.msra.mxu0 0.0
  %7914 = vmatprep.subr.mxu0 0.0
  %7915 = vmatpush1.msra.mxu0 0.0
  %7916 = vmatprep.subr.mxu0 0.0
  %7917 = vmatpush1.msra.mxu0 0.0
  %7918 = vmatprep.subr.mxu0 0.0
  %7919 = vmatpush1.msra.mxu0 0.0
  %7920 = vmatprep.subr.mxu0 0.0
  %7921 = vmatpush1.msra.mxu0 0.0
  %7922 = vmatprep.subr.mxu0 0.0
  %7923 = vmatpush1.msra.mxu0 0.0
  %7924 = vmatprep.subr.mxu0 0.0
  %7925 = vmatpush1.msra.mxu0 0.0
  %7926 = vmatprep.subr.mxu0 0.0
  %7927 = vmatpush1.msra.mxu0 0.0
  %7928 = vmatprep.subr.mxu0 0.0
  %7929 = vmatpush1.msra.mxu0 0.0
  %7930 = vmatprep.subr.mxu0 0.0
  %7931 = vmatpush1.msra.mxu0 0.0
  %7932 = vmatprep.subr.mxu0 0.0
  %7933 = vmatpush1.msra.mxu0 0.0
  %7934 = vmatprep.subr.mxu0 0.0
  %7935 = vmatpush1.msra.mxu0 0.0
  %7936 = vmatprep.subr.mxu0 0.0
  %7937 = vmatpush1.msra.mxu0 0.0
  %7938 = vmatprep.mubr.f32.mxu0 0.0
  %7939 = vmatmul.mubr.f32.gmra.mrb[0].mxu0 %v7857
  %v7940 = vpop.f32.mrb[0].mxu0
  %v7941 = vadd.f32 0.0, %v7940
  %v7942 = vpop.f32.mrb[0].mxu0
  %7943 = vmatprep.mubr.f32.mxu0 0.0
  %7944 = vmatmul.mubr.f32.gmra.mrb[0].mxu0 %v7860
  %v7945 = vpop.f32.mrb[0].mxu0
  %v7946 = vadd.f32 0.0, %v7945
  %v7947 = vpop.f32.mrb[0].mxu0
  %7948 = vmatprep.mubr.f32.mxu0 0.0
  %7949 = vmatmul.mubr.f32.gmra.mrb[0].mxu0 %v7863
  %v7950 = vpop.f32.mrb[0].mxu0
  %v7951 = vadd.f32 0.0, %v7950
  %v7952 = vpop.f32.mrb[0].mxu0
  %7953 = vmatprep.mubr.f32.mxu0 0.0
  %7954 = vmatmul.mubr.f32.gmra.mrb[0].mxu0 %v7866
  %v7955 = vpop.f32.mrb[0].mxu0
  %v7956 = vadd.f32 0.0, %v7955
  %v7957 = vpop.f32.mrb[0].mxu0
  %7958 = vmatprep.mubr.f32.mxu0 0.0
  %7959 = vmatmul.mubr.f32.gmra.mrb[0].mxu0 %v7869
  %v7960 = vpop.f32.mrb[0].mxu0
  %v7961 = vadd.f32 0.0, %v7960
  %v7962 = vpop.f32.mrb[0].mxu0
  %7963 = vmatprep.mubr.f32.mxu0 0.0
  %7964 = vmatmul.mubr.f32.gmra.mrb[0].mxu0 %v7872
  %v7965 = vpop.f32.mrb[0].mxu0
  %v7966 = vadd.f32 0.0, %v7965
  %v7967 = vpop.f32.mrb[0].mxu0
  %7968 = vdwg.mxu0
  %v7969 = vmul.f32 %v7753, %v7941
  %v7970 = vmul.f32 %v7756, %v7946
  %v7971 = vmul.f32 %v7761, %v7951
  %v7972 = vmul.f32 %v7764, %v7956
  %v7973 = vmul.f32 %v7769, %v7961
  %v7974 = vmul.f32 %v7772, %v7966
  %vm7975 = vcmp.gt.f32.partialorder %v7969, 0.0
  %vm7976 = vcmp.gt.f32.partialorder %v7970, 0.0
  %vm7977 = vcmp.gt.f32.partialorder %v7971, 0.0
  %vm7978 = vcmp.gt.f32.partialorder %v7972, 0.0
  %vm7979 = vcmp.gt.f32.partialorder %v7973, 0.0
  %vm7980 = vcmp.gt.f32.partialorder %v7974, 0.0
  %v7981 = vmin.f32 %v7969, 0.0
  %v7982 = vmin.f32 %v7970, 0.0
  %v7983 = vmin.f32 %v7971, 0.0
  %v7984 = vmin.f32 %v7972, 0.0
  %v7985 = vmin.f32 %v7973, 0.0
  %v7986 = vmin.f32 %v7974, 0.0
  %v7987 = vmul.f32 %v7981, 1.442695
  %v7988 = vpow.pop %v7987
  %v7989 = vmul.f32 %v7982, 1.442695
  %v7990 = vpow.pop %v7989
  %v7991 = vmul.f32 %v7983, 1.442695
  %v7992 = vpow.pop %v7991
  %v7993 = vmul.f32 %v7984, 1.442695
  %v7994 = vpow.pop %v7993
  %v7995 = vmul.f32 %v7985, 1.442695
  %v7996 = vpow.pop %v7995
  %v7997 = vmul.f32 %v7986, 1.442695
  %v7998 = vpow.pop %v7997
  %v7999 = vsub.f32 %v7988, 1.0
  %v8000 = vsub.f32 %v7990, 1.0
  %v8001 = vsub.f32 %v7992, 1.0
  %v8002 = vsub.f32 %v7994, 1.0
  %v8003 = vsub.f32 %v7996, 1.0
  %v8004 = vsub.f32 %v7998, 1.0
  %v8005 = vsel %vm7975, %v7969, %v7999
  %v8006 = vsel %vm7976, %v7970, %v8000
  %v8007 = vsel %vm7977, %v7971, %v8001
  %v8008 = vsel %vm7978, %v7972, %v8002
  %v8009 = vsel %vm7979, %v7973, %v8003
  %v8010 = vsel %vm7980, %v7974, %v8004
  %v8011 = vpack.c.bf16 %v8006, %v8005
  %v8012 = vpack.c.bf16 %v8008, %v8007
  %v8013 = vpack.c.bf16 %v8010, %v8009
  %v8015 = vsel %vm696, %v8011, 0
  %v8018 = vsel %vm696, %v8012, 0
  %v8021 = vsel %vm696, %v8013, 0
  %8023 = vmatprep.subr.bf16.mxu0 0
  %8024 = vmatpush1.bf16.msra.mxu0 %v4056
  %8025 = vmatprep.subr.bf16.mxu0 0
  %8026 = vmatpush1.bf16.msra.mxu0 %v4057
  %8027 = vmatprep.subr.bf16.mxu0 0
  %8028 = vmatpush1.bf16.msra.mxu0 %v4058
  %8029 = vmatprep.subr.bf16.mxu0 0
  %8030 = vmatpush1.bf16.msra.mxu0 %v4059
  %8031 = vmatprep.subr.bf16.mxu0 0
  %8032 = vmatpush1.bf16.msra.mxu0 0
  %8033 = vmatprep.subr.bf16.mxu0 0
  %8034 = vmatpush1.bf16.msra.mxu0 0
  %8035 = vmatprep.subr.bf16.mxu0 0
  %8036 = vmatpush1.bf16.msra.mxu0 0
  %8037 = vmatprep.subr.bf16.mxu0 0
  %8038 = vmatpush1.bf16.msra.mxu0 0
  %8039 = vmatprep.subr.bf16.mxu0 0
  %8040 = vmatpush1.bf16.msra.mxu0 0
  %8041 = vmatprep.subr.bf16.mxu0 0
  %8042 = vmatpush1.bf16.msra.mxu0 0
  %8043 = vmatprep.subr.bf16.mxu0 0
  %8044 = vmatpush1.bf16.msra.mxu0 0
  %8045 = vmatprep.subr.bf16.mxu0 0
  %8046 = vmatpush1.bf16.msra.mxu0 0
  %8047 = vmatprep.subr.bf16.mxu0 0
  %8048 = vmatpush1.bf16.msra.mxu0 0
  %8049 = vmatprep.subr.bf16.mxu0 0
  %8050 = vmatpush1.bf16.msra.mxu0 0
  %8051 = vmatprep.subr.bf16.mxu0 0
  %8052 = vmatpush1.bf16.msra.mxu0 0
  %8053 = vmatprep.subr.bf16.mxu0 0
  %8054 = vmatpush1.bf16.msra.mxu0 0
  %8055 = vmatprep.mubr.bf16.mxu0 0
  %8056 = vmatmul.mubr.bf16.gmra.mrb[0].mxu0 %v8015
  %v8057 = vpop.f32.mrb[0].mxu0
  %v8058 = vadd.f32 0.0, %v8057
  %v8059 = vpop.f32.mrb[0].mxu0
  %v8060 = vpop.f32.mrb[0].mxu0
  %v8061 = vadd.f32 0.0, %v8060
  %v8062 = vpop.f32.mrb[0].mxu0
  %8063 = vmatprep.mubr.bf16.mxu0 0
  %8064 = vmatmul.mubr.bf16.gmra.mrb[0].mxu0 %v8018
  %v8065 = vpop.f32.mrb[0].mxu0
  %v8066 = vadd.f32 0.0, %v8065
  %v8067 = vpop.f32.mrb[0].mxu0
  %v8068 = vpop.f32.mrb[0].mxu0
  %v8069 = vadd.f32 0.0, %v8068
  %v8070 = vpop.f32.mrb[0].mxu0
  %8071 = vmatprep.mubr.bf16.mxu0 0
  %8072 = vmatmul.mubr.bf16.gmra.mrb[0].mxu0 %v8021
  %v8073 = vpop.f32.mrb[0].mxu0
  %v8074 = vadd.f32 0.0, %v8073
  %v8075 = vpop.f32.mrb[0].mxu0
  %v8076 = vpop.f32.mrb[0].mxu0
  %v8077 = vadd.f32 0.0, %v8076
  %v8078 = vpop.f32.mrb[0].mxu0
  %8079 = vdwg.mxu0
  %v8080 = vpack.c.bf16 %v8061, %v8058
  %v8081 = vpack.c.bf16 %v8069, %v8066
  %v8082 = vpack.c.bf16 %v8077, %v8074
  %8083 = vmatprep.subr.bf16.mxu0 0
  %8084 = vmatpush1.bf16.msra.mxu0 %v8080
  %8085 = vmatprep.subr.bf16.mxu0 0
  %8086 = vmatpush1.bf16.msra.mxu0 %v8081
  %8087 = vmatprep.subr.bf16.mxu0 0
  %8088 = vmatpush1.bf16.msra.mxu0 %v8082
  %8089 = vmatprep.subr.bf16.mxu0 0
  %8090 = vmatpush1.bf16.msra.mxu0 0
  %8091 = vmatprep.subr.bf16.mxu0 0
  %8092 = vmatpush1.bf16.msra.mxu0 0
  %8093 = vmatprep.subr.bf16.mxu0 0
  %8094 = vmatpush1.bf16.msra.mxu0 0
  %8095 = vmatprep.subr.bf16.mxu0 0
  %8096 = vmatpush1.bf16.msra.mxu0 0
  %8097 = vmatprep.subr.bf16.mxu0 0
  %8098 = vmatpush1.bf16.msra.mxu0 0
  %8099 = vmatprep.subr.bf16.mxu0 0
  %8100 = vmatpush1.bf16.msra.mxu0 0
  %8101 = vmatprep.subr.bf16.mxu0 0
  %8102 = vmatpush1.bf16.msra.mxu0 0
  %8103 = vmatprep.subr.bf16.mxu0 0
  %8104 = vmatpush1.bf16.msra.mxu0 0
  %8105 = vmatprep.subr.bf16.mxu0 0
  %8106 = vmatpush1.bf16.msra.mxu0 0
  %8107 = vmatprep.subr.bf16.mxu0 0
  %8108 = vmatpush1.bf16.msra.mxu0 0
  %8109 = vmatprep.subr.bf16.mxu0 0
  %8110 = vmatpush1.bf16.msra.mxu0 0
  %8111 = vmatprep.subr.bf16.mxu0 0
  %8112 = vmatpush1.bf16.msra.mxu0 0
  %8113 = vmatprep.subr.bf16.mxu0 0
  %8114 = vmatpush1.bf16.msra.mxu0 0
  %8115 = vmatprep.mubr.bf16.mxu0 0
  %8116 = vmatmul.mubr.bf16.gmra.mrb[0].mxu0 %v2959
  %v8117 = vpop.f32.mrb[0].mxu0
  %v8118 = vadd.f32 0.0, %v8117
  %v8119 = vpop.f32.mrb[0].mxu0
  %v8120 = vpop.f32.mrb[0].mxu0
  %v8121 = vadd.f32 0.0, %v8120
  %v8122 = vpop.f32.mrb[0].mxu0
  %8123 = vmatprep.mubr.bf16.mxu0 0
  %8124 = vmatmul.mubr.bf16.gmra.mrb[0].mxu0 %v2962
  %v8125 = vpop.f32.mrb[0].mxu0
  %v8126 = vadd.f32 0.0, %v8125
  %v8127 = vpop.f32.mrb[0].mxu0
  %v8128 = vpop.f32.mrb[0].mxu0
  %v8129 = vadd.f32 0.0, %v8128
  %v8130 = vpop.f32.mrb[0].mxu0
  %8131 = vmatprep.mubr.bf16.mxu0 0
  %8132 = vmatmul.mubr.bf16.gmra.mrb[0].mxu0 %v2965
  %v8133 = vpop.f32.mrb[0].mxu0
  %v8134 = vadd.f32 0.0, %v8133
  %v8135 = vpop.f32.mrb[0].mxu0
  %v8136 = vpop.f32.mrb[0].mxu0
  %v8137 = vadd.f32 0.0, %v8136
  %v8138 = vpop.f32.mrb[0].mxu0
  %8139 = vmatprep.mubr.bf16.mxu0 0
  %8140 = vmatmul.mubr.bf16.gmra.mrb[0].mxu0 %v2968
  %v8141 = vpop.f32.mrb[0].mxu0
  %v8142 = vadd.f32 0.0, %v8141
  %v8143 = vpop.f32.mrb[0].mxu0
  %v8144 = vpop.f32.mrb[0].mxu0
  %v8145 = vadd.f32 0.0, %v8144
  %v8146 = vpop.f32.mrb[0].mxu0
  %8147 = vmatprep.mubr.bf16.mxu0 0
  %8148 = vmatmul.mubr.bf16.gmra.mrb[0].mxu0 %v2971
  %v8149 = vpop.f32.mrb[0].mxu0
  %v8150 = vadd.f32 0.0, %v8149
  %v8151 = vpop.f32.mrb[0].mxu0
  %v8152 = vpop.f32.mrb[0].mxu0
  %v8153 = vadd.f32 0.0, %v8152
  %v8154 = vpop.f32.mrb[0].mxu0
  %8155 = vmatprep.mubr.bf16.mxu0 0
  %8156 = vmatmul.mubr.bf16.gmra.mrb[0].mxu0 %v2974
  %v8157 = vpop.f32.mrb[0].mxu0
  %v8158 = vadd.f32 0.0, %v8157
  %v8159 = vpop.f32.mrb[0].mxu0
  %v8160 = vpop.f32.mrb[0].mxu0
  %v8161 = vadd.f32 0.0, %v8160
  %v8162 = vpop.f32.mrb[0].mxu0
  %8163 = vdwg.mxu0
  %v8165 = vsel %vm696, %v8058, 0
  %v8168 = vsel %vm696, %v8061, 0
  %v8171 = vsel %vm696, %v8066, 0
  %v8174 = vsel %vm696, %v8069, 0
  %v8177 = vsel %vm696, %v8074, 0
  %v8180 = vsel %vm696, %v8077, 0
  %8182 = vmatprep.subr.mxu0 0.0
  %8183 = vmatpush1.msra.mxu0 %v4036
  %8184 = vmatprep.subr.mxu0 0.0
  %8185 = vmatpush1.msra.mxu0 %v4037
  %8186 = vmatprep.subr.mxu0 0.0
  %8187 = vmatpush1.msra.mxu0 %v4038
  %8188 = vmatprep.subr.mxu0 0.0
  %8189 = vmatpush1.msra.mxu0 %v4039
  %8190 = vmatprep.subr.mxu0 0.0
  %8191 = vmatpush1.msra.mxu0 %v4040
  %8192 = vmatprep.subr.mxu0 0.0
  %8193 = vmatpush1.msra.mxu0 %v4041
  %8194 = vmatprep.subr.mxu0 0.0
  %8195 = vmatpush1.msra.mxu0 %v4042
  %8196 = vmatprep.subr.mxu0 0.0
  %8197 = vmatpush1.msra.mxu0 %v4043
  %8198 = vmatprep.subr.mxu0 0.0
  %8199 = vmatpush1.msra.mxu0 0.0
  %8200 = vmatprep.subr.mxu0 0.0
  %8201 = vmatpush1.msra.mxu0 0.0
  %8202 = vmatprep.subr.mxu0 0.0
  %8203 = vmatpush1.msra.mxu0 0.0
  %8204 = vmatprep.subr.mxu0 0.0
  %8205 = vmatpush1.msra.mxu0 0.0
  %8206 = vmatprep.subr.mxu0 0.0
  %8207 = vmatpush1.msra.mxu0 0.0
  %8208 = vmatprep.subr.mxu0 0.0
  %8209 = vmatpush1.msra.mxu0 0.0
  %8210 = vmatprep.subr.mxu0 0.0
  %8211 = vmatpush1.msra.mxu0 0.0
  %8212 = vmatprep.subr.mxu0 0.0
  %8213 = vmatpush1.msra.mxu0 0.0
  %8214 = vmatprep.subr.mxu0 0.0
  %8215 = vmatpush1.msra.mxu0 0.0
  %8216 = vmatprep.subr.mxu0 0.0
  %8217 = vmatpush1.msra.mxu0 0.0
  %8218 = vmatprep.subr.mxu0 0.0
  %8219 = vmatpush1.msra.mxu0 0.0
  %8220 = vmatprep.subr.mxu0 0.0
  %8221 = vmatpush1.msra.mxu0 0.0
  %8222 = vmatprep.subr.mxu0 0.0
  %8223 = vmatpush1.msra.mxu0 0.0
  %8224 = vmatprep.subr.mxu0 0.0
  %8225 = vmatpush1.msra.mxu0 0.0
  %8226 = vmatprep.subr.mxu0 0.0
  %8227 = vmatpush1.msra.mxu0 0.0
  %8228 = vmatprep.subr.mxu0 0.0
  %8229 = vmatpush1.msra.mxu0 0.0
  %8230 = vmatprep.subr.mxu0 0.0
  %8231 = vmatpush1.msra.mxu0 0.0
  %8232 = vmatprep.subr.mxu0 0.0
  %8233 = vmatpush1.msra.mxu0 0.0
  %8234 = vmatprep.subr.mxu0 0.0
  %8235 = vmatpush1.msra.mxu0 0.0
  %8236 = vmatprep.subr.mxu0 0.0
  %8237 = vmatpush1.msra.mxu0 0.0
  %8238 = vmatprep.subr.mxu0 0.0
  %8239 = vmatpush1.msra.mxu0 0.0
  %8240 = vmatprep.subr.mxu0 0.0
  %8241 = vmatpush1.msra.mxu0 0.0
  %8242 = vmatprep.subr.mxu0 0.0
  %8243 = vmatpush1.msra.mxu0 0.0
  %8244 = vmatprep.subr.mxu0 0.0
  %8245 = vmatpush1.msra.mxu0 0.0
  %8246 = vmatprep.mubr.f32.mxu0 0.0
  %8247 = vmatmul.mubr.f32.gmra.mrb[0].mxu0 %v8165
  %v8248 = vpop.f32.mrb[0].mxu0
  %v8249 = vadd.f32 0.0, %v8248
  %v8250 = vpop.f32.mrb[0].mxu0
  %8251 = vmatprep.mubr.f32.mxu0 0.0
  %8252 = vmatmul.mubr.f32.gmra.mrb[0].mxu0 %v8168
  %v8253 = vpop.f32.mrb[0].mxu0
  %v8254 = vadd.f32 0.0, %v8253
  %v8255 = vpop.f32.mrb[0].mxu0
  %8256 = vmatprep.mubr.f32.mxu0 0.0
  %8257 = vmatmul.mubr.f32.gmra.mrb[0].mxu0 %v8171
  %v8258 = vpop.f32.mrb[0].mxu0
  %v8259 = vadd.f32 0.0, %v8258
  %v8260 = vpop.f32.mrb[0].mxu0
  %8261 = vmatprep.mubr.f32.mxu0 0.0
  %8262 = vmatmul.mubr.f32.gmra.mrb[0].mxu0 %v8174
  %v8263 = vpop.f32.mrb[0].mxu0
  %v8264 = vadd.f32 0.0, %v8263
  %v8265 = vpop.f32.mrb[0].mxu0
  %8266 = vmatprep.mubr.f32.mxu0 0.0
  %8267 = vmatmul.mubr.f32.gmra.mrb[0].mxu0 %v8177
  %v8268 = vpop.f32.mrb[0].mxu0
  %v8269 = vadd.f32 0.0, %v8268
  %v8270 = vpop.f32.mrb[0].mxu0
  %8271 = vmatprep.mubr.f32.mxu0 0.0
  %8272 = vmatmul.mubr.f32.gmra.mrb[0].mxu0 %v8180
  %v8273 = vpop.f32.mrb[0].mxu0
  %v8274 = vadd.f32 0.0, %v8273
  %v8275 = vpop.f32.mrb[0].mxu0
  %8276 = vdwg.mxu0
  %v8277 = vpack.c.bf16 %v8254, %v8249
  %v8278 = vpack.c.bf16 %v8264, %v8259
  %v8279 = vpack.c.bf16 %v8274, %v8269
  %v8281 = vsel %vm696, %v8118, 0
  %v8284 = vsel %vm696, %v8121, 0
  %v8287 = vsel %vm696, %v8126, 0
  %v8290 = vsel %vm696, %v8129, 0
  %v8293 = vsel %vm696, %v8134, 0
  %v8296 = vsel %vm696, %v8137, 0
  %v8299 = vsel %vm696, %v8142, 0
  %v8302 = vsel %vm696, %v8145, 0
  %v8305 = vsel %vm696, %v8150, 0
  %v8308 = vsel %vm696, %v8153, 0
  %v8311 = vsel %vm696, %v8158, 0
  %v8314 = vsel %vm696, %v8161, 0
  %8316 = vmatprep.subr.mxu0 0.0
  %8317 = vmatpush1.msra.mxu0 %v4044
  %8318 = vmatprep.subr.mxu0 0.0
  %8319 = vmatpush1.msra.mxu0 %v4045
  %8320 = vmatprep.subr.mxu0 0.0
  %8321 = vmatpush1.msra.mxu0 %v4046
  %8322 = vmatprep.subr.mxu0 0.0
  %8323 = vmatpush1.msra.mxu0 %v4047
  %8324 = vmatprep.subr.mxu0 0.0
  %8325 = vmatpush1.msra.mxu0 %v4048
  %8326 = vmatprep.subr.mxu0 0.0
  %8327 = vmatpush1.msra.mxu0 %v4049
  %8328 = vmatprep.subr.mxu0 0.0
  %8329 = vmatpush1.msra.mxu0 %v4050
  %8330 = vmatprep.subr.mxu0 0.0
  %8331 = vmatpush1.msra.mxu0 %v4051
  %8332 = vmatprep.subr.mxu0 0.0
  %8333 = vmatpush1.msra.mxu0 0.0
  %8334 = vmatprep.subr.mxu0 0.0
  %8335 = vmatpush1.msra.mxu0 0.0
  %8336 = vmatprep.subr.mxu0 0.0
  %8337 = vmatpush1.msra.mxu0 0.0
  %8338 = vmatprep.subr.mxu0 0.0
  %8339 = vmatpush1.msra.mxu0 0.0
  %8340 = vmatprep.subr.mxu0 0.0
  %8341 = vmatpush1.msra.mxu0 0.0
  %8342 = vmatprep.subr.mxu0 0.0
  %8343 = vmatpush1.msra.mxu0 0.0
  %8344 = vmatprep.subr.mxu0 0.0
  %8345 = vmatpush1.msra.mxu0 0.0
  %8346 = vmatprep.subr.mxu0 0.0
  %8347 = vmatpush1.msra.mxu0 0.0
  %8348 = vmatprep.subr.mxu0 0.0
  %8349 = vmatpush1.msra.mxu0 0.0
  %8350 = vmatprep.subr.mxu0 0.0
  %8351 = vmatpush1.msra.mxu0 0.0
  %8352 = vmatprep.subr.mxu0 0.0
  %8353 = vmatpush1.msra.mxu0 0.0
  %8354 = vmatprep.subr.mxu0 0.0
  %8355 = vmatpush1.msra.mxu0 0.0
  %8356 = vmatprep.subr.mxu0 0.0
  %8357 = vmatpush1.msra.mxu0 0.0
  %8358 = vmatprep.subr.mxu0 0.0
  %8359 = vmatpush1.msra.mxu0 0.0
  %8360 = vmatprep.subr.mxu0 0.0
  %8361 = vmatpush1.msra.mxu0 0.0
  %8362 = vmatprep.subr.mxu0 0.0
  %8363 = vmatpush1.msra.mxu0 0.0
  %8364 = vmatprep.subr.mxu0 0.0
  %8365 = vmatpush1.msra.mxu0 0.0
  %8366 = vmatprep.subr.mxu0 0.0
  %8367 = vmatpush1.msra.mxu0 0.0
  %8368 = vmatprep.subr.mxu0 0.0
  %8369 = vmatpush1.msra.mxu0 0.0
  %8370 = vmatprep.subr.mxu0 0.0
  %8371 = vmatpush1.msra.mxu0 0.0
  %8372 = vmatprep.subr.mxu0 0.0
  %8373 = vmatpush1.msra.mxu0 0.0
  %8374 = vmatprep.subr.mxu0 0.0
  %8375 = vmatpush1.msra.mxu0 0.0
  %8376 = vmatprep.subr.mxu0 0.0
  %8377 = vmatpush1.msra.mxu0 0.0
  %8378 = vmatprep.subr.mxu0 0.0
  %8379 = vmatpush1.msra.mxu0 0.0
  %8380 = vmatprep.mubr.f32.mxu0 0.0
  %8381 = vmatmul.mubr.f32.gmra.mrb[0].mxu0 %v8281
  %v8382 = vpop.f32.mrb[0].mxu0
  %v8383 = vadd.f32 0.0, %v8382
  %v8384 = vpop.f32.mrb[0].mxu0
  %8385 = vmatprep.mubr.f32.mxu0 0.0
  %8386 = vmatmul.mubr.f32.gmra.mrb[0].mxu0 %v8284
  %v8387 = vpop.f32.mrb[0].mxu0
  %v8388 = vadd.f32 0.0, %v8387
  %v8389 = vpop.f32.mrb[0].mxu0
  %8390 = vmatprep.mubr.f32.mxu0 0.0
  %8391 = vmatmul.mubr.f32.gmra.mrb[0].mxu0 %v8287
  %v8392 = vpop.f32.mrb[0].mxu0
  %v8393 = vadd.f32 0.0, %v8392
  %v8394 = vpop.f32.mrb[0].mxu0
  %8395 = vmatprep.mubr.f32.mxu0 0.0
  %8396 = vmatmul.mubr.f32.gmra.mrb[0].mxu0 %v8290
  %v8397 = vpop.f32.mrb[0].mxu0
  %v8398 = vadd.f32 0.0, %v8397
  %v8399 = vpop.f32.mrb[0].mxu0
  %8400 = vmatprep.mubr.f32.mxu0 0.0
  %8401 = vmatmul.mubr.f32.gmra.mrb[0].mxu0 %v8293
  %v8402 = vpop.f32.mrb[0].mxu0
  %v8403 = vadd.f32 0.0, %v8402
  %v8404 = vpop.f32.mrb[0].mxu0
  %8405 = vmatprep.mubr.f32.mxu0 0.0
  %8406 = vmatmul.mubr.f32.gmra.mrb[0].mxu0 %v8296
  %v8407 = vpop.f32.mrb[0].mxu0
  %v8408 = vadd.f32 0.0, %v8407
  %v8409 = vpop.f32.mrb[0].mxu0
  %8410 = vmatprep.mubr.f32.mxu0 0.0
  %8411 = vmatmul.mubr.f32.gmra.mrb[0].mxu0 %v8299
  %v8412 = vpop.f32.mrb[0].mxu0
  %v8413 = vadd.f32 0.0, %v8412
  %v8414 = vpop.f32.mrb[0].mxu0
  %8415 = vmatprep.mubr.f32.mxu0 0.0
  %8416 = vmatmul.mubr.f32.gmra.mrb[0].mxu0 %v8302
  %v8417 = vpop.f32.mrb[0].mxu0
  %v8418 = vadd.f32 0.0, %v8417
  %v8419 = vpop.f32.mrb[0].mxu0
  %8420 = vmatprep.mubr.f32.mxu0 0.0
  %8421 = vmatmul.mubr.f32.gmra.mrb[0].mxu0 %v8305
  %v8422 = vpop.f32.mrb[0].mxu0
  %v8423 = vadd.f32 0.0, %v8422
  %v8424 = vpop.f32.mrb[0].mxu0
  %8425 = vmatprep.mubr.f32.mxu0 0.0
  %8426 = vmatmul.mubr.f32.gmra.mrb[0].mxu0 %v8308
  %v8427 = vpop.f32.mrb[0].mxu0
  %v8428 = vadd.f32 0.0, %v8427
  %v8429 = vpop.f32.mrb[0].mxu0
  %8430 = vmatprep.mubr.f32.mxu0 0.0
  %8431 = vmatmul.mubr.f32.gmra.mrb[0].mxu0 %v8311
  %v8432 = vpop.f32.mrb[0].mxu0
  %v8433 = vadd.f32 0.0, %v8432
  %v8434 = vpop.f32.mrb[0].mxu0
  %8435 = vmatprep.mubr.f32.mxu0 0.0
  %8436 = vmatmul.mubr.f32.gmra.mrb[0].mxu0 %v8314
  %v8437 = vpop.f32.mrb[0].mxu0
  %v8438 = vadd.f32 0.0, %v8437
  %v8439 = vpop.f32.mrb[0].mxu0
  %8440 = vdwg.mxu0
  %8441 = vmatprep.subr.bf16.mxu0 0
  %8442 = vmatpush1.bf16.msra.mxu0 %v8277
  %8443 = vmatprep.subr.bf16.mxu0 0
  %8444 = vmatpush1.bf16.msra.mxu0 %v8278
  %8445 = vmatprep.subr.bf16.mxu0 0
  %8446 = vmatpush1.bf16.msra.mxu0 %v8279
  %8447 = vmatprep.subr.bf16.mxu0 0
  %8448 = vmatpush1.bf16.msra.mxu0 0
  %8449 = vmatprep.subr.bf16.mxu0 0
  %8450 = vmatpush1.bf16.msra.mxu0 0
  %8451 = vmatprep.subr.bf16.mxu0 0
  %8452 = vmatpush1.bf16.msra.mxu0 0
  %8453 = vmatprep.subr.bf16.mxu0 0
  %8454 = vmatpush1.bf16.msra.mxu0 0
  %8455 = vmatprep.subr.bf16.mxu0 0
  %8456 = vmatpush1.bf16.msra.mxu0 0
  %8457 = vmatprep.subr.bf16.mxu0 0
  %8458 = vmatpush1.bf16.msra.mxu0 0
  %8459 = vmatprep.subr.bf16.mxu0 0
  %8460 = vmatpush1.bf16.msra.mxu0 0
  %8461 = vmatprep.subr.bf16.mxu0 0
  %8462 = vmatpush1.bf16.msra.mxu0 0
  %8463 = vmatprep.subr.bf16.mxu0 0
  %8464 = vmatpush1.bf16.msra.mxu0 0
  %8465 = vmatprep.subr.bf16.mxu0 0
  %8466 = vmatpush1.bf16.msra.mxu0 0
  %8467 = vmatprep.subr.bf16.mxu0 0
  %8468 = vmatpush1.bf16.msra.mxu0 0
  %8469 = vmatprep.subr.bf16.mxu0 0
  %8470 = vmatpush1.bf16.msra.mxu0 0
  %8471 = vmatprep.subr.bf16.mxu0 0
  %8472 = vmatpush1.bf16.msra.mxu0 0
  %8473 = vmatprep.mubr.bf16.mxu0 0
  %8474 = vmatmul.mubr.bf16.gmra.mrb[0].mxu0 %v3335
  %v8475 = vpop.f32.mrb[0].mxu0
  %v8476 = vadd.f32 %v8383, %v8475
  %v8477 = vpop.f32.mrb[0].mxu0
  %v8478 = vpop.f32.mrb[0].mxu0
  %v8479 = vadd.f32 %v8388, %v8478
  %v8480 = vpop.f32.mrb[0].mxu0
  %8481 = vmatprep.mubr.bf16.mxu0 0
  %8482 = vmatmul.mubr.bf16.gmra.mrb[0].mxu0 %v3338
  %v8483 = vpop.f32.mrb[0].mxu0
  %v8484 = vadd.f32 %v8393, %v8483
  %v8485 = vpop.f32.mrb[0].mxu0
  %v8486 = vpop.f32.mrb[0].mxu0
  %v8487 = vadd.f32 %v8398, %v8486
  %v8488 = vpop.f32.mrb[0].mxu0
  %8489 = vmatprep.mubr.bf16.mxu0 0
  %8490 = vmatmul.mubr.bf16.gmra.mrb[0].mxu0 %v3341
  %v8491 = vpop.f32.mrb[0].mxu0
  %v8492 = vadd.f32 %v8403, %v8491
  %v8493 = vpop.f32.mrb[0].mxu0
  %v8494 = vpop.f32.mrb[0].mxu0
  %v8495 = vadd.f32 %v8408, %v8494
  %v8496 = vpop.f32.mrb[0].mxu0
  %8497 = vmatprep.mubr.bf16.mxu0 0
  %8498 = vmatmul.mubr.bf16.gmra.mrb[0].mxu0 %v3344
  %v8499 = vpop.f32.mrb[0].mxu0
  %v8500 = vadd.f32 %v8413, %v8499
  %v8501 = vpop.f32.mrb[0].mxu0
  %v8502 = vpop.f32.mrb[0].mxu0
  %v8503 = vadd.f32 %v8418, %v8502
  %v8504 = vpop.f32.mrb[0].mxu0
  %8505 = vmatprep.mubr.bf16.mxu0 0
  %8506 = vmatmul.mubr.bf16.gmra.mrb[0].mxu0 %v3347
  %v8507 = vpop.f32.mrb[0].mxu0
  %v8508 = vadd.f32 %v8423, %v8507
  %v8509 = vpop.f32.mrb[0].mxu0
  %v8510 = vpop.f32.mrb[0].mxu0
  %v8511 = vadd.f32 %v8428, %v8510
  %v8512 = vpop.f32.mrb[0].mxu0
  %8513 = vmatprep.mubr.bf16.mxu0 0
  %8514 = vmatmul.mubr.bf16.gmra.mrb[0].mxu0 %v3350
  %v8515 = vpop.f32.mrb[0].mxu0
  %v8516 = vadd.f32 %v8433, %v8515
  %v8517 = vpop.f32.mrb[0].mxu0
  %v8518 = vpop.f32.mrb[0].mxu0
  %v8519 = vadd.f32 %v8438, %v8518
  %v8520 = vpop.f32.mrb[0].mxu0
  %8521 = vdwg.mxu0
  %v8522 = vmul.f32 %v6908, %v4572
  %v8523 = vmul.f32 %v6909, %v4572
  %v8524 = vmul.f32 %v6910, %v4572
  %v8525 = vmul.f32 %v6911, %v4572
  %v8526 = vmul.f32 %v6912, %v4572
  %v8527 = vmul.f32 %v6913, %v4572
  %v8528 = vmul.f32 %v6914, %v4572
  %v8529 = vmul.f32 %v6915, %v4572
  %v8530 = vmul.f32 %v6916, %v4572
  %v8531 = vmul.f32 %v6917, %v4572
  %v8532 = vmul.f32 %v6918, %v4572
  %v8533 = vmul.f32 %v6919, %v4572
  %v8534 = vadd.f32 %v8476, %v8522
  %v8535 = vadd.f32 %v8479, %v8523
  %v8536 = vadd.f32 %v8484, %v8524
  %v8537 = vadd.f32 %v8487, %v8525
  %v8538 = vadd.f32 %v8492, %v8526
  %v8539 = vadd.f32 %v8495, %v8527
  %v8540 = vadd.f32 %v8500, %v8528
  %v8541 = vadd.f32 %v8503, %v8529
  %v8542 = vadd.f32 %v8508, %v8530
  %v8543 = vadd.f32 %v8511, %v8531
  %v8544 = vadd.f32 %v8516, %v8532
  %v8545 = vadd.f32 %v8519, %v8533
  %vm8546 = vcmp.gt.f32.partialorder %v8534, 0.0
  %vm8547 = vcmp.gt.f32.partialorder %v8535, 0.0
  %vm8548 = vcmp.gt.f32.partialorder %v8536, 0.0
  %vm8549 = vcmp.gt.f32.partialorder %v8537, 0.0
  %vm8550 = vcmp.gt.f32.partialorder %v8538, 0.0
  %vm8551 = vcmp.gt.f32.partialorder %v8539, 0.0
  %vm8552 = vcmp.gt.f32.partialorder %v8540, 0.0
  %vm8553 = vcmp.gt.f32.partialorder %v8541, 0.0
  %vm8554 = vcmp.gt.f32.partialorder %v8542, 0.0
  %vm8555 = vcmp.gt.f32.partialorder %v8543, 0.0
  %vm8556 = vcmp.gt.f32.partialorder %v8544, 0.0
  %vm8557 = vcmp.gt.f32.partialorder %v8545, 0.0
  %v8558 = vmul.f32 %v8534, 0.2
  %v8559 = vmul.f32 %v8535, 0.2
  %v8560 = vmul.f32 %v8536, 0.2
  %v8561 = vmul.f32 %v8537, 0.2
  %v8562 = vmul.f32 %v8538, 0.2
  %v8563 = vmul.f32 %v8539, 0.2
  %v8564 = vmul.f32 %v8540, 0.2
  %v8565 = vmul.f32 %v8541, 0.2
  %v8566 = vmul.f32 %v8542, 0.2
  %v8567 = vmul.f32 %v8543, 0.2
  %v8568 = vmul.f32 %v8544, 0.2
  %v8569 = vmul.f32 %v8545, 0.2
  %v8570 = vsel %vm8546, %v8534, %v8558
  %v8571 = vsel %vm8547, %v8535, %v8559
  %v8572 = vsel %vm8548, %v8536, %v8560
  %v8573 = vsel %vm8549, %v8537, %v8561
  %v8574 = vsel %vm8550, %v8538, %v8562
  %v8575 = vsel %vm8551, %v8539, %v8563
  %v8576 = vsel %vm8552, %v8540, %v8564
  %v8577 = vsel %vm8553, %v8541, %v8565
  %v8578 = vsel %vm8554, %v8542, %v8566
  %v8579 = vsel %vm8555, %v8543, %v8567
  %v8580 = vsel %vm8556, %v8544, %v8568
  %v8581 = vsel %vm8557, %v8545, %v8569
  %v8582 = vsub.f32 0.0, %v8570
  %v8583 = vsub.f32 0.0, %v8571
  %v8584 = vsub.f32 0.0, %v8572
  %v8585 = vsub.f32 0.0, %v8573
  %v8586 = vsub.f32 0.0, %v8574
  %v8587 = vsub.f32 0.0, %v8575
  %v8588 = vsub.f32 0.0, %v8576
  %v8589 = vsub.f32 0.0, %v8577
  %v8590 = vsub.f32 0.0, %v8578
  %v8591 = vsub.f32 0.0, %v8579
  %v8592 = vsub.f32 0.0, %v8580
  %v8593 = vsub.f32 0.0, %v8581
  %v8594 = vmin.f32 %v8582, 60.0
  %v8595 = vmin.f32 %v8583, 60.0
  %v8596 = vmin.f32 %v8584, 60.0
  %v8597 = vmin.f32 %v8585, 60.0
  %v8598 = vmin.f32 %v8586, 60.0
  %v8599 = vmin.f32 %v8587, 60.0
  %v8600 = vmin.f32 %v8588, 60.0
  %v8601 = vmin.f32 %v8589, 60.0
  %v8602 = vmin.f32 %v8590, 60.0
  %v8603 = vmin.f32 %v8591, 60.0
  %v8604 = vmin.f32 %v8592, 60.0
  %v8605 = vmin.f32 %v8593, 60.0
  %v8606 = vmul.f32 %v8594, 1.442695
  %v8607 = vpow.pop %v8606
  %v8608 = vmul.f32 %v8595, 1.442695
  %v8609 = vpow.pop %v8608
  %v8610 = vmul.f32 %v8596, 1.442695
  %v8611 = vpow.pop %v8610
  %v8612 = vmul.f32 %v8597, 1.442695
  %v8613 = vpow.pop %v8612
  %v8614 = vmul.f32 %v8598, 1.442695
  %v8615 = vpow.pop %v8614
  %v8616 = vmul.f32 %v8599, 1.442695
  %v8617 = vpow.pop %v8616
  %v8618 = vmul.f32 %v8600, 1.442695
  %v8619 = vpow.pop %v8618
  %v8620 = vmul.f32 %v8601, 1.442695
  %v8621 = vpow.pop %v8620
  %v8622 = vmul.f32 %v8602, 1.442695
  %v8623 = vpow.pop %v8622
  %v8624 = vmul.f32 %v8603, 1.442695
  %v8625 = vpow.pop %v8624
  %v8626 = vmul.f32 %v8604, 1.442695
  %v8627 = vpow.pop %v8626
  %v8628 = vmul.f32 %v8605, 1.442695
  %v8629 = vpow.pop %v8628
  %8631 = vset.pattern.permute.xlu0 0
  %8632 = vperm.xlu0 %8631, %v8607
  %v8633 = vpop.permute.xlu0 %8632
  %8636 = vset.pattern.permute.xlu0 0
  %8637 = vperm.xlu0 %8636, %v8609
  %v8638 = vpop.permute.xlu0 %8637
  %8641 = vset.pattern.permute.xlu0 0
  %8642 = vperm.xlu0 %8641, %v8611
  %v8643 = vpop.permute.xlu0 %8642
  %8646 = vset.pattern.permute.xlu0 0
  %8647 = vperm.xlu0 %8646, %v8613
  %v8648 = vpop.permute.xlu0 %8647
  %8651 = vset.pattern.permute.xlu0 0
  %8652 = vperm.xlu0 %8651, %v8615
  %v8653 = vpop.permute.xlu0 %8652
  %8656 = vset.pattern.permute.xlu0 0
  %8657 = vperm.xlu0 %8656, %v8617
  %v8658 = vpop.permute.xlu0 %8657
  %8661 = vset.pattern.permute.xlu0 0
  %8662 = vperm.xlu0 %8661, %v8619
  %v8663 = vpop.permute.xlu0 %8662
  %8666 = vset.pattern.permute.xlu0 0
  %8667 = vperm.xlu0 %8666, %v8621
  %v8668 = vpop.permute.xlu0 %8667
  %8671 = vset.pattern.permute.xlu0 0
  %8672 = vperm.xlu0 %8671, %v8623
  %v8673 = vpop.permute.xlu0 %8672
  %8676 = vset.pattern.permute.xlu0 0
  %8677 = vperm.xlu0 %8676, %v8625
  %v8678 = vpop.permute.xlu0 %8677
  %8681 = vset.pattern.permute.xlu0 0
  %8682 = vperm.xlu0 %8681, %v8627
  %v8683 = vpop.permute.xlu0 %8682
  %8686 = vset.pattern.permute.xlu0 0
  %8687 = vperm.xlu0 %8686, %v8629
  %v8688 = vpop.permute.xlu0 %8687
  %v8690 = vmul.f32 %v8633, %v8118
  %v8691 = vmul.f32 %v8638, %v8121
  %v8692 = vmul.f32 %v8643, %v8126
  %v8693 = vmul.f32 %v8648, %v8129
  %v8694 = vmul.f32 %v8653, %v8134
  %v8695 = vmul.f32 %v8658, %v8137
  %v8696 = vmul.f32 %v8663, %v8142
  %v8697 = vmul.f32 %v8668, %v8145
  %v8698 = vmul.f32 %v8673, %v8150
  %v8699 = vmul.f32 %v8678, %v8153
  %v8700 = vmul.f32 %v8683, %v8158
  %v8701 = vmul.f32 %v8688, %v8161
  %v8702 = vpack.c.bf16 %v8691, %v8690
  %v8703 = vpack.c.bf16 %v8693, %v8692
  %v8704 = vpack.c.bf16 %v8695, %v8694
  %v8705 = vpack.c.bf16 %v8697, %v8696
  %v8706 = vpack.c.bf16 %v8699, %v8698
  %v8707 = vpack.c.bf16 %v8701, %v8700
  %8708 = vmatprep.subr.bf16.mxu0 0
  %8709 = vmatpush1.bf16.msra.mxu0 %v8702
  %8710 = vmatprep.subr.bf16.mxu0 0
  %8711 = vmatpush1.bf16.msra.mxu0 %v8703
  %8712 = vmatprep.subr.bf16.mxu0 0
  %8713 = vmatpush1.bf16.msra.mxu0 %v8704
  %8714 = vmatprep.subr.bf16.mxu0 0
  %8715 = vmatpush1.bf16.msra.mxu0 %v8705
  %8716 = vmatprep.subr.bf16.mxu0 0
  %8717 = vmatpush1.bf16.msra.mxu0 %v8706
  %8718 = vmatprep.subr.bf16.mxu0 0
  %8719 = vmatpush1.bf16.msra.mxu0 %v8707
  %8720 = vmatprep.subr.bf16.mxu0 0
  %8721 = vmatpush1.bf16.msra.mxu0 0
  %8722 = vmatprep.subr.bf16.mxu0 0
  %8723 = vmatpush1.bf16.msra.mxu0 0
  %8724 = vmatprep.subr.bf16.mxu0 0
  %8725 = vmatpush1.bf16.msra.mxu0 0
  %8726 = vmatprep.subr.bf16.mxu0 0
  %8727 = vmatpush1.bf16.msra.mxu0 0
  %8728 = vmatprep.subr.bf16.mxu0 0
  %8729 = vmatpush1.bf16.msra.mxu0 0
  %8730 = vmatprep.subr.bf16.mxu0 0
  %8731 = vmatpush1.bf16.msra.mxu0 0
  %8732 = vmatprep.subr.bf16.mxu0 0
  %8733 = vmatpush1.bf16.msra.mxu0 0
  %8734 = vmatprep.subr.bf16.mxu0 0
  %8735 = vmatpush1.bf16.msra.mxu0 0
  %8736 = vmatprep.subr.bf16.mxu0 0
  %8737 = vmatpush1.bf16.msra.mxu0 0
  %8738 = vmatprep.subr.bf16.mxu0 0
  %8739 = vmatpush1.bf16.msra.mxu0 0
  %8740 = vmatprep.mubr.bf16.mxu0 0
  %8741 = vmatmul.mubr.bf16.gmra.mrb[0].mxu0 %v3727
  %v8742 = vpop.f32.mrb[0].mxu0
  %v8743 = vadd.f32 0.0, %v8742
  %v8744 = vpop.f32.mrb[0].mxu0
  %v8745 = vpop.f32.mrb[0].mxu0
  %v8746 = vadd.f32 0.0, %v8745
  %v8747 = vpop.f32.mrb[0].mxu0
  %8748 = vmatprep.mubr.bf16.mxu0 0
  %8749 = vmatmul.mubr.bf16.gmra.mrb[0].mxu0 %v3730
  %v8750 = vpop.f32.mrb[0].mxu0
  %v8751 = vadd.f32 0.0, %v8750
  %v8752 = vpop.f32.mrb[0].mxu0
  %v8753 = vpop.f32.mrb[0].mxu0
  %v8754 = vadd.f32 0.0, %v8753
  %v8755 = vpop.f32.mrb[0].mxu0
  %8756 = vmatprep.mubr.bf16.mxu0 0
  %8757 = vmatmul.mubr.bf16.gmra.mrb[0].mxu0 %v3733
  %v8758 = vpop.f32.mrb[0].mxu0
  %v8759 = vadd.f32 0.0, %v8758
  %v8760 = vpop.f32.mrb[0].mxu0
  %v8761 = vpop.f32.mrb[0].mxu0
  %v8762 = vadd.f32 0.0, %v8761
  %v8763 = vpop.f32.mrb[0].mxu0
  %8764 = vdwg.mxu0
  %v8765 = vpack.c.bf16 %v8609, %v8607
  %v8766 = vpack.c.bf16 %v8613, %v8611
  %v8767 = vpack.c.bf16 %v8617, %v8615
  %v8768 = vpack.c.bf16 %v8621, %v8619
  %v8769 = vpack.c.bf16 %v8625, %v8623
  %v8770 = vpack.c.bf16 %v8629, %v8627
  %8771 = vmatprep.subr.bf16.mxu0 0
  %8772 = vmatpush1.bf16.msra.mxu0 %v8765
  %8773 = vmatprep.subr.bf16.mxu0 0
  %8774 = vmatpush1.bf16.msra.mxu0 %v8766
  %8775 = vmatprep.subr.bf16.mxu0 0
  %8776 = vmatpush1.bf16.msra.mxu0 %v8767
  %8777 = vmatprep.subr.bf16.mxu0 0
  %8778 = vmatpush1.bf16.msra.mxu0 %v8768
  %8779 = vmatprep.subr.bf16.mxu0 0
  %8780 = vmatpush1.bf16.msra.mxu0 %v8769
  %8781 = vmatprep.subr.bf16.mxu0 0
  %8782 = vmatpush1.bf16.msra.mxu0 %v8770
  %8783 = vmatprep.subr.bf16.mxu0 0
  %8784 = vmatpush1.bf16.msra.mxu0 0
  %8785 = vmatprep.subr.bf16.mxu0 0
  %8786 = vmatpush1.bf16.msra.mxu0 0
  %8787 = vmatprep.subr.bf16.mxu0 0
  %8788 = vmatpush1.bf16.msra.mxu0 0
  %8789 = vmatprep.subr.bf16.mxu0 0
  %8790 = vmatpush1.bf16.msra.mxu0 0
  %8791 = vmatprep.subr.bf16.mxu0 0
  %8792 = vmatpush1.bf16.msra.mxu0 0
  %8793 = vmatprep.subr.bf16.mxu0 0
  %8794 = vmatpush1.bf16.msra.mxu0 0
  %8795 = vmatprep.subr.bf16.mxu0 0
  %8796 = vmatpush1.bf16.msra.mxu0 0
  %8797 = vmatprep.subr.bf16.mxu0 0
  %8798 = vmatpush1.bf16.msra.mxu0 0
  %8799 = vmatprep.subr.bf16.mxu0 0
  %8800 = vmatpush1.bf16.msra.mxu0 0
  %8801 = vmatprep.subr.bf16.mxu0 0
  %8802 = vmatpush1.bf16.msra.mxu0 0
  %8803 = vmatprep.mubr.bf16.mxu0 0
  %8804 = vmatmul.mubr.bf16.gmra.mrb[0].mxu0 %v3727
  %v8805 = vpop.f32.mrb[0].mxu0
  %v8806 = vadd.f32 0.0, %v8805
  %v8807 = vpop.f32.mrb[0].mxu0
  %v8808 = vpop.f32.mrb[0].mxu0
  %v8809 = vadd.f32 0.0, %v8808
  %v8810 = vpop.f32.mrb[0].mxu0
  %8811 = vmatprep.mubr.bf16.mxu0 0
  %8812 = vmatmul.mubr.bf16.gmra.mrb[0].mxu0 %v3730
  %v8813 = vpop.f32.mrb[0].mxu0
  %v8814 = vadd.f32 0.0, %v8813
  %v8815 = vpop.f32.mrb[0].mxu0
  %v8816 = vpop.f32.mrb[0].mxu0
  %v8817 = vadd.f32 0.0, %v8816
  %v8818 = vpop.f32.mrb[0].mxu0
  %8819 = vmatprep.mubr.bf16.mxu0 0
  %8820 = vmatmul.mubr.bf16.gmra.mrb[0].mxu0 %v3733
  %v8821 = vpop.f32.mrb[0].mxu0
  %v8822 = vadd.f32 0.0, %v8821
  %v8823 = vpop.f32.mrb[0].mxu0
  %v8824 = vpop.f32.mrb[0].mxu0
  %v8825 = vadd.f32 0.0, %v8824
  %v8826 = vpop.f32.mrb[0].mxu0
  %8827 = vdwg.mxu0
  %vm8828 = vcmp.eq.f32.partialorder %v8806, 0.0
  %vm8829 = vcmp.eq.f32.partialorder %v8809, 0.0
  %vm8830 = vcmp.eq.f32.partialorder %v8814, 0.0
  %vm8831 = vcmp.eq.f32.partialorder %v8817, 0.0
  %vm8832 = vcmp.eq.f32.partialorder %v8822, 0.0
  %vm8833 = vcmp.eq.f32.partialorder %v8825, 0.0
  %v8834 = vsel %vm8828, 1.0, %v8806
  %v8835 = vsel %vm8829, 1.0, %v8809
  %v8836 = vsel %vm8830, 1.0, %v8814
  %v8837 = vsel %vm8831, 1.0, %v8817
  %v8838 = vsel %vm8832, 1.0, %v8822
  %v8839 = vsel %vm8833, 1.0, %v8825
  %v8840 = vrcp.pop %v8834
  %v8841 = vrcp.pop %v8835
  %v8842 = vrcp.pop %v8836
  %v8843 = vrcp.pop %v8837
  %v8844 = vrcp.pop %v8838
  %v8845 = vrcp.pop %v8839
  %8847 = vset.pattern.permute.xlu0 0
  %8848 = vperm.xlu0 %8847, %v8840
  %v8849 = vpop.permute.xlu0 %8848
  %8852 = vset.pattern.permute.xlu0 0
  %8853 = vperm.xlu0 %8852, %v8841
  %v8854 = vpop.permute.xlu0 %8853
  %8857 = vset.pattern.permute.xlu0 0
  %8858 = vperm.xlu0 %8857, %v8842
  %v8859 = vpop.permute.xlu0 %8858
  %8862 = vset.pattern.permute.xlu0 0
  %8863 = vperm.xlu0 %8862, %v8843
  %v8864 = vpop.permute.xlu0 %8863
  %8867 = vset.pattern.permute.xlu0 0
  %8868 = vperm.xlu0 %8867, %v8844
  %v8869 = vpop.permute.xlu0 %8868
  %8872 = vset.pattern.permute.xlu0 0
  %8873 = vperm.xlu0 %8872, %v8845
  %v8874 = vpop.permute.xlu0 %8873
  %v8876 = vmul.f32 %v8743, %v8849
  %v8877 = vmul.f32 %v8746, %v8854
  %v8878 = vmul.f32 %v8751, %v8859
  %v8879 = vmul.f32 %v8754, %v8864
  %v8880 = vmul.f32 %v8759, %v8869
  %v8881 = vmul.f32 %v8762, %v8874
  %v8882 = vsel %vm1416, %v7516, 0.0
  %8883 = vadd.xlane.f32.xlu0 %v8882
  %v8884 = vpop.xlane.xlu0 %8883
  %v8885 = vsel %vm1416, %v7518, 0.0
  %8886 = vadd.xlane.f32.xlu0 %v8885
  %v8887 = vpop.xlane.xlu0 %8886
  %v8888 = vsel %vm1416, %v7520, 0.0
  %8889 = vadd.xlane.f32.xlu0 %v8888
  %v8890 = vpop.xlane.xlu0 %8889
  %v8891 = vsel %vm1416, %v7522, 0.0
  %8892 = vadd.xlane.f32.xlu0 %v8891
  %v8893 = vpop.xlane.xlu0 %8892
  %v8894 = vsel %vm1416, %v7524, 0.0
  %8895 = vadd.xlane.f32.xlu0 %v8894
  %v8896 = vpop.xlane.xlu0 %8895
  %v8897 = vsel %vm1416, %v7526, 0.0
  %8898 = vadd.xlane.f32.xlu0 %v8897
  %v8899 = vpop.xlane.xlu0 %8898
  %v8900 = vsel %vm1416, %v7528, 0.0
  %8901 = vadd.xlane.f32.xlu0 %v8900
  %v8902 = vpop.xlane.xlu0 %8901
  %v8903 = vsel %vm1416, %v7530, 0.0
  %8904 = vadd.xlane.f32.xlu0 %v8903
  %v8905 = vpop.xlane.xlu0 %8904
  %v8906 = vsel %vm1416, %v7532, 0.0
  %8907 = vadd.xlane.f32.xlu0 %v8906
  %v8908 = vpop.xlane.xlu0 %8907
  %v8909 = vsel %vm1416, %v7534, 0.0
  %8910 = vadd.xlane.f32.xlu0 %v8909
  %v8911 = vpop.xlane.xlu0 %8910
  %v8912 = vsel %vm1416, %v7536, 0.0
  %8913 = vadd.xlane.f32.xlu0 %v8912
  %v8914 = vpop.xlane.xlu0 %8913
  %v8915 = vsel %vm1416, %v7538, 0.0
  %8916 = vadd.xlane.f32.xlu0 %v8915
  %v8917 = vpop.xlane.xlu0 %8916
  %v8918 = vmul.f32 %v8884, 0.25
  %v8919 = vmul.f32 %v8887, 0.25
  %v8920 = vmul.f32 %v8890, 0.25
  %v8921 = vmul.f32 %v8893, 0.25
  %v8922 = vmul.f32 %v8896, 0.25
  %v8923 = vmul.f32 %v8899, 0.25
  %v8924 = vmul.f32 %v8902, 0.25
  %v8925 = vmul.f32 %v8905, 0.25
  %v8926 = vmul.f32 %v8908, 0.25
  %v8927 = vmul.f32 %v8911, 0.25
  %v8928 = vmul.f32 %v8914, 0.25
  %v8929 = vmul.f32 %v8917, 0.25
  %v8930 = vld [vmem:[%s55] sm:$0xff]
  %v8931 = vld [vmem:[%s55 + $0x8] sm:$0xff]
  %v8932 = vld [vmem:[%s55 + $0x10] sm:$0xff]
  %v8933 = vld [vmem:[%s55 + $0x18] sm:$0xff]
  %v8934 = vld [vmem:[%s55 + $0x20] sm:$0xff]
  %v8935 = vld [vmem:[%s55 + $0x28] sm:$0xff]
  %v8936 = vld [vmem:[%s55 + $0x30] sm:$0xff]
  %v8937 = vld [vmem:[%s55 + $0x38] sm:$0xff]
  %v8938 = vld [vmem:[%s57] sm:$0x1]
  %v8940 = vlaneseq
  %v8941 = vshrl.u32 %v8940, 7
  %v8942 = vsub.s32 0, %v8941
  %v8943 = vrot.slane %v8938, %v8942
  %v8946 = vsel %vm696, %v8876, 0
  %v8949 = vsel %vm696, %v8877, 0
  %v8952 = vsel %vm696, %v8878, 0
  %v8955 = vsel %vm696, %v8879, 0
  %v8958 = vsel %vm696, %v8880, 0
  %v8961 = vsel %vm696, %v8881, 0
  %8963 = vmatprep.subr.mxu0 0.0
  %8964 = vmatpush1.msra.mxu0 %v8930
  %8965 = vmatprep.subr.mxu0 0.0
  %8966 = vmatpush1.msra.mxu0 %v8931
  %8967 = vmatprep.subr.mxu0 0.0
  %8968 = vmatpush1.msra.mxu0 %v8932
  %8969 = vmatprep.subr.mxu0 0.0
  %8970 = vmatpush1.msra.mxu0 %v8933
  %8971 = vmatprep.subr.mxu0 0.0
  %8972 = vmatpush1.msra.mxu0 %v8934
  %8973 = vmatprep.subr.mxu0 0.0
  %8974 = vmatpush1.msra.mxu0 %v8935
  %8975 = vmatprep.subr.mxu0 0.0
  %8976 = vmatpush1.msra.mxu0 %v8936
  %8977 = vmatprep.subr.mxu0 0.0
  %8978 = vmatpush1.msra.mxu0 %v8937
  %8979 = vmatprep.subr.mxu0 0.0
  %8980 = vmatpush1.msra.mxu0 0.0
  %8981 = vmatprep.subr.mxu0 0.0
  %8982 = vmatpush1.msra.mxu0 0.0
  %8983 = vmatprep.subr.mxu0 0.0
  %8984 = vmatpush1.msra.mxu0 0.0
  %8985 = vmatprep.subr.mxu0 0.0
  %8986 = vmatpush1.msra.mxu0 0.0
  %8987 = vmatprep.subr.mxu0 0.0
  %8988 = vmatpush1.msra.mxu0 0.0
  %8989 = vmatprep.subr.mxu0 0.0
  %8990 = vmatpush1.msra.mxu0 0.0
  %8991 = vmatprep.subr.mxu0 0.0
  %8992 = vmatpush1.msra.mxu0 0.0
  %8993 = vmatprep.subr.mxu0 0.0
  %8994 = vmatpush1.msra.mxu0 0.0
  %8995 = vmatprep.subr.mxu0 0.0
  %8996 = vmatpush1.msra.mxu0 0.0
  %8997 = vmatprep.subr.mxu0 0.0
  %8998 = vmatpush1.msra.mxu0 0.0
  %8999 = vmatprep.subr.mxu0 0.0
  %9000 = vmatpush1.msra.mxu0 0.0
  %9001 = vmatprep.subr.mxu0 0.0
  %9002 = vmatpush1.msra.mxu0 0.0
  %9003 = vmatprep.subr.mxu0 0.0
  %9004 = vmatpush1.msra.mxu0 0.0
  %9005 = vmatprep.subr.mxu0 0.0
  %9006 = vmatpush1.msra.mxu0 0.0
  %9007 = vmatprep.subr.mxu0 0.0
  %9008 = vmatpush1.msra.mxu0 0.0
  %9009 = vmatprep.subr.mxu0 0.0
  %9010 = vmatpush1.msra.mxu0 0.0
  %9011 = vmatprep.subr.mxu0 0.0
  %9012 = vmatpush1.msra.mxu0 0.0
  %9013 = vmatprep.subr.mxu0 0.0
  %9014 = vmatpush1.msra.mxu0 0.0
  %9015 = vmatprep.subr.mxu0 0.0
  %9016 = vmatpush1.msra.mxu0 0.0
  %9017 = vmatprep.subr.mxu0 0.0
  %9018 = vmatpush1.msra.mxu0 0.0
  %9019 = vmatprep.subr.mxu0 0.0
  %9020 = vmatpush1.msra.mxu0 0.0
  %9021 = vmatprep.subr.mxu0 0.0
  %9022 = vmatpush1.msra.mxu0 0.0
  %9023 = vmatprep.subr.mxu0 0.0
  %9024 = vmatpush1.msra.mxu0 0.0
  %9025 = vmatprep.subr.mxu0 0.0
  %9026 = vmatpush1.msra.mxu0 0.0
  %9027 = vmatprep.mubr.f32.mxu0 0.0
  %9028 = vmatmul.mubr.f32.gmra.mrb[0].mxu0 %v8946
  %v9029 = vpop.f32.mrb[0].mxu0
  %v9030 = vadd.f32 %v8943, %v9029
  %v9031 = vpop.f32.mrb[0].mxu0
  %9032 = vmatprep.mubr.f32.mxu0 0.0
  %9033 = vmatmul.mubr.f32.gmra.mrb[0].mxu0 %v8949
  %v9034 = vpop.f32.mrb[0].mxu0
  %v9035 = vadd.f32 %v8943, %v9034
  %v9036 = vpop.f32.mrb[0].mxu0
  %9037 = vmatprep.mubr.f32.mxu0 0.0
  %9038 = vmatmul.mubr.f32.gmra.mrb[0].mxu0 %v8952
  %v9039 = vpop.f32.mrb[0].mxu0
  %v9040 = vadd.f32 %v8943, %v9039
  %v9041 = vpop.f32.mrb[0].mxu0
  %9042 = vmatprep.mubr.f32.mxu0 0.0
  %9043 = vmatmul.mubr.f32.gmra.mrb[0].mxu0 %v8955
  %v9044 = vpop.f32.mrb[0].mxu0
  %v9045 = vadd.f32 %v8943, %v9044
  %v9046 = vpop.f32.mrb[0].mxu0
  %9047 = vmatprep.mubr.f32.mxu0 0.0
  %9048 = vmatmul.mubr.f32.gmra.mrb[0].mxu0 %v8958
  %v9049 = vpop.f32.mrb[0].mxu0
  %v9050 = vadd.f32 %v8943, %v9049
  %v9051 = vpop.f32.mrb[0].mxu0
  %9052 = vmatprep.mubr.f32.mxu0 0.0
  %9053 = vmatmul.mubr.f32.gmra.mrb[0].mxu0 %v8961
  %v9054 = vpop.f32.mrb[0].mxu0
  %v9055 = vadd.f32 %v8943, %v9054
  %v9056 = vpop.f32.mrb[0].mxu0
  %9057 = vdwg.mxu0
  %v9058 = vmax.f32 %v9030, 0.0
  %v9059 = vmax.f32 %v9035, 0.0
  %v9060 = vmax.f32 %v9040, 0.0
  %v9061 = vmax.f32 %v9045, 0.0
  %v9062 = vmax.f32 %v9050, 0.0
  %v9063 = vmax.f32 %v9055, 0.0
  %v9064 = vld [vmem:[%s59] sm:$0x1]
  %v9065 = vld [vmem:[%s61] sm:$0x1]
  %v9066 = vsel %vm696, %v9058, 0.0
  %9067 = vadd.xlane.f32.xlu0 %v9066
  %v9068 = vpop.xlane.xlu0 %9067
  %v9069 = vsel %vm696, %v9059, 0.0
  %9070 = vadd.xlane.f32.xlu0 %v9069
  %v9071 = vpop.xlane.xlu0 %9070
  %v9072 = vsel %vm696, %v9060, 0.0
  %9073 = vadd.xlane.f32.xlu0 %v9072
  %v9074 = vpop.xlane.xlu0 %9073
  %v9075 = vsel %vm696, %v9061, 0.0
  %9076 = vadd.xlane.f32.xlu0 %v9075
  %v9077 = vpop.xlane.xlu0 %9076
  %v9078 = vsel %vm696, %v9062, 0.0
  %9079 = vadd.xlane.f32.xlu0 %v9078
  %v9080 = vpop.xlane.xlu0 %9079
  %v9081 = vsel %vm696, %v9063, 0.0
  %9082 = vadd.xlane.f32.xlu0 %v9081
  %v9083 = vpop.xlane.xlu0 %9082
  %v9084 = vrcp.pop 64.0
  %v9085 = vmul.f32 %v9068, %v9084
  %v9086 = vmul.f32 %v9071, %v9084
  %v9087 = vmul.f32 %v9074, %v9084
  %v9088 = vmul.f32 %v9077, %v9084
  %v9089 = vmul.f32 %v9080, %v9084
  %v9090 = vmul.f32 %v9083, %v9084
  %v9091 = vsub.f32 %v9058, %v9085
  %v9092 = vsub.f32 %v9059, %v9086
  %v9093 = vsub.f32 %v9060, %v9087
  %v9094 = vsub.f32 %v9061, %v9088
  %v9095 = vsub.f32 %v9062, %v9089
  %v9096 = vsub.f32 %v9063, %v9090
  %v9097 = vmul.f32 %v9091, %v9091
  %v9098 = vmul.f32 %v9092, %v9092
  %v9099 = vmul.f32 %v9093, %v9093
  %v9100 = vmul.f32 %v9094, %v9094
  %v9101 = vmul.f32 %v9095, %v9095
  %v9102 = vmul.f32 %v9096, %v9096
  %v9103 = vsel %vm696, %v9097, 0.0
  %9104 = vadd.xlane.f32.xlu0 %v9103
  %v9105 = vpop.xlane.xlu0 %9104
  %v9106 = vsel %vm696, %v9098, 0.0
  %9107 = vadd.xlane.f32.xlu0 %v9106
  %v9108 = vpop.xlane.xlu0 %9107
  %v9109 = vsel %vm696, %v9099, 0.0
  %9110 = vadd.xlane.f32.xlu0 %v9109
  %v9111 = vpop.xlane.xlu0 %9110
  %v9112 = vsel %vm696, %v9100, 0.0
  %9113 = vadd.xlane.f32.xlu0 %v9112
  %v9114 = vpop.xlane.xlu0 %9113
  %v9115 = vsel %vm696, %v9101, 0.0
  %9116 = vadd.xlane.f32.xlu0 %v9115
  %v9117 = vpop.xlane.xlu0 %9116
  %v9118 = vsel %vm696, %v9102, 0.0
  %9119 = vadd.xlane.f32.xlu0 %v9118
  %v9120 = vpop.xlane.xlu0 %9119
  %v9121 = vmul.f32 %v9105, %v9084
  %v9122 = vmul.f32 %v9108, %v9084
  %v9123 = vmul.f32 %v9111, %v9084
  %v9124 = vmul.f32 %v9114, %v9084
  %v9125 = vmul.f32 %v9117, %v9084
  %v9126 = vmul.f32 %v9120, %v9084
  %v9127 = vadd.f32 %v9121, 1e-05
  %v9128 = vadd.f32 %v9122, 1e-05
  %v9129 = vadd.f32 %v9123, 1e-05
  %v9130 = vadd.f32 %v9124, 1e-05
  %v9131 = vadd.f32 %v9125, 1e-05
  %v9132 = vadd.f32 %v9126, 1e-05
  %v9133 = vrsqrt.pop %v9127
  %v9134 = vrsqrt.pop %v9128
  %v9135 = vrsqrt.pop %v9129
  %v9136 = vrsqrt.pop %v9130
  %v9137 = vrsqrt.pop %v9131
  %v9138 = vrsqrt.pop %v9132
  %v9139 = vmul.f32 %v9091, %v9133
  %v9140 = vmul.f32 %v9092, %v9134
  %v9141 = vmul.f32 %v9093, %v9135
  %v9142 = vmul.f32 %v9094, %v9136
  %v9143 = vmul.f32 %v9095, %v9137
  %v9144 = vmul.f32 %v9096, %v9138
  %v9146 = vlaneseq
  %v9147 = vshrl.u32 %v9146, 7
  %v9148 = vsub.s32 0, %v9147
  %v9149 = vrot.slane %v9064, %v9148
  %v9151 = vmul.f32 %v9139, %v9149
  %v9152 = vmul.f32 %v9140, %v9149
  %v9153 = vmul.f32 %v9141, %v9149
  %v9154 = vmul.f32 %v9142, %v9149
  %v9155 = vmul.f32 %v9143, %v9149
  %v9156 = vmul.f32 %v9144, %v9149
  %v9158 = vlaneseq
  %v9159 = vshrl.u32 %v9158, 7
  %v9160 = vsub.s32 0, %v9159
  %v9161 = vrot.slane %v9065, %v9160
  %v9163 = vadd.f32 %v9151, %v9161
  %v9164 = vadd.f32 %v9152, %v9161
  %v9165 = vadd.f32 %v9153, %v9161
  %v9166 = vadd.f32 %v9154, %v9161
  %v9167 = vadd.f32 %v9155, %v9161
  %v9168 = vadd.f32 %v9156, %v9161
  %v9169 = vld [vmem:[%s63] sm:$0xff]
  %v9170 = vld [vmem:[%s63 + $0x8] sm:$0xff]
  %v9171 = vld [vmem:[%s63 + $0x10] sm:$0xff]
  %v9172 = vld [vmem:[%s63 + $0x18] sm:$0xff]
  %v9173 = vld [vmem:[%s63 + $0x20] sm:$0xff]
  %v9174 = vld [vmem:[%s63 + $0x28] sm:$0xff]
  %v9175 = vld [vmem:[%s63 + $0x30] sm:$0xff]
  %v9176 = vld [vmem:[%s63 + $0x38] sm:$0xff]
  %v9177 = vld [vmem:[%s65] sm:$0x1]
  %v9179 = vlaneseq
  %v9180 = vshrl.u32 %v9179, 7
  %v9181 = vsub.s32 0, %v9180
  %v9182 = vrot.slane %v9177, %v9181
  %v9185 = vsel %vm696, %v9163, 0
  %v9188 = vsel %vm696, %v9164, 0
  %v9191 = vsel %vm696, %v9165, 0
  %v9194 = vsel %vm696, %v9166, 0
  %v9197 = vsel %vm696, %v9167, 0
  %v9200 = vsel %vm696, %v9168, 0
  %9202 = vmatprep.subr.mxu0 0.0
  %9203 = vmatpush1.msra.mxu0 %v9169
  %9204 = vmatprep.subr.mxu0 0.0
  %9205 = vmatpush1.msra.mxu0 %v9170
  %9206 = vmatprep.subr.mxu0 0.0
  %9207 = vmatpush1.msra.mxu0 %v9171
  %9208 = vmatprep.subr.mxu0 0.0
  %9209 = vmatpush1.msra.mxu0 %v9172
  %9210 = vmatprep.subr.mxu0 0.0
  %9211 = vmatpush1.msra.mxu0 %v9173
  %9212 = vmatprep.subr.mxu0 0.0
  %9213 = vmatpush1.msra.mxu0 %v9174
  %9214 = vmatprep.subr.mxu0 0.0
  %9215 = vmatpush1.msra.mxu0 %v9175
  %9216 = vmatprep.subr.mxu0 0.0
  %9217 = vmatpush1.msra.mxu0 %v9176
  %9218 = vmatprep.subr.mxu0 0.0
  %9219 = vmatpush1.msra.mxu0 0.0
  %9220 = vmatprep.subr.mxu0 0.0
  %9221 = vmatpush1.msra.mxu0 0.0
  %9222 = vmatprep.subr.mxu0 0.0
  %9223 = vmatpush1.msra.mxu0 0.0
  %9224 = vmatprep.subr.mxu0 0.0
  %9225 = vmatpush1.msra.mxu0 0.0
  %9226 = vmatprep.subr.mxu0 0.0
  %9227 = vmatpush1.msra.mxu0 0.0
  %9228 = vmatprep.subr.mxu0 0.0
  %9229 = vmatpush1.msra.mxu0 0.0
  %9230 = vmatprep.subr.mxu0 0.0
  %9231 = vmatpush1.msra.mxu0 0.0
  %9232 = vmatprep.subr.mxu0 0.0
  %9233 = vmatpush1.msra.mxu0 0.0
  %9234 = vmatprep.subr.mxu0 0.0
  %9235 = vmatpush1.msra.mxu0 0.0
  %9236 = vmatprep.subr.mxu0 0.0
  %9237 = vmatpush1.msra.mxu0 0.0
  %9238 = vmatprep.subr.mxu0 0.0
  %9239 = vmatpush1.msra.mxu0 0.0
  %9240 = vmatprep.subr.mxu0 0.0
  %9241 = vmatpush1.msra.mxu0 0.0
  %9242 = vmatprep.subr.mxu0 0.0
  %9243 = vmatpush1.msra.mxu0 0.0
  %9244 = vmatprep.subr.mxu0 0.0
  %9245 = vmatpush1.msra.mxu0 0.0
  %9246 = vmatprep.subr.mxu0 0.0
  %9247 = vmatpush1.msra.mxu0 0.0
  %9248 = vmatprep.subr.mxu0 0.0
  %9249 = vmatpush1.msra.mxu0 0.0
  %9250 = vmatprep.subr.mxu0 0.0
  %9251 = vmatpush1.msra.mxu0 0.0
  %9252 = vmatprep.subr.mxu0 0.0
  %9253 = vmatpush1.msra.mxu0 0.0
  %9254 = vmatprep.subr.mxu0 0.0
  %9255 = vmatpush1.msra.mxu0 0.0
  %9256 = vmatprep.subr.mxu0 0.0
  %9257 = vmatpush1.msra.mxu0 0.0
  %9258 = vmatprep.subr.mxu0 0.0
  %9259 = vmatpush1.msra.mxu0 0.0
  %9260 = vmatprep.subr.mxu0 0.0
  %9261 = vmatpush1.msra.mxu0 0.0
  %9262 = vmatprep.subr.mxu0 0.0
  %9263 = vmatpush1.msra.mxu0 0.0
  %9264 = vmatprep.subr.mxu0 0.0
  %9265 = vmatpush1.msra.mxu0 0.0
  %9266 = vmatprep.mubr.f32.mxu0 0.0
  %9267 = vmatmul.mubr.f32.gmra.mrb[0].mxu0 %v9185
  %v9268 = vpop.f32.mrb[0].mxu0
  %v9269 = vadd.f32 %v9182, %v9268
  %v9270 = vpop.f32.mrb[0].mxu0
  %9271 = vmatprep.mubr.f32.mxu0 0.0
  %9272 = vmatmul.mubr.f32.gmra.mrb[0].mxu0 %v9188
  %v9273 = vpop.f32.mrb[0].mxu0
  %v9274 = vadd.f32 %v9182, %v9273
  %v9275 = vpop.f32.mrb[0].mxu0
  %9276 = vmatprep.mubr.f32.mxu0 0.0
  %9277 = vmatmul.mubr.f32.gmra.mrb[0].mxu0 %v9191
  %v9278 = vpop.f32.mrb[0].mxu0
  %v9279 = vadd.f32 %v9182, %v9278
  %v9280 = vpop.f32.mrb[0].mxu0
  %9281 = vmatprep.mubr.f32.mxu0 0.0
  %9282 = vmatmul.mubr.f32.gmra.mrb[0].mxu0 %v9194
  %v9283 = vpop.f32.mrb[0].mxu0
  %v9284 = vadd.f32 %v9182, %v9283
  %v9285 = vpop.f32.mrb[0].mxu0
  %9286 = vmatprep.mubr.f32.mxu0 0.0
  %9287 = vmatmul.mubr.f32.gmra.mrb[0].mxu0 %v9197
  %v9288 = vpop.f32.mrb[0].mxu0
  %v9289 = vadd.f32 %v9182, %v9288
  %v9290 = vpop.f32.mrb[0].mxu0
  %9291 = vmatprep.mubr.f32.mxu0 0.0
  %9292 = vmatmul.mubr.f32.gmra.mrb[0].mxu0 %v9200
  %v9293 = vpop.f32.mrb[0].mxu0
  %v9294 = vadd.f32 %v9182, %v9293
  %v9295 = vpop.f32.mrb[0].mxu0
  %9296 = vdwg.mxu0
  %v9297 = vmax.f32 %v9269, 0.0
  %v9298 = vmax.f32 %v9274, 0.0
  %v9299 = vmax.f32 %v9279, 0.0
  %v9300 = vmax.f32 %v9284, 0.0
  %v9301 = vmax.f32 %v9289, 0.0
  %v9302 = vmax.f32 %v9294, 0.0
  %v9303 = vld [vmem:[%s67] sm:$0x1]
  %v9304 = vld [vmem:[%s69] sm:$0x1]
  %v9305 = vsel %vm696, %v9297, 0.0
  %9306 = vadd.xlane.f32.xlu0 %v9305
  %v9307 = vpop.xlane.xlu0 %9306
  %v9308 = vsel %vm696, %v9298, 0.0
  %9309 = vadd.xlane.f32.xlu0 %v9308
  %v9310 = vpop.xlane.xlu0 %9309
  %v9311 = vsel %vm696, %v9299, 0.0
  %9312 = vadd.xlane.f32.xlu0 %v9311
  %v9313 = vpop.xlane.xlu0 %9312
  %v9314 = vsel %vm696, %v9300, 0.0
  %9315 = vadd.xlane.f32.xlu0 %v9314
  %v9316 = vpop.xlane.xlu0 %9315
  %v9317 = vsel %vm696, %v9301, 0.0
  %9318 = vadd.xlane.f32.xlu0 %v9317
  %v9319 = vpop.xlane.xlu0 %9318
  %v9320 = vsel %vm696, %v9302, 0.0
  %9321 = vadd.xlane.f32.xlu0 %v9320
  %v9322 = vpop.xlane.xlu0 %9321
  %v9323 = vmul.f32 %v9307, %v9084
  %v9324 = vmul.f32 %v9310, %v9084
  %v9325 = vmul.f32 %v9313, %v9084
  %v9326 = vmul.f32 %v9316, %v9084
  %v9327 = vmul.f32 %v9319, %v9084
  %v9328 = vmul.f32 %v9322, %v9084
  %v9329 = vsub.f32 %v9297, %v9323
  %v9330 = vsub.f32 %v9298, %v9324
  %v9331 = vsub.f32 %v9299, %v9325
  %v9332 = vsub.f32 %v9300, %v9326
  %v9333 = vsub.f32 %v9301, %v9327
  %v9334 = vsub.f32 %v9302, %v9328
  %v9335 = vmul.f32 %v9329, %v9329
  %v9336 = vmul.f32 %v9330, %v9330
  %v9337 = vmul.f32 %v9331, %v9331
  %v9338 = vmul.f32 %v9332, %v9332
  %v9339 = vmul.f32 %v9333, %v9333
  %v9340 = vmul.f32 %v9334, %v9334
  %v9341 = vsel %vm696, %v9335, 0.0
  %9342 = vadd.xlane.f32.xlu0 %v9341
  %v9343 = vpop.xlane.xlu0 %9342
  %v9344 = vsel %vm696, %v9336, 0.0
  %9345 = vadd.xlane.f32.xlu0 %v9344
  %v9346 = vpop.xlane.xlu0 %9345
  %v9347 = vsel %vm696, %v9337, 0.0
  %9348 = vadd.xlane.f32.xlu0 %v9347
  %v9349 = vpop.xlane.xlu0 %9348
  %v9350 = vsel %vm696, %v9338, 0.0
  %9351 = vadd.xlane.f32.xlu0 %v9350
  %v9352 = vpop.xlane.xlu0 %9351
  %v9353 = vsel %vm696, %v9339, 0.0
  %9354 = vadd.xlane.f32.xlu0 %v9353
  %v9355 = vpop.xlane.xlu0 %9354
  %v9356 = vsel %vm696, %v9340, 0.0
  %9357 = vadd.xlane.f32.xlu0 %v9356
  %v9358 = vpop.xlane.xlu0 %9357
  %v9359 = vmul.f32 %v9343, %v9084
  %v9360 = vmul.f32 %v9346, %v9084
  %v9361 = vmul.f32 %v9349, %v9084
  %v9362 = vmul.f32 %v9352, %v9084
  %v9363 = vmul.f32 %v9355, %v9084
  %v9364 = vmul.f32 %v9358, %v9084
  %v9365 = vadd.f32 %v9359, 1e-05
  %v9366 = vadd.f32 %v9360, 1e-05
  %v9367 = vadd.f32 %v9361, 1e-05
  %v9368 = vadd.f32 %v9362, 1e-05
  %v9369 = vadd.f32 %v9363, 1e-05
  %v9370 = vadd.f32 %v9364, 1e-05
  %v9371 = vrsqrt.pop %v9365
  %v9372 = vrsqrt.pop %v9366
  %v9373 = vrsqrt.pop %v9367
  %v9374 = vrsqrt.pop %v9368
  %v9375 = vrsqrt.pop %v9369
  %v9376 = vrsqrt.pop %v9370
  %v9377 = vmul.f32 %v9329, %v9371
  %v9378 = vmul.f32 %v9330, %v9372
  %v9379 = vmul.f32 %v9331, %v9373
  %v9380 = vmul.f32 %v9332, %v9374
  %v9381 = vmul.f32 %v9333, %v9375
  %v9382 = vmul.f32 %v9334, %v9376
  %v9384 = vlaneseq
  %v9385 = vshrl.u32 %v9384, 7
  %v9386 = vsub.s32 0, %v9385
  %v9387 = vrot.slane %v9303, %v9386
  %v9389 = vmul.f32 %v9377, %v9387
  %v9390 = vmul.f32 %v9378, %v9387
  %v9391 = vmul.f32 %v9379, %v9387
  %v9392 = vmul.f32 %v9380, %v9387
  %v9393 = vmul.f32 %v9381, %v9387
  %v9394 = vmul.f32 %v9382, %v9387
  %v9396 = vlaneseq
  %v9397 = vshrl.u32 %v9396, 7
  %v9398 = vsub.s32 0, %v9397
  %v9399 = vrot.slane %v9304, %v9398
  %v9401 = vadd.f32 %v9389, %v9399
  %v9402 = vadd.f32 %v9390, %v9399
  %v9403 = vadd.f32 %v9391, %v9399
  %v9404 = vadd.f32 %v9392, %v9399
  %v9405 = vadd.f32 %v9393, %v9399
  %v9406 = vadd.f32 %v9394, %v9399
  %v9407 = vld [vmem:[%s71] sm:$0xff]
  %v9408 = vld [vmem:[%s71 + $0x8] sm:$0xff]
  %v9409 = vld [vmem:[%s71 + $0x10] sm:$0xff]
  %v9410 = vld [vmem:[%s71 + $0x18] sm:$0xff]
  %v9411 = vld [vmem:[%s71 + $0x20] sm:$0xff]
  %v9412 = vld [vmem:[%s71 + $0x28] sm:$0xff]
  %v9413 = vld [vmem:[%s71 + $0x30] sm:$0xff]
  %v9414 = vld [vmem:[%s71 + $0x38] sm:$0xff]
  %vm9415 = vcmp.lt.s32.totalorder %v159, 2
  %v9416 = vsel %vm9415, 0.0, -1e+30
  %v9418 = vsel %vm696, %v9401, 0
  %v9421 = vsel %vm696, %v9402, 0
  %v9424 = vsel %vm696, %v9403, 0
  %v9427 = vsel %vm696, %v9404, 0
  %v9430 = vsel %vm696, %v9405, 0
  %v9433 = vsel %vm696, %v9406, 0
  %9435 = vmatprep.subr.mxu0 0.0
  %9436 = vmatpush1.msra.mxu0 %v9407
  %9437 = vmatprep.subr.mxu0 0.0
  %9438 = vmatpush1.msra.mxu0 %v9408
  %9439 = vmatprep.subr.mxu0 0.0
  %9440 = vmatpush1.msra.mxu0 %v9409
  %9441 = vmatprep.subr.mxu0 0.0
  %9442 = vmatpush1.msra.mxu0 %v9410
  %9443 = vmatprep.subr.mxu0 0.0
  %9444 = vmatpush1.msra.mxu0 %v9411
  %9445 = vmatprep.subr.mxu0 0.0
  %9446 = vmatpush1.msra.mxu0 %v9412
  %9447 = vmatprep.subr.mxu0 0.0
  %9448 = vmatpush1.msra.mxu0 %v9413
  %9449 = vmatprep.subr.mxu0 0.0
  %9450 = vmatpush1.msra.mxu0 %v9414
  %9451 = vmatprep.subr.mxu0 0.0
  %9452 = vmatpush1.msra.mxu0 0.0
  %9453 = vmatprep.subr.mxu0 0.0
  %9454 = vmatpush1.msra.mxu0 0.0
  %9455 = vmatprep.subr.mxu0 0.0
  %9456 = vmatpush1.msra.mxu0 0.0
  %9457 = vmatprep.subr.mxu0 0.0
  %9458 = vmatpush1.msra.mxu0 0.0
  %9459 = vmatprep.subr.mxu0 0.0
  %9460 = vmatpush1.msra.mxu0 0.0
  %9461 = vmatprep.subr.mxu0 0.0
  %9462 = vmatpush1.msra.mxu0 0.0
  %9463 = vmatprep.subr.mxu0 0.0
  %9464 = vmatpush1.msra.mxu0 0.0
  %9465 = vmatprep.subr.mxu0 0.0
  %9466 = vmatpush1.msra.mxu0 0.0
  %9467 = vmatprep.subr.mxu0 0.0
  %9468 = vmatpush1.msra.mxu0 0.0
  %9469 = vmatprep.subr.mxu0 0.0
  %9470 = vmatpush1.msra.mxu0 0.0
  %9471 = vmatprep.subr.mxu0 0.0
  %9472 = vmatpush1.msra.mxu0 0.0
  %9473 = vmatprep.subr.mxu0 0.0
  %9474 = vmatpush1.msra.mxu0 0.0
  %9475 = vmatprep.subr.mxu0 0.0
  %9476 = vmatpush1.msra.mxu0 0.0
  %9477 = vmatprep.subr.mxu0 0.0
  %9478 = vmatpush1.msra.mxu0 0.0
  %9479 = vmatprep.subr.mxu0 0.0
  %9480 = vmatpush1.msra.mxu0 0.0
  %9481 = vmatprep.subr.mxu0 0.0
  %9482 = vmatpush1.msra.mxu0 0.0
  %9483 = vmatprep.subr.mxu0 0.0
  %9484 = vmatpush1.msra.mxu0 0.0
  %9485 = vmatprep.subr.mxu0 0.0
  %9486 = vmatpush1.msra.mxu0 0.0
  %9487 = vmatprep.subr.mxu0 0.0
  %9488 = vmatpush1.msra.mxu0 0.0
  %9489 = vmatprep.subr.mxu0 0.0
  %9490 = vmatpush1.msra.mxu0 0.0
  %9491 = vmatprep.subr.mxu0 0.0
  %9492 = vmatpush1.msra.mxu0 0.0
  %9493 = vmatprep.subr.mxu0 0.0
  %9494 = vmatpush1.msra.mxu0 0.0
  %9495 = vmatprep.subr.mxu0 0.0
  %9496 = vmatpush1.msra.mxu0 0.0
  %9497 = vmatprep.subr.mxu0 0.0
  %9498 = vmatpush1.msra.mxu0 0.0
  %9499 = vmatprep.mubr.f32.mxu0 0.0
  %9500 = vmatmul.mubr.f32.gmra.mrb[0].mxu0 %v9418
  %v9501 = vpop.f32.mrb[0].mxu0
  %v9502 = vadd.f32 %v9416, %v9501
  %v9503 = vpop.f32.mrb[0].mxu0
  %9504 = vmatprep.mubr.f32.mxu0 0.0
  %9505 = vmatmul.mubr.f32.gmra.mrb[0].mxu0 %v9421
  %v9506 = vpop.f32.mrb[0].mxu0
  %v9507 = vadd.f32 %v9416, %v9506
  %v9508 = vpop.f32.mrb[0].mxu0
  %9509 = vmatprep.mubr.f32.mxu0 0.0
  %9510 = vmatmul.mubr.f32.gmra.mrb[0].mxu0 %v9424
  %v9511 = vpop.f32.mrb[0].mxu0
  %v9512 = vadd.f32 %v9416, %v9511
  %v9513 = vpop.f32.mrb[0].mxu0
  %9514 = vmatprep.mubr.f32.mxu0 0.0
  %9515 = vmatmul.mubr.f32.gmra.mrb[0].mxu0 %v9427
  %v9516 = vpop.f32.mrb[0].mxu0
  %v9517 = vadd.f32 %v9416, %v9516
  %v9518 = vpop.f32.mrb[0].mxu0
  %9519 = vmatprep.mubr.f32.mxu0 0.0
  %9520 = vmatmul.mubr.f32.gmra.mrb[0].mxu0 %v9430
  %v9521 = vpop.f32.mrb[0].mxu0
  %v9522 = vadd.f32 %v9416, %v9521
  %v9523 = vpop.f32.mrb[0].mxu0
  %9524 = vmatprep.mubr.f32.mxu0 0.0
  %9525 = vmatmul.mubr.f32.gmra.mrb[0].mxu0 %v9433
  %v9526 = vpop.f32.mrb[0].mxu0
  %v9527 = vadd.f32 %v9416, %v9526
  %v9528 = vpop.f32.mrb[0].mxu0
  %9529 = vdwg.mxu0
  %9530 = vmax.xlane.f32.xlu0 %v9502
  %v9531 = vpop.xlane.xlu0 %9530
  %9532 = vmax.xlane.f32.xlu0 %v9507
  %v9533 = vpop.xlane.xlu0 %9532
  %9534 = vmax.xlane.f32.xlu0 %v9512
  %v9535 = vpop.xlane.xlu0 %9534
  %9536 = vmax.xlane.f32.xlu0 %v9517
  %v9537 = vpop.xlane.xlu0 %9536
  %9538 = vmax.xlane.f32.xlu0 %v9522
  %v9539 = vpop.xlane.xlu0 %9538
  %9540 = vmax.xlane.f32.xlu0 %v9527
  %v9541 = vpop.xlane.xlu0 %9540
  %v9542 = vsub.f32 %v9502, %v9531
  %v9543 = vsub.f32 %v9507, %v9533
  %v9544 = vsub.f32 %v9512, %v9535
  %v9545 = vsub.f32 %v9517, %v9537
  %v9546 = vsub.f32 %v9522, %v9539
  %v9547 = vsub.f32 %v9527, %v9541
  %v9548 = vmul.f32 %v9542, 1.442695
  %v9549 = vpow.pop %v9548
  %v9550 = vmul.f32 %v9543, 1.442695
  %v9551 = vpow.pop %v9550
  %v9552 = vmul.f32 %v9544, 1.442695
  %v9553 = vpow.pop %v9552
  %v9554 = vmul.f32 %v9545, 1.442695
  %v9555 = vpow.pop %v9554
  %v9556 = vmul.f32 %v9546, 1.442695
  %v9557 = vpow.pop %v9556
  %v9558 = vmul.f32 %v9547, 1.442695
  %v9559 = vpow.pop %v9558
  %9560 = vadd.xlane.f32.xlu0 %v9549
  %v9561 = vpop.xlane.xlu0 %9560
  %9562 = vadd.xlane.f32.xlu0 %v9551
  %v9563 = vpop.xlane.xlu0 %9562
  %9564 = vadd.xlane.f32.xlu0 %v9553
  %v9565 = vpop.xlane.xlu0 %9564
  %9566 = vadd.xlane.f32.xlu0 %v9555
  %v9567 = vpop.xlane.xlu0 %9566
  %9568 = vadd.xlane.f32.xlu0 %v9557
  %v9569 = vpop.xlane.xlu0 %9568
  %9570 = vadd.xlane.f32.xlu0 %v9559
  %v9571 = vpop.xlane.xlu0 %9570
  %v9572 = vrcp.pop %v9561
  %v9573 = vmul.f32 %v9549, %v9572
  %v9574 = vrcp.pop %v9563
  %v9575 = vmul.f32 %v9551, %v9574
  %v9576 = vrcp.pop %v9565
  %v9577 = vmul.f32 %v9553, %v9576
  %v9578 = vrcp.pop %v9567
  %v9579 = vmul.f32 %v9555, %v9578
  %v9580 = vrcp.pop %v9569
  %v9581 = vmul.f32 %v9557, %v9580
  %v9582 = vrcp.pop %v9571
  %v9583 = vmul.f32 %v9559, %v9582
  %9584 = vst [vmem:[%s73] sm:$0xff] %v9573
  %9585 = vst [vmem:[%s73 + $0x8] sm:$0xff] %v9575
  %9586 = vst [vmem:[%s73 + $0x10] sm:$0xff] %v9577
  %9587 = vst [vmem:[%s73 + $0x18] sm:$0xff] %v9579
  %9588 = vst [vmem:[%s73 + $0x20] sm:$0xff] %v9581
  %9589 = vst [vmem:[%s73 + $0x28] sm:$0xff] %v9583
  %9590 = vst [vmem:[%s75] sm:$0xff] %v8918
  %9591 = vst [vmem:[%s75 + $0x8] sm:$0xff] %v8919
  %9592 = vst [vmem:[%s75 + $0x10] sm:$0xff] %v8920
  %9593 = vst [vmem:[%s75 + $0x18] sm:$0xff] %v8921
  %9594 = vst [vmem:[%s75 + $0x20] sm:$0xff] %v8922
  %9595 = vst [vmem:[%s75 + $0x28] sm:$0xff] %v8923
  %9596 = vst [vmem:[%s75 + $0x30] sm:$0xff] %v8924
  %9597 = vst [vmem:[%s75 + $0x38] sm:$0xff] %v8925
  %9598 = vst [vmem:[%s75 + $0x40] sm:$0xff] %v8926
  %9599 = vst [vmem:[%s75 + $0x48] sm:$0xff] %v8927
  %9600 = vst [vmem:[%s75 + $0x50] sm:$0xff] %v8928
  %9601 = vst [vmem:[%s75 + $0x58] sm:$0xff] %v8929
  // Predicated region
  $region146: #{spgat_forward.1} parent=0 // pred_check
    _
  $region147: #{spgat_forward.1} parent=0 // pred_check_branch
    %9603 = sbr.rel (0) target = $region149
  $region148: #{spgat_forward.1} parent=0 // pred_region
    _
  $region149: #{spgat_forward.1} parent=0 // pred_fallthru
    _
  // Predicated region
  $region150: #{spgat_forward.1} parent=0 // pred_check
    _
  $region151: #{spgat_forward.1} parent=0 // pred_check_branch
    %9605 = sbr.rel (0) target = $region153
  $region152: #{spgat_forward.1} parent=0 // pred_region
    _
  $region153: #{spgat_forward.1} parent=0 // pred_fallthru
    _
  // Predicated region
  $region154: #{spgat_forward.1} parent=0 // pred_check
    _
  $region155: #{spgat_forward.1} parent=0 // pred_check_branch
    %9607 = sbr.rel (0) target = $region157
  $region156: #{spgat_forward.1} parent=0 // pred_region
    _
  $region157: #{spgat_forward.1} parent=0 // pred_fallthru
    _
  // Predicated region
  $region158: #{spgat_forward.1} parent=0 // pred_check
    _
  $region159: #{spgat_forward.1} parent=0 // pred_check_branch
    %9609 = sbr.rel (0) target = $region161
  $region160: #{spgat_forward.1} parent=0 // pred_region
    _
  $region161: #{spgat_forward.1} parent=0 // pred_fallthru
    _

</llo_original>
